<compile_context>
chip_gen: v7x
topology: tpu7x:2x2x1
jax: 0.10.0
libtpu: 0.0.40
codegen_flags: <defaults>
</compile_context>

<pallas_src>
import jax
import jax.numpy as jnp
import numpy as np
from jax.experimental import pallas as pl
from jax.experimental.pallas import tpu as pltpu

LANES = 128
H_IN = 32                 # CNNnet's forward implies 32x32 RGB input (CIFAR-like).
C1_W, C2_W = 168, 160     # conv1 lanes = 28 cols x 6 ch, conv2 lanes = 10 cols x 16 ch
Q1_W, Q2_W = 162, 144     # widths after the lane-direction 2x2 pooling shift


def _round_up(x, m):
    return (x + m - 1) // m * m


def _tile_plan(n):
    """Samples per tile and tile count.

    * >= 8 samples/tile so the (NB, 128) output block obeys the (8, 128) rule.
    * <= 32 samples/tile keeps the per-step VMEM working set at a few MiB.
    * >= 2 grid steps so both v7x TensorCores get work (megacore).
    """
    nb = min(32, max(8, _round_up(pl.cdiv(n, 2), 8)))
    tiles = max(2, pl.cdiv(n, nb))
    return nb, tiles


# -----------------------------------------------------------------------------
# The fused kernel.  Per batch tile of NB samples (ROWS = NB*32 input rows):
#
#   x_ref : (NB*32, 96)    raw input, row = (n, h), lane = 3*w + c
#   B1    : (5, 96, 168)   banded conv1 weights, one slab per kernel row di
#   cb1   : (1, 162)       conv1 bias tiled over the pooled lane layout
#   B2    : (5, 162, 160)  banded conv2 weights
#   cb2   : (1, 144)       conv2 bias tiled over the pooled lane layout
#   C1    : (5, 144, 128)  fc1 weights folded over the 5 pooled rows
#                          (also realizes the NCHW .view(-1,400) order)
#   fb1/fb2/fb3 : (1, 128) fc biases (zero padded)
#   W2/W3 : (128, 128)     fc2/fc3 weights (transposed, zero padded)
#   o_ref : (NB, 128)      logits (lanes 0..9 real, rest exactly zero)
#
# Valid data tracking (garbage rows/lanes are finite and multiplied by the
# zero entries of the banded matrices, so they never contaminate real rows):
#   conv1  : y [n*32 + i,        6*j  + c]   i,j in [0,28)
#   pool1  : q [n*32 + 2*ip,    12*jp + c]   ip,jp in [0,14)
#   conv2  : y2[n*32 + 2*i2,    16*j2 + c]   i2,j2 in [0,10)
#   pool2  : q2[n*32 + 4*i2p,   32*j2p + c]  i2p,j2p in [0,5)
#   fc1    : r [n*32, f]  -> compacted to rows n by a selector matmul
# -----------------------------------------------------------------------------
def _cnn_fused_kernel(x_ref, B1_ref, cb1_ref, B2_ref, cb2_ref, C1_ref,
                      fb1_ref, W2_ref, fb2_ref, W3_ref, fb3_ref, o_ref):
    f32 = jnp.float32
    rows = x_ref.shape[0]          # NB * 32 (static)
    nb = o_ref.shape[0]            # NB      (static)

    # ---- stage 1: conv1 (5 banded matmuls) + 2x2 max-pool + bias + ReLU ----
    m1 = rows - 4
    y = jnp.dot(x_ref[0:m1, :], B1_ref[0], preferred_element_type=f32)
    for di in range(1, 5):
        y = y + jnp.dot(x_ref[di:di + m1, :], B1_ref[di],
                        preferred_element_type=f32)
    p = jnp.maximum(y[:-1, :], y[1:, :])        # pool over rows (h)
    q = jnp.maximum(p[:, :-6], p[:, 6:])        # pool over cols (w); lanes = (j, c)
    q = jnp.maximum(q + cb1_ref[...], 0.0)      # shared bias + monotone ReLU

    # ---- stage 2: conv2 (5 banded matmuls) + 2x2 max-pool + bias + ReLU ----
    m2 = rows - 13
    y2 = jnp.dot(q[0:m2, :], B2_ref[0], preferred_element_type=f32)
    for di in range(1, 5):
        y2 = y2 + jnp.dot(q[2 * di:2 * di + m2, :], B2_ref[di],
                          preferred_element_type=f32)
    p2 = jnp.maximum(y2[:-2, :], y2[2:, :])
    q2 = jnp.maximum(p2[:, :-16], p2[:, 16:])
    q2 = jnp.maximum(q2 + cb2_ref[...], 0.0)

    # ---- fc1: flatten folded into 5 banded matmuls (one per pooled row) ----
    m3 = rows - 31
    r = jnp.dot(q2[0:m3, :], C1_ref[0], preferred_element_type=f32)
    for i in range(1, 5):
        r = r + jnp.dot(q2[4 * i:4 * i + m3, :], C1_ref[i],
                        preferred_element_type=f32)

    # Valid fc1 pre-activations live at rows n*32.  Compact them with a 0/1
    # selector matmul (MXU), avoiding a strided-row relayout / strided store.
    row_id = jax.lax.broadcasted_iota(jnp.int32, (nb, m3), 1)
    want = 32 * jax.lax.broadcasted_iota(jnp.int32, (nb, m3), 0)
    sel = (row_id == want).astype(f32)
    rc = jnp.dot(sel, r, preferred_element_type=f32)          # (NB, 128)

    # ---- MLP tail (fc1 bias/relu -> fc2 -> fc3), all resident ----
    h = jnp.maximum(rc + fb1_ref[...], 0.0)
    h = jnp.dot(h, W2_ref[...], preferred_element_type=f32)
    h = jnp.maximum(h + fb2_ref[...], 0.0)
    h = jnp.dot(h, W3_ref[...], preferred_element_type=f32)
    o_ref[...] = h + fb3_ref[...]


# -----------------------------------------------------------------------------
# Parameters: PyTorch-default-style init, then a one-time re-layout into the
# banded / padded forms the fused kernel wants (outside the hot path).
# -----------------------------------------------------------------------------
def _uniform(key, shape, fan_in):
    bound = 1.0 / jnp.sqrt(jnp.float32(fan_in))
    return jax.random.uniform(key, shape, dtype=jnp.float32,
                              minval=-bound, maxval=bound)


def init_params(key):
    keys = jax.random.split(key, 10)
    return {
        "conv1_w": _uniform(keys[0], (6, 3, 5, 5), 3 * 5 * 5),
        "conv1_b": _uniform(keys[1], (6,), 3 * 5 * 5),
        "conv2_w": _uniform(keys[2], (16, 6, 5, 5), 6 * 5 * 5),
        "conv2_b": _uniform(keys[3], (16,), 6 * 5 * 5),
        "fc1_w": _uniform(keys[4], (120, 400), 400),
        "fc1_b": _uniform(keys[5], (120,), 400),
        "fc2_w": _uniform(keys[6], (84, 120), 120),
        "fc2_b": _uniform(keys[7], (84,), 120),
        "fc3_w": _uniform(keys[8], (10, 84), 84),
        "fc3_b": _uniform(keys[9], (10,), 84),
    }


def prepare_params(p):
    """One-time weight re-layout into block-banded / padded matrices.

    This is where the im2col structure, the pooled lane layout and the
    PyTorch NCHW flatten order are all folded into the weights, so the hot
    path never materializes patches, transposes or reshapes.
    """
    w1 = np.asarray(p["conv1_w"], np.float32)     # (6, 3, 5, 5)
    b1 = np.asarray(p["conv1_b"], np.float32)
    w2 = np.asarray(p["conv2_w"], np.float32)     # (16, 6, 5, 5)
    b2 = np.asarray(p["conv2_b"], np.float32)
    f1w = np.asarray(p["fc1_w"], np.float32)      # (120, 400)
    f1b = np.asarray(p["fc1_b"], np.float32)
    f2w = np.asarray(p["fc2_w"], np.float32)      # (84, 120)
    f2b = np.asarray(p["fc2_b"], np.float32)
    f3w = np.asarray(p["fc3_w"], np.float32)      # (10, 84)
    f3b = np.asarray(p["fc3_b"], np.float32)

    # conv1: B1[di, 3*(j+dj)+ci, 6*j+co] = w1[co, ci, di, dj], j in [0,28)
    B1 = np.zeros((5, 96, C1_W), np.float32)
    for di in range(5):
        for dj in range(5):
            for ci in range(3):
                for j in range(28):
                    B1[di, 3 * (j + dj) + ci, 6 * j:6 * j + 6] = w1[:, ci, di, dj]
    cb1 = np.tile(b1, Q1_W // 6)[None, :]         # bias at pooled lanes 12*jp+c

    # conv2 (reads the pooled conv1 layout directly, incl. its garbage lanes
    # via zero rows): B2[di, 12*(j2+dj)+ci, 16*j2+co] = w2[co, ci, di, dj]
    B2 = np.zeros((5, Q1_W, C2_W), np.float32)
    for di in range(5):
        for dj in range(5):
            for ci in range(6):
                for j2 in range(10):
                    B2[di, 12 * (j2 + dj) + ci, 16 * j2:16 * j2 + 16] = \
                        w2[:, ci, di, dj]
    cb2 = np.tile(b2, Q2_W // 16)[None, :]        # bias at pooled lanes 32*j2p+c

    # fc1 folded over the 5 pooled rows; realizes torch's .view(-1, 400)
    # (C-major) flatten order: flat = co*25 + i2p*5 + j2p.
    C1 = np.zeros((5, Q2_W, LANES), np.float32)
    for i2p in range(5):
        for j2p in range(5):
            for co in range(16):
                C1[i2p, 32 * j2p + co, :120] = f1w[:, co * 25 + i2p * 5 + j2p]

    def pad_bias(b):
        out = np.zeros((1, LANES), np.float32)
        out[0, :b.shape[0]] = b
        return out

    W2 = np.zeros((LANES, LANES), np.float32)
    W2[:120, :84] = f2w.T
    W3 = np.zeros((LANES, LANES), np.float32)
    W3[:84, :10] = f3w.T

    kp = {"B1": B1, "cb1": cb1, "B2": B2, "cb2": cb2, "C1": C1,
          "fb1": pad_bias(f1b), "W2": W2, "fb2": pad_bias(f2b),
          "W3": W3, "fb3": pad_bias(f3b)}
    return {k: jnp.asarray(v) for k, v in kp.items()}


# -----------------------------------------------------------------------------
# Forward pass (mirrors CNNnet.forward) — single fused pallas_call.
# -----------------------------------------------------------------------------
def cnn_forward(kp, x):
    # x: (N, 3, 32, 32) float32, NCHW like PyTorch.
    n = x.shape[0]
    assert x.shape[1:] == (3, H_IN, H_IN), x.shape

    nb, tiles = _tile_plan(n)
    n_pad = nb * tiles
    if n_pad != n:
        x = jnp.pad(x, ((0, n_pad - n), (0, 0), (0, 0), (0, 0)))
    # Only per-forward layout op: row = (n, h), lane = 3*w + c.  The raw input
    # is the ONLY activation that ever touches HBM besides the (N,128) logits.
    x2d = jnp.transpose(x, (0, 2, 3, 1)).reshape(n_pad * H_IN, 96)

    rows_t = nb * H_IN
    m1, m2, m3 = rows_t - 4, rows_t - 13, rows_t - 31
    flops = 2 * tiles * (5 * m1 * 96 * C1_W + 5 * m2 * Q1_W * C2_W
                         + 5 * m3 * Q2_W * LANES + nb * m3 * LANES
                         + 2 * nb * LANES * LANES)
    bytes_accessed = 4 * (n_pad * H_IN * 96 + n_pad * LANES
                          + 5 * (96 * C1_W + Q1_W * C2_W + Q2_W * LANES)
                          + 2 * LANES * LANES + 5 * LANES + Q1_W + Q2_W)

    out = pl.pallas_call(
        _cnn_fused_kernel,
        out_shape=jax.ShapeDtypeStruct((n_pad, LANES), jnp.float32),
        grid=(tiles,),
        in_specs=[
            pl.BlockSpec((rows_t, 96), lambda i: (i, 0)),          # input tile
            pl.BlockSpec((5, 96, C1_W), lambda i: (0, 0, 0)),      # B1 (resident)
            pl.BlockSpec((1, Q1_W), lambda i: (0, 0)),             # cb1
            pl.BlockSpec((5, Q1_W, C2_W), lambda i: (0, 0, 0)),    # B2
            pl.BlockSpec((1, Q2_W), lambda i: (0, 0)),             # cb2
            pl.BlockSpec((5, Q2_W, LANES), lambda i: (0, 0, 0)),   # C1 (fc1)
            pl.BlockSpec((1, LANES), lambda i: (0, 0)),            # fb1
            pl.BlockSpec((LANES, LANES), lambda i: (0, 0)),        # W2
            pl.BlockSpec((1, LANES), lambda i: (0, 0)),            # fb2
            pl.BlockSpec((LANES, LANES), lambda i: (0, 0)),        # W3
            pl.BlockSpec((1, LANES), lambda i: (0, 0)),            # fb3
        ],
        out_specs=pl.BlockSpec((nb, LANES), lambda i: (i, 0)),
        compiler_params=pltpu.CompilerParams(
            dimension_semantics=("parallel",),
            vmem_limit_bytes=32 * 1024 * 1024),
        cost_estimate=pl.CostEstimate(
            flops=flops, transcendentals=0, bytes_accessed=bytes_accessed),
    )(x2d, kp["B1"], kp["cb1"], kp["B2"], kp["cb2"], kp["C1"], kp["fb1"],
      kp["W2"], kp["fb2"], kp["W3"], kp["fb3"])

    return out[:n, :10]


# -----------------------------------------------------------------------------
# Pure-JAX reference (exact replica of the PyTorch forward) for validation.
# -----------------------------------------------------------------------------
def _reference_forward(p, x):
    def conv2d(x, w, b):
        co, ci, kh, kw = w.shape
        _, _, h, wd = x.shape
        ho, wo = h - kh + 1, wd - kw + 1
        cols = [x[:, :, di:di + ho, dj:dj + wo]
                for di in range(kh) for dj in range(kw)]
        patches = jnp.stack(cols, axis=-1)                    # (N,Ci,Ho,Wo,kh*kw)
        out = jnp.einsum("ncijt,oct->noij", patches,
                         w.reshape(co, ci, kh * kw),
                         precision=jax.lax.Precision.HIGHEST)
        return out + b[None, :, None, None]

    def pool2(x):
        n, c, h, w = x.shape
        return x.reshape(n, c, h // 2, 2, w // 2, 2).max(axis=(3, 5))

    y = pool2(jnp.maximum(conv2d(x, p["conv1_w"], p["conv1_b"]), 0.0))
    y = pool2(jnp.maximum(conv2d(y, p["conv2_w"], p["conv2_b"]), 0.0))
    y = y.reshape(y.shape[0], -1)                             # == torch .view(-1, 400)
    y = jnp.maximum(y @ p["fc1_w"].T + p["fc1_b"], 0.0)
    y = jnp.maximum(y @ p["fc2_w"].T + p["fc2_b"], 0.0)
    return y @ p["fc3_w"].T + p["fc3_b"]


if __name__ == "__main__":
    key = jax.random.PRNGKey(0)
    k_params, k_x = jax.random.split(key)
    params = init_params(k_params)
    kparams = prepare_params(params)      # one-time banded re-layout, not hot path
    x = jax.random.normal(k_x, (2, 3, 32, 32), dtype=jnp.float32)

    fwd = jax.jit(cnn_forward)
    out = jax.block_until_ready(fwd(kparams, x))
    assert out.shape == (2, 10), out.shape
    assert out.dtype == jnp.float32

    ref = jax.block_until_ready(_reference_forward(params, x))
    err = float(jnp.max(jnp.abs(out - ref)))
    assert err < 2e-2, f"max abs err vs reference: {err}"
    print("KERNEL_OK")
</pallas_src>

<mosaic_0001>
module attributes {stable_mosaic.version = 11 : i64} {
  func.func @_cnn_fused_kernel(%arg0: i32, %arg1: memref<256x96xf32, #tpu.memory_space<vmem>>, %arg2: memref<5x96x168xf32, #tpu.memory_space<vmem>>, %arg3: memref<1x162xf32, #tpu.memory_space<vmem>>, %arg4: memref<5x162x160xf32, #tpu.memory_space<vmem>>, %arg5: memref<1x144xf32, #tpu.memory_space<vmem>>, %arg6: memref<5x144x128xf32, #tpu.memory_space<vmem>>, %arg7: memref<1x128xf32, #tpu.memory_space<vmem>>, %arg8: memref<128x128xf32, #tpu.memory_space<vmem>>, %arg9: memref<1x128xf32, #tpu.memory_space<vmem>>, %arg10: memref<128x128xf32, #tpu.memory_space<vmem>>, %arg11: memref<1x128xf32, #tpu.memory_space<vmem>>, %arg12: memref<8x128xf32, #tpu.memory_space<vmem>>) attributes {dimension_semantics = [#tpu.dimension_semantics<parallel>], iteration_bounds = array<i64: 2>, scalar_prefetch = 0 : i64, scratch_operands = 0 : i64, tpu.core_type = #tpu.core_type<tc>, window_params = [{transform_indices = @transform_0, window_bounds = array<i64: 256, 96>}, {pipeline_mode = #tpu.pipeline_mode<synchronous>, transform_indices = @transform_1, window_bounds = array<i64: 5, 96, 168>}, {pipeline_mode = #tpu.pipeline_mode<synchronous>, transform_indices = @transform_2, window_bounds = array<i64: 1, 162>}, {pipeline_mode = #tpu.pipeline_mode<synchronous>, transform_indices = @transform_3, window_bounds = array<i64: 5, 162, 160>}, {pipeline_mode = #tpu.pipeline_mode<synchronous>, transform_indices = @transform_4, window_bounds = array<i64: 1, 144>}, {pipeline_mode = #tpu.pipeline_mode<synchronous>, transform_indices = @transform_5, window_bounds = array<i64: 5, 144, 128>}, {pipeline_mode = #tpu.pipeline_mode<synchronous>, transform_indices = @transform_6, window_bounds = array<i64: 1, 128>}, {pipeline_mode = #tpu.pipeline_mode<synchronous>, transform_indices = @transform_7, window_bounds = array<i64: 128, 128>}, {pipeline_mode = #tpu.pipeline_mode<synchronous>, transform_indices = @transform_8, window_bounds = array<i64: 1, 128>}, {pipeline_mode = #tpu.pipeline_mode<synchronous>, transform_indices = @transform_9, window_bounds = array<i64: 128, 128>}, {pipeline_mode = #tpu.pipeline_mode<synchronous>, transform_indices = @transform_10, window_bounds = array<i64: 1, 128>}, {transform_indices = @transform_11, window_bounds = array<i64: 8, 128>}]} {
    %c0 = arith.constant 0 : index
    %c0_0 = arith.constant 0 : index
    %0 = vector.load %arg1[%c0, %c0_0] : memref<256x96xf32, #tpu.memory_space<vmem>>, vector<252x96xf32>
    %c0_1 = arith.constant 0 : index
    %c0_2 = arith.constant 0 : index
    %c0_3 = arith.constant 0 : index
    %1 = vector.load %arg2[%c0_1, %c0_2, %c0_3] : memref<5x96x168xf32, #tpu.memory_space<vmem>>, vector<1x96x168xf32>
    %2 = vector.shape_cast %1 : vector<1x96x168xf32> to vector<96x168xf32>
    %cst = arith.constant dense<0.000000e+00> : vector<252x168xf32>
    %3 = tpu.matmul %0, %2, %cst {dimension_numbers = #tpu.dot_dimension_numbers<[1], [0], [0], [1], [0, 0, 1, 1], [], []>} : vector<252x96xf32>, vector<96x168xf32>, vector<252x168xf32> -> vector<252x168xf32>
    %c1 = arith.constant 1 : index
    %c0_4 = arith.constant 0 : index
    %4 = vector.load %arg1[%c1, %c0_4] : memref<256x96xf32, #tpu.memory_space<vmem>>, vector<252x96xf32>
    %c1_5 = arith.constant 1 : index
    %c0_6 = arith.constant 0 : index
    %c0_7 = arith.constant 0 : index
    %5 = vector.load %arg2[%c1_5, %c0_6, %c0_7] : memref<5x96x168xf32, #tpu.memory_space<vmem>>, vector<1x96x168xf32>
    %6 = vector.shape_cast %5 : vector<1x96x168xf32> to vector<96x168xf32>
    %cst_8 = arith.constant dense<0.000000e+00> : vector<252x168xf32>
    %7 = tpu.matmul %4, %6, %cst_8 {dimension_numbers = #tpu.dot_dimension_numbers<[1], [0], [0], [1], [0, 0, 1, 1], [], []>} : vector<252x96xf32>, vector<96x168xf32>, vector<252x168xf32> -> vector<252x168xf32>
    %8 = arith.addf %3, %7 : vector<252x168xf32>
    %c2 = arith.constant 2 : index
    %c0_9 = arith.constant 0 : index
    %9 = vector.load %arg1[%c2, %c0_9] : memref<256x96xf32, #tpu.memory_space<vmem>>, vector<252x96xf32>
    %c2_10 = arith.constant 2 : index
    %c0_11 = arith.constant 0 : index
    %c0_12 = arith.constant 0 : index
    %10 = vector.load %arg2[%c2_10, %c0_11, %c0_12] : memref<5x96x168xf32, #tpu.memory_space<vmem>>, vector<1x96x168xf32>
    %11 = vector.shape_cast %10 : vector<1x96x168xf32> to vector<96x168xf32>
    %cst_13 = arith.constant dense<0.000000e+00> : vector<252x168xf32>
    %12 = tpu.matmul %9, %11, %cst_13 {dimension_numbers = #tpu.dot_dimension_numbers<[1], [0], [0], [1], [0, 0, 1, 1], [], []>} : vector<252x96xf32>, vector<96x168xf32>, vector<252x168xf32> -> vector<252x168xf32>
    %13 = arith.addf %8, %12 : vector<252x168xf32>
    %c3 = arith.constant 3 : index
    %c0_14 = arith.constant 0 : index
    %14 = vector.load %arg1[%c3, %c0_14] : memref<256x96xf32, #tpu.memory_space<vmem>>, vector<252x96xf32>
    %c3_15 = arith.constant 3 : index
    %c0_16 = arith.constant 0 : index
    %c0_17 = arith.constant 0 : index
    %15 = vector.load %arg2[%c3_15, %c0_16, %c0_17] : memref<5x96x168xf32, #tpu.memory_space<vmem>>, vector<1x96x168xf32>
    %16 = vector.shape_cast %15 : vector<1x96x168xf32> to vector<96x168xf32>
    %cst_18 = arith.constant dense<0.000000e+00> : vector<252x168xf32>
    %17 = tpu.matmul %14, %16, %cst_18 {dimension_numbers = #tpu.dot_dimension_numbers<[1], [0], [0], [1], [0, 0, 1, 1], [], []>} : vector<252x96xf32>, vector<96x168xf32>, vector<252x168xf32> -> vector<252x168xf32>
    %18 = arith.addf %13, %17 : vector<252x168xf32>
    %c4 = arith.constant 4 : index
    %c0_19 = arith.constant 0 : index
    %19 = vector.load %arg1[%c4, %c0_19] : memref<256x96xf32, #tpu.memory_space<vmem>>, vector<252x96xf32>
    %c4_20 = arith.constant 4 : index
    %c0_21 = arith.constant 0 : index
    %c0_22 = arith.constant 0 : index
    %20 = vector.load %arg2[%c4_20, %c0_21, %c0_22] : memref<5x96x168xf32, #tpu.memory_space<vmem>>, vector<1x96x168xf32>
    %21 = vector.shape_cast %20 : vector<1x96x168xf32> to vector<96x168xf32>
    %cst_23 = arith.constant dense<0.000000e+00> : vector<252x168xf32>
    %22 = tpu.matmul %19, %21, %cst_23 {dimension_numbers = #tpu.dot_dimension_numbers<[1], [0], [0], [1], [0, 0, 1, 1], [], []>} : vector<252x96xf32>, vector<96x168xf32>, vector<252x168xf32> -> vector<252x168xf32>
    %23 = arith.addf %18, %22 : vector<252x168xf32>
    %24 = vector.extract_strided_slice %23 {offsets = [0, 0], sizes = [251, 168], strides = [1, 1]} : vector<252x168xf32> to vector<251x168xf32>
    %25 = vector.extract_strided_slice %23 {offsets = [1, 0], sizes = [251, 168], strides = [1, 1]} : vector<252x168xf32> to vector<251x168xf32>
    %26 = arith.maximumf %24, %25 : vector<251x168xf32>
    %27 = vector.extract_strided_slice %26 {offsets = [0, 0], sizes = [251, 162], strides = [1, 1]} : vector<251x168xf32> to vector<251x162xf32>
    %28 = vector.extract_strided_slice %26 {offsets = [0, 6], sizes = [251, 162], strides = [1, 1]} : vector<251x168xf32> to vector<251x162xf32>
    %29 = arith.maximumf %27, %28 : vector<251x162xf32>
    %c0_24 = arith.constant 0 : index
    %c0_25 = arith.constant 0 : index
    %30 = vector.load %arg3[%c0_24, %c0_25] : memref<1x162xf32, #tpu.memory_space<vmem>>, vector<1x162xf32>
    %31 = vector.broadcast %30 : vector<1x162xf32> to vector<251x162xf32>
    %32 = arith.addf %29, %31 : vector<251x162xf32>
    %cst_26 = arith.constant 0.000000e+00 : f32
    %33 = vector.broadcast %cst_26 : f32 to vector<251x162xf32>
    %34 = arith.maximumf %32, %33 : vector<251x162xf32>
    %35 = vector.extract_strided_slice %34 {offsets = [0, 0], sizes = [243, 162], strides = [1, 1]} : vector<251x162xf32> to vector<243x162xf32>
    %c0_27 = arith.constant 0 : index
    %c0_28 = arith.constant 0 : index
    %c0_29 = arith.constant 0 : index
    %36 = vector.load %arg4[%c0_27, %c0_28, %c0_29] : memref<5x162x160xf32, #tpu.memory_space<vmem>>, vector<1x162x160xf32>
    %37 = vector.shape_cast %36 : vector<1x162x160xf32> to vector<162x160xf32>
    %cst_30 = arith.constant dense<0.000000e+00> : vector<243x160xf32>
    %38 = tpu.matmul %35, %37, %cst_30 {dimension_numbers = #tpu.dot_dimension_numbers<[1], [0], [0], [1], [0, 0, 1, 1], [], []>} : vector<243x162xf32>, vector<162x160xf32>, vector<243x160xf32> -> vector<243x160xf32>
    %39 = vector.extract_strided_slice %34 {offsets = [2, 0], sizes = [243, 162], strides = [1, 1]} : vector<251x162xf32> to vector<243x162xf32>
    %c1_31 = arith.constant 1 : index
    %c0_32 = arith.constant 0 : index
    %c0_33 = arith.constant 0 : index
    %40 = vector.load %arg4[%c1_31, %c0_32, %c0_33] : memref<5x162x160xf32, #tpu.memory_space<vmem>>, vector<1x162x160xf32>
    %41 = vector.shape_cast %40 : vector<1x162x160xf32> to vector<162x160xf32>
    %cst_34 = arith.constant dense<0.000000e+00> : vector<243x160xf32>
    %42 = tpu.matmul %39, %41, %cst_34 {dimension_numbers = #tpu.dot_dimension_numbers<[1], [0], [0], [1], [0, 0, 1, 1], [], []>} : vector<243x162xf32>, vector<162x160xf32>, vector<243x160xf32> -> vector<243x160xf32>
    %43 = arith.addf %38, %42 : vector<243x160xf32>
    %44 = vector.extract_strided_slice %34 {offsets = [4, 0], sizes = [243, 162], strides = [1, 1]} : vector<251x162xf32> to vector<243x162xf32>
    %c2_35 = arith.constant 2 : index
    %c0_36 = arith.constant 0 : index
    %c0_37 = arith.constant 0 : index
    %45 = vector.load %arg4[%c2_35, %c0_36, %c0_37] : memref<5x162x160xf32, #tpu.memory_space<vmem>>, vector<1x162x160xf32>
    %46 = vector.shape_cast %45 : vector<1x162x160xf32> to vector<162x160xf32>
    %cst_38 = arith.constant dense<0.000000e+00> : vector<243x160xf32>
    %47 = tpu.matmul %44, %46, %cst_38 {dimension_numbers = #tpu.dot_dimension_numbers<[1], [0], [0], [1], [0, 0, 1, 1], [], []>} : vector<243x162xf32>, vector<162x160xf32>, vector<243x160xf32> -> vector<243x160xf32>
    %48 = arith.addf %43, %47 : vector<243x160xf32>
    %49 = vector.extract_strided_slice %34 {offsets = [6, 0], sizes = [243, 162], strides = [1, 1]} : vector<251x162xf32> to vector<243x162xf32>
    %c3_39 = arith.constant 3 : index
    %c0_40 = arith.constant 0 : index
    %c0_41 = arith.constant 0 : index
    %50 = vector.load %arg4[%c3_39, %c0_40, %c0_41] : memref<5x162x160xf32, #tpu.memory_space<vmem>>, vector<1x162x160xf32>
    %51 = vector.shape_cast %50 : vector<1x162x160xf32> to vector<162x160xf32>
    %cst_42 = arith.constant dense<0.000000e+00> : vector<243x160xf32>
    %52 = tpu.matmul %49, %51, %cst_42 {dimension_numbers = #tpu.dot_dimension_numbers<[1], [0], [0], [1], [0, 0, 1, 1], [], []>} : vector<243x162xf32>, vector<162x160xf32>, vector<243x160xf32> -> vector<243x160xf32>
    %53 = arith.addf %48, %52 : vector<243x160xf32>
    %54 = vector.extract_strided_slice %34 {offsets = [8, 0], sizes = [243, 162], strides = [1, 1]} : vector<251x162xf32> to vector<243x162xf32>
    %c4_43 = arith.constant 4 : index
    %c0_44 = arith.constant 0 : index
    %c0_45 = arith.constant 0 : index
    %55 = vector.load %arg4[%c4_43, %c0_44, %c0_45] : memref<5x162x160xf32, #tpu.memory_space<vmem>>, vector<1x162x160xf32>
    %56 = vector.shape_cast %55 : vector<1x162x160xf32> to vector<162x160xf32>
    %cst_46 = arith.constant dense<0.000000e+00> : vector<243x160xf32>
    %57 = tpu.matmul %54, %56, %cst_46 {dimension_numbers = #tpu.dot_dimension_numbers<[1], [0], [0], [1], [0, 0, 1, 1], [], []>} : vector<243x162xf32>, vector<162x160xf32>, vector<243x160xf32> -> vector<243x160xf32>
    %58 = arith.addf %53, %57 : vector<243x160xf32>
    %59 = vector.extract_strided_slice %58 {offsets = [0, 0], sizes = [241, 160], strides = [1, 1]} : vector<243x160xf32> to vector<241x160xf32>
    %60 = vector.extract_strided_slice %58 {offsets = [2, 0], sizes = [241, 160], strides = [1, 1]} : vector<243x160xf32> to vector<241x160xf32>
    %61 = arith.maximumf %59, %60 : vector<241x160xf32>
    %62 = vector.extract_strided_slice %61 {offsets = [0, 0], sizes = [241, 144], strides = [1, 1]} : vector<241x160xf32> to vector<241x144xf32>
    %63 = vector.extract_strided_slice %61 {offsets = [0, 16], sizes = [241, 144], strides = [1, 1]} : vector<241x160xf32> to vector<241x144xf32>
    %64 = arith.maximumf %62, %63 : vector<241x144xf32>
    %c0_47 = arith.constant 0 : index
    %c0_48 = arith.constant 0 : index
    %65 = vector.load %arg5[%c0_47, %c0_48] : memref<1x144xf32, #tpu.memory_space<vmem>>, vector<1x144xf32>
    %66 = vector.broadcast %65 : vector<1x144xf32> to vector<241x144xf32>
    %67 = arith.addf %64, %66 : vector<241x144xf32>
    %cst_49 = arith.constant 0.000000e+00 : f32
    %68 = vector.broadcast %cst_49 : f32 to vector<241x144xf32>
    %69 = arith.maximumf %67, %68 : vector<241x144xf32>
    %70 = vector.extract_strided_slice %69 {offsets = [0, 0], sizes = [225, 144], strides = [1, 1]} : vector<241x144xf32> to vector<225x144xf32>
    %c0_50 = arith.constant 0 : index
    %c0_51 = arith.constant 0 : index
    %c0_52 = arith.constant 0 : index
    %71 = vector.load %arg6[%c0_50, %c0_51, %c0_52] : memref<5x144x128xf32, #tpu.memory_space<vmem>>, vector<1x144x128xf32>
    %72 = vector.shape_cast %71 : vector<1x144x128xf32> to vector<144x128xf32>
    %cst_53 = arith.constant dense<0.000000e+00> : vector<225x128xf32>
    %73 = tpu.matmul %70, %72, %cst_53 {dimension_numbers = #tpu.dot_dimension_numbers<[1], [0], [0], [1], [0, 0, 1, 1], [], []>} : vector<225x144xf32>, vector<144x128xf32>, vector<225x128xf32> -> vector<225x128xf32>
    %74 = vector.extract_strided_slice %69 {offsets = [4, 0], sizes = [225, 144], strides = [1, 1]} : vector<241x144xf32> to vector<225x144xf32>
    %c1_54 = arith.constant 1 : index
    %c0_55 = arith.constant 0 : index
    %c0_56 = arith.constant 0 : index
    %75 = vector.load %arg6[%c1_54, %c0_55, %c0_56] : memref<5x144x128xf32, #tpu.memory_space<vmem>>, vector<1x144x128xf32>
    %76 = vector.shape_cast %75 : vector<1x144x128xf32> to vector<144x128xf32>
    %cst_57 = arith.constant dense<0.000000e+00> : vector<225x128xf32>
    %77 = tpu.matmul %74, %76, %cst_57 {dimension_numbers = #tpu.dot_dimension_numbers<[1], [0], [0], [1], [0, 0, 1, 1], [], []>} : vector<225x144xf32>, vector<144x128xf32>, vector<225x128xf32> -> vector<225x128xf32>
    %78 = arith.addf %73, %77 : vector<225x128xf32>
    %79 = vector.extract_strided_slice %69 {offsets = [8, 0], sizes = [225, 144], strides = [1, 1]} : vector<241x144xf32> to vector<225x144xf32>
    %c2_58 = arith.constant 2 : index
    %c0_59 = arith.constant 0 : index
    %c0_60 = arith.constant 0 : index
    %80 = vector.load %arg6[%c2_58, %c0_59, %c0_60] : memref<5x144x128xf32, #tpu.memory_space<vmem>>, vector<1x144x128xf32>
    %81 = vector.shape_cast %80 : vector<1x144x128xf32> to vector<144x128xf32>
    %cst_61 = arith.constant dense<0.000000e+00> : vector<225x128xf32>
    %82 = tpu.matmul %79, %81, %cst_61 {dimension_numbers = #tpu.dot_dimension_numbers<[1], [0], [0], [1], [0, 0, 1, 1], [], []>} : vector<225x144xf32>, vector<144x128xf32>, vector<225x128xf32> -> vector<225x128xf32>
    %83 = arith.addf %78, %82 : vector<225x128xf32>
    %84 = vector.extract_strided_slice %69 {offsets = [12, 0], sizes = [225, 144], strides = [1, 1]} : vector<241x144xf32> to vector<225x144xf32>
    %c3_62 = arith.constant 3 : index
    %c0_63 = arith.constant 0 : index
    %c0_64 = arith.constant 0 : index
    %85 = vector.load %arg6[%c3_62, %c0_63, %c0_64] : memref<5x144x128xf32, #tpu.memory_space<vmem>>, vector<1x144x128xf32>
    %86 = vector.shape_cast %85 : vector<1x144x128xf32> to vector<144x128xf32>
    %cst_65 = arith.constant dense<0.000000e+00> : vector<225x128xf32>
    %87 = tpu.matmul %84, %86, %cst_65 {dimension_numbers = #tpu.dot_dimension_numbers<[1], [0], [0], [1], [0, 0, 1, 1], [], []>} : vector<225x144xf32>, vector<144x128xf32>, vector<225x128xf32> -> vector<225x128xf32>
    %88 = arith.addf %83, %87 : vector<225x128xf32>
    %89 = vector.extract_strided_slice %69 {offsets = [16, 0], sizes = [225, 144], strides = [1, 1]} : vector<241x144xf32> to vector<225x144xf32>
    %c4_66 = arith.constant 4 : index
    %c0_67 = arith.constant 0 : index
    %c0_68 = arith.constant 0 : index
    %90 = vector.load %arg6[%c4_66, %c0_67, %c0_68] : memref<5x144x128xf32, #tpu.memory_space<vmem>>, vector<1x144x128xf32>
    %91 = vector.shape_cast %90 : vector<1x144x128xf32> to vector<144x128xf32>
    %cst_69 = arith.constant dense<0.000000e+00> : vector<225x128xf32>
    %92 = tpu.matmul %89, %91, %cst_69 {dimension_numbers = #tpu.dot_dimension_numbers<[1], [0], [0], [1], [0, 0, 1, 1], [], []>} : vector<225x144xf32>, vector<144x128xf32>, vector<225x128xf32> -> vector<225x128xf32>
    %93 = arith.addf %88, %92 : vector<225x128xf32>
    %94 = tpu.iota {dimensions = array<i32: 1>} : vector<8x225xi32>
    %95 = tpu.iota {dimensions = array<i32: 0>} : vector<8x225xi32>
    %c32_i32 = arith.constant 32 : i32
    %96 = vector.broadcast %c32_i32 : i32 to vector<8x225xi32>
    %97 = arith.muli %96, %95 : vector<8x225xi32>
    %98 = arith.cmpi eq, %94, %97 : vector<8x225xi32>
    %99 = arith.extui %98 : vector<8x225xi1> to vector<8x225xi32>
    %100 = arith.sitofp %99 : vector<8x225xi32> to vector<8x225xf32>
    %cst_70 = arith.constant dense<0.000000e+00> : vector<8x128xf32>
    %101 = tpu.matmul %100, %93, %cst_70 {dimension_numbers = #tpu.dot_dimension_numbers<[1], [0], [0], [1], [0, 0, 1, 1], [], []>} : vector<8x225xf32>, vector<225x128xf32>, vector<8x128xf32> -> vector<8x128xf32>
    %c0_71 = arith.constant 0 : index
    %c0_72 = arith.constant 0 : index
    %102 = vector.load %arg7[%c0_71, %c0_72] : memref<1x128xf32, #tpu.memory_space<vmem>>, vector<1x128xf32>
    %103 = vector.broadcast %102 : vector<1x128xf32> to vector<8x128xf32>
    %104 = arith.addf %101, %103 : vector<8x128xf32>
    %cst_73 = arith.constant 0.000000e+00 : f32
    %105 = vector.broadcast %cst_73 : f32 to vector<8x128xf32>
    %106 = arith.maximumf %104, %105 : vector<8x128xf32>
    %c0_74 = arith.constant 0 : index
    %c0_75 = arith.constant 0 : index
    %107 = vector.load %arg8[%c0_74, %c0_75] : memref<128x128xf32, #tpu.memory_space<vmem>>, vector<128x128xf32>
    %cst_76 = arith.constant dense<0.000000e+00> : vector<8x128xf32>
    %108 = tpu.matmul %106, %107, %cst_76 {dimension_numbers = #tpu.dot_dimension_numbers<[1], [0], [0], [1], [0, 0, 1, 1], [], []>} : vector<8x128xf32>, vector<128x128xf32>, vector<8x128xf32> -> vector<8x128xf32>
    %c0_77 = arith.constant 0 : index
    %c0_78 = arith.constant 0 : index
    %109 = vector.load %arg9[%c0_77, %c0_78] : memref<1x128xf32, #tpu.memory_space<vmem>>, vector<1x128xf32>
    %110 = vector.broadcast %109 : vector<1x128xf32> to vector<8x128xf32>
    %111 = arith.addf %108, %110 : vector<8x128xf32>
    %cst_79 = arith.constant 0.000000e+00 : f32
    %112 = vector.broadcast %cst_79 : f32 to vector<8x128xf32>
    %113 = arith.maximumf %111, %112 : vector<8x128xf32>
    %c0_80 = arith.constant 0 : index
    %c0_81 = arith.constant 0 : index
    %114 = vector.load %arg10[%c0_80, %c0_81] : memref<128x128xf32, #tpu.memory_space<vmem>>, vector<128x128xf32>
    %cst_82 = arith.constant dense<0.000000e+00> : vector<8x128xf32>
    %115 = tpu.matmul %113, %114, %cst_82 {dimension_numbers = #tpu.dot_dimension_numbers<[1], [0], [0], [1], [0, 0, 1, 1], [], []>} : vector<8x128xf32>, vector<128x128xf32>, vector<8x128xf32> -> vector<8x128xf32>
    %c0_83 = arith.constant 0 : index
    %c0_84 = arith.constant 0 : index
    %116 = vector.load %arg11[%c0_83, %c0_84] : memref<1x128xf32, #tpu.memory_space<vmem>>, vector<1x128xf32>
    %117 = vector.broadcast %116 : vector<1x128xf32> to vector<8x128xf32>
    %118 = arith.addf %115, %117 : vector<8x128xf32>
    %c0_85 = arith.constant 0 : index
    %c0_86 = arith.constant 0 : index
    %119 = vector.load %arg12[%c0_85, %c0_86] : memref<8x128xf32, #tpu.memory_space<vmem>>, vector<8x128xf32>
    tpu.vector_store %arg12[%c0_85, %c0_86], %118 {strides = array<i32>} : memref<8x128xf32, #tpu.memory_space<vmem>>, vector<8x128xf32>,
    return
  }
  func.func @transform_0(%arg0: i32) -> (i32, i32) {
    %c0_i32 = arith.constant 0 : i32
    %c0_i32_0 = arith.constant 0 : i32
    return %arg0, %c0_i32 : i32, i32
  }
  func.func @transform_1(%arg0: i32) -> (i32, i32, i32) {
    %c0_i32 = arith.constant 0 : i32
    %c0_i32_0 = arith.constant 0 : i32
    %c0_i32_1 = arith.constant 0 : i32
    %c0_i32_2 = arith.constant 0 : i32
    return %c0_i32, %c0_i32_0, %c0_i32_1 : i32, i32, i32
  }
  func.func @transform_2(%arg0: i32) -> (i32, i32) {
    %c0_i32 = arith.constant 0 : i32
    %c0_i32_0 = arith.constant 0 : i32
    %c0_i32_1 = arith.constant 0 : i32
    return %c0_i32, %c0_i32_0 : i32, i32
  }
  func.func @transform_3(%arg0: i32) -> (i32, i32, i32) {
    %c0_i32 = arith.constant 0 : i32
    %c0_i32_0 = arith.constant 0 : i32
    %c0_i32_1 = arith.constant 0 : i32
    %c0_i32_2 = arith.constant 0 : i32
    return %c0_i32, %c0_i32_0, %c0_i32_1 : i32, i32, i32
  }
  func.func @transform_4(%arg0: i32) -> (i32, i32) {
    %c0_i32 = arith.constant 0 : i32
    %c0_i32_0 = arith.constant 0 : i32
    %c0_i32_1 = arith.constant 0 : i32
    return %c0_i32, %c0_i32_0 : i32, i32
  }
  func.func @transform_5(%arg0: i32) -> (i32, i32, i32) {
    %c0_i32 = arith.constant 0 : i32
    %c0_i32_0 = arith.constant 0 : i32
    %c0_i32_1 = arith.constant 0 : i32
    %c0_i32_2 = arith.constant 0 : i32
    return %c0_i32, %c0_i32_0, %c0_i32_1 : i32, i32, i32
  }
  func.func @transform_6(%arg0: i32) -> (i32, i32) {
    %c0_i32 = arith.constant 0 : i32
    %c0_i32_0 = arith.constant 0 : i32
    %c0_i32_1 = arith.constant 0 : i32
    return %c0_i32, %c0_i32_0 : i32, i32
  }
  func.func @transform_7(%arg0: i32) -> (i32, i32) {
    %c0_i32 = arith.constant 0 : i32
    %c0_i32_0 = arith.constant 0 : i32
    %c0_i32_1 = arith.constant 0 : i32
    return %c0_i32, %c0_i32_0 : i32, i32
  }
  func.func @transform_8(%arg0: i32) -> (i32, i32) {
    %c0_i32 = arith.constant 0 : i32
    %c0_i32_0 = arith.constant 0 : i32
    %c0_i32_1 = arith.constant 0 : i32
    return %c0_i32, %c0_i32_0 : i32, i32
  }
  func.func @transform_9(%arg0: i32) -> (i32, i32) {
    %c0_i32 = arith.constant 0 : i32
    %c0_i32_0 = arith.constant 0 : i32
    %c0_i32_1 = arith.constant 0 : i32
    return %c0_i32, %c0_i32_0 : i32, i32
  }
  func.func @transform_10(%arg0: i32) -> (i32, i32) {
    %c0_i32 = arith.constant 0 : i32
    %c0_i32_0 = arith.constant 0 : i32
    %c0_i32_1 = arith.constant 0 : i32
    return %c0_i32, %c0_i32_0 : i32, i32
  }
  func.func @transform_11(%arg0: i32) -> (i32, i32) {
    %c0_i32 = arith.constant 0 : i32
    %c0_i32_0 = arith.constant 0 : i32
    return %arg0, %c0_i32 : i32, i32
  }
}

</mosaic_0001>

<llo_original>
// kernel: cnn_forward.1
$region0: #{cnn_forward.1}
  #allocation0 [shape = 'u32[]', space=smem, size = 0x4, offset = 0x4, fixed_abs, tag = 'smem constant byte address 0x4 - core index']
  #allocation1 [shape = 'u32[144,128]{1,0:T(1,128)}', space=vmem, size = 0x12000, scoped, tag = 'internal scratch']
  %s0 = inlined_call_operand.vmem [shape: f32[512,96], index: 0, kind: input, shape index: {}]
  %s1 = inlined_call_operand.vmem [shape: f32[5,96,168], index: 1, kind: input, shape index: {}]
  %s2 = inlined_call_operand.vmem [shape: f32[1,162], index: 2, kind: input, shape index: {}]
  %s3 = inlined_call_operand.vmem [shape: f32[5,162,160], index: 3, kind: input, shape index: {}]
  %s4 = inlined_call_operand.vmem [shape: f32[1,144], index: 4, kind: input, shape index: {}]
  %s5 = inlined_call_operand.vmem [shape: f32[5,144,128], index: 5, kind: input, shape index: {}]
  %s6 = inlined_call_operand.vmem [shape: f32[1,128], index: 6, kind: input, shape index: {}]
  %s7 = inlined_call_operand.vmem [shape: f32[128,128], index: 7, kind: input, shape index: {}]
  %s8 = inlined_call_operand.vmem [shape: f32[1,128], index: 8, kind: input, shape index: {}]
  %s9 = inlined_call_operand.vmem [shape: f32[128,128], index: 9, kind: input, shape index: {}]
  %s10 = inlined_call_operand.vmem [shape: f32[1,128], index: 10, kind: input, shape index: {}]
  %s11 = inlined_call_operand.vmem [shape: f32[16,128], index: 11, kind: output, shape index: {}]
  %s12 = sld [smem:[#allocation0]]
  $region77: #{cnn_forward.1} parent=0
    _
  %s14 = ssub.s32 1, %s12
  %s15 = scalar_select 0, %s14, %s12
  loop: start=0, step=1, limit=4
  $region2: #{cnn_forward.1} parent=0 // loop_pre_header
    _
  $region3: #{cnn_forward.1} parent=0 // loop_header
    %s17 = sphi 0, %s21
    %p18 = scmp.ge.s32.totalorder %s17, 4
    %s27 = sphi 0, %s29
    %s30 = sphi 0, %s27
    %s31 = sphi 0, %s30
    %s47 = sphi 0, %s31
    %s51 = sphi 0, %s51
    %s53 = sphi 0, %s51
    %s54 = sphi 0, %s53
    %s68 = sphi 0, %s54
    %s72 = sphi 0, %s72
    %s74 = sphi 0, %s72
    %s75 = sphi 0, %s74
    %s89 = sphi 0, %s75
    %s93 = sphi 0, %s93
    %s95 = sphi 0, %s93
    %s96 = sphi 0, %s95
    %s110 = sphi 0, %s96
    %s114 = sphi 0, %s114
    %s116 = sphi 0, %s114
    %s117 = sphi 0, %s116
    %s131 = sphi 0, %s117
    %s135 = sphi 0, %s135
    %s137 = sphi 0, %s135
    %s138 = sphi 0, %s137
    %s152 = sphi 0, %s138
    %s156 = sphi 0, %s156
    %s158 = sphi 0, %s156
    %s159 = sphi 0, %s158
    %s173 = sphi 0, %s159
    %s177 = sphi 0, %s177
    %s179 = sphi 0, %s177
    %s180 = sphi 0, %s179
    %s194 = sphi 0, %s180
    %s198 = sphi 0, %s198
    %s200 = sphi 0, %s198
    %s201 = sphi 0, %s200
    %s215 = sphi 0, %s201
    %s219 = sphi 0, %s219
    %s221 = sphi 0, %s219
    %s222 = sphi 0, %s221
    %s236 = sphi 0, %s222
    %s240 = sphi 0, %s240
    %s242 = sphi 0, %s240
    %s243 = sphi 0, %s242
    %s257 = sphi 0, %s243
    %s263 = sphi 0, %s265
    %s266 = sphi 0, %s263
    %s267 = sphi 0, %s266
    %s283 = sphi 0, %s267
  $region4: #{cnn_forward.1} parent=0 // loop_header_branch
    %20 = sbr.rel (%p18) target = $region8
  $region5: #{cnn_forward.1} parent=0 // loop_body
    %s22 = ssub.s32 %s17, 1
    %s23 = ssub.s32 %s17, 2
    %s24 = sadd.s32 %s17, 1
    %s25 = ssub.s32 %s17, %s24
    %p26 = scmp.eq.s32.totalorder %s25, 0
    %s28 = sadd.s32 %s27, 1
    %s29 = scalar_select %p26, %s27, %s28
    %p32 = pneg %p26
    %p33 = scmp.eq.s32.totalorder %s17, 1
    %p34 = por %p32, %p33
    %p35 = scmp.ne.s32.totalorder %s27, %s30
    %p36 = scmp.eq.s32.totalorder %s17, 0
    %p37 = por %p35, %p36
    %p38 = scmp.ne.s32.totalorder %s27, %s30
    %p39 = scmp.eq.s32.totalorder %s22, 1
    %p40 = por %p38, %p39
    %p41 = scmp.ne.s32.totalorder %s30, %s31
    %p42 = scmp.eq.s32.totalorder %s22, 0
    %p43 = por %p41, %p42
    %p44 = scmp.ne.s32.totalorder %s30, %s31
    %p45 = scmp.eq.s32.totalorder %s23, 1
    %p46 = por %p44, %p45
    %p48 = scmp.ne.s32.totalorder %s31, %s47
    %p49 = scmp.eq.s32.totalorder %s23, 0
    %p50 = por %p48, %p49
    %s52 = sadd.s32 %s51, 1
    %p55 = scmp.eq.s32.totalorder %s17, 1
    %p56 = scmp.ne.s32.totalorder %s51, %s53
    %p57 = scmp.eq.s32.totalorder %s17, 0
    %p58 = por %p56, %p57
    %p59 = scmp.ne.s32.totalorder %s51, %s53
    %p60 = scmp.eq.s32.totalorder %s22, 1
    %p61 = por %p59, %p60
    %p62 = scmp.ne.s32.totalorder %s53, %s54
    %p63 = scmp.eq.s32.totalorder %s22, 0
    %p64 = por %p62, %p63
    %p65 = scmp.ne.s32.totalorder %s53, %s54
    %p66 = scmp.eq.s32.totalorder %s23, 1
    %p67 = por %p65, %p66
    %p69 = scmp.ne.s32.totalorder %s54, %s68
    %p70 = scmp.eq.s32.totalorder %s23, 0
    %p71 = por %p69, %p70
    %s73 = sadd.s32 %s72, 1
    %p76 = scmp.eq.s32.totalorder %s17, 1
    %p77 = scmp.ne.s32.totalorder %s72, %s74
    %p78 = scmp.eq.s32.totalorder %s17, 0
    %p79 = por %p77, %p78
    %p80 = scmp.ne.s32.totalorder %s72, %s74
    %p81 = scmp.eq.s32.totalorder %s22, 1
    %p82 = por %p80, %p81
    %p83 = scmp.ne.s32.totalorder %s74, %s75
    %p84 = scmp.eq.s32.totalorder %s22, 0
    %p85 = por %p83, %p84
    %p86 = scmp.ne.s32.totalorder %s74, %s75
    %p87 = scmp.eq.s32.totalorder %s23, 1
    %p88 = por %p86, %p87
    %p90 = scmp.ne.s32.totalorder %s75, %s89
    %p91 = scmp.eq.s32.totalorder %s23, 0
    %p92 = por %p90, %p91
    %s94 = sadd.s32 %s93, 1
    %p97 = scmp.eq.s32.totalorder %s17, 1
    %p98 = scmp.ne.s32.totalorder %s93, %s95
    %p99 = scmp.eq.s32.totalorder %s17, 0
    %p100 = por %p98, %p99
    %p101 = scmp.ne.s32.totalorder %s93, %s95
    %p102 = scmp.eq.s32.totalorder %s22, 1
    %p103 = por %p101, %p102
    %p104 = scmp.ne.s32.totalorder %s95, %s96
    %p105 = scmp.eq.s32.totalorder %s22, 0
    %p106 = por %p104, %p105
    %p107 = scmp.ne.s32.totalorder %s95, %s96
    %p108 = scmp.eq.s32.totalorder %s23, 1
    %p109 = por %p107, %p108
    %p111 = scmp.ne.s32.totalorder %s96, %s110
    %p112 = scmp.eq.s32.totalorder %s23, 0
    %p113 = por %p111, %p112
    %s115 = sadd.s32 %s114, 1
    %p118 = scmp.eq.s32.totalorder %s17, 1
    %p119 = scmp.ne.s32.totalorder %s114, %s116
    %p120 = scmp.eq.s32.totalorder %s17, 0
    %p121 = por %p119, %p120
    %p122 = scmp.ne.s32.totalorder %s114, %s116
    %p123 = scmp.eq.s32.totalorder %s22, 1
    %p124 = por %p122, %p123
    %p125 = scmp.ne.s32.totalorder %s116, %s117
    %p126 = scmp.eq.s32.totalorder %s22, 0
    %p127 = por %p125, %p126
    %p128 = scmp.ne.s32.totalorder %s116, %s117
    %p129 = scmp.eq.s32.totalorder %s23, 1
    %p130 = por %p128, %p129
    %p132 = scmp.ne.s32.totalorder %s117, %s131
    %p133 = scmp.eq.s32.totalorder %s23, 0
    %p134 = por %p132, %p133
    %s136 = sadd.s32 %s135, 1
    %p139 = scmp.eq.s32.totalorder %s17, 1
    %p140 = scmp.ne.s32.totalorder %s135, %s137
    %p141 = scmp.eq.s32.totalorder %s17, 0
    %p142 = por %p140, %p141
    %p143 = scmp.ne.s32.totalorder %s135, %s137
    %p144 = scmp.eq.s32.totalorder %s22, 1
    %p145 = por %p143, %p144
    %p146 = scmp.ne.s32.totalorder %s137, %s138
    %p147 = scmp.eq.s32.totalorder %s22, 0
    %p148 = por %p146, %p147
    %p149 = scmp.ne.s32.totalorder %s137, %s138
    %p150 = scmp.eq.s32.totalorder %s23, 1
    %p151 = por %p149, %p150
    %p153 = scmp.ne.s32.totalorder %s138, %s152
    %p154 = scmp.eq.s32.totalorder %s23, 0
    %p155 = por %p153, %p154
    %s157 = sadd.s32 %s156, 1
    %p160 = scmp.eq.s32.totalorder %s17, 1
    %p161 = scmp.ne.s32.totalorder %s156, %s158
    %p162 = scmp.eq.s32.totalorder %s17, 0
    %p163 = por %p161, %p162
    %p164 = scmp.ne.s32.totalorder %s156, %s158
    %p165 = scmp.eq.s32.totalorder %s22, 1
    %p166 = por %p164, %p165
    %p167 = scmp.ne.s32.totalorder %s158, %s159
    %p168 = scmp.eq.s32.totalorder %s22, 0
    %p169 = por %p167, %p168
    %p170 = scmp.ne.s32.totalorder %s158, %s159
    %p171 = scmp.eq.s32.totalorder %s23, 1
    %p172 = por %p170, %p171
    %p174 = scmp.ne.s32.totalorder %s159, %s173
    %p175 = scmp.eq.s32.totalorder %s23, 0
    %p176 = por %p174, %p175
    %s178 = sadd.s32 %s177, 1
    %p181 = scmp.eq.s32.totalorder %s17, 1
    %p182 = scmp.ne.s32.totalorder %s177, %s179
    %p183 = scmp.eq.s32.totalorder %s17, 0
    %p184 = por %p182, %p183
    %p185 = scmp.ne.s32.totalorder %s177, %s179
    %p186 = scmp.eq.s32.totalorder %s22, 1
    %p187 = por %p185, %p186
    %p188 = scmp.ne.s32.totalorder %s179, %s180
    %p189 = scmp.eq.s32.totalorder %s22, 0
    %p190 = por %p188, %p189
    %p191 = scmp.ne.s32.totalorder %s179, %s180
    %p192 = scmp.eq.s32.totalorder %s23, 1
    %p193 = por %p191, %p192
    %p195 = scmp.ne.s32.totalorder %s180, %s194
    %p196 = scmp.eq.s32.totalorder %s23, 0
    %p197 = por %p195, %p196
    %s199 = sadd.s32 %s198, 1
    %p202 = scmp.eq.s32.totalorder %s17, 1
    %p203 = scmp.ne.s32.totalorder %s198, %s200
    %p204 = scmp.eq.s32.totalorder %s17, 0
    %p205 = por %p203, %p204
    %p206 = scmp.ne.s32.totalorder %s198, %s200
    %p207 = scmp.eq.s32.totalorder %s22, 1
    %p208 = por %p206, %p207
    %p209 = scmp.ne.s32.totalorder %s200, %s201
    %p210 = scmp.eq.s32.totalorder %s22, 0
    %p211 = por %p209, %p210
    %p212 = scmp.ne.s32.totalorder %s200, %s201
    %p213 = scmp.eq.s32.totalorder %s23, 1
    %p214 = por %p212, %p213
    %p216 = scmp.ne.s32.totalorder %s201, %s215
    %p217 = scmp.eq.s32.totalorder %s23, 0
    %p218 = por %p216, %p217
    %s220 = sadd.s32 %s219, 1
    %p223 = scmp.eq.s32.totalorder %s17, 1
    %p224 = scmp.ne.s32.totalorder %s219, %s221
    %p225 = scmp.eq.s32.totalorder %s17, 0
    %p226 = por %p224, %p225
    %p227 = scmp.ne.s32.totalorder %s219, %s221
    %p228 = scmp.eq.s32.totalorder %s22, 1
    %p229 = por %p227, %p228
    %p230 = scmp.ne.s32.totalorder %s221, %s222
    %p231 = scmp.eq.s32.totalorder %s22, 0
    %p232 = por %p230, %p231
    %p233 = scmp.ne.s32.totalorder %s221, %s222
    %p234 = scmp.eq.s32.totalorder %s23, 1
    %p235 = por %p233, %p234
    %p237 = scmp.ne.s32.totalorder %s222, %s236
    %p238 = scmp.eq.s32.totalorder %s23, 0
    %p239 = por %p237, %p238
    %s241 = sadd.s32 %s240, 1
    %p244 = scmp.eq.s32.totalorder %s17, 1
    %p245 = scmp.ne.s32.totalorder %s240, %s242
    %p246 = scmp.eq.s32.totalorder %s17, 0
    %p247 = por %p245, %p246
    %p248 = scmp.ne.s32.totalorder %s240, %s242
    %p249 = scmp.eq.s32.totalorder %s22, 1
    %p250 = por %p248, %p249
    %p251 = scmp.ne.s32.totalorder %s242, %s243
    %p252 = scmp.eq.s32.totalorder %s22, 0
    %p253 = por %p251, %p252
    %p254 = scmp.ne.s32.totalorder %s242, %s243
    %p255 = scmp.eq.s32.totalorder %s23, 1
    %p256 = por %p254, %p255
    %p258 = scmp.ne.s32.totalorder %s243, %s257
    %p259 = scmp.eq.s32.totalorder %s23, 0
    %p260 = por %p258, %p259
    %s261 = ssub.s32 %s17, %s24
    %p262 = scmp.eq.s32.totalorder %s261, 0
    %s264 = sadd.s32 %s263, 1
    %s265 = scalar_select %p262, %s263, %s264
    %p268 = pneg %p262
    %p269 = scmp.eq.s32.totalorder %s17, 1
    %p270 = por %p268, %p269
    %p271 = scmp.ne.s32.totalorder %s263, %s266
    %p272 = scmp.eq.s32.totalorder %s17, 0
    %p273 = por %p271, %p272
    %p274 = scmp.ne.s32.totalorder %s263, %s266
    %p275 = scmp.eq.s32.totalorder %s22, 1
    %p276 = por %p274, %p275
    %p277 = scmp.ne.s32.totalorder %s266, %s267
    %p278 = scmp.eq.s32.totalorder %s22, 0
    %p279 = por %p277, %p278
    %p280 = scmp.ne.s32.totalorder %s266, %s267
    %p281 = scmp.eq.s32.totalorder %s23, 1
    %p282 = por %p280, %p281
    %p284 = scmp.ne.s32.totalorder %s267, %s283
    %p285 = scmp.eq.s32.totalorder %s23, 0
    %p286 = por %p284, %p285
    %p287 = scmp.le.s32.totalorder 1, %s17
    %p288 = scmp.lt.s32.totalorder %s17, 3
    %p289 = pnand %p287, %p288
    %p290 = pneg %p289
    // Predicated region
    $region9: #{cnn_forward.1} parent=5 // pred_check
      _
    $region10: #{cnn_forward.1} parent=5 // pred_check_branch
      %292 = sbr.rel (%p289) target = $region12
    $region11: #{cnn_forward.1} parent=5 // pred_region
      %s293 = ssub.s32 %s17, 1
      // Predicated region
      $region13: #{cnn_forward.1} parent=11 // pred_check
        %p294 = pneg %p64
      $region14: #{cnn_forward.1} parent=11 // pred_check_branch
        %296 = sbr.rel (%p294) target = $region16
      $region15: #{cnn_forward.1} parent=11 // pred_region
        _
      $region16: #{cnn_forward.1} parent=11 // pred_fallthru
        _
      // Predicated region
      $region17: #{cnn_forward.1} parent=11 // pred_check
        %p297 = pneg %p85
      $region18: #{cnn_forward.1} parent=11 // pred_check_branch
        %299 = sbr.rel (%p297) target = $region20
      $region19: #{cnn_forward.1} parent=11 // pred_region
        _
      $region20: #{cnn_forward.1} parent=11 // pred_fallthru
        _
      // Predicated region
      $region21: #{cnn_forward.1} parent=11 // pred_check
        %p300 = pneg %p106
      $region22: #{cnn_forward.1} parent=11 // pred_check_branch
        %302 = sbr.rel (%p300) target = $region24
      $region23: #{cnn_forward.1} parent=11 // pred_region
        _
      $region24: #{cnn_forward.1} parent=11 // pred_fallthru
        _
      // Predicated region
      $region25: #{cnn_forward.1} parent=11 // pred_check
        %p303 = pneg %p127
      $region26: #{cnn_forward.1} parent=11 // pred_check_branch
        %305 = sbr.rel (%p303) target = $region28
      $region27: #{cnn_forward.1} parent=11 // pred_region
        _
      $region28: #{cnn_forward.1} parent=11 // pred_fallthru
        _
      // Predicated region
      $region29: #{cnn_forward.1} parent=11 // pred_check
        %p306 = pneg %p148
      $region30: #{cnn_forward.1} parent=11 // pred_check_branch
        %308 = sbr.rel (%p306) target = $region32
      $region31: #{cnn_forward.1} parent=11 // pred_region
        _
      $region32: #{cnn_forward.1} parent=11 // pred_fallthru
        _
      // Predicated region
      $region33: #{cnn_forward.1} parent=11 // pred_check
        %p309 = pneg %p169
      $region34: #{cnn_forward.1} parent=11 // pred_check_branch
        %311 = sbr.rel (%p309) target = $region36
      $region35: #{cnn_forward.1} parent=11 // pred_region
        _
      $region36: #{cnn_forward.1} parent=11 // pred_fallthru
        _
      // Predicated region
      $region37: #{cnn_forward.1} parent=11 // pred_check
        %p312 = pneg %p190
      $region38: #{cnn_forward.1} parent=11 // pred_check_branch
        %314 = sbr.rel (%p312) target = $region40
      $region39: #{cnn_forward.1} parent=11 // pred_region
        _
      $region40: #{cnn_forward.1} parent=11 // pred_fallthru
        _
      // Predicated region
      $region41: #{cnn_forward.1} parent=11 // pred_check
        %p315 = pneg %p211
      $region42: #{cnn_forward.1} parent=11 // pred_check_branch
        %317 = sbr.rel (%p315) target = $region44
      $region43: #{cnn_forward.1} parent=11 // pred_region
        _
      $region44: #{cnn_forward.1} parent=11 // pred_fallthru
        _
      // Predicated region
      $region45: #{cnn_forward.1} parent=11 // pred_check
        %p318 = pneg %p232
      $region46: #{cnn_forward.1} parent=11 // pred_check_branch
        %320 = sbr.rel (%p318) target = $region48
      $region47: #{cnn_forward.1} parent=11 // pred_region
        _
      $region48: #{cnn_forward.1} parent=11 // pred_fallthru
        _
      // Predicated region
      $region49: #{cnn_forward.1} parent=11 // pred_check
        %p321 = pneg %p253
      $region50: #{cnn_forward.1} parent=11 // pred_check_branch
        %323 = sbr.rel (%p321) target = $region52
      $region51: #{cnn_forward.1} parent=11 // pred_region
        _
      $region52: #{cnn_forward.1} parent=11 // pred_fallthru
        _
    $region12: #{cnn_forward.1} parent=5 // pred_fallthru
      _
    %p324 = scmp.lt.s32.totalorder %s17, 2
    // Predicated region
    $region53: #{cnn_forward.1} parent=5 // pred_check
      %p325 = pneg %p324
    $region54: #{cnn_forward.1} parent=5 // pred_check_branch
      %327 = sbr.rel (%p325) target = $region56
    $region55: #{cnn_forward.1} parent=5 // pred_region
      // Predicated region
      $region57: #{cnn_forward.1} parent=55 // pred_check
        %p328 = pneg %p37
      $region58: #{cnn_forward.1} parent=55 // pred_check_branch
        %330 = sbr.rel (%p328) target = $region60
      $region59: #{cnn_forward.1} parent=55 // pred_region
        %s331 = smul.u32 32, %s17
        %p332 = scmp.lt.s32.totalorder %s331, 63
        %s333 = scalar_select %p332, %s331, 63
        %s334 = smul.addr %s333, 8
        %s335 = scalar_lea.vmem %s0, %s334
        %s336 = smul.u32 32, %s17
      $region60: #{cnn_forward.1} parent=55 // pred_fallthru
        _
    $region56: #{cnn_forward.1} parent=5 // pred_fallthru
      _
    %p337 = scmp.le.s32.totalorder 1, %s17
    %p338 = scmp.lt.s32.totalorder %s17, 3
    %p339 = pnand %p337, %p338
    %p340 = pneg %p339
    // Predicated region
    $region61: #{cnn_forward.1} parent=5 // pred_check
      _
    $region62: #{cnn_forward.1} parent=5 // pred_check_branch
      %342 = sbr.rel (%p339) target = $region64
    $region63: #{cnn_forward.1} parent=5 // pred_region
      %s343 = ssub.s32 %s17, 1
      %s344 = smul.u32 32, %s22
      %p345 = scmp.lt.s32.totalorder %s344, 63
      %s346 = scalar_select %p345, %s344, 63
      %s347 = smul.addr %s346, 8
      %s348 = scalar_lea.vmem %s0, %s347
      %p349 = pneg %p43
      %p350 = pneg %p40
      %p351 = pneg %p64
      %p352 = pneg %p61
      %p353 = pneg %p85
      %p354 = pneg %p82
      %p355 = pneg %p106
      %p356 = pneg %p103
      %p357 = pneg %p127
      %p358 = pneg %p124
      %p359 = pneg %p148
      %p360 = pneg %p145
      %p361 = pneg %p169
      %p362 = pneg %p166
      %p363 = pneg %p190
      %p364 = pneg %p187
      %p365 = pneg %p211
      %p366 = pneg %p208
      %p367 = pneg %p232
      %p368 = pneg %p229
      %p369 = pneg %p253
      %p370 = pneg %p250
      %p371 = pneg %p279
      %p372 = pneg %p276
      %p373 = scmp.lt.s32.totalorder %s22, 1
      %s374 = scalar_select %p373, %s22, 1
      %s375 = smul.addr %s374, 8
      %s376 = scalar_lea.vmem %s11, %s375
      %s377 = smul.u32 32, %s22
      %p378 = scmp.lt.s32.totalorder %s377, 63
      %s379 = scalar_select %p378, %s377, 63
      %s380 = smul.addr %s379, 8
      %s381 = scalar_lea.vmem %s0, %s380
      %s382 = smul.u32 32, %s22
      %p383 = scmp.lt.s32.totalorder %s22, 1
      %s384 = scalar_select %p383, %s22, 1
      %s385 = smul.addr %s384, 8
      %s386 = scalar_lea.vmem %s11, %s385
      %v387 = vld [vmem:[%s381] sm:$0xff]
      %v388 = vld [vmem:[%s381 + $0x8] sm:$0xff]
      %v389 = vld [vmem:[%s381 + $0x10] sm:$0xff]
      %v390 = vld [vmem:[%s381 + $0x18] sm:$0xff]
      %v391 = vld [vmem:[%s381 + $0x20] sm:$0xff]
      %v392 = vld [vmem:[%s381 + $0x28] sm:$0xff]
      %v393 = vld [vmem:[%s381 + $0x30] sm:$0xff]
      %v394 = vld [vmem:[%s381 + $0x38] sm:$0xff]
      %v395 = vld [vmem:[%s381 + $0x40] sm:$0xff]
      %v396 = vld [vmem:[%s381 + $0x48] sm:$0xff]
      %v397 = vld [vmem:[%s381 + $0x50] sm:$0xff]
      %v398 = vld [vmem:[%s381 + $0x58] sm:$0xff]
      %v399 = vld [vmem:[%s381 + $0x60] sm:$0xff]
      %v400 = vld [vmem:[%s381 + $0x68] sm:$0xff]
      %v401 = vld [vmem:[%s381 + $0x70] sm:$0xff]
      %v402 = vld [vmem:[%s381 + $0x78] sm:$0xff]
      %v403 = vld [vmem:[%s381 + $0x80] sm:$0xff]
      %v404 = vld [vmem:[%s381 + $0x88] sm:$0xff]
      %v405 = vld [vmem:[%s381 + $0x90] sm:$0xff]
      %v406 = vld [vmem:[%s381 + $0x98] sm:$0xff]
      %v407 = vld [vmem:[%s381 + $0xa0] sm:$0xff]
      %v408 = vld [vmem:[%s381 + $0xa8] sm:$0xff]
      %v409 = vld [vmem:[%s381 + $0xb0] sm:$0xff]
      %v410 = vld [vmem:[%s381 + $0xb8] sm:$0xff]
      %v411 = vld [vmem:[%s381 + $0xc0] sm:$0xff]
      %v412 = vld [vmem:[%s381 + $0xc8] sm:$0xff]
      %v413 = vld [vmem:[%s381 + $0xd0] sm:$0xff]
      %v414 = vld [vmem:[%s381 + $0xd8] sm:$0xff]
      %v415 = vld [vmem:[%s381 + $0xe0] sm:$0xff]
      %v416 = vld [vmem:[%s381 + $0xe8] sm:$0xff]
      %v417 = vld [vmem:[%s381 + $0xf0] sm:$0xff]
      %v418 = vld [vmem:[%s381 + $0xf8] sm:$0xf]
      %v419 = vld [vmem:[%s1] sm:$0xff]
      %v420 = vld [vmem:[%s1 + $0x8] sm:$0xff]
      %v421 = vld [vmem:[%s1 + $0x10] sm:$0xff]
      %v422 = vld [vmem:[%s1 + $0x18] sm:$0xff]
      %v423 = vld [vmem:[%s1 + $0x20] sm:$0xff]
      %v424 = vld [vmem:[%s1 + $0x28] sm:$0xff]
      %v425 = vld [vmem:[%s1 + $0x30] sm:$0xff]
      %v426 = vld [vmem:[%s1 + $0x38] sm:$0xff]
      %v427 = vld [vmem:[%s1 + $0x40] sm:$0xff]
      %v428 = vld [vmem:[%s1 + $0x48] sm:$0xff]
      %v429 = vld [vmem:[%s1 + $0x50] sm:$0xff]
      %v430 = vld [vmem:[%s1 + $0x58] sm:$0xff]
      %v431 = vld [vmem:[%s1 + $0x60] sm:$0xff]
      %v432 = vld [vmem:[%s1 + $0x68] sm:$0xff]
      %v433 = vld [vmem:[%s1 + $0x70] sm:$0xff]
      %v434 = vld [vmem:[%s1 + $0x78] sm:$0xff]
      %v435 = vld [vmem:[%s1 + $0x80] sm:$0xff]
      %v436 = vld [vmem:[%s1 + $0x88] sm:$0xff]
      %v437 = vld [vmem:[%s1 + $0x90] sm:$0xff]
      %v438 = vld [vmem:[%s1 + $0x98] sm:$0xff]
      %v439 = vld [vmem:[%s1 + $0xa0] sm:$0xff]
      %v440 = vld [vmem:[%s1 + $0xa8] sm:$0xff]
      %v441 = vld [vmem:[%s1 + $0xb0] sm:$0xff]
      %v442 = vld [vmem:[%s1 + $0xb8] sm:$0xff]
      %v443 = vld [vmem:[%s381 + $0x1] sm:$0xff]
      %v444 = vld [vmem:[%s381 + $0x9] sm:$0xff]
      %v445 = vld [vmem:[%s381 + $0x11] sm:$0xff]
      %v446 = vld [vmem:[%s381 + $0x19] sm:$0xff]
      %v447 = vld [vmem:[%s381 + $0x21] sm:$0xff]
      %v448 = vld [vmem:[%s381 + $0x29] sm:$0xff]
      %v449 = vld [vmem:[%s381 + $0x31] sm:$0xff]
      %v450 = vld [vmem:[%s381 + $0x39] sm:$0xff]
      %v451 = vld [vmem:[%s381 + $0x41] sm:$0xff]
      %v452 = vld [vmem:[%s381 + $0x49] sm:$0xff]
      %v453 = vld [vmem:[%s381 + $0x51] sm:$0xff]
      %v454 = vld [vmem:[%s381 + $0x59] sm:$0xff]
      %v455 = vld [vmem:[%s381 + $0x61] sm:$0xff]
      %v456 = vld [vmem:[%s381 + $0x69] sm:$0xff]
      %v457 = vld [vmem:[%s381 + $0x71] sm:$0xff]
      %v458 = vld [vmem:[%s381 + $0x79] sm:$0xff]
      %v459 = vld [vmem:[%s381 + $0x81] sm:$0xff]
      %v460 = vld [vmem:[%s381 + $0x89] sm:$0xff]
      %v461 = vld [vmem:[%s381 + $0x91] sm:$0xff]
      %v462 = vld [vmem:[%s381 + $0x99] sm:$0xff]
      %v463 = vld [vmem:[%s381 + $0xa1] sm:$0xff]
      %v464 = vld [vmem:[%s381 + $0xa9] sm:$0xff]
      %v465 = vld [vmem:[%s381 + $0xb1] sm:$0xff]
      %v466 = vld [vmem:[%s381 + $0xb9] sm:$0xff]
      %v467 = vld [vmem:[%s381 + $0xc1] sm:$0xff]
      %v468 = vld [vmem:[%s381 + $0xc9] sm:$0xff]
      %v469 = vld [vmem:[%s381 + $0xd1] sm:$0xff]
      %v470 = vld [vmem:[%s381 + $0xd9] sm:$0xff]
      %v471 = vld [vmem:[%s381 + $0xe1] sm:$0xff]
      %v472 = vld [vmem:[%s381 + $0xe9] sm:$0xff]
      %v473 = vld [vmem:[%s381 + $0xf1] sm:$0xff]
      %v474 = vld [vmem:[%s381 + $0xf9] sm:$0xf]
      %s475 = scalar_lea.vmem %s1, 192
      %v476 = vld [vmem:[%s475] sm:$0xff]
      %v477 = vld [vmem:[%s475 + $0x8] sm:$0xff]
      %v478 = vld [vmem:[%s475 + $0x10] sm:$0xff]
      %v479 = vld [vmem:[%s475 + $0x18] sm:$0xff]
      %v480 = vld [vmem:[%s475 + $0x20] sm:$0xff]
      %v481 = vld [vmem:[%s475 + $0x28] sm:$0xff]
      %v482 = vld [vmem:[%s475 + $0x30] sm:$0xff]
      %v483 = vld [vmem:[%s475 + $0x38] sm:$0xff]
      %v484 = vld [vmem:[%s475 + $0x40] sm:$0xff]
      %v485 = vld [vmem:[%s475 + $0x48] sm:$0xff]
      %v486 = vld [vmem:[%s475 + $0x50] sm:$0xff]
      %v487 = vld [vmem:[%s475 + $0x58] sm:$0xff]
      %v488 = vld [vmem:[%s475 + $0x60] sm:$0xff]
      %v489 = vld [vmem:[%s475 + $0x68] sm:$0xff]
      %v490 = vld [vmem:[%s475 + $0x70] sm:$0xff]
      %v491 = vld [vmem:[%s475 + $0x78] sm:$0xff]
      %v492 = vld [vmem:[%s475 + $0x80] sm:$0xff]
      %v493 = vld [vmem:[%s475 + $0x88] sm:$0xff]
      %v494 = vld [vmem:[%s475 + $0x90] sm:$0xff]
      %v495 = vld [vmem:[%s475 + $0x98] sm:$0xff]
      %v496 = vld [vmem:[%s475 + $0xa0] sm:$0xff]
      %v497 = vld [vmem:[%s475 + $0xa8] sm:$0xff]
      %v498 = vld [vmem:[%s475 + $0xb0] sm:$0xff]
      %v499 = vld [vmem:[%s475 + $0xb8] sm:$0xff]
      %vm500 = vcmask 785408
      %v502 = vsel %vm500, %v443, 0
      %v505 = vsel %vm500, %v444, 0
      %v508 = vsel %vm500, %v445, 0
      %v511 = vsel %vm500, %v446, 0
      %v514 = vsel %vm500, %v447, 0
      %v517 = vsel %vm500, %v448, 0
      %v520 = vsel %vm500, %v449, 0
      %v523 = vsel %vm500, %v450, 0
      %v526 = vsel %vm500, %v451, 0
      %v529 = vsel %vm500, %v452, 0
      %v532 = vsel %vm500, %v453, 0
      %v535 = vsel %vm500, %v454, 0
      %v538 = vsel %vm500, %v455, 0
      %v541 = vsel %vm500, %v456, 0
      %v544 = vsel %vm500, %v457, 0
      %v547 = vsel %vm500, %v458, 0
      %v550 = vsel %vm500, %v459, 0
      %v553 = vsel %vm500, %v460, 0
      %v556 = vsel %vm500, %v461, 0
      %v559 = vsel %vm500, %v462, 0
      %v562 = vsel %vm500, %v463, 0
      %v565 = vsel %vm500, %v464, 0
      %v568 = vsel %vm500, %v465, 0
      %v571 = vsel %vm500, %v466, 0
      %v574 = vsel %vm500, %v467, 0
      %v577 = vsel %vm500, %v468, 0
      %v580 = vsel %vm500, %v469, 0
      %v583 = vsel %vm500, %v470, 0
      %v586 = vsel %vm500, %v471, 0
      %v589 = vsel %vm500, %v472, 0
      %v592 = vsel %vm500, %v473, 0
      %v595 = vsel %vm500, %v474, 0
      %597 = vmatprep.subr.mxu0 %v477
      %598 = vmatpush1.msra.mxu0 %v476
      %599 = vmatprep.subr.mxu0 %v479
      %600 = vmatpush1.msra.mxu0 %v478
      %601 = vmatprep.subr.mxu0 %v481
      %602 = vmatpush1.msra.mxu0 %v480
      %603 = vmatprep.subr.mxu0 %v483
      %604 = vmatpush1.msra.mxu0 %v482
      %605 = vmatprep.subr.mxu0 %v485
      %606 = vmatpush1.msra.mxu0 %v484
      %607 = vmatprep.subr.mxu0 %v487
      %608 = vmatpush1.msra.mxu0 %v486
      %609 = vmatprep.subr.mxu0 %v489
      %610 = vmatpush1.msra.mxu0 %v488
      %611 = vmatprep.subr.mxu0 %v491
      %612 = vmatpush1.msra.mxu0 %v490
      %613 = vmatprep.subr.mxu0 %v493
      %614 = vmatpush1.msra.mxu0 %v492
      %615 = vmatprep.subr.mxu0 %v495
      %616 = vmatpush1.msra.mxu0 %v494
      %617 = vmatprep.subr.mxu0 %v497
      %618 = vmatpush1.msra.mxu0 %v496
      %619 = vmatprep.subr.mxu0 %v499
      %620 = vmatpush1.msra.mxu0 %v498
      %621 = vmatprep.subr.mxu0 0.0
      %622 = vmatpush1.msra.mxu0 0.0
      %623 = vmatprep.subr.mxu0 0.0
      %624 = vmatpush1.msra.mxu0 0.0
      %625 = vmatprep.subr.mxu0 0.0
      %626 = vmatpush1.msra.mxu0 0.0
      %627 = vmatprep.subr.mxu0 0.0
      %628 = vmatpush1.msra.mxu0 0.0
      %629 = vmatprep.subr.mxu0 0.0
      %630 = vmatpush1.msra.mxu0 0.0
      %631 = vmatprep.subr.mxu0 0.0
      %632 = vmatpush1.msra.mxu0 0.0
      %633 = vmatprep.subr.mxu0 0.0
      %634 = vmatpush1.msra.mxu0 0.0
      %635 = vmatprep.subr.mxu0 0.0
      %636 = vmatpush1.msra.mxu0 0.0
      %637 = vmatprep.subr.mxu0 0.0
      %638 = vmatpush1.msra.mxu0 0.0
      %639 = vmatprep.subr.mxu0 0.0
      %640 = vmatpush1.msra.mxu0 0.0
      %641 = vmatprep.subr.mxu0 0.0
      %642 = vmatpush1.msra.mxu0 0.0
      %643 = vmatprep.subr.mxu0 0.0
      %644 = vmatpush1.msra.mxu0 0.0
      %645 = vmatprep.subr.mxu0 0.0
      %646 = vmatpush1.msra.mxu0 0.0
      %647 = vmatprep.subr.mxu0 0.0
      %648 = vmatpush1.msra.mxu0 0.0
      %649 = vmatprep.subr.mxu0 0.0
      %650 = vmatpush1.msra.mxu0 0.0
      %651 = vmatprep.subr.mxu0 0.0
      %652 = vmatpush1.msra.mxu0 0.0
      %653 = vmatprep.subr.mxu0 0.0
      %654 = vmatpush1.msra.mxu0 0.0
      %655 = vmatprep.subr.mxu0 0.0
      %656 = vmatpush1.msra.mxu0 0.0
      %657 = vmatprep.subr.mxu0 0.0
      %658 = vmatpush1.msra.mxu0 0.0
      %659 = vmatprep.subr.mxu0 0.0
      %660 = vmatpush1.msra.mxu0 0.0
      %661 = vmatprep.mubr.f32.mxu0 0.0
      %662 = vmatmul.mubr.f32.gmra.mrb[0].mxu0 %v502
      %v663 = vpop.f32.mrb[0].mxu0
      %v664 = vadd.f32 0.0, %v663
      %v665 = vpop.f32.mrb[0].mxu0
      %v666 = vadd.f32 0.0, %v665
      %667 = vmatprep.mubr.f32.mxu0 0.0
      %668 = vmatmul.mubr.f32.gmra.mrb[0].mxu0 %v505
      %v669 = vpop.f32.mrb[0].mxu0
      %v670 = vadd.f32 0.0, %v669
      %v671 = vpop.f32.mrb[0].mxu0
      %v672 = vadd.f32 0.0, %v671
      %673 = vmatprep.mubr.f32.mxu0 0.0
      %674 = vmatmul.mubr.f32.gmra.mrb[0].mxu0 %v508
      %v675 = vpop.f32.mrb[0].mxu0
      %v676 = vadd.f32 0.0, %v675
      %v677 = vpop.f32.mrb[0].mxu0
      %v678 = vadd.f32 0.0, %v677
      %679 = vmatprep.mubr.f32.mxu0 0.0
      %680 = vmatmul.mubr.f32.gmra.mrb[0].mxu0 %v511
      %v681 = vpop.f32.mrb[0].mxu0
      %v682 = vadd.f32 0.0, %v681
      %v683 = vpop.f32.mrb[0].mxu0
      %v684 = vadd.f32 0.0, %v683
      %685 = vmatprep.mubr.f32.mxu0 0.0
      %686 = vmatmul.mubr.f32.gmra.mrb[0].mxu0 %v514
      %v687 = vpop.f32.mrb[0].mxu0
      %v688 = vadd.f32 0.0, %v687
      %v689 = vpop.f32.mrb[0].mxu0
      %v690 = vadd.f32 0.0, %v689
      %691 = vmatprep.mubr.f32.mxu0 0.0
      %692 = vmatmul.mubr.f32.gmra.mrb[0].mxu0 %v517
      %v693 = vpop.f32.mrb[0].mxu0
      %v694 = vadd.f32 0.0, %v693
      %v695 = vpop.f32.mrb[0].mxu0
      %v696 = vadd.f32 0.0, %v695
      %697 = vmatprep.mubr.f32.mxu0 0.0
      %698 = vmatmul.mubr.f32.gmra.mrb[0].mxu0 %v520
      %v699 = vpop.f32.mrb[0].mxu0
      %v700 = vadd.f32 0.0, %v699
      %v701 = vpop.f32.mrb[0].mxu0
      %v702 = vadd.f32 0.0, %v701
      %703 = vmatprep.mubr.f32.mxu0 0.0
      %704 = vmatmul.mubr.f32.gmra.mrb[0].mxu0 %v523
      %v705 = vpop.f32.mrb[0].mxu0
      %v706 = vadd.f32 0.0, %v705
      %v707 = vpop.f32.mrb[0].mxu0
      %v708 = vadd.f32 0.0, %v707
      %709 = vmatprep.mubr.f32.mxu0 0.0
      %710 = vmatmul.mubr.f32.gmra.mrb[0].mxu0 %v526
      %v711 = vpop.f32.mrb[0].mxu0
      %v712 = vadd.f32 0.0, %v711
      %v713 = vpop.f32.mrb[0].mxu0
      %v714 = vadd.f32 0.0, %v713
      %715 = vmatprep.mubr.f32.mxu0 0.0
      %716 = vmatmul.mubr.f32.gmra.mrb[0].mxu0 %v529
      %v717 = vpop.f32.mrb[0].mxu0
      %v718 = vadd.f32 0.0, %v717
      %v719 = vpop.f32.mrb[0].mxu0
      %v720 = vadd.f32 0.0, %v719
      %721 = vmatprep.mubr.f32.mxu0 0.0
      %722 = vmatmul.mubr.f32.gmra.mrb[0].mxu0 %v532
      %v723 = vpop.f32.mrb[0].mxu0
      %v724 = vadd.f32 0.0, %v723
      %v725 = vpop.f32.mrb[0].mxu0
      %v726 = vadd.f32 0.0, %v725
      %727 = vmatprep.mubr.f32.mxu0 0.0
      %728 = vmatmul.mubr.f32.gmra.mrb[0].mxu0 %v535
      %v729 = vpop.f32.mrb[0].mxu0
      %v730 = vadd.f32 0.0, %v729
      %v731 = vpop.f32.mrb[0].mxu0
      %v732 = vadd.f32 0.0, %v731
      %733 = vmatprep.mubr.f32.mxu0 0.0
      %734 = vmatmul.mubr.f32.gmra.mrb[0].mxu0 %v538
      %v735 = vpop.f32.mrb[0].mxu0
      %v736 = vadd.f32 0.0, %v735
      %v737 = vpop.f32.mrb[0].mxu0
      %v738 = vadd.f32 0.0, %v737
      %739 = vmatprep.mubr.f32.mxu0 0.0
      %740 = vmatmul.mubr.f32.gmra.mrb[0].mxu0 %v541
      %v741 = vpop.f32.mrb[0].mxu0
      %v742 = vadd.f32 0.0, %v741
      %v743 = vpop.f32.mrb[0].mxu0
      %v744 = vadd.f32 0.0, %v743
      %745 = vmatprep.mubr.f32.mxu0 0.0
      %746 = vmatmul.mubr.f32.gmra.mrb[0].mxu0 %v544
      %v747 = vpop.f32.mrb[0].mxu0
      %v748 = vadd.f32 0.0, %v747
      %v749 = vpop.f32.mrb[0].mxu0
      %v750 = vadd.f32 0.0, %v749
      %751 = vmatprep.mubr.f32.mxu0 0.0
      %752 = vmatmul.mubr.f32.gmra.mrb[0].mxu0 %v547
      %v753 = vpop.f32.mrb[0].mxu0
      %v754 = vadd.f32 0.0, %v753
      %v755 = vpop.f32.mrb[0].mxu0
      %v756 = vadd.f32 0.0, %v755
      %757 = vmatprep.mubr.f32.mxu0 0.0
      %758 = vmatmul.mubr.f32.gmra.mrb[0].mxu0 %v550
      %v759 = vpop.f32.mrb[0].mxu0
      %v760 = vadd.f32 0.0, %v759
      %v761 = vpop.f32.mrb[0].mxu0
      %v762 = vadd.f32 0.0, %v761
      %763 = vmatprep.mubr.f32.mxu0 0.0
      %764 = vmatmul.mubr.f32.gmra.mrb[0].mxu0 %v553
      %v765 = vpop.f32.mrb[0].mxu0
      %v766 = vadd.f32 0.0, %v765
      %v767 = vpop.f32.mrb[0].mxu0
      %v768 = vadd.f32 0.0, %v767
      %769 = vmatprep.mubr.f32.mxu0 0.0
      %770 = vmatmul.mubr.f32.gmra.mrb[0].mxu0 %v556
      %v771 = vpop.f32.mrb[0].mxu0
      %v772 = vadd.f32 0.0, %v771
      %v773 = vpop.f32.mrb[0].mxu0
      %v774 = vadd.f32 0.0, %v773
      %775 = vmatprep.mubr.f32.mxu0 0.0
      %776 = vmatmul.mubr.f32.gmra.mrb[0].mxu0 %v559
      %v777 = vpop.f32.mrb[0].mxu0
      %v778 = vadd.f32 0.0, %v777
      %v779 = vpop.f32.mrb[0].mxu0
      %v780 = vadd.f32 0.0, %v779
      %781 = vmatprep.mubr.f32.mxu0 0.0
      %782 = vmatmul.mubr.f32.gmra.mrb[0].mxu0 %v562
      %v783 = vpop.f32.mrb[0].mxu0
      %v784 = vadd.f32 0.0, %v783
      %v785 = vpop.f32.mrb[0].mxu0
      %v786 = vadd.f32 0.0, %v785
      %787 = vmatprep.mubr.f32.mxu0 0.0
      %788 = vmatmul.mubr.f32.gmra.mrb[0].mxu0 %v565
      %v789 = vpop.f32.mrb[0].mxu0
      %v790 = vadd.f32 0.0, %v789
      %v791 = vpop.f32.mrb[0].mxu0
      %v792 = vadd.f32 0.0, %v791
      %793 = vmatprep.mubr.f32.mxu0 0.0
      %794 = vmatmul.mubr.f32.gmra.mrb[0].mxu0 %v568
      %v795 = vpop.f32.mrb[0].mxu0
      %v796 = vadd.f32 0.0, %v795
      %v797 = vpop.f32.mrb[0].mxu0
      %v798 = vadd.f32 0.0, %v797
      %799 = vmatprep.mubr.f32.mxu0 0.0
      %800 = vmatmul.mubr.f32.gmra.mrb[0].mxu0 %v571
      %v801 = vpop.f32.mrb[0].mxu0
      %v802 = vadd.f32 0.0, %v801
      %v803 = vpop.f32.mrb[0].mxu0
      %v804 = vadd.f32 0.0, %v803
      %805 = vmatprep.mubr.f32.mxu0 0.0
      %806 = vmatmul.mubr.f32.gmra.mrb[0].mxu0 %v574
      %v807 = vpop.f32.mrb[0].mxu0
      %v808 = vadd.f32 0.0, %v807
      %v809 = vpop.f32.mrb[0].mxu0
      %v810 = vadd.f32 0.0, %v809
      %811 = vmatprep.mubr.f32.mxu0 0.0
      %812 = vmatmul.mubr.f32.gmra.mrb[0].mxu0 %v577
      %v813 = vpop.f32.mrb[0].mxu0
      %v814 = vadd.f32 0.0, %v813
      %v815 = vpop.f32.mrb[0].mxu0
      %v816 = vadd.f32 0.0, %v815
      %817 = vmatprep.mubr.f32.mxu0 0.0
      %818 = vmatmul.mubr.f32.gmra.mrb[0].mxu0 %v580
      %v819 = vpop.f32.mrb[0].mxu0
      %v820 = vadd.f32 0.0, %v819
      %v821 = vpop.f32.mrb[0].mxu0
      %v822 = vadd.f32 0.0, %v821
      %823 = vmatprep.mubr.f32.mxu0 0.0
      %824 = vmatmul.mubr.f32.gmra.mrb[0].mxu0 %v583
      %v825 = vpop.f32.mrb[0].mxu0
      %v826 = vadd.f32 0.0, %v825
      %v827 = vpop.f32.mrb[0].mxu0
      %v828 = vadd.f32 0.0, %v827
      %829 = vmatprep.mubr.f32.mxu0 0.0
      %830 = vmatmul.mubr.f32.gmra.mrb[0].mxu0 %v586
      %v831 = vpop.f32.mrb[0].mxu0
      %v832 = vadd.f32 0.0, %v831
      %v833 = vpop.f32.mrb[0].mxu0
      %v834 = vadd.f32 0.0, %v833
      %835 = vmatprep.mubr.f32.mxu0 0.0
      %836 = vmatmul.mubr.f32.gmra.mrb[0].mxu0 %v589
      %v837 = vpop.f32.mrb[0].mxu0
      %v838 = vadd.f32 0.0, %v837
      %v839 = vpop.f32.mrb[0].mxu0
      %v840 = vadd.f32 0.0, %v839
      %841 = vmatprep.mubr.f32.mxu0 0.0
      %842 = vmatmul.mubr.f32.gmra.mrb[0].mxu0 %v592
      %v843 = vpop.f32.mrb[0].mxu0
      %v844 = vadd.f32 0.0, %v843
      %v845 = vpop.f32.mrb[0].mxu0
      %v846 = vadd.f32 0.0, %v845
      %847 = vmatprep.mubr.f32.mxu0 0.0
      %848 = vmatmul.mubr.f32.gmra.mrb[0].mxu0 %v595
      %v849 = vpop.f32.mrb[0].mxu0
      %v850 = vadd.f32 0.0, %v849
      %v851 = vpop.f32.mrb[0].mxu0
      %v852 = vadd.f32 0.0, %v851
      %853 = vdwg.mxu0
      %v855 = vsel %vm500, %v387, 0
      %v858 = vsel %vm500, %v388, 0
      %v861 = vsel %vm500, %v389, 0
      %v864 = vsel %vm500, %v390, 0
      %v867 = vsel %vm500, %v391, 0
      %v870 = vsel %vm500, %v392, 0
      %v873 = vsel %vm500, %v393, 0
      %v876 = vsel %vm500, %v394, 0
      %v879 = vsel %vm500, %v395, 0
      %v882 = vsel %vm500, %v396, 0
      %v885 = vsel %vm500, %v397, 0
      %v888 = vsel %vm500, %v398, 0
      %v891 = vsel %vm500, %v399, 0
      %v894 = vsel %vm500, %v400, 0
      %v897 = vsel %vm500, %v401, 0
      %v900 = vsel %vm500, %v402, 0
      %v903 = vsel %vm500, %v403, 0
      %v906 = vsel %vm500, %v404, 0
      %v909 = vsel %vm500, %v405, 0
      %v912 = vsel %vm500, %v406, 0
      %v915 = vsel %vm500, %v407, 0
      %v918 = vsel %vm500, %v408, 0
      %v921 = vsel %vm500, %v409, 0
      %v924 = vsel %vm500, %v410, 0
      %v927 = vsel %vm500, %v411, 0
      %v930 = vsel %vm500, %v412, 0
      %v933 = vsel %vm500, %v413, 0
      %v936 = vsel %vm500, %v414, 0
      %v939 = vsel %vm500, %v415, 0
      %v942 = vsel %vm500, %v416, 0
      %v945 = vsel %vm500, %v417, 0
      %v948 = vsel %vm500, %v418, 0
      %950 = vmatprep.subr.mxu0 %v420
      %951 = vmatpush1.msra.mxu0 %v419
      %952 = vmatprep.subr.mxu0 %v422
      %953 = vmatpush1.msra.mxu0 %v421
      %954 = vmatprep.subr.mxu0 %v424
      %955 = vmatpush1.msra.mxu0 %v423
      %956 = vmatprep.subr.mxu0 %v426
      %957 = vmatpush1.msra.mxu0 %v425
      %958 = vmatprep.subr.mxu0 %v428
      %959 = vmatpush1.msra.mxu0 %v427
      %960 = vmatprep.subr.mxu0 %v430
      %961 = vmatpush1.msra.mxu0 %v429
      %962 = vmatprep.subr.mxu0 %v432
      %963 = vmatpush1.msra.mxu0 %v431
      %964 = vmatprep.subr.mxu0 %v434
      %965 = vmatpush1.msra.mxu0 %v433
      %966 = vmatprep.subr.mxu0 %v436
      %967 = vmatpush1.msra.mxu0 %v435
      %968 = vmatprep.subr.mxu0 %v438
      %969 = vmatpush1.msra.mxu0 %v437
      %970 = vmatprep.subr.mxu0 %v440
      %971 = vmatpush1.msra.mxu0 %v439
      %972 = vmatprep.subr.mxu0 %v442
      %973 = vmatpush1.msra.mxu0 %v441
      %974 = vmatprep.subr.mxu0 0.0
      %975 = vmatpush1.msra.mxu0 0.0
      %976 = vmatprep.subr.mxu0 0.0
      %977 = vmatpush1.msra.mxu0 0.0
      %978 = vmatprep.subr.mxu0 0.0
      %979 = vmatpush1.msra.mxu0 0.0
      %980 = vmatprep.subr.mxu0 0.0
      %981 = vmatpush1.msra.mxu0 0.0
      %982 = vmatprep.subr.mxu0 0.0
      %983 = vmatpush1.msra.mxu0 0.0
      %984 = vmatprep.subr.mxu0 0.0
      %985 = vmatpush1.msra.mxu0 0.0
      %986 = vmatprep.subr.mxu0 0.0
      %987 = vmatpush1.msra.mxu0 0.0
      %988 = vmatprep.subr.mxu0 0.0
      %989 = vmatpush1.msra.mxu0 0.0
      %990 = vmatprep.subr.mxu0 0.0
      %991 = vmatpush1.msra.mxu0 0.0
      %992 = vmatprep.subr.mxu0 0.0
      %993 = vmatpush1.msra.mxu0 0.0
      %994 = vmatprep.subr.mxu0 0.0
      %995 = vmatpush1.msra.mxu0 0.0
      %996 = vmatprep.subr.mxu0 0.0
      %997 = vmatpush1.msra.mxu0 0.0
      %998 = vmatprep.subr.mxu0 0.0
      %999 = vmatpush1.msra.mxu0 0.0
      %1000 = vmatprep.subr.mxu0 0.0
      %1001 = vmatpush1.msra.mxu0 0.0
      %1002 = vmatprep.subr.mxu0 0.0
      %1003 = vmatpush1.msra.mxu0 0.0
      %1004 = vmatprep.subr.mxu0 0.0
      %1005 = vmatpush1.msra.mxu0 0.0
      %1006 = vmatprep.subr.mxu0 0.0
      %1007 = vmatpush1.msra.mxu0 0.0
      %1008 = vmatprep.subr.mxu0 0.0
      %1009 = vmatpush1.msra.mxu0 0.0
      %1010 = vmatprep.subr.mxu0 0.0
      %1011 = vmatpush1.msra.mxu0 0.0
      %1012 = vmatprep.subr.mxu0 0.0
      %1013 = vmatpush1.msra.mxu0 0.0
      %1014 = vmatprep.mubr.f32.mxu0 0.0
      %1015 = vmatmul.mubr.f32.gmra.mrb[0].mxu0 %v855
      %v1016 = vpop.f32.mrb[0].mxu0
      %v1017 = vadd.f32 %v664, %v1016
      %v1018 = vpop.f32.mrb[0].mxu0
      %v1019 = vadd.f32 %v666, %v1018
      %1020 = vmatprep.mubr.f32.mxu0 0.0
      %1021 = vmatmul.mubr.f32.gmra.mrb[0].mxu0 %v858
      %v1022 = vpop.f32.mrb[0].mxu0
      %v1023 = vadd.f32 %v670, %v1022
      %v1024 = vpop.f32.mrb[0].mxu0
      %v1025 = vadd.f32 %v672, %v1024
      %1026 = vmatprep.mubr.f32.mxu0 0.0
      %1027 = vmatmul.mubr.f32.gmra.mrb[0].mxu0 %v861
      %v1028 = vpop.f32.mrb[0].mxu0
      %v1029 = vadd.f32 %v676, %v1028
      %v1030 = vpop.f32.mrb[0].mxu0
      %v1031 = vadd.f32 %v678, %v1030
      %1032 = vmatprep.mubr.f32.mxu0 0.0
      %1033 = vmatmul.mubr.f32.gmra.mrb[0].mxu0 %v864
      %v1034 = vpop.f32.mrb[0].mxu0
      %v1035 = vadd.f32 %v682, %v1034
      %v1036 = vpop.f32.mrb[0].mxu0
      %v1037 = vadd.f32 %v684, %v1036
      %1038 = vmatprep.mubr.f32.mxu0 0.0
      %1039 = vmatmul.mubr.f32.gmra.mrb[0].mxu0 %v867
      %v1040 = vpop.f32.mrb[0].mxu0
      %v1041 = vadd.f32 %v688, %v1040
      %v1042 = vpop.f32.mrb[0].mxu0
      %v1043 = vadd.f32 %v690, %v1042
      %1044 = vmatprep.mubr.f32.mxu0 0.0
      %1045 = vmatmul.mubr.f32.gmra.mrb[0].mxu0 %v870
      %v1046 = vpop.f32.mrb[0].mxu0
      %v1047 = vadd.f32 %v694, %v1046
      %v1048 = vpop.f32.mrb[0].mxu0
      %v1049 = vadd.f32 %v696, %v1048
      %1050 = vmatprep.mubr.f32.mxu0 0.0
      %1051 = vmatmul.mubr.f32.gmra.mrb[0].mxu0 %v873
      %v1052 = vpop.f32.mrb[0].mxu0
      %v1053 = vadd.f32 %v700, %v1052
      %v1054 = vpop.f32.mrb[0].mxu0
      %v1055 = vadd.f32 %v702, %v1054
      %1056 = vmatprep.mubr.f32.mxu0 0.0
      %1057 = vmatmul.mubr.f32.gmra.mrb[0].mxu0 %v876
      %v1058 = vpop.f32.mrb[0].mxu0
      %v1059 = vadd.f32 %v706, %v1058
      %v1060 = vpop.f32.mrb[0].mxu0
      %v1061 = vadd.f32 %v708, %v1060
      %1062 = vmatprep.mubr.f32.mxu0 0.0
      %1063 = vmatmul.mubr.f32.gmra.mrb[0].mxu0 %v879
      %v1064 = vpop.f32.mrb[0].mxu0
      %v1065 = vadd.f32 %v712, %v1064
      %v1066 = vpop.f32.mrb[0].mxu0
      %v1067 = vadd.f32 %v714, %v1066
      %1068 = vmatprep.mubr.f32.mxu0 0.0
      %1069 = vmatmul.mubr.f32.gmra.mrb[0].mxu0 %v882
      %v1070 = vpop.f32.mrb[0].mxu0
      %v1071 = vadd.f32 %v718, %v1070
      %v1072 = vpop.f32.mrb[0].mxu0
      %v1073 = vadd.f32 %v720, %v1072
      %1074 = vmatprep.mubr.f32.mxu0 0.0
      %1075 = vmatmul.mubr.f32.gmra.mrb[0].mxu0 %v885
      %v1076 = vpop.f32.mrb[0].mxu0
      %v1077 = vadd.f32 %v724, %v1076
      %v1078 = vpop.f32.mrb[0].mxu0
      %v1079 = vadd.f32 %v726, %v1078
      %1080 = vmatprep.mubr.f32.mxu0 0.0
      %1081 = vmatmul.mubr.f32.gmra.mrb[0].mxu0 %v888
      %v1082 = vpop.f32.mrb[0].mxu0
      %v1083 = vadd.f32 %v730, %v1082
      %v1084 = vpop.f32.mrb[0].mxu0
      %v1085 = vadd.f32 %v732, %v1084
      %1086 = vmatprep.mubr.f32.mxu0 0.0
      %1087 = vmatmul.mubr.f32.gmra.mrb[0].mxu0 %v891
      %v1088 = vpop.f32.mrb[0].mxu0
      %v1089 = vadd.f32 %v736, %v1088
      %v1090 = vpop.f32.mrb[0].mxu0
      %v1091 = vadd.f32 %v738, %v1090
      %1092 = vmatprep.mubr.f32.mxu0 0.0
      %1093 = vmatmul.mubr.f32.gmra.mrb[0].mxu0 %v894
      %v1094 = vpop.f32.mrb[0].mxu0
      %v1095 = vadd.f32 %v742, %v1094
      %v1096 = vpop.f32.mrb[0].mxu0
      %v1097 = vadd.f32 %v744, %v1096
      %1098 = vmatprep.mubr.f32.mxu0 0.0
      %1099 = vmatmul.mubr.f32.gmra.mrb[0].mxu0 %v897
      %v1100 = vpop.f32.mrb[0].mxu0
      %v1101 = vadd.f32 %v748, %v1100
      %v1102 = vpop.f32.mrb[0].mxu0
      %v1103 = vadd.f32 %v750, %v1102
      %1104 = vmatprep.mubr.f32.mxu0 0.0
      %1105 = vmatmul.mubr.f32.gmra.mrb[0].mxu0 %v900
      %v1106 = vpop.f32.mrb[0].mxu0
      %v1107 = vadd.f32 %v754, %v1106
      %v1108 = vpop.f32.mrb[0].mxu0
      %v1109 = vadd.f32 %v756, %v1108
      %1110 = vmatprep.mubr.f32.mxu0 0.0
      %1111 = vmatmul.mubr.f32.gmra.mrb[0].mxu0 %v903
      %v1112 = vpop.f32.mrb[0].mxu0
      %v1113 = vadd.f32 %v760, %v1112
      %v1114 = vpop.f32.mrb[0].mxu0
      %v1115 = vadd.f32 %v762, %v1114
      %1116 = vmatprep.mubr.f32.mxu0 0.0
      %1117 = vmatmul.mubr.f32.gmra.mrb[0].mxu0 %v906
      %v1118 = vpop.f32.mrb[0].mxu0
      %v1119 = vadd.f32 %v766, %v1118
      %v1120 = vpop.f32.mrb[0].mxu0
      %v1121 = vadd.f32 %v768, %v1120
      %1122 = vmatprep.mubr.f32.mxu0 0.0
      %1123 = vmatmul.mubr.f32.gmra.mrb[0].mxu0 %v909
      %v1124 = vpop.f32.mrb[0].mxu0
      %v1125 = vadd.f32 %v772, %v1124
      %v1126 = vpop.f32.mrb[0].mxu0
      %v1127 = vadd.f32 %v774, %v1126
      %1128 = vmatprep.mubr.f32.mxu0 0.0
      %1129 = vmatmul.mubr.f32.gmra.mrb[0].mxu0 %v912
      %v1130 = vpop.f32.mrb[0].mxu0
      %v1131 = vadd.f32 %v778, %v1130
      %v1132 = vpop.f32.mrb[0].mxu0
      %v1133 = vadd.f32 %v780, %v1132
      %1134 = vmatprep.mubr.f32.mxu0 0.0
      %1135 = vmatmul.mubr.f32.gmra.mrb[0].mxu0 %v915
      %v1136 = vpop.f32.mrb[0].mxu0
      %v1137 = vadd.f32 %v784, %v1136
      %v1138 = vpop.f32.mrb[0].mxu0
      %v1139 = vadd.f32 %v786, %v1138
      %1140 = vmatprep.mubr.f32.mxu0 0.0
      %1141 = vmatmul.mubr.f32.gmra.mrb[0].mxu0 %v918
      %v1142 = vpop.f32.mrb[0].mxu0
      %v1143 = vadd.f32 %v790, %v1142
      %v1144 = vpop.f32.mrb[0].mxu0
      %v1145 = vadd.f32 %v792, %v1144
      %1146 = vmatprep.mubr.f32.mxu0 0.0
      %1147 = vmatmul.mubr.f32.gmra.mrb[0].mxu0 %v921
      %v1148 = vpop.f32.mrb[0].mxu0
      %v1149 = vadd.f32 %v796, %v1148
      %v1150 = vpop.f32.mrb[0].mxu0
      %v1151 = vadd.f32 %v798, %v1150
      %1152 = vmatprep.mubr.f32.mxu0 0.0
      %1153 = vmatmul.mubr.f32.gmra.mrb[0].mxu0 %v924
      %v1154 = vpop.f32.mrb[0].mxu0
      %v1155 = vadd.f32 %v802, %v1154
      %v1156 = vpop.f32.mrb[0].mxu0
      %v1157 = vadd.f32 %v804, %v1156
      %1158 = vmatprep.mubr.f32.mxu0 0.0
      %1159 = vmatmul.mubr.f32.gmra.mrb[0].mxu0 %v927
      %v1160 = vpop.f32.mrb[0].mxu0
      %v1161 = vadd.f32 %v808, %v1160
      %v1162 = vpop.f32.mrb[0].mxu0
      %v1163 = vadd.f32 %v810, %v1162
      %1164 = vmatprep.mubr.f32.mxu0 0.0
      %1165 = vmatmul.mubr.f32.gmra.mrb[0].mxu0 %v930
      %v1166 = vpop.f32.mrb[0].mxu0
      %v1167 = vadd.f32 %v814, %v1166
      %v1168 = vpop.f32.mrb[0].mxu0
      %v1169 = vadd.f32 %v816, %v1168
      %1170 = vmatprep.mubr.f32.mxu0 0.0
      %1171 = vmatmul.mubr.f32.gmra.mrb[0].mxu0 %v933
      %v1172 = vpop.f32.mrb[0].mxu0
      %v1173 = vadd.f32 %v820, %v1172
      %v1174 = vpop.f32.mrb[0].mxu0
      %v1175 = vadd.f32 %v822, %v1174
      %1176 = vmatprep.mubr.f32.mxu0 0.0
      %1177 = vmatmul.mubr.f32.gmra.mrb[0].mxu0 %v936
      %v1178 = vpop.f32.mrb[0].mxu0
      %v1179 = vadd.f32 %v826, %v1178
      %v1180 = vpop.f32.mrb[0].mxu0
      %v1181 = vadd.f32 %v828, %v1180
      %1182 = vmatprep.mubr.f32.mxu0 0.0
      %1183 = vmatmul.mubr.f32.gmra.mrb[0].mxu0 %v939
      %v1184 = vpop.f32.mrb[0].mxu0
      %v1185 = vadd.f32 %v832, %v1184
      %v1186 = vpop.f32.mrb[0].mxu0
      %v1187 = vadd.f32 %v834, %v1186
      %1188 = vmatprep.mubr.f32.mxu0 0.0
      %1189 = vmatmul.mubr.f32.gmra.mrb[0].mxu0 %v942
      %v1190 = vpop.f32.mrb[0].mxu0
      %v1191 = vadd.f32 %v838, %v1190
      %v1192 = vpop.f32.mrb[0].mxu0
      %v1193 = vadd.f32 %v840, %v1192
      %1194 = vmatprep.mubr.f32.mxu0 0.0
      %1195 = vmatmul.mubr.f32.gmra.mrb[0].mxu0 %v945
      %v1196 = vpop.f32.mrb[0].mxu0
      %v1197 = vadd.f32 %v844, %v1196
      %v1198 = vpop.f32.mrb[0].mxu0
      %v1199 = vadd.f32 %v846, %v1198
      %1200 = vmatprep.mubr.f32.mxu0 0.0
      %1201 = vmatmul.mubr.f32.gmra.mrb[0].mxu0 %v948
      %v1202 = vpop.f32.mrb[0].mxu0
      %v1203 = vadd.f32 %v850, %v1202
      %v1204 = vpop.f32.mrb[0].mxu0
      %v1205 = vadd.f32 %v852, %v1204
      %1206 = vdwg.mxu0
      %v1207 = vld [vmem:[%s381 + $0x2] sm:$0xff]
      %v1208 = vld [vmem:[%s381 + $0xa] sm:$0xff]
      %v1209 = vld [vmem:[%s381 + $0x12] sm:$0xff]
      %v1210 = vld [vmem:[%s381 + $0x1a] sm:$0xff]
      %v1211 = vld [vmem:[%s381 + $0x22] sm:$0xff]
      %v1212 = vld [vmem:[%s381 + $0x2a] sm:$0xff]
      %v1213 = vld [vmem:[%s381 + $0x32] sm:$0xff]
      %v1214 = vld [vmem:[%s381 + $0x3a] sm:$0xff]
      %v1215 = vld [vmem:[%s381 + $0x42] sm:$0xff]
      %v1216 = vld [vmem:[%s381 + $0x4a] sm:$0xff]
      %v1217 = vld [vmem:[%s381 + $0x52] sm:$0xff]
      %v1218 = vld [vmem:[%s381 + $0x5a] sm:$0xff]
      %v1219 = vld [vmem:[%s381 + $0x62] sm:$0xff]
      %v1220 = vld [vmem:[%s381 + $0x6a] sm:$0xff]
      %v1221 = vld [vmem:[%s381 + $0x72] sm:$0xff]
      %v1222 = vld [vmem:[%s381 + $0x7a] sm:$0xff]
      %v1223 = vld [vmem:[%s381 + $0x82] sm:$0xff]
      %v1224 = vld [vmem:[%s381 + $0x8a] sm:$0xff]
      %v1225 = vld [vmem:[%s381 + $0x92] sm:$0xff]
      %v1226 = vld [vmem:[%s381 + $0x9a] sm:$0xff]
      %v1227 = vld [vmem:[%s381 + $0xa2] sm:$0xff]
      %v1228 = vld [vmem:[%s381 + $0xaa] sm:$0xff]
      %v1229 = vld [vmem:[%s381 + $0xb2] sm:$0xff]
      %v1230 = vld [vmem:[%s381 + $0xba] sm:$0xff]
      %v1231 = vld [vmem:[%s381 + $0xc2] sm:$0xff]
      %v1232 = vld [vmem:[%s381 + $0xca] sm:$0xff]
      %v1233 = vld [vmem:[%s381 + $0xd2] sm:$0xff]
      %v1234 = vld [vmem:[%s381 + $0xda] sm:$0xff]
      %v1235 = vld [vmem:[%s381 + $0xe2] sm:$0xff]
      %v1236 = vld [vmem:[%s381 + $0xea] sm:$0xff]
      %v1237 = vld [vmem:[%s381 + $0xf2] sm:$0xff]
      %v1238 = vld [vmem:[%s381 + $0xfa] sm:$0xf]
      %s1239 = scalar_lea.vmem %s1, 384
      %v1240 = vld [vmem:[%s1239] sm:$0xff]
      %v1241 = vld [vmem:[%s1239 + $0x8] sm:$0xff]
      %v1242 = vld [vmem:[%s1239 + $0x10] sm:$0xff]
      %v1243 = vld [vmem:[%s1239 + $0x18] sm:$0xff]
      %v1244 = vld [vmem:[%s1239 + $0x20] sm:$0xff]
      %v1245 = vld [vmem:[%s1239 + $0x28] sm:$0xff]
      %v1246 = vld [vmem:[%s1239 + $0x30] sm:$0xff]
      %v1247 = vld [vmem:[%s1239 + $0x38] sm:$0xff]
      %v1248 = vld [vmem:[%s1239 + $0x40] sm:$0xff]
      %v1249 = vld [vmem:[%s1239 + $0x48] sm:$0xff]
      %v1250 = vld [vmem:[%s1239 + $0x50] sm:$0xff]
      %v1251 = vld [vmem:[%s1239 + $0x58] sm:$0xff]
      %v1252 = vld [vmem:[%s1239 + $0x60] sm:$0xff]
      %v1253 = vld [vmem:[%s1239 + $0x68] sm:$0xff]
      %v1254 = vld [vmem:[%s1239 + $0x70] sm:$0xff]
      %v1255 = vld [vmem:[%s1239 + $0x78] sm:$0xff]
      %v1256 = vld [vmem:[%s1239 + $0x80] sm:$0xff]
      %v1257 = vld [vmem:[%s1239 + $0x88] sm:$0xff]
      %v1258 = vld [vmem:[%s1239 + $0x90] sm:$0xff]
      %v1259 = vld [vmem:[%s1239 + $0x98] sm:$0xff]
      %v1260 = vld [vmem:[%s1239 + $0xa0] sm:$0xff]
      %v1261 = vld [vmem:[%s1239 + $0xa8] sm:$0xff]
      %v1262 = vld [vmem:[%s1239 + $0xb0] sm:$0xff]
      %v1263 = vld [vmem:[%s1239 + $0xb8] sm:$0xff]
      %v1265 = vsel %vm500, %v1207, 0
      %v1268 = vsel %vm500, %v1208, 0
      %v1271 = vsel %vm500, %v1209, 0
      %v1274 = vsel %vm500, %v1210, 0
      %v1277 = vsel %vm500, %v1211, 0
      %v1280 = vsel %vm500, %v1212, 0
      %v1283 = vsel %vm500, %v1213, 0
      %v1286 = vsel %vm500, %v1214, 0
      %v1289 = vsel %vm500, %v1215, 0
      %v1292 = vsel %vm500, %v1216, 0
      %v1295 = vsel %vm500, %v1217, 0
      %v1298 = vsel %vm500, %v1218, 0
      %v1301 = vsel %vm500, %v1219, 0
      %v1304 = vsel %vm500, %v1220, 0
      %v1307 = vsel %vm500, %v1221, 0
      %v1310 = vsel %vm500, %v1222, 0
      %v1313 = vsel %vm500, %v1223, 0
      %v1316 = vsel %vm500, %v1224, 0
      %v1319 = vsel %vm500, %v1225, 0
      %v1322 = vsel %vm500, %v1226, 0
      %v1325 = vsel %vm500, %v1227, 0
      %v1328 = vsel %vm500, %v1228, 0
      %v1331 = vsel %vm500, %v1229, 0
      %v1334 = vsel %vm500, %v1230, 0
      %v1337 = vsel %vm500, %v1231, 0
      %v1340 = vsel %vm500, %v1232, 0
      %v1343 = vsel %vm500, %v1233, 0
      %v1346 = vsel %vm500, %v1234, 0
      %v1349 = vsel %vm500, %v1235, 0
      %v1352 = vsel %vm500, %v1236, 0
      %v1355 = vsel %vm500, %v1237, 0
      %v1358 = vsel %vm500, %v1238, 0
      %1360 = vmatprep.subr.mxu0 %v1241
      %1361 = vmatpush1.msra.mxu0 %v1240
      %1362 = vmatprep.subr.mxu0 %v1243
      %1363 = vmatpush1.msra.mxu0 %v1242
      %1364 = vmatprep.subr.mxu0 %v1245
      %1365 = vmatpush1.msra.mxu0 %v1244
      %1366 = vmatprep.subr.mxu0 %v1247
      %1367 = vmatpush1.msra.mxu0 %v1246
      %1368 = vmatprep.subr.mxu0 %v1249
      %1369 = vmatpush1.msra.mxu0 %v1248
      %1370 = vmatprep.subr.mxu0 %v1251
      %1371 = vmatpush1.msra.mxu0 %v1250
      %1372 = vmatprep.subr.mxu0 %v1253
      %1373 = vmatpush1.msra.mxu0 %v1252
      %1374 = vmatprep.subr.mxu0 %v1255
      %1375 = vmatpush1.msra.mxu0 %v1254
      %1376 = vmatprep.subr.mxu0 %v1257
      %1377 = vmatpush1.msra.mxu0 %v1256
      %1378 = vmatprep.subr.mxu0 %v1259
      %1379 = vmatpush1.msra.mxu0 %v1258
      %1380 = vmatprep.subr.mxu0 %v1261
      %1381 = vmatpush1.msra.mxu0 %v1260
      %1382 = vmatprep.subr.mxu0 %v1263
      %1383 = vmatpush1.msra.mxu0 %v1262
      %1384 = vmatprep.subr.mxu0 0.0
      %1385 = vmatpush1.msra.mxu0 0.0
      %1386 = vmatprep.subr.mxu0 0.0
      %1387 = vmatpush1.msra.mxu0 0.0
      %1388 = vmatprep.subr.mxu0 0.0
      %1389 = vmatpush1.msra.mxu0 0.0
      %1390 = vmatprep.subr.mxu0 0.0
      %1391 = vmatpush1.msra.mxu0 0.0
      %1392 = vmatprep.subr.mxu0 0.0
      %1393 = vmatpush1.msra.mxu0 0.0
      %1394 = vmatprep.subr.mxu0 0.0
      %1395 = vmatpush1.msra.mxu0 0.0
      %1396 = vmatprep.subr.mxu0 0.0
      %1397 = vmatpush1.msra.mxu0 0.0
      %1398 = vmatprep.subr.mxu0 0.0
      %1399 = vmatpush1.msra.mxu0 0.0
      %1400 = vmatprep.subr.mxu0 0.0
      %1401 = vmatpush1.msra.mxu0 0.0
      %1402 = vmatprep.subr.mxu0 0.0
      %1403 = vmatpush1.msra.mxu0 0.0
      %1404 = vmatprep.subr.mxu0 0.0
      %1405 = vmatpush1.msra.mxu0 0.0
      %1406 = vmatprep.subr.mxu0 0.0
      %1407 = vmatpush1.msra.mxu0 0.0
      %1408 = vmatprep.subr.mxu0 0.0
      %1409 = vmatpush1.msra.mxu0 0.0
      %1410 = vmatprep.subr.mxu0 0.0
      %1411 = vmatpush1.msra.mxu0 0.0
      %1412 = vmatprep.subr.mxu0 0.0
      %1413 = vmatpush1.msra.mxu0 0.0
      %1414 = vmatprep.subr.mxu0 0.0
      %1415 = vmatpush1.msra.mxu0 0.0
      %1416 = vmatprep.subr.mxu0 0.0
      %1417 = vmatpush1.msra.mxu0 0.0
      %1418 = vmatprep.subr.mxu0 0.0
      %1419 = vmatpush1.msra.mxu0 0.0
      %1420 = vmatprep.subr.mxu0 0.0
      %1421 = vmatpush1.msra.mxu0 0.0
      %1422 = vmatprep.subr.mxu0 0.0
      %1423 = vmatpush1.msra.mxu0 0.0
      %1424 = vmatprep.mubr.f32.mxu0 0.0
      %1425 = vmatmul.mubr.f32.gmra.mrb[0].mxu0 %v1265
      %v1426 = vpop.f32.mrb[0].mxu0
      %v1427 = vadd.f32 0.0, %v1426
      %v1428 = vpop.f32.mrb[0].mxu0
      %v1429 = vadd.f32 0.0, %v1428
      %1430 = vmatprep.mubr.f32.mxu0 0.0
      %1431 = vmatmul.mubr.f32.gmra.mrb[0].mxu0 %v1268
      %v1432 = vpop.f32.mrb[0].mxu0
      %v1433 = vadd.f32 0.0, %v1432
      %v1434 = vpop.f32.mrb[0].mxu0
      %v1435 = vadd.f32 0.0, %v1434
      %1436 = vmatprep.mubr.f32.mxu0 0.0
      %1437 = vmatmul.mubr.f32.gmra.mrb[0].mxu0 %v1271
      %v1438 = vpop.f32.mrb[0].mxu0
      %v1439 = vadd.f32 0.0, %v1438
      %v1440 = vpop.f32.mrb[0].mxu0
      %v1441 = vadd.f32 0.0, %v1440
      %1442 = vmatprep.mubr.f32.mxu0 0.0
      %1443 = vmatmul.mubr.f32.gmra.mrb[0].mxu0 %v1274
      %v1444 = vpop.f32.mrb[0].mxu0
      %v1445 = vadd.f32 0.0, %v1444
      %v1446 = vpop.f32.mrb[0].mxu0
      %v1447 = vadd.f32 0.0, %v1446
      %1448 = vmatprep.mubr.f32.mxu0 0.0
      %1449 = vmatmul.mubr.f32.gmra.mrb[0].mxu0 %v1277
      %v1450 = vpop.f32.mrb[0].mxu0
      %v1451 = vadd.f32 0.0, %v1450
      %v1452 = vpop.f32.mrb[0].mxu0
      %v1453 = vadd.f32 0.0, %v1452
      %1454 = vmatprep.mubr.f32.mxu0 0.0
      %1455 = vmatmul.mubr.f32.gmra.mrb[0].mxu0 %v1280
      %v1456 = vpop.f32.mrb[0].mxu0
      %v1457 = vadd.f32 0.0, %v1456
      %v1458 = vpop.f32.mrb[0].mxu0
      %v1459 = vadd.f32 0.0, %v1458
      %1460 = vmatprep.mubr.f32.mxu0 0.0
      %1461 = vmatmul.mubr.f32.gmra.mrb[0].mxu0 %v1283
      %v1462 = vpop.f32.mrb[0].mxu0
      %v1463 = vadd.f32 0.0, %v1462
      %v1464 = vpop.f32.mrb[0].mxu0
      %v1465 = vadd.f32 0.0, %v1464
      %1466 = vmatprep.mubr.f32.mxu0 0.0
      %1467 = vmatmul.mubr.f32.gmra.mrb[0].mxu0 %v1286
      %v1468 = vpop.f32.mrb[0].mxu0
      %v1469 = vadd.f32 0.0, %v1468
      %v1470 = vpop.f32.mrb[0].mxu0
      %v1471 = vadd.f32 0.0, %v1470
      %1472 = vmatprep.mubr.f32.mxu0 0.0
      %1473 = vmatmul.mubr.f32.gmra.mrb[0].mxu0 %v1289
      %v1474 = vpop.f32.mrb[0].mxu0
      %v1475 = vadd.f32 0.0, %v1474
      %v1476 = vpop.f32.mrb[0].mxu0
      %v1477 = vadd.f32 0.0, %v1476
      %1478 = vmatprep.mubr.f32.mxu0 0.0
      %1479 = vmatmul.mubr.f32.gmra.mrb[0].mxu0 %v1292
      %v1480 = vpop.f32.mrb[0].mxu0
      %v1481 = vadd.f32 0.0, %v1480
      %v1482 = vpop.f32.mrb[0].mxu0
      %v1483 = vadd.f32 0.0, %v1482
      %1484 = vmatprep.mubr.f32.mxu0 0.0
      %1485 = vmatmul.mubr.f32.gmra.mrb[0].mxu0 %v1295
      %v1486 = vpop.f32.mrb[0].mxu0
      %v1487 = vadd.f32 0.0, %v1486
      %v1488 = vpop.f32.mrb[0].mxu0
      %v1489 = vadd.f32 0.0, %v1488
      %1490 = vmatprep.mubr.f32.mxu0 0.0
      %1491 = vmatmul.mubr.f32.gmra.mrb[0].mxu0 %v1298
      %v1492 = vpop.f32.mrb[0].mxu0
      %v1493 = vadd.f32 0.0, %v1492
      %v1494 = vpop.f32.mrb[0].mxu0
      %v1495 = vadd.f32 0.0, %v1494
      %1496 = vmatprep.mubr.f32.mxu0 0.0
      %1497 = vmatmul.mubr.f32.gmra.mrb[0].mxu0 %v1301
      %v1498 = vpop.f32.mrb[0].mxu0
      %v1499 = vadd.f32 0.0, %v1498
      %v1500 = vpop.f32.mrb[0].mxu0
      %v1501 = vadd.f32 0.0, %v1500
      %1502 = vmatprep.mubr.f32.mxu0 0.0
      %1503 = vmatmul.mubr.f32.gmra.mrb[0].mxu0 %v1304
      %v1504 = vpop.f32.mrb[0].mxu0
      %v1505 = vadd.f32 0.0, %v1504
      %v1506 = vpop.f32.mrb[0].mxu0
      %v1507 = vadd.f32 0.0, %v1506
      %1508 = vmatprep.mubr.f32.mxu0 0.0
      %1509 = vmatmul.mubr.f32.gmra.mrb[0].mxu0 %v1307
      %v1510 = vpop.f32.mrb[0].mxu0
      %v1511 = vadd.f32 0.0, %v1510
      %v1512 = vpop.f32.mrb[0].mxu0
      %v1513 = vadd.f32 0.0, %v1512
      %1514 = vmatprep.mubr.f32.mxu0 0.0
      %1515 = vmatmul.mubr.f32.gmra.mrb[0].mxu0 %v1310
      %v1516 = vpop.f32.mrb[0].mxu0
      %v1517 = vadd.f32 0.0, %v1516
      %v1518 = vpop.f32.mrb[0].mxu0
      %v1519 = vadd.f32 0.0, %v1518
      %1520 = vmatprep.mubr.f32.mxu0 0.0
      %1521 = vmatmul.mubr.f32.gmra.mrb[0].mxu0 %v1313
      %v1522 = vpop.f32.mrb[0].mxu0
      %v1523 = vadd.f32 0.0, %v1522
      %v1524 = vpop.f32.mrb[0].mxu0
      %v1525 = vadd.f32 0.0, %v1524
      %1526 = vmatprep.mubr.f32.mxu0 0.0
      %1527 = vmatmul.mubr.f32.gmra.mrb[0].mxu0 %v1316
      %v1528 = vpop.f32.mrb[0].mxu0
      %v1529 = vadd.f32 0.0, %v1528
      %v1530 = vpop.f32.mrb[0].mxu0
      %v1531 = vadd.f32 0.0, %v1530
      %1532 = vmatprep.mubr.f32.mxu0 0.0
      %1533 = vmatmul.mubr.f32.gmra.mrb[0].mxu0 %v1319
      %v1534 = vpop.f32.mrb[0].mxu0
      %v1535 = vadd.f32 0.0, %v1534
      %v1536 = vpop.f32.mrb[0].mxu0
      %v1537 = vadd.f32 0.0, %v1536
      %1538 = vmatprep.mubr.f32.mxu0 0.0
      %1539 = vmatmul.mubr.f32.gmra.mrb[0].mxu0 %v1322
      %v1540 = vpop.f32.mrb[0].mxu0
      %v1541 = vadd.f32 0.0, %v1540
      %v1542 = vpop.f32.mrb[0].mxu0
      %v1543 = vadd.f32 0.0, %v1542
      %1544 = vmatprep.mubr.f32.mxu0 0.0
      %1545 = vmatmul.mubr.f32.gmra.mrb[0].mxu0 %v1325
      %v1546 = vpop.f32.mrb[0].mxu0
      %v1547 = vadd.f32 0.0, %v1546
      %v1548 = vpop.f32.mrb[0].mxu0
      %v1549 = vadd.f32 0.0, %v1548
      %1550 = vmatprep.mubr.f32.mxu0 0.0
      %1551 = vmatmul.mubr.f32.gmra.mrb[0].mxu0 %v1328
      %v1552 = vpop.f32.mrb[0].mxu0
      %v1553 = vadd.f32 0.0, %v1552
      %v1554 = vpop.f32.mrb[0].mxu0
      %v1555 = vadd.f32 0.0, %v1554
      %1556 = vmatprep.mubr.f32.mxu0 0.0
      %1557 = vmatmul.mubr.f32.gmra.mrb[0].mxu0 %v1331
      %v1558 = vpop.f32.mrb[0].mxu0
      %v1559 = vadd.f32 0.0, %v1558
      %v1560 = vpop.f32.mrb[0].mxu0
      %v1561 = vadd.f32 0.0, %v1560
      %1562 = vmatprep.mubr.f32.mxu0 0.0
      %1563 = vmatmul.mubr.f32.gmra.mrb[0].mxu0 %v1334
      %v1564 = vpop.f32.mrb[0].mxu0
      %v1565 = vadd.f32 0.0, %v1564
      %v1566 = vpop.f32.mrb[0].mxu0
      %v1567 = vadd.f32 0.0, %v1566
      %1568 = vmatprep.mubr.f32.mxu0 0.0
      %1569 = vmatmul.mubr.f32.gmra.mrb[0].mxu0 %v1337
      %v1570 = vpop.f32.mrb[0].mxu0
      %v1571 = vadd.f32 0.0, %v1570
      %v1572 = vpop.f32.mrb[0].mxu0
      %v1573 = vadd.f32 0.0, %v1572
      %1574 = vmatprep.mubr.f32.mxu0 0.0
      %1575 = vmatmul.mubr.f32.gmra.mrb[0].mxu0 %v1340
      %v1576 = vpop.f32.mrb[0].mxu0
      %v1577 = vadd.f32 0.0, %v1576
      %v1578 = vpop.f32.mrb[0].mxu0
      %v1579 = vadd.f32 0.0, %v1578
      %1580 = vmatprep.mubr.f32.mxu0 0.0
      %1581 = vmatmul.mubr.f32.gmra.mrb[0].mxu0 %v1343
      %v1582 = vpop.f32.mrb[0].mxu0
      %v1583 = vadd.f32 0.0, %v1582
      %v1584 = vpop.f32.mrb[0].mxu0
      %v1585 = vadd.f32 0.0, %v1584
      %1586 = vmatprep.mubr.f32.mxu0 0.0
      %1587 = vmatmul.mubr.f32.gmra.mrb[0].mxu0 %v1346
      %v1588 = vpop.f32.mrb[0].mxu0
      %v1589 = vadd.f32 0.0, %v1588
      %v1590 = vpop.f32.mrb[0].mxu0
      %v1591 = vadd.f32 0.0, %v1590
      %1592 = vmatprep.mubr.f32.mxu0 0.0
      %1593 = vmatmul.mubr.f32.gmra.mrb[0].mxu0 %v1349
      %v1594 = vpop.f32.mrb[0].mxu0
      %v1595 = vadd.f32 0.0, %v1594
      %v1596 = vpop.f32.mrb[0].mxu0
      %v1597 = vadd.f32 0.0, %v1596
      %1598 = vmatprep.mubr.f32.mxu0 0.0
      %1599 = vmatmul.mubr.f32.gmra.mrb[0].mxu0 %v1352
      %v1600 = vpop.f32.mrb[0].mxu0
      %v1601 = vadd.f32 0.0, %v1600
      %v1602 = vpop.f32.mrb[0].mxu0
      %v1603 = vadd.f32 0.0, %v1602
      %1604 = vmatprep.mubr.f32.mxu0 0.0
      %1605 = vmatmul.mubr.f32.gmra.mrb[0].mxu0 %v1355
      %v1606 = vpop.f32.mrb[0].mxu0
      %v1607 = vadd.f32 0.0, %v1606
      %v1608 = vpop.f32.mrb[0].mxu0
      %v1609 = vadd.f32 0.0, %v1608
      %1610 = vmatprep.mubr.f32.mxu0 0.0
      %1611 = vmatmul.mubr.f32.gmra.mrb[0].mxu0 %v1358
      %v1612 = vpop.f32.mrb[0].mxu0
      %v1613 = vadd.f32 0.0, %v1612
      %v1614 = vpop.f32.mrb[0].mxu0
      %v1615 = vadd.f32 0.0, %v1614
      %1616 = vdwg.mxu0
      %v1617 = vadd.f32 %v1017, %v1427
      %v1618 = vadd.f32 %v1019, %v1429
      %v1619 = vadd.f32 %v1023, %v1433
      %v1620 = vadd.f32 %v1025, %v1435
      %v1621 = vadd.f32 %v1029, %v1439
      %v1622 = vadd.f32 %v1031, %v1441
      %v1623 = vadd.f32 %v1035, %v1445
      %v1624 = vadd.f32 %v1037, %v1447
      %v1625 = vadd.f32 %v1041, %v1451
      %v1626 = vadd.f32 %v1043, %v1453
      %v1627 = vadd.f32 %v1047, %v1457
      %v1628 = vadd.f32 %v1049, %v1459
      %v1629 = vadd.f32 %v1053, %v1463
      %v1630 = vadd.f32 %v1055, %v1465
      %v1631 = vadd.f32 %v1059, %v1469
      %v1632 = vadd.f32 %v1061, %v1471
      %v1633 = vadd.f32 %v1065, %v1475
      %v1634 = vadd.f32 %v1067, %v1477
      %v1635 = vadd.f32 %v1071, %v1481
      %v1636 = vadd.f32 %v1073, %v1483
      %v1637 = vadd.f32 %v1077, %v1487
      %v1638 = vadd.f32 %v1079, %v1489
      %v1639 = vadd.f32 %v1083, %v1493
      %v1640 = vadd.f32 %v1085, %v1495
      %v1641 = vadd.f32 %v1089, %v1499
      %v1642 = vadd.f32 %v1091, %v1501
      %v1643 = vadd.f32 %v1095, %v1505
      %v1644 = vadd.f32 %v1097, %v1507
      %v1645 = vadd.f32 %v1101, %v1511
      %v1646 = vadd.f32 %v1103, %v1513
      %v1647 = vadd.f32 %v1107, %v1517
      %v1648 = vadd.f32 %v1109, %v1519
      %v1649 = vadd.f32 %v1113, %v1523
      %v1650 = vadd.f32 %v1115, %v1525
      %v1651 = vadd.f32 %v1119, %v1529
      %v1652 = vadd.f32 %v1121, %v1531
      %v1653 = vadd.f32 %v1125, %v1535
      %v1654 = vadd.f32 %v1127, %v1537
      %v1655 = vadd.f32 %v1131, %v1541
      %v1656 = vadd.f32 %v1133, %v1543
      %v1657 = vadd.f32 %v1137, %v1547
      %v1658 = vadd.f32 %v1139, %v1549
      %v1659 = vadd.f32 %v1143, %v1553
      %v1660 = vadd.f32 %v1145, %v1555
      %v1661 = vadd.f32 %v1149, %v1559
      %v1662 = vadd.f32 %v1151, %v1561
      %v1663 = vadd.f32 %v1155, %v1565
      %v1664 = vadd.f32 %v1157, %v1567
      %v1665 = vadd.f32 %v1161, %v1571
      %v1666 = vadd.f32 %v1163, %v1573
      %v1667 = vadd.f32 %v1167, %v1577
      %v1668 = vadd.f32 %v1169, %v1579
      %v1669 = vadd.f32 %v1173, %v1583
      %v1670 = vadd.f32 %v1175, %v1585
      %v1671 = vadd.f32 %v1179, %v1589
      %v1672 = vadd.f32 %v1181, %v1591
      %v1673 = vadd.f32 %v1185, %v1595
      %v1674 = vadd.f32 %v1187, %v1597
      %v1675 = vadd.f32 %v1191, %v1601
      %v1676 = vadd.f32 %v1193, %v1603
      %v1677 = vadd.f32 %v1197, %v1607
      %v1678 = vadd.f32 %v1199, %v1609
      %v1679 = vadd.f32 %v1203, %v1613
      %v1680 = vadd.f32 %v1205, %v1615
      %v1681 = vld [vmem:[%s381 + $0x3] sm:$0xff]
      %v1682 = vld [vmem:[%s381 + $0xb] sm:$0xff]
      %v1683 = vld [vmem:[%s381 + $0x13] sm:$0xff]
      %v1684 = vld [vmem:[%s381 + $0x1b] sm:$0xff]
      %v1685 = vld [vmem:[%s381 + $0x23] sm:$0xff]
      %v1686 = vld [vmem:[%s381 + $0x2b] sm:$0xff]
      %v1687 = vld [vmem:[%s381 + $0x33] sm:$0xff]
      %v1688 = vld [vmem:[%s381 + $0x3b] sm:$0xff]
      %v1689 = vld [vmem:[%s381 + $0x43] sm:$0xff]
      %v1690 = vld [vmem:[%s381 + $0x4b] sm:$0xff]
      %v1691 = vld [vmem:[%s381 + $0x53] sm:$0xff]
      %v1692 = vld [vmem:[%s381 + $0x5b] sm:$0xff]
      %v1693 = vld [vmem:[%s381 + $0x63] sm:$0xff]
      %v1694 = vld [vmem:[%s381 + $0x6b] sm:$0xff]
      %v1695 = vld [vmem:[%s381 + $0x73] sm:$0xff]
      %v1696 = vld [vmem:[%s381 + $0x7b] sm:$0xff]
      %v1697 = vld [vmem:[%s381 + $0x83] sm:$0xff]
      %v1698 = vld [vmem:[%s381 + $0x8b] sm:$0xff]
      %v1699 = vld [vmem:[%s381 + $0x93] sm:$0xff]
      %v1700 = vld [vmem:[%s381 + $0x9b] sm:$0xff]
      %v1701 = vld [vmem:[%s381 + $0xa3] sm:$0xff]
      %v1702 = vld [vmem:[%s381 + $0xab] sm:$0xff]
      %v1703 = vld [vmem:[%s381 + $0xb3] sm:$0xff]
      %v1704 = vld [vmem:[%s381 + $0xbb] sm:$0xff]
      %v1705 = vld [vmem:[%s381 + $0xc3] sm:$0xff]
      %v1706 = vld [vmem:[%s381 + $0xcb] sm:$0xff]
      %v1707 = vld [vmem:[%s381 + $0xd3] sm:$0xff]
      %v1708 = vld [vmem:[%s381 + $0xdb] sm:$0xff]
      %v1709 = vld [vmem:[%s381 + $0xe3] sm:$0xff]
      %v1710 = vld [vmem:[%s381 + $0xeb] sm:$0xff]
      %v1711 = vld [vmem:[%s381 + $0xf3] sm:$0xff]
      %v1712 = vld [vmem:[%s381 + $0xfb] sm:$0xf]
      %s1713 = scalar_lea.vmem %s1, 576
      %v1714 = vld [vmem:[%s1713] sm:$0xff]
      %v1715 = vld [vmem:[%s1713 + $0x8] sm:$0xff]
      %v1716 = vld [vmem:[%s1713 + $0x10] sm:$0xff]
      %v1717 = vld [vmem:[%s1713 + $0x18] sm:$0xff]
      %v1718 = vld [vmem:[%s1713 + $0x20] sm:$0xff]
      %v1719 = vld [vmem:[%s1713 + $0x28] sm:$0xff]
      %v1720 = vld [vmem:[%s1713 + $0x30] sm:$0xff]
      %v1721 = vld [vmem:[%s1713 + $0x38] sm:$0xff]
      %v1722 = vld [vmem:[%s1713 + $0x40] sm:$0xff]
      %v1723 = vld [vmem:[%s1713 + $0x48] sm:$0xff]
      %v1724 = vld [vmem:[%s1713 + $0x50] sm:$0xff]
      %v1725 = vld [vmem:[%s1713 + $0x58] sm:$0xff]
      %v1726 = vld [vmem:[%s1713 + $0x60] sm:$0xff]
      %v1727 = vld [vmem:[%s1713 + $0x68] sm:$0xff]
      %v1728 = vld [vmem:[%s1713 + $0x70] sm:$0xff]
      %v1729 = vld [vmem:[%s1713 + $0x78] sm:$0xff]
      %v1730 = vld [vmem:[%s1713 + $0x80] sm:$0xff]
      %v1731 = vld [vmem:[%s1713 + $0x88] sm:$0xff]
      %v1732 = vld [vmem:[%s1713 + $0x90] sm:$0xff]
      %v1733 = vld [vmem:[%s1713 + $0x98] sm:$0xff]
      %v1734 = vld [vmem:[%s1713 + $0xa0] sm:$0xff]
      %v1735 = vld [vmem:[%s1713 + $0xa8] sm:$0xff]
      %v1736 = vld [vmem:[%s1713 + $0xb0] sm:$0xff]
      %v1737 = vld [vmem:[%s1713 + $0xb8] sm:$0xff]
      %v1739 = vsel %vm500, %v1681, 0
      %v1742 = vsel %vm500, %v1682, 0
      %v1745 = vsel %vm500, %v1683, 0
      %v1748 = vsel %vm500, %v1684, 0
      %v1751 = vsel %vm500, %v1685, 0
      %v1754 = vsel %vm500, %v1686, 0
      %v1757 = vsel %vm500, %v1687, 0
      %v1760 = vsel %vm500, %v1688, 0
      %v1763 = vsel %vm500, %v1689, 0
      %v1766 = vsel %vm500, %v1690, 0
      %v1769 = vsel %vm500, %v1691, 0
      %v1772 = vsel %vm500, %v1692, 0
      %v1775 = vsel %vm500, %v1693, 0
      %v1778 = vsel %vm500, %v1694, 0
      %v1781 = vsel %vm500, %v1695, 0
      %v1784 = vsel %vm500, %v1696, 0
      %v1787 = vsel %vm500, %v1697, 0
      %v1790 = vsel %vm500, %v1698, 0
      %v1793 = vsel %vm500, %v1699, 0
      %v1796 = vsel %vm500, %v1700, 0
      %v1799 = vsel %vm500, %v1701, 0
      %v1802 = vsel %vm500, %v1702, 0
      %v1805 = vsel %vm500, %v1703, 0
      %v1808 = vsel %vm500, %v1704, 0
      %v1811 = vsel %vm500, %v1705, 0
      %v1814 = vsel %vm500, %v1706, 0
      %v1817 = vsel %vm500, %v1707, 0
      %v1820 = vsel %vm500, %v1708, 0
      %v1823 = vsel %vm500, %v1709, 0
      %v1826 = vsel %vm500, %v1710, 0
      %v1829 = vsel %vm500, %v1711, 0
      %v1832 = vsel %vm500, %v1712, 0
      %1834 = vmatprep.subr.mxu0 %v1715
      %1835 = vmatpush1.msra.mxu0 %v1714
      %1836 = vmatprep.subr.mxu0 %v1717
      %1837 = vmatpush1.msra.mxu0 %v1716
      %1838 = vmatprep.subr.mxu0 %v1719
      %1839 = vmatpush1.msra.mxu0 %v1718
      %1840 = vmatprep.subr.mxu0 %v1721
      %1841 = vmatpush1.msra.mxu0 %v1720
      %1842 = vmatprep.subr.mxu0 %v1723
      %1843 = vmatpush1.msra.mxu0 %v1722
      %1844 = vmatprep.subr.mxu0 %v1725
      %1845 = vmatpush1.msra.mxu0 %v1724
      %1846 = vmatprep.subr.mxu0 %v1727
      %1847 = vmatpush1.msra.mxu0 %v1726
      %1848 = vmatprep.subr.mxu0 %v1729
      %1849 = vmatpush1.msra.mxu0 %v1728
      %1850 = vmatprep.subr.mxu0 %v1731
      %1851 = vmatpush1.msra.mxu0 %v1730
      %1852 = vmatprep.subr.mxu0 %v1733
      %1853 = vmatpush1.msra.mxu0 %v1732
      %1854 = vmatprep.subr.mxu0 %v1735
      %1855 = vmatpush1.msra.mxu0 %v1734
      %1856 = vmatprep.subr.mxu0 %v1737
      %1857 = vmatpush1.msra.mxu0 %v1736
      %1858 = vmatprep.subr.mxu0 0.0
      %1859 = vmatpush1.msra.mxu0 0.0
      %1860 = vmatprep.subr.mxu0 0.0
      %1861 = vmatpush1.msra.mxu0 0.0
      %1862 = vmatprep.subr.mxu0 0.0
      %1863 = vmatpush1.msra.mxu0 0.0
      %1864 = vmatprep.subr.mxu0 0.0
      %1865 = vmatpush1.msra.mxu0 0.0
      %1866 = vmatprep.subr.mxu0 0.0
      %1867 = vmatpush1.msra.mxu0 0.0
      %1868 = vmatprep.subr.mxu0 0.0
      %1869 = vmatpush1.msra.mxu0 0.0
      %1870 = vmatprep.subr.mxu0 0.0
      %1871 = vmatpush1.msra.mxu0 0.0
      %1872 = vmatprep.subr.mxu0 0.0
      %1873 = vmatpush1.msra.mxu0 0.0
      %1874 = vmatprep.subr.mxu0 0.0
      %1875 = vmatpush1.msra.mxu0 0.0
      %1876 = vmatprep.subr.mxu0 0.0
      %1877 = vmatpush1.msra.mxu0 0.0
      %1878 = vmatprep.subr.mxu0 0.0
      %1879 = vmatpush1.msra.mxu0 0.0
      %1880 = vmatprep.subr.mxu0 0.0
      %1881 = vmatpush1.msra.mxu0 0.0
      %1882 = vmatprep.subr.mxu0 0.0
      %1883 = vmatpush1.msra.mxu0 0.0
      %1884 = vmatprep.subr.mxu0 0.0
      %1885 = vmatpush1.msra.mxu0 0.0
      %1886 = vmatprep.subr.mxu0 0.0
      %1887 = vmatpush1.msra.mxu0 0.0
      %1888 = vmatprep.subr.mxu0 0.0
      %1889 = vmatpush1.msra.mxu0 0.0
      %1890 = vmatprep.subr.mxu0 0.0
      %1891 = vmatpush1.msra.mxu0 0.0
      %1892 = vmatprep.subr.mxu0 0.0
      %1893 = vmatpush1.msra.mxu0 0.0
      %1894 = vmatprep.subr.mxu0 0.0
      %1895 = vmatpush1.msra.mxu0 0.0
      %1896 = vmatprep.subr.mxu0 0.0
      %1897 = vmatpush1.msra.mxu0 0.0
      %1898 = vmatprep.mubr.f32.mxu0 0.0
      %1899 = vmatmul.mubr.f32.gmra.mrb[0].mxu0 %v1739
      %v1900 = vpop.f32.mrb[0].mxu0
      %v1901 = vadd.f32 0.0, %v1900
      %v1902 = vpop.f32.mrb[0].mxu0
      %v1903 = vadd.f32 0.0, %v1902
      %1904 = vmatprep.mubr.f32.mxu0 0.0
      %1905 = vmatmul.mubr.f32.gmra.mrb[0].mxu0 %v1742
      %v1906 = vpop.f32.mrb[0].mxu0
      %v1907 = vadd.f32 0.0, %v1906
      %v1908 = vpop.f32.mrb[0].mxu0
      %v1909 = vadd.f32 0.0, %v1908
      %1910 = vmatprep.mubr.f32.mxu0 0.0
      %1911 = vmatmul.mubr.f32.gmra.mrb[0].mxu0 %v1745
      %v1912 = vpop.f32.mrb[0].mxu0
      %v1913 = vadd.f32 0.0, %v1912
      %v1914 = vpop.f32.mrb[0].mxu0
      %v1915 = vadd.f32 0.0, %v1914
      %1916 = vmatprep.mubr.f32.mxu0 0.0
      %1917 = vmatmul.mubr.f32.gmra.mrb[0].mxu0 %v1748
      %v1918 = vpop.f32.mrb[0].mxu0
      %v1919 = vadd.f32 0.0, %v1918
      %v1920 = vpop.f32.mrb[0].mxu0
      %v1921 = vadd.f32 0.0, %v1920
      %1922 = vmatprep.mubr.f32.mxu0 0.0
      %1923 = vmatmul.mubr.f32.gmra.mrb[0].mxu0 %v1751
      %v1924 = vpop.f32.mrb[0].mxu0
      %v1925 = vadd.f32 0.0, %v1924
      %v1926 = vpop.f32.mrb[0].mxu0
      %v1927 = vadd.f32 0.0, %v1926
      %1928 = vmatprep.mubr.f32.mxu0 0.0
      %1929 = vmatmul.mubr.f32.gmra.mrb[0].mxu0 %v1754
      %v1930 = vpop.f32.mrb[0].mxu0
      %v1931 = vadd.f32 0.0, %v1930
      %v1932 = vpop.f32.mrb[0].mxu0
      %v1933 = vadd.f32 0.0, %v1932
      %1934 = vmatprep.mubr.f32.mxu0 0.0
      %1935 = vmatmul.mubr.f32.gmra.mrb[0].mxu0 %v1757
      %v1936 = vpop.f32.mrb[0].mxu0
      %v1937 = vadd.f32 0.0, %v1936
      %v1938 = vpop.f32.mrb[0].mxu0
      %v1939 = vadd.f32 0.0, %v1938
      %1940 = vmatprep.mubr.f32.mxu0 0.0
      %1941 = vmatmul.mubr.f32.gmra.mrb[0].mxu0 %v1760
      %v1942 = vpop.f32.mrb[0].mxu0
      %v1943 = vadd.f32 0.0, %v1942
      %v1944 = vpop.f32.mrb[0].mxu0
      %v1945 = vadd.f32 0.0, %v1944
      %1946 = vmatprep.mubr.f32.mxu0 0.0
      %1947 = vmatmul.mubr.f32.gmra.mrb[0].mxu0 %v1763
      %v1948 = vpop.f32.mrb[0].mxu0
      %v1949 = vadd.f32 0.0, %v1948
      %v1950 = vpop.f32.mrb[0].mxu0
      %v1951 = vadd.f32 0.0, %v1950
      %1952 = vmatprep.mubr.f32.mxu0 0.0
      %1953 = vmatmul.mubr.f32.gmra.mrb[0].mxu0 %v1766
      %v1954 = vpop.f32.mrb[0].mxu0
      %v1955 = vadd.f32 0.0, %v1954
      %v1956 = vpop.f32.mrb[0].mxu0
      %v1957 = vadd.f32 0.0, %v1956
      %1958 = vmatprep.mubr.f32.mxu0 0.0
      %1959 = vmatmul.mubr.f32.gmra.mrb[0].mxu0 %v1769
      %v1960 = vpop.f32.mrb[0].mxu0
      %v1961 = vadd.f32 0.0, %v1960
      %v1962 = vpop.f32.mrb[0].mxu0
      %v1963 = vadd.f32 0.0, %v1962
      %1964 = vmatprep.mubr.f32.mxu0 0.0
      %1965 = vmatmul.mubr.f32.gmra.mrb[0].mxu0 %v1772
      %v1966 = vpop.f32.mrb[0].mxu0
      %v1967 = vadd.f32 0.0, %v1966
      %v1968 = vpop.f32.mrb[0].mxu0
      %v1969 = vadd.f32 0.0, %v1968
      %1970 = vmatprep.mubr.f32.mxu0 0.0
      %1971 = vmatmul.mubr.f32.gmra.mrb[0].mxu0 %v1775
      %v1972 = vpop.f32.mrb[0].mxu0
      %v1973 = vadd.f32 0.0, %v1972
      %v1974 = vpop.f32.mrb[0].mxu0
      %v1975 = vadd.f32 0.0, %v1974
      %1976 = vmatprep.mubr.f32.mxu0 0.0
      %1977 = vmatmul.mubr.f32.gmra.mrb[0].mxu0 %v1778
      %v1978 = vpop.f32.mrb[0].mxu0
      %v1979 = vadd.f32 0.0, %v1978
      %v1980 = vpop.f32.mrb[0].mxu0
      %v1981 = vadd.f32 0.0, %v1980
      %1982 = vmatprep.mubr.f32.mxu0 0.0
      %1983 = vmatmul.mubr.f32.gmra.mrb[0].mxu0 %v1781
      %v1984 = vpop.f32.mrb[0].mxu0
      %v1985 = vadd.f32 0.0, %v1984
      %v1986 = vpop.f32.mrb[0].mxu0
      %v1987 = vadd.f32 0.0, %v1986
      %1988 = vmatprep.mubr.f32.mxu0 0.0
      %1989 = vmatmul.mubr.f32.gmra.mrb[0].mxu0 %v1784
      %v1990 = vpop.f32.mrb[0].mxu0
      %v1991 = vadd.f32 0.0, %v1990
      %v1992 = vpop.f32.mrb[0].mxu0
      %v1993 = vadd.f32 0.0, %v1992
      %1994 = vmatprep.mubr.f32.mxu0 0.0
      %1995 = vmatmul.mubr.f32.gmra.mrb[0].mxu0 %v1787
      %v1996 = vpop.f32.mrb[0].mxu0
      %v1997 = vadd.f32 0.0, %v1996
      %v1998 = vpop.f32.mrb[0].mxu0
      %v1999 = vadd.f32 0.0, %v1998
      %2000 = vmatprep.mubr.f32.mxu0 0.0
      %2001 = vmatmul.mubr.f32.gmra.mrb[0].mxu0 %v1790
      %v2002 = vpop.f32.mrb[0].mxu0
      %v2003 = vadd.f32 0.0, %v2002
      %v2004 = vpop.f32.mrb[0].mxu0
      %v2005 = vadd.f32 0.0, %v2004
      %2006 = vmatprep.mubr.f32.mxu0 0.0
      %2007 = vmatmul.mubr.f32.gmra.mrb[0].mxu0 %v1793
      %v2008 = vpop.f32.mrb[0].mxu0
      %v2009 = vadd.f32 0.0, %v2008
      %v2010 = vpop.f32.mrb[0].mxu0
      %v2011 = vadd.f32 0.0, %v2010
      %2012 = vmatprep.mubr.f32.mxu0 0.0
      %2013 = vmatmul.mubr.f32.gmra.mrb[0].mxu0 %v1796
      %v2014 = vpop.f32.mrb[0].mxu0
      %v2015 = vadd.f32 0.0, %v2014
      %v2016 = vpop.f32.mrb[0].mxu0
      %v2017 = vadd.f32 0.0, %v2016
      %2018 = vmatprep.mubr.f32.mxu0 0.0
      %2019 = vmatmul.mubr.f32.gmra.mrb[0].mxu0 %v1799
      %v2020 = vpop.f32.mrb[0].mxu0
      %v2021 = vadd.f32 0.0, %v2020
      %v2022 = vpop.f32.mrb[0].mxu0
      %v2023 = vadd.f32 0.0, %v2022
      %2024 = vmatprep.mubr.f32.mxu0 0.0
      %2025 = vmatmul.mubr.f32.gmra.mrb[0].mxu0 %v1802
      %v2026 = vpop.f32.mrb[0].mxu0
      %v2027 = vadd.f32 0.0, %v2026
      %v2028 = vpop.f32.mrb[0].mxu0
      %v2029 = vadd.f32 0.0, %v2028
      %2030 = vmatprep.mubr.f32.mxu0 0.0
      %2031 = vmatmul.mubr.f32.gmra.mrb[0].mxu0 %v1805
      %v2032 = vpop.f32.mrb[0].mxu0
      %v2033 = vadd.f32 0.0, %v2032
      %v2034 = vpop.f32.mrb[0].mxu0
      %v2035 = vadd.f32 0.0, %v2034
      %2036 = vmatprep.mubr.f32.mxu0 0.0
      %2037 = vmatmul.mubr.f32.gmra.mrb[0].mxu0 %v1808
      %v2038 = vpop.f32.mrb[0].mxu0
      %v2039 = vadd.f32 0.0, %v2038
      %v2040 = vpop.f32.mrb[0].mxu0
      %v2041 = vadd.f32 0.0, %v2040
      %2042 = vmatprep.mubr.f32.mxu0 0.0
      %2043 = vmatmul.mubr.f32.gmra.mrb[0].mxu0 %v1811
      %v2044 = vpop.f32.mrb[0].mxu0
      %v2045 = vadd.f32 0.0, %v2044
      %v2046 = vpop.f32.mrb[0].mxu0
      %v2047 = vadd.f32 0.0, %v2046
      %2048 = vmatprep.mubr.f32.mxu0 0.0
      %2049 = vmatmul.mubr.f32.gmra.mrb[0].mxu0 %v1814
      %v2050 = vpop.f32.mrb[0].mxu0
      %v2051 = vadd.f32 0.0, %v2050
      %v2052 = vpop.f32.mrb[0].mxu0
      %v2053 = vadd.f32 0.0, %v2052
      %2054 = vmatprep.mubr.f32.mxu0 0.0
      %2055 = vmatmul.mubr.f32.gmra.mrb[0].mxu0 %v1817
      %v2056 = vpop.f32.mrb[0].mxu0
      %v2057 = vadd.f32 0.0, %v2056
      %v2058 = vpop.f32.mrb[0].mxu0
      %v2059 = vadd.f32 0.0, %v2058
      %2060 = vmatprep.mubr.f32.mxu0 0.0
      %2061 = vmatmul.mubr.f32.gmra.mrb[0].mxu0 %v1820
      %v2062 = vpop.f32.mrb[0].mxu0
      %v2063 = vadd.f32 0.0, %v2062
      %v2064 = vpop.f32.mrb[0].mxu0
      %v2065 = vadd.f32 0.0, %v2064
      %2066 = vmatprep.mubr.f32.mxu0 0.0
      %2067 = vmatmul.mubr.f32.gmra.mrb[0].mxu0 %v1823
      %v2068 = vpop.f32.mrb[0].mxu0
      %v2069 = vadd.f32 0.0, %v2068
      %v2070 = vpop.f32.mrb[0].mxu0
      %v2071 = vadd.f32 0.0, %v2070
      %2072 = vmatprep.mubr.f32.mxu0 0.0
      %2073 = vmatmul.mubr.f32.gmra.mrb[0].mxu0 %v1826
      %v2074 = vpop.f32.mrb[0].mxu0
      %v2075 = vadd.f32 0.0, %v2074
      %v2076 = vpop.f32.mrb[0].mxu0
      %v2077 = vadd.f32 0.0, %v2076
      %2078 = vmatprep.mubr.f32.mxu0 0.0
      %2079 = vmatmul.mubr.f32.gmra.mrb[0].mxu0 %v1829
      %v2080 = vpop.f32.mrb[0].mxu0
      %v2081 = vadd.f32 0.0, %v2080
      %v2082 = vpop.f32.mrb[0].mxu0
      %v2083 = vadd.f32 0.0, %v2082
      %2084 = vmatprep.mubr.f32.mxu0 0.0
      %2085 = vmatmul.mubr.f32.gmra.mrb[0].mxu0 %v1832
      %v2086 = vpop.f32.mrb[0].mxu0
      %v2087 = vadd.f32 0.0, %v2086
      %v2088 = vpop.f32.mrb[0].mxu0
      %v2089 = vadd.f32 0.0, %v2088
      %2090 = vdwg.mxu0
      %v2091 = vadd.f32 %v1617, %v1901
      %v2092 = vadd.f32 %v1618, %v1903
      %v2093 = vadd.f32 %v1619, %v1907
      %v2094 = vadd.f32 %v1620, %v1909
      %v2095 = vadd.f32 %v1621, %v1913
      %v2096 = vadd.f32 %v1622, %v1915
      %v2097 = vadd.f32 %v1623, %v1919
      %v2098 = vadd.f32 %v1624, %v1921
      %v2099 = vadd.f32 %v1625, %v1925
      %v2100 = vadd.f32 %v1626, %v1927
      %v2101 = vadd.f32 %v1627, %v1931
      %v2102 = vadd.f32 %v1628, %v1933
      %v2103 = vadd.f32 %v1629, %v1937
      %v2104 = vadd.f32 %v1630, %v1939
      %v2105 = vadd.f32 %v1631, %v1943
      %v2106 = vadd.f32 %v1632, %v1945
      %v2107 = vadd.f32 %v1633, %v1949
      %v2108 = vadd.f32 %v1634, %v1951
      %v2109 = vadd.f32 %v1635, %v1955
      %v2110 = vadd.f32 %v1636, %v1957
      %v2111 = vadd.f32 %v1637, %v1961
      %v2112 = vadd.f32 %v1638, %v1963
      %v2113 = vadd.f32 %v1639, %v1967
      %v2114 = vadd.f32 %v1640, %v1969
      %v2115 = vadd.f32 %v1641, %v1973
      %v2116 = vadd.f32 %v1642, %v1975
      %v2117 = vadd.f32 %v1643, %v1979
      %v2118 = vadd.f32 %v1644, %v1981
      %v2119 = vadd.f32 %v1645, %v1985
      %v2120 = vadd.f32 %v1646, %v1987
      %v2121 = vadd.f32 %v1647, %v1991
      %v2122 = vadd.f32 %v1648, %v1993
      %v2123 = vadd.f32 %v1649, %v1997
      %v2124 = vadd.f32 %v1650, %v1999
      %v2125 = vadd.f32 %v1651, %v2003
      %v2126 = vadd.f32 %v1652, %v2005
      %v2127 = vadd.f32 %v1653, %v2009
      %v2128 = vadd.f32 %v1654, %v2011
      %v2129 = vadd.f32 %v1655, %v2015
      %v2130 = vadd.f32 %v1656, %v2017
      %v2131 = vadd.f32 %v1657, %v2021
      %v2132 = vadd.f32 %v1658, %v2023
      %v2133 = vadd.f32 %v1659, %v2027
      %v2134 = vadd.f32 %v1660, %v2029
      %v2135 = vadd.f32 %v1661, %v2033
      %v2136 = vadd.f32 %v1662, %v2035
      %v2137 = vadd.f32 %v1663, %v2039
      %v2138 = vadd.f32 %v1664, %v2041
      %v2139 = vadd.f32 %v1665, %v2045
      %v2140 = vadd.f32 %v1666, %v2047
      %v2141 = vadd.f32 %v1667, %v2051
      %v2142 = vadd.f32 %v1668, %v2053
      %v2143 = vadd.f32 %v1669, %v2057
      %v2144 = vadd.f32 %v1670, %v2059
      %v2145 = vadd.f32 %v1671, %v2063
      %v2146 = vadd.f32 %v1672, %v2065
      %v2147 = vadd.f32 %v1673, %v2069
      %v2148 = vadd.f32 %v1674, %v2071
      %v2149 = vadd.f32 %v1675, %v2075
      %v2150 = vadd.f32 %v1676, %v2077
      %v2151 = vadd.f32 %v1677, %v2081
      %v2152 = vadd.f32 %v1678, %v2083
      %v2153 = vadd.f32 %v1679, %v2087
      %v2154 = vadd.f32 %v1680, %v2089
      %v2155 = vld [vmem:[%s381 + $0x4] sm:$0xff]
      %v2156 = vld [vmem:[%s381 + $0xc] sm:$0xff]
      %v2157 = vld [vmem:[%s381 + $0x14] sm:$0xff]
      %v2158 = vld [vmem:[%s381 + $0x1c] sm:$0xff]
      %v2159 = vld [vmem:[%s381 + $0x24] sm:$0xff]
      %v2160 = vld [vmem:[%s381 + $0x2c] sm:$0xff]
      %v2161 = vld [vmem:[%s381 + $0x34] sm:$0xff]
      %v2162 = vld [vmem:[%s381 + $0x3c] sm:$0xff]
      %v2163 = vld [vmem:[%s381 + $0x44] sm:$0xff]
      %v2164 = vld [vmem:[%s381 + $0x4c] sm:$0xff]
      %v2165 = vld [vmem:[%s381 + $0x54] sm:$0xff]
      %v2166 = vld [vmem:[%s381 + $0x5c] sm:$0xff]
      %v2167 = vld [vmem:[%s381 + $0x64] sm:$0xff]
      %v2168 = vld [vmem:[%s381 + $0x6c] sm:$0xff]
      %v2169 = vld [vmem:[%s381 + $0x74] sm:$0xff]
      %v2170 = vld [vmem:[%s381 + $0x7c] sm:$0xff]
      %v2171 = vld [vmem:[%s381 + $0x84] sm:$0xff]
      %v2172 = vld [vmem:[%s381 + $0x8c] sm:$0xff]
      %v2173 = vld [vmem:[%s381 + $0x94] sm:$0xff]
      %v2174 = vld [vmem:[%s381 + $0x9c] sm:$0xff]
      %v2175 = vld [vmem:[%s381 + $0xa4] sm:$0xff]
      %v2176 = vld [vmem:[%s381 + $0xac] sm:$0xff]
      %v2177 = vld [vmem:[%s381 + $0xb4] sm:$0xff]
      %v2178 = vld [vmem:[%s381 + $0xbc] sm:$0xff]
      %v2179 = vld [vmem:[%s381 + $0xc4] sm:$0xff]
      %v2180 = vld [vmem:[%s381 + $0xcc] sm:$0xff]
      %v2181 = vld [vmem:[%s381 + $0xd4] sm:$0xff]
      %v2182 = vld [vmem:[%s381 + $0xdc] sm:$0xff]
      %v2183 = vld [vmem:[%s381 + $0xe4] sm:$0xff]
      %v2184 = vld [vmem:[%s381 + $0xec] sm:$0xff]
      %v2185 = vld [vmem:[%s381 + $0xf4] sm:$0xff]
      %v2186 = vld [vmem:[%s381 + $0xfc] sm:$0xf]
      %s2187 = scalar_lea.vmem %s1, 768
      %v2188 = vld [vmem:[%s2187] sm:$0xff]
      %v2189 = vld [vmem:[%s2187 + $0x8] sm:$0xff]
      %v2190 = vld [vmem:[%s2187 + $0x10] sm:$0xff]
      %v2191 = vld [vmem:[%s2187 + $0x18] sm:$0xff]
      %v2192 = vld [vmem:[%s2187 + $0x20] sm:$0xff]
      %v2193 = vld [vmem:[%s2187 + $0x28] sm:$0xff]
      %v2194 = vld [vmem:[%s2187 + $0x30] sm:$0xff]
      %v2195 = vld [vmem:[%s2187 + $0x38] sm:$0xff]
      %v2196 = vld [vmem:[%s2187 + $0x40] sm:$0xff]
      %v2197 = vld [vmem:[%s2187 + $0x48] sm:$0xff]
      %v2198 = vld [vmem:[%s2187 + $0x50] sm:$0xff]
      %v2199 = vld [vmem:[%s2187 + $0x58] sm:$0xff]
      %v2200 = vld [vmem:[%s2187 + $0x60] sm:$0xff]
      %v2201 = vld [vmem:[%s2187 + $0x68] sm:$0xff]
      %v2202 = vld [vmem:[%s2187 + $0x70] sm:$0xff]
      %v2203 = vld [vmem:[%s2187 + $0x78] sm:$0xff]
      %v2204 = vld [vmem:[%s2187 + $0x80] sm:$0xff]
      %v2205 = vld [vmem:[%s2187 + $0x88] sm:$0xff]
      %v2206 = vld [vmem:[%s2187 + $0x90] sm:$0xff]
      %v2207 = vld [vmem:[%s2187 + $0x98] sm:$0xff]
      %v2208 = vld [vmem:[%s2187 + $0xa0] sm:$0xff]
      %v2209 = vld [vmem:[%s2187 + $0xa8] sm:$0xff]
      %v2210 = vld [vmem:[%s2187 + $0xb0] sm:$0xff]
      %v2211 = vld [vmem:[%s2187 + $0xb8] sm:$0xff]
      %v2213 = vsel %vm500, %v2155, 0
      %v2216 = vsel %vm500, %v2156, 0
      %v2219 = vsel %vm500, %v2157, 0
      %v2222 = vsel %vm500, %v2158, 0
      %v2225 = vsel %vm500, %v2159, 0
      %v2228 = vsel %vm500, %v2160, 0
      %v2231 = vsel %vm500, %v2161, 0
      %v2234 = vsel %vm500, %v2162, 0
      %v2237 = vsel %vm500, %v2163, 0
      %v2240 = vsel %vm500, %v2164, 0
      %v2243 = vsel %vm500, %v2165, 0
      %v2246 = vsel %vm500, %v2166, 0
      %v2249 = vsel %vm500, %v2167, 0
      %v2252 = vsel %vm500, %v2168, 0
      %v2255 = vsel %vm500, %v2169, 0
      %v2258 = vsel %vm500, %v2170, 0
      %v2261 = vsel %vm500, %v2171, 0
      %v2264 = vsel %vm500, %v2172, 0
      %v2267 = vsel %vm500, %v2173, 0
      %v2270 = vsel %vm500, %v2174, 0
      %v2273 = vsel %vm500, %v2175, 0
      %v2276 = vsel %vm500, %v2176, 0
      %v2279 = vsel %vm500, %v2177, 0
      %v2282 = vsel %vm500, %v2178, 0
      %v2285 = vsel %vm500, %v2179, 0
      %v2288 = vsel %vm500, %v2180, 0
      %v2291 = vsel %vm500, %v2181, 0
      %v2294 = vsel %vm500, %v2182, 0
      %v2297 = vsel %vm500, %v2183, 0
      %v2300 = vsel %vm500, %v2184, 0
      %v2303 = vsel %vm500, %v2185, 0
      %v2306 = vsel %vm500, %v2186, 0
      %2308 = vmatprep.subr.mxu0 %v2189
      %2309 = vmatpush1.msra.mxu0 %v2188
      %2310 = vmatprep.subr.mxu0 %v2191
      %2311 = vmatpush1.msra.mxu0 %v2190
      %2312 = vmatprep.subr.mxu0 %v2193
      %2313 = vmatpush1.msra.mxu0 %v2192
      %2314 = vmatprep.subr.mxu0 %v2195
      %2315 = vmatpush1.msra.mxu0 %v2194
      %2316 = vmatprep.subr.mxu0 %v2197
      %2317 = vmatpush1.msra.mxu0 %v2196
      %2318 = vmatprep.subr.mxu0 %v2199
      %2319 = vmatpush1.msra.mxu0 %v2198
      %2320 = vmatprep.subr.mxu0 %v2201
      %2321 = vmatpush1.msra.mxu0 %v2200
      %2322 = vmatprep.subr.mxu0 %v2203
      %2323 = vmatpush1.msra.mxu0 %v2202
      %2324 = vmatprep.subr.mxu0 %v2205
      %2325 = vmatpush1.msra.mxu0 %v2204
      %2326 = vmatprep.subr.mxu0 %v2207
      %2327 = vmatpush1.msra.mxu0 %v2206
      %2328 = vmatprep.subr.mxu0 %v2209
      %2329 = vmatpush1.msra.mxu0 %v2208
      %2330 = vmatprep.subr.mxu0 %v2211
      %2331 = vmatpush1.msra.mxu0 %v2210
      %2332 = vmatprep.subr.mxu0 0.0
      %2333 = vmatpush1.msra.mxu0 0.0
      %2334 = vmatprep.subr.mxu0 0.0
      %2335 = vmatpush1.msra.mxu0 0.0
      %2336 = vmatprep.subr.mxu0 0.0
      %2337 = vmatpush1.msra.mxu0 0.0
      %2338 = vmatprep.subr.mxu0 0.0
      %2339 = vmatpush1.msra.mxu0 0.0
      %2340 = vmatprep.subr.mxu0 0.0
      %2341 = vmatpush1.msra.mxu0 0.0
      %2342 = vmatprep.subr.mxu0 0.0
      %2343 = vmatpush1.msra.mxu0 0.0
      %2344 = vmatprep.subr.mxu0 0.0
      %2345 = vmatpush1.msra.mxu0 0.0
      %2346 = vmatprep.subr.mxu0 0.0
      %2347 = vmatpush1.msra.mxu0 0.0
      %2348 = vmatprep.subr.mxu0 0.0
      %2349 = vmatpush1.msra.mxu0 0.0
      %2350 = vmatprep.subr.mxu0 0.0
      %2351 = vmatpush1.msra.mxu0 0.0
      %2352 = vmatprep.subr.mxu0 0.0
      %2353 = vmatpush1.msra.mxu0 0.0
      %2354 = vmatprep.subr.mxu0 0.0
      %2355 = vmatpush1.msra.mxu0 0.0
      %2356 = vmatprep.subr.mxu0 0.0
      %2357 = vmatpush1.msra.mxu0 0.0
      %2358 = vmatprep.subr.mxu0 0.0
      %2359 = vmatpush1.msra.mxu0 0.0
      %2360 = vmatprep.subr.mxu0 0.0
      %2361 = vmatpush1.msra.mxu0 0.0
      %2362 = vmatprep.subr.mxu0 0.0
      %2363 = vmatpush1.msra.mxu0 0.0
      %2364 = vmatprep.subr.mxu0 0.0
      %2365 = vmatpush1.msra.mxu0 0.0
      %2366 = vmatprep.subr.mxu0 0.0
      %2367 = vmatpush1.msra.mxu0 0.0
      %2368 = vmatprep.subr.mxu0 0.0
      %2369 = vmatpush1.msra.mxu0 0.0
      %2370 = vmatprep.subr.mxu0 0.0
      %2371 = vmatpush1.msra.mxu0 0.0
      %2372 = vmatprep.mubr.f32.mxu0 0.0
      %2373 = vmatmul.mubr.f32.gmra.mrb[0].mxu0 %v2213
      %v2374 = vpop.f32.mrb[0].mxu0
      %v2375 = vadd.f32 0.0, %v2374
      %v2376 = vpop.f32.mrb[0].mxu0
      %v2377 = vadd.f32 0.0, %v2376
      %2378 = vmatprep.mubr.f32.mxu0 0.0
      %2379 = vmatmul.mubr.f32.gmra.mrb[0].mxu0 %v2216
      %v2380 = vpop.f32.mrb[0].mxu0
      %v2381 = vadd.f32 0.0, %v2380
      %v2382 = vpop.f32.mrb[0].mxu0
      %v2383 = vadd.f32 0.0, %v2382
      %2384 = vmatprep.mubr.f32.mxu0 0.0
      %2385 = vmatmul.mubr.f32.gmra.mrb[0].mxu0 %v2219
      %v2386 = vpop.f32.mrb[0].mxu0
      %v2387 = vadd.f32 0.0, %v2386
      %v2388 = vpop.f32.mrb[0].mxu0
      %v2389 = vadd.f32 0.0, %v2388
      %2390 = vmatprep.mubr.f32.mxu0 0.0
      %2391 = vmatmul.mubr.f32.gmra.mrb[0].mxu0 %v2222
      %v2392 = vpop.f32.mrb[0].mxu0
      %v2393 = vadd.f32 0.0, %v2392
      %v2394 = vpop.f32.mrb[0].mxu0
      %v2395 = vadd.f32 0.0, %v2394
      %2396 = vmatprep.mubr.f32.mxu0 0.0
      %2397 = vmatmul.mubr.f32.gmra.mrb[0].mxu0 %v2225
      %v2398 = vpop.f32.mrb[0].mxu0
      %v2399 = vadd.f32 0.0, %v2398
      %v2400 = vpop.f32.mrb[0].mxu0
      %v2401 = vadd.f32 0.0, %v2400
      %2402 = vmatprep.mubr.f32.mxu0 0.0
      %2403 = vmatmul.mubr.f32.gmra.mrb[0].mxu0 %v2228
      %v2404 = vpop.f32.mrb[0].mxu0
      %v2405 = vadd.f32 0.0, %v2404
      %v2406 = vpop.f32.mrb[0].mxu0
      %v2407 = vadd.f32 0.0, %v2406
      %2408 = vmatprep.mubr.f32.mxu0 0.0
      %2409 = vmatmul.mubr.f32.gmra.mrb[0].mxu0 %v2231
      %v2410 = vpop.f32.mrb[0].mxu0
      %v2411 = vadd.f32 0.0, %v2410
      %v2412 = vpop.f32.mrb[0].mxu0
      %v2413 = vadd.f32 0.0, %v2412
      %2414 = vmatprep.mubr.f32.mxu0 0.0
      %2415 = vmatmul.mubr.f32.gmra.mrb[0].mxu0 %v2234
      %v2416 = vpop.f32.mrb[0].mxu0
      %v2417 = vadd.f32 0.0, %v2416
      %v2418 = vpop.f32.mrb[0].mxu0
      %v2419 = vadd.f32 0.0, %v2418
      %2420 = vmatprep.mubr.f32.mxu0 0.0
      %2421 = vmatmul.mubr.f32.gmra.mrb[0].mxu0 %v2237
      %v2422 = vpop.f32.mrb[0].mxu0
      %v2423 = vadd.f32 0.0, %v2422
      %v2424 = vpop.f32.mrb[0].mxu0
      %v2425 = vadd.f32 0.0, %v2424
      %2426 = vmatprep.mubr.f32.mxu0 0.0
      %2427 = vmatmul.mubr.f32.gmra.mrb[0].mxu0 %v2240
      %v2428 = vpop.f32.mrb[0].mxu0
      %v2429 = vadd.f32 0.0, %v2428
      %v2430 = vpop.f32.mrb[0].mxu0
      %v2431 = vadd.f32 0.0, %v2430
      %2432 = vmatprep.mubr.f32.mxu0 0.0
      %2433 = vmatmul.mubr.f32.gmra.mrb[0].mxu0 %v2243
      %v2434 = vpop.f32.mrb[0].mxu0
      %v2435 = vadd.f32 0.0, %v2434
      %v2436 = vpop.f32.mrb[0].mxu0
      %v2437 = vadd.f32 0.0, %v2436
      %2438 = vmatprep.mubr.f32.mxu0 0.0
      %2439 = vmatmul.mubr.f32.gmra.mrb[0].mxu0 %v2246
      %v2440 = vpop.f32.mrb[0].mxu0
      %v2441 = vadd.f32 0.0, %v2440
      %v2442 = vpop.f32.mrb[0].mxu0
      %v2443 = vadd.f32 0.0, %v2442
      %2444 = vmatprep.mubr.f32.mxu0 0.0
      %2445 = vmatmul.mubr.f32.gmra.mrb[0].mxu0 %v2249
      %v2446 = vpop.f32.mrb[0].mxu0
      %v2447 = vadd.f32 0.0, %v2446
      %v2448 = vpop.f32.mrb[0].mxu0
      %v2449 = vadd.f32 0.0, %v2448
      %2450 = vmatprep.mubr.f32.mxu0 0.0
      %2451 = vmatmul.mubr.f32.gmra.mrb[0].mxu0 %v2252
      %v2452 = vpop.f32.mrb[0].mxu0
      %v2453 = vadd.f32 0.0, %v2452
      %v2454 = vpop.f32.mrb[0].mxu0
      %v2455 = vadd.f32 0.0, %v2454
      %2456 = vmatprep.mubr.f32.mxu0 0.0
      %2457 = vmatmul.mubr.f32.gmra.mrb[0].mxu0 %v2255
      %v2458 = vpop.f32.mrb[0].mxu0
      %v2459 = vadd.f32 0.0, %v2458
      %v2460 = vpop.f32.mrb[0].mxu0
      %v2461 = vadd.f32 0.0, %v2460
      %2462 = vmatprep.mubr.f32.mxu0 0.0
      %2463 = vmatmul.mubr.f32.gmra.mrb[0].mxu0 %v2258
      %v2464 = vpop.f32.mrb[0].mxu0
      %v2465 = vadd.f32 0.0, %v2464
      %v2466 = vpop.f32.mrb[0].mxu0
      %v2467 = vadd.f32 0.0, %v2466
      %2468 = vmatprep.mubr.f32.mxu0 0.0
      %2469 = vmatmul.mubr.f32.gmra.mrb[0].mxu0 %v2261
      %v2470 = vpop.f32.mrb[0].mxu0
      %v2471 = vadd.f32 0.0, %v2470
      %v2472 = vpop.f32.mrb[0].mxu0
      %v2473 = vadd.f32 0.0, %v2472
      %2474 = vmatprep.mubr.f32.mxu0 0.0
      %2475 = vmatmul.mubr.f32.gmra.mrb[0].mxu0 %v2264
      %v2476 = vpop.f32.mrb[0].mxu0
      %v2477 = vadd.f32 0.0, %v2476
      %v2478 = vpop.f32.mrb[0].mxu0
      %v2479 = vadd.f32 0.0, %v2478
      %2480 = vmatprep.mubr.f32.mxu0 0.0
      %2481 = vmatmul.mubr.f32.gmra.mrb[0].mxu0 %v2267
      %v2482 = vpop.f32.mrb[0].mxu0
      %v2483 = vadd.f32 0.0, %v2482
      %v2484 = vpop.f32.mrb[0].mxu0
      %v2485 = vadd.f32 0.0, %v2484
      %2486 = vmatprep.mubr.f32.mxu0 0.0
      %2487 = vmatmul.mubr.f32.gmra.mrb[0].mxu0 %v2270
      %v2488 = vpop.f32.mrb[0].mxu0
      %v2489 = vadd.f32 0.0, %v2488
      %v2490 = vpop.f32.mrb[0].mxu0
      %v2491 = vadd.f32 0.0, %v2490
      %2492 = vmatprep.mubr.f32.mxu0 0.0
      %2493 = vmatmul.mubr.f32.gmra.mrb[0].mxu0 %v2273
      %v2494 = vpop.f32.mrb[0].mxu0
      %v2495 = vadd.f32 0.0, %v2494
      %v2496 = vpop.f32.mrb[0].mxu0
      %v2497 = vadd.f32 0.0, %v2496
      %2498 = vmatprep.mubr.f32.mxu0 0.0
      %2499 = vmatmul.mubr.f32.gmra.mrb[0].mxu0 %v2276
      %v2500 = vpop.f32.mrb[0].mxu0
      %v2501 = vadd.f32 0.0, %v2500
      %v2502 = vpop.f32.mrb[0].mxu0
      %v2503 = vadd.f32 0.0, %v2502
      %2504 = vmatprep.mubr.f32.mxu0 0.0
      %2505 = vmatmul.mubr.f32.gmra.mrb[0].mxu0 %v2279
      %v2506 = vpop.f32.mrb[0].mxu0
      %v2507 = vadd.f32 0.0, %v2506
      %v2508 = vpop.f32.mrb[0].mxu0
      %v2509 = vadd.f32 0.0, %v2508
      %2510 = vmatprep.mubr.f32.mxu0 0.0
      %2511 = vmatmul.mubr.f32.gmra.mrb[0].mxu0 %v2282
      %v2512 = vpop.f32.mrb[0].mxu0
      %v2513 = vadd.f32 0.0, %v2512
      %v2514 = vpop.f32.mrb[0].mxu0
      %v2515 = vadd.f32 0.0, %v2514
      %2516 = vmatprep.mubr.f32.mxu0 0.0
      %2517 = vmatmul.mubr.f32.gmra.mrb[0].mxu0 %v2285
      %v2518 = vpop.f32.mrb[0].mxu0
      %v2519 = vadd.f32 0.0, %v2518
      %v2520 = vpop.f32.mrb[0].mxu0
      %v2521 = vadd.f32 0.0, %v2520
      %2522 = vmatprep.mubr.f32.mxu0 0.0
      %2523 = vmatmul.mubr.f32.gmra.mrb[0].mxu0 %v2288
      %v2524 = vpop.f32.mrb[0].mxu0
      %v2525 = vadd.f32 0.0, %v2524
      %v2526 = vpop.f32.mrb[0].mxu0
      %v2527 = vadd.f32 0.0, %v2526
      %2528 = vmatprep.mubr.f32.mxu0 0.0
      %2529 = vmatmul.mubr.f32.gmra.mrb[0].mxu0 %v2291
      %v2530 = vpop.f32.mrb[0].mxu0
      %v2531 = vadd.f32 0.0, %v2530
      %v2532 = vpop.f32.mrb[0].mxu0
      %v2533 = vadd.f32 0.0, %v2532
      %2534 = vmatprep.mubr.f32.mxu0 0.0
      %2535 = vmatmul.mubr.f32.gmra.mrb[0].mxu0 %v2294
      %v2536 = vpop.f32.mrb[0].mxu0
      %v2537 = vadd.f32 0.0, %v2536
      %v2538 = vpop.f32.mrb[0].mxu0
      %v2539 = vadd.f32 0.0, %v2538
      %2540 = vmatprep.mubr.f32.mxu0 0.0
      %2541 = vmatmul.mubr.f32.gmra.mrb[0].mxu0 %v2297
      %v2542 = vpop.f32.mrb[0].mxu0
      %v2543 = vadd.f32 0.0, %v2542
      %v2544 = vpop.f32.mrb[0].mxu0
      %v2545 = vadd.f32 0.0, %v2544
      %2546 = vmatprep.mubr.f32.mxu0 0.0
      %2547 = vmatmul.mubr.f32.gmra.mrb[0].mxu0 %v2300
      %v2548 = vpop.f32.mrb[0].mxu0
      %v2549 = vadd.f32 0.0, %v2548
      %v2550 = vpop.f32.mrb[0].mxu0
      %v2551 = vadd.f32 0.0, %v2550
      %2552 = vmatprep.mubr.f32.mxu0 0.0
      %2553 = vmatmul.mubr.f32.gmra.mrb[0].mxu0 %v2303
      %v2554 = vpop.f32.mrb[0].mxu0
      %v2555 = vadd.f32 0.0, %v2554
      %v2556 = vpop.f32.mrb[0].mxu0
      %v2557 = vadd.f32 0.0, %v2556
      %2558 = vmatprep.mubr.f32.mxu0 0.0
      %2559 = vmatmul.mubr.f32.gmra.mrb[0].mxu0 %v2306
      %v2560 = vpop.f32.mrb[0].mxu0
      %v2561 = vadd.f32 0.0, %v2560
      %v2562 = vpop.f32.mrb[0].mxu0
      %v2563 = vadd.f32 0.0, %v2562
      %2564 = vdwg.mxu0
      %v2565 = vadd.f32 %v2091, %v2375
      %v2566 = vadd.f32 %v2092, %v2377
      %v2567 = vadd.f32 %v2093, %v2381
      %v2568 = vadd.f32 %v2094, %v2383
      %v2569 = vadd.f32 %v2095, %v2387
      %v2570 = vadd.f32 %v2096, %v2389
      %v2571 = vadd.f32 %v2097, %v2393
      %v2572 = vadd.f32 %v2098, %v2395
      %v2573 = vadd.f32 %v2099, %v2399
      %v2574 = vadd.f32 %v2100, %v2401
      %v2575 = vadd.f32 %v2101, %v2405
      %v2576 = vadd.f32 %v2102, %v2407
      %v2577 = vadd.f32 %v2103, %v2411
      %v2578 = vadd.f32 %v2104, %v2413
      %v2579 = vadd.f32 %v2105, %v2417
      %v2580 = vadd.f32 %v2106, %v2419
      %v2581 = vadd.f32 %v2107, %v2423
      %v2582 = vadd.f32 %v2108, %v2425
      %v2583 = vadd.f32 %v2109, %v2429
      %v2584 = vadd.f32 %v2110, %v2431
      %v2585 = vadd.f32 %v2111, %v2435
      %v2586 = vadd.f32 %v2112, %v2437
      %v2587 = vadd.f32 %v2113, %v2441
      %v2588 = vadd.f32 %v2114, %v2443
      %v2589 = vadd.f32 %v2115, %v2447
      %v2590 = vadd.f32 %v2116, %v2449
      %v2591 = vadd.f32 %v2117, %v2453
      %v2592 = vadd.f32 %v2118, %v2455
      %v2593 = vadd.f32 %v2119, %v2459
      %v2594 = vadd.f32 %v2120, %v2461
      %v2595 = vadd.f32 %v2121, %v2465
      %v2596 = vadd.f32 %v2122, %v2467
      %v2597 = vadd.f32 %v2123, %v2471
      %v2598 = vadd.f32 %v2124, %v2473
      %v2599 = vadd.f32 %v2125, %v2477
      %v2600 = vadd.f32 %v2126, %v2479
      %v2601 = vadd.f32 %v2127, %v2483
      %v2602 = vadd.f32 %v2128, %v2485
      %v2603 = vadd.f32 %v2129, %v2489
      %v2604 = vadd.f32 %v2130, %v2491
      %v2605 = vadd.f32 %v2131, %v2495
      %v2606 = vadd.f32 %v2132, %v2497
      %v2607 = vadd.f32 %v2133, %v2501
      %v2608 = vadd.f32 %v2134, %v2503
      %v2609 = vadd.f32 %v2135, %v2507
      %v2610 = vadd.f32 %v2136, %v2509
      %v2611 = vadd.f32 %v2137, %v2513
      %v2612 = vadd.f32 %v2138, %v2515
      %v2613 = vadd.f32 %v2139, %v2519
      %v2614 = vadd.f32 %v2140, %v2521
      %v2615 = vadd.f32 %v2141, %v2525
      %v2616 = vadd.f32 %v2142, %v2527
      %v2617 = vadd.f32 %v2143, %v2531
      %v2618 = vadd.f32 %v2144, %v2533
      %v2619 = vadd.f32 %v2145, %v2537
      %v2620 = vadd.f32 %v2146, %v2539
      %v2621 = vadd.f32 %v2147, %v2543
      %v2622 = vadd.f32 %v2148, %v2545
      %v2623 = vadd.f32 %v2149, %v2549
      %v2624 = vadd.f32 %v2150, %v2551
      %v2625 = vadd.f32 %v2151, %v2555
      %v2626 = vadd.f32 %v2152, %v2557
      %v2627 = vadd.f32 %v2153, %v2561
      %v2628 = vadd.f32 %v2154, %v2563
      %vm2693 = vcmask 1046528
      %v2694 = vrot.slane %v2565, 1
      %v2695 = vrot.slane %v2567, 1
      %v2696 = vsel %vm2693, %v2694, %v2695
      %v2697 = vrot.slane %v2566, 1
      %v2698 = vrot.slane %v2568, 1
      %v2699 = vsel %vm2693, %v2697, %v2698
      %v2700 = vrot.slane %v2569, 1
      %v2701 = vsel %vm2693, %v2695, %v2700
      %v2702 = vrot.slane %v2570, 1
      %v2703 = vsel %vm2693, %v2698, %v2702
      %v2704 = vrot.slane %v2571, 1
      %v2705 = vsel %vm2693, %v2700, %v2704
      %v2706 = vrot.slane %v2572, 1
      %v2707 = vsel %vm2693, %v2702, %v2706
      %v2708 = vrot.slane %v2573, 1
      %v2709 = vsel %vm2693, %v2704, %v2708
      %v2710 = vrot.slane %v2574, 1
      %v2711 = vsel %vm2693, %v2706, %v2710
      %v2712 = vrot.slane %v2575, 1
      %v2713 = vsel %vm2693, %v2708, %v2712
      %v2714 = vrot.slane %v2576, 1
      %v2715 = vsel %vm2693, %v2710, %v2714
      %v2716 = vrot.slane %v2577, 1
      %v2717 = vsel %vm2693, %v2712, %v2716
      %v2718 = vrot.slane %v2578, 1
      %v2719 = vsel %vm2693, %v2714, %v2718
      %v2720 = vrot.slane %v2579, 1
      %v2721 = vsel %vm2693, %v2716, %v2720
      %v2722 = vrot.slane %v2580, 1
      %v2723 = vsel %vm2693, %v2718, %v2722
      %v2724 = vrot.slane %v2581, 1
      %v2725 = vsel %vm2693, %v2720, %v2724
      %v2726 = vrot.slane %v2582, 1
      %v2727 = vsel %vm2693, %v2722, %v2726
      %v2728 = vrot.slane %v2583, 1
      %v2729 = vsel %vm2693, %v2724, %v2728
      %v2730 = vrot.slane %v2584, 1
      %v2731 = vsel %vm2693, %v2726, %v2730
      %v2732 = vrot.slane %v2585, 1
      %v2733 = vsel %vm2693, %v2728, %v2732
      %v2734 = vrot.slane %v2586, 1
      %v2735 = vsel %vm2693, %v2730, %v2734
      %v2736 = vrot.slane %v2587, 1
      %v2737 = vsel %vm2693, %v2732, %v2736
      %v2738 = vrot.slane %v2588, 1
      %v2739 = vsel %vm2693, %v2734, %v2738
      %v2740 = vrot.slane %v2589, 1
      %v2741 = vsel %vm2693, %v2736, %v2740
      %v2742 = vrot.slane %v2590, 1
      %v2743 = vsel %vm2693, %v2738, %v2742
      %v2744 = vrot.slane %v2591, 1
      %v2745 = vsel %vm2693, %v2740, %v2744
      %v2746 = vrot.slane %v2592, 1
      %v2747 = vsel %vm2693, %v2742, %v2746
      %v2748 = vrot.slane %v2593, 1
      %v2749 = vsel %vm2693, %v2744, %v2748
      %v2750 = vrot.slane %v2594, 1
      %v2751 = vsel %vm2693, %v2746, %v2750
      %v2752 = vrot.slane %v2595, 1
      %v2753 = vsel %vm2693, %v2748, %v2752
      %v2754 = vrot.slane %v2596, 1
      %v2755 = vsel %vm2693, %v2750, %v2754
      %v2756 = vrot.slane %v2597, 1
      %v2757 = vsel %vm2693, %v2752, %v2756
      %v2758 = vrot.slane %v2598, 1
      %v2759 = vsel %vm2693, %v2754, %v2758
      %v2760 = vrot.slane %v2599, 1
      %v2761 = vsel %vm2693, %v2756, %v2760
      %v2762 = vrot.slane %v2600, 1
      %v2763 = vsel %vm2693, %v2758, %v2762
      %v2764 = vrot.slane %v2601, 1
      %v2765 = vsel %vm2693, %v2760, %v2764
      %v2766 = vrot.slane %v2602, 1
      %v2767 = vsel %vm2693, %v2762, %v2766
      %v2768 = vrot.slane %v2603, 1
      %v2769 = vsel %vm2693, %v2764, %v2768
      %v2770 = vrot.slane %v2604, 1
      %v2771 = vsel %vm2693, %v2766, %v2770
      %v2772 = vrot.slane %v2605, 1
      %v2773 = vsel %vm2693, %v2768, %v2772
      %v2774 = vrot.slane %v2606, 1
      %v2775 = vsel %vm2693, %v2770, %v2774
      %v2776 = vrot.slane %v2607, 1
      %v2777 = vsel %vm2693, %v2772, %v2776
      %v2778 = vrot.slane %v2608, 1
      %v2779 = vsel %vm2693, %v2774, %v2778
      %v2780 = vrot.slane %v2609, 1
      %v2781 = vsel %vm2693, %v2776, %v2780
      %v2782 = vrot.slane %v2610, 1
      %v2783 = vsel %vm2693, %v2778, %v2782
      %v2784 = vrot.slane %v2611, 1
      %v2785 = vsel %vm2693, %v2780, %v2784
      %v2786 = vrot.slane %v2612, 1
      %v2787 = vsel %vm2693, %v2782, %v2786
      %v2788 = vrot.slane %v2613, 1
      %v2789 = vsel %vm2693, %v2784, %v2788
      %v2790 = vrot.slane %v2614, 1
      %v2791 = vsel %vm2693, %v2786, %v2790
      %v2792 = vrot.slane %v2615, 1
      %v2793 = vsel %vm2693, %v2788, %v2792
      %v2794 = vrot.slane %v2616, 1
      %v2795 = vsel %vm2693, %v2790, %v2794
      %v2796 = vrot.slane %v2617, 1
      %v2797 = vsel %vm2693, %v2792, %v2796
      %v2798 = vrot.slane %v2618, 1
      %v2799 = vsel %vm2693, %v2794, %v2798
      %v2800 = vrot.slane %v2619, 1
      %v2801 = vsel %vm2693, %v2796, %v2800
      %v2802 = vrot.slane %v2620, 1
      %v2803 = vsel %vm2693, %v2798, %v2802
      %v2804 = vrot.slane %v2621, 1
      %v2805 = vsel %vm2693, %v2800, %v2804
      %v2806 = vrot.slane %v2622, 1
      %v2807 = vsel %vm2693, %v2802, %v2806
      %v2808 = vrot.slane %v2623, 1
      %v2809 = vsel %vm2693, %v2804, %v2808
      %v2810 = vrot.slane %v2624, 1
      %v2811 = vsel %vm2693, %v2806, %v2810
      %v2812 = vrot.slane %v2625, 1
      %v2813 = vsel %vm2693, %v2808, %v2812
      %v2814 = vrot.slane %v2626, 1
      %v2815 = vsel %vm2693, %v2810, %v2814
      %v2816 = vrot.slane %v2627, 1
      %v2817 = vsel %vm2693, %v2812, %v2816
      %v2818 = vrot.slane %v2628, 1
      %v2819 = vsel %vm2693, %v2814, %v2818
      %v2884 = vmax.f32 %v2565, %v2696
      %v2885 = vmax.f32 %v2566, %v2699
      %v2886 = vmax.f32 %v2567, %v2701
      %v2887 = vmax.f32 %v2568, %v2703
      %v2888 = vmax.f32 %v2569, %v2705
      %v2889 = vmax.f32 %v2570, %v2707
      %v2890 = vmax.f32 %v2571, %v2709
      %v2891 = vmax.f32 %v2572, %v2711
      %v2892 = vmax.f32 %v2573, %v2713
      %v2893 = vmax.f32 %v2574, %v2715
      %v2894 = vmax.f32 %v2575, %v2717
      %v2895 = vmax.f32 %v2576, %v2719
      %v2896 = vmax.f32 %v2577, %v2721
      %v2897 = vmax.f32 %v2578, %v2723
      %v2898 = vmax.f32 %v2579, %v2725
      %v2899 = vmax.f32 %v2580, %v2727
      %v2900 = vmax.f32 %v2581, %v2729
      %v2901 = vmax.f32 %v2582, %v2731
      %v2902 = vmax.f32 %v2583, %v2733
      %v2903 = vmax.f32 %v2584, %v2735
      %v2904 = vmax.f32 %v2585, %v2737
      %v2905 = vmax.f32 %v2586, %v2739
      %v2906 = vmax.f32 %v2587, %v2741
      %v2907 = vmax.f32 %v2588, %v2743
      %v2908 = vmax.f32 %v2589, %v2745
      %v2909 = vmax.f32 %v2590, %v2747
      %v2910 = vmax.f32 %v2591, %v2749
      %v2911 = vmax.f32 %v2592, %v2751
      %v2912 = vmax.f32 %v2593, %v2753
      %v2913 = vmax.f32 %v2594, %v2755
      %v2914 = vmax.f32 %v2595, %v2757
      %v2915 = vmax.f32 %v2596, %v2759
      %v2916 = vmax.f32 %v2597, %v2761
      %v2917 = vmax.f32 %v2598, %v2763
      %v2918 = vmax.f32 %v2599, %v2765
      %v2919 = vmax.f32 %v2600, %v2767
      %v2920 = vmax.f32 %v2601, %v2769
      %v2921 = vmax.f32 %v2602, %v2771
      %v2922 = vmax.f32 %v2603, %v2773
      %v2923 = vmax.f32 %v2604, %v2775
      %v2924 = vmax.f32 %v2605, %v2777
      %v2925 = vmax.f32 %v2606, %v2779
      %v2926 = vmax.f32 %v2607, %v2781
      %v2927 = vmax.f32 %v2608, %v2783
      %v2928 = vmax.f32 %v2609, %v2785
      %v2929 = vmax.f32 %v2610, %v2787
      %v2930 = vmax.f32 %v2611, %v2789
      %v2931 = vmax.f32 %v2612, %v2791
      %v2932 = vmax.f32 %v2613, %v2793
      %v2933 = vmax.f32 %v2614, %v2795
      %v2934 = vmax.f32 %v2615, %v2797
      %v2935 = vmax.f32 %v2616, %v2799
      %v2936 = vmax.f32 %v2617, %v2801
      %v2937 = vmax.f32 %v2618, %v2803
      %v2938 = vmax.f32 %v2619, %v2805
      %v2939 = vmax.f32 %v2620, %v2807
      %v2940 = vmax.f32 %v2621, %v2809
      %v2941 = vmax.f32 %v2622, %v2811
      %v2942 = vmax.f32 %v2623, %v2813
      %v2943 = vmax.f32 %v2624, %v2815
      %v2944 = vmax.f32 %v2625, %v2817
      %v2945 = vmax.f32 %v2626, %v2819
      %v2946 = vmax.f32 %v2627, %v2816
      %v2947 = vmax.f32 %v2628, %v2818
      %3012 = vrot.lane.b32.xlu0 %v2884, 122
      %v3013 = vpop.permute.xlu0 %3012
      %3014 = vrot.lane.b32.xlu0 %v2885, 122
      %v3015 = vpop.permute.xlu0 %3014
      %3016 = vrot.lane.b32.xlu0 %v2886, 122
      %v3017 = vpop.permute.xlu0 %3016
      %3018 = vrot.lane.b32.xlu0 %v2887, 122
      %v3019 = vpop.permute.xlu0 %3018
      %3020 = vrot.lane.b32.xlu0 %v2888, 122
      %v3021 = vpop.permute.xlu0 %3020
      %3022 = vrot.lane.b32.xlu0 %v2889, 122
      %v3023 = vpop.permute.xlu0 %3022
      %3024 = vrot.lane.b32.xlu0 %v2890, 122
      %v3025 = vpop.permute.xlu0 %3024
      %3026 = vrot.lane.b32.xlu0 %v2891, 122
      %v3027 = vpop.permute.xlu0 %3026
      %3028 = vrot.lane.b32.xlu0 %v2892, 122
      %v3029 = vpop.permute.xlu0 %3028
      %3030 = vrot.lane.b32.xlu0 %v2893, 122
      %v3031 = vpop.permute.xlu0 %3030
      %3032 = vrot.lane.b32.xlu0 %v2894, 122
      %v3033 = vpop.permute.xlu0 %3032
      %3034 = vrot.lane.b32.xlu0 %v2895, 122
      %v3035 = vpop.permute.xlu0 %3034
      %3036 = vrot.lane.b32.xlu0 %v2896, 122
      %v3037 = vpop.permute.xlu0 %3036
      %3038 = vrot.lane.b32.xlu0 %v2897, 122
      %v3039 = vpop.permute.xlu0 %3038
      %3040 = vrot.lane.b32.xlu0 %v2898, 122
      %v3041 = vpop.permute.xlu0 %3040
      %3042 = vrot.lane.b32.xlu0 %v2899, 122
      %v3043 = vpop.permute.xlu0 %3042
      %3044 = vrot.lane.b32.xlu0 %v2900, 122
      %v3045 = vpop.permute.xlu0 %3044
      %3046 = vrot.lane.b32.xlu0 %v2901, 122
      %v3047 = vpop.permute.xlu0 %3046
      %3048 = vrot.lane.b32.xlu0 %v2902, 122
      %v3049 = vpop.permute.xlu0 %3048
      %3050 = vrot.lane.b32.xlu0 %v2903, 122
      %v3051 = vpop.permute.xlu0 %3050
      %3052 = vrot.lane.b32.xlu0 %v2904, 122
      %v3053 = vpop.permute.xlu0 %3052
      %3054 = vrot.lane.b32.xlu0 %v2905, 122
      %v3055 = vpop.permute.xlu0 %3054
      %3056 = vrot.lane.b32.xlu0 %v2906, 122
      %v3057 = vpop.permute.xlu0 %3056
      %3058 = vrot.lane.b32.xlu0 %v2907, 122
      %v3059 = vpop.permute.xlu0 %3058
      %3060 = vrot.lane.b32.xlu0 %v2908, 122
      %v3061 = vpop.permute.xlu0 %3060
      %3062 = vrot.lane.b32.xlu0 %v2909, 122
      %v3063 = vpop.permute.xlu0 %3062
      %3064 = vrot.lane.b32.xlu0 %v2910, 122
      %v3065 = vpop.permute.xlu0 %3064
      %3066 = vrot.lane.b32.xlu0 %v2911, 122
      %v3067 = vpop.permute.xlu0 %3066
      %3068 = vrot.lane.b32.xlu0 %v2912, 122
      %v3069 = vpop.permute.xlu0 %3068
      %3070 = vrot.lane.b32.xlu0 %v2913, 122
      %v3071 = vpop.permute.xlu0 %3070
      %3072 = vrot.lane.b32.xlu0 %v2914, 122
      %v3073 = vpop.permute.xlu0 %3072
      %3074 = vrot.lane.b32.xlu0 %v2915, 122
      %v3075 = vpop.permute.xlu0 %3074
      %3076 = vrot.lane.b32.xlu0 %v2916, 122
      %v3077 = vpop.permute.xlu0 %3076
      %3078 = vrot.lane.b32.xlu0 %v2917, 122
      %v3079 = vpop.permute.xlu0 %3078
      %3080 = vrot.lane.b32.xlu0 %v2918, 122
      %v3081 = vpop.permute.xlu0 %3080
      %3082 = vrot.lane.b32.xlu0 %v2919, 122
      %v3083 = vpop.permute.xlu0 %3082
      %3084 = vrot.lane.b32.xlu0 %v2920, 122
      %v3085 = vpop.permute.xlu0 %3084
      %3086 = vrot.lane.b32.xlu0 %v2921, 122
      %v3087 = vpop.permute.xlu0 %3086
      %3088 = vrot.lane.b32.xlu0 %v2922, 122
      %v3089 = vpop.permute.xlu0 %3088
      %3090 = vrot.lane.b32.xlu0 %v2923, 122
      %v3091 = vpop.permute.xlu0 %3090
      %3092 = vrot.lane.b32.xlu0 %v2924, 122
      %v3093 = vpop.permute.xlu0 %3092
      %3094 = vrot.lane.b32.xlu0 %v2925, 122
      %v3095 = vpop.permute.xlu0 %3094
      %3096 = vrot.lane.b32.xlu0 %v2926, 122
      %v3097 = vpop.permute.xlu0 %3096
      %3098 = vrot.lane.b32.xlu0 %v2927, 122
      %v3099 = vpop.permute.xlu0 %3098
      %3100 = vrot.lane.b32.xlu0 %v2928, 122
      %v3101 = vpop.permute.xlu0 %3100
      %3102 = vrot.lane.b32.xlu0 %v2929, 122
      %v3103 = vpop.permute.xlu0 %3102
      %3104 = vrot.lane.b32.xlu0 %v2930, 122
      %v3105 = vpop.permute.xlu0 %3104
      %3106 = vrot.lane.b32.xlu0 %v2931, 122
      %v3107 = vpop.permute.xlu0 %3106
      %3108 = vrot.lane.b32.xlu0 %v2932, 122
      %v3109 = vpop.permute.xlu0 %3108
      %3110 = vrot.lane.b32.xlu0 %v2933, 122
      %v3111 = vpop.permute.xlu0 %3110
      %3112 = vrot.lane.b32.xlu0 %v2934, 122
      %v3113 = vpop.permute.xlu0 %3112
      %3114 = vrot.lane.b32.xlu0 %v2935, 122
      %v3115 = vpop.permute.xlu0 %3114
      %3116 = vrot.lane.b32.xlu0 %v2936, 122
      %v3117 = vpop.permute.xlu0 %3116
      %3118 = vrot.lane.b32.xlu0 %v2937, 122
      %v3119 = vpop.permute.xlu0 %3118
      %3120 = vrot.lane.b32.xlu0 %v2938, 122
      %v3121 = vpop.permute.xlu0 %3120
      %3122 = vrot.lane.b32.xlu0 %v2939, 122
      %v3123 = vpop.permute.xlu0 %3122
      %3124 = vrot.lane.b32.xlu0 %v2940, 122
      %v3125 = vpop.permute.xlu0 %3124
      %3126 = vrot.lane.b32.xlu0 %v2941, 122
      %v3127 = vpop.permute.xlu0 %3126
      %3128 = vrot.lane.b32.xlu0 %v2942, 122
      %v3129 = vpop.permute.xlu0 %3128
      %3130 = vrot.lane.b32.xlu0 %v2943, 122
      %v3131 = vpop.permute.xlu0 %3130
      %3132 = vrot.lane.b32.xlu0 %v2944, 122
      %v3133 = vpop.permute.xlu0 %3132
      %3134 = vrot.lane.b32.xlu0 %v2945, 122
      %v3135 = vpop.permute.xlu0 %3134
      %3136 = vrot.lane.b32.xlu0 %v2946, 122
      %v3137 = vpop.permute.xlu0 %3136
      %3138 = vrot.lane.b32.xlu0 %v2947, 122
      %v3139 = vpop.permute.xlu0 %3138
      %vm3140 = vcmask 998400
      %v3141 = vsel %vm3140, %v3013, %v3015
      %v3142 = vsel %vm3140, %v3017, %v3019
      %v3143 = vsel %vm3140, %v3021, %v3023
      %v3144 = vsel %vm3140, %v3025, %v3027
      %v3145 = vsel %vm3140, %v3029, %v3031
      %v3146 = vsel %vm3140, %v3033, %v3035
      %v3147 = vsel %vm3140, %v3037, %v3039
      %v3148 = vsel %vm3140, %v3041, %v3043
      %v3149 = vsel %vm3140, %v3045, %v3047
      %v3150 = vsel %vm3140, %v3049, %v3051
      %v3151 = vsel %vm3140, %v3053, %v3055
      %v3152 = vsel %vm3140, %v3057, %v3059
      %v3153 = vsel %vm3140, %v3061, %v3063
      %v3154 = vsel %vm3140, %v3065, %v3067
      %v3155 = vsel %vm3140, %v3069, %v3071
      %v3156 = vsel %vm3140, %v3073, %v3075
      %v3157 = vsel %vm3140, %v3077, %v3079
      %v3158 = vsel %vm3140, %v3081, %v3083
      %v3159 = vsel %vm3140, %v3085, %v3087
      %v3160 = vsel %vm3140, %v3089, %v3091
      %v3161 = vsel %vm3140, %v3093, %v3095
      %v3162 = vsel %vm3140, %v3097, %v3099
      %v3163 = vsel %vm3140, %v3101, %v3103
      %v3164 = vsel %vm3140, %v3105, %v3107
      %v3165 = vsel %vm3140, %v3109, %v3111
      %v3166 = vsel %vm3140, %v3113, %v3115
      %v3167 = vsel %vm3140, %v3117, %v3119
      %v3168 = vsel %vm3140, %v3121, %v3123
      %v3169 = vsel %vm3140, %v3125, %v3127
      %v3170 = vsel %vm3140, %v3129, %v3131
      %v3171 = vsel %vm3140, %v3133, %v3135
      %v3172 = vsel %vm3140, %v3137, %v3139
      %v3237 = vmax.f32 %v2884, %v3141
      %v3238 = vmax.f32 %v2885, %v3015
      %v3239 = vmax.f32 %v2886, %v3142
      %v3240 = vmax.f32 %v2887, %v3019
      %v3241 = vmax.f32 %v2888, %v3143
      %v3242 = vmax.f32 %v2889, %v3023
      %v3243 = vmax.f32 %v2890, %v3144
      %v3244 = vmax.f32 %v2891, %v3027
      %v3245 = vmax.f32 %v2892, %v3145
      %v3246 = vmax.f32 %v2893, %v3031
      %v3247 = vmax.f32 %v2894, %v3146
      %v3248 = vmax.f32 %v2895, %v3035
      %v3249 = vmax.f32 %v2896, %v3147
      %v3250 = vmax.f32 %v2897, %v3039
      %v3251 = vmax.f32 %v2898, %v3148
      %v3252 = vmax.f32 %v2899, %v3043
      %v3253 = vmax.f32 %v2900, %v3149
      %v3254 = vmax.f32 %v2901, %v3047
      %v3255 = vmax.f32 %v2902, %v3150
      %v3256 = vmax.f32 %v2903, %v3051
      %v3257 = vmax.f32 %v2904, %v3151
      %v3258 = vmax.f32 %v2905, %v3055
      %v3259 = vmax.f32 %v2906, %v3152
      %v3260 = vmax.f32 %v2907, %v3059
      %v3261 = vmax.f32 %v2908, %v3153
      %v3262 = vmax.f32 %v2909, %v3063
      %v3263 = vmax.f32 %v2910, %v3154
      %v3264 = vmax.f32 %v2911, %v3067
      %v3265 = vmax.f32 %v2912, %v3155
      %v3266 = vmax.f32 %v2913, %v3071
      %v3267 = vmax.f32 %v2914, %v3156
      %v3268 = vmax.f32 %v2915, %v3075
      %v3269 = vmax.f32 %v2916, %v3157
      %v3270 = vmax.f32 %v2917, %v3079
      %v3271 = vmax.f32 %v2918, %v3158
      %v3272 = vmax.f32 %v2919, %v3083
      %v3273 = vmax.f32 %v2920, %v3159
      %v3274 = vmax.f32 %v2921, %v3087
      %v3275 = vmax.f32 %v2922, %v3160
      %v3276 = vmax.f32 %v2923, %v3091
      %v3277 = vmax.f32 %v2924, %v3161
      %v3278 = vmax.f32 %v2925, %v3095
      %v3279 = vmax.f32 %v2926, %v3162
      %v3280 = vmax.f32 %v2927, %v3099
      %v3281 = vmax.f32 %v2928, %v3163
      %v3282 = vmax.f32 %v2929, %v3103
      %v3283 = vmax.f32 %v2930, %v3164
      %v3284 = vmax.f32 %v2931, %v3107
      %v3285 = vmax.f32 %v2932, %v3165
      %v3286 = vmax.f32 %v2933, %v3111
      %v3287 = vmax.f32 %v2934, %v3166
      %v3288 = vmax.f32 %v2935, %v3115
      %v3289 = vmax.f32 %v2936, %v3167
      %v3290 = vmax.f32 %v2937, %v3119
      %v3291 = vmax.f32 %v2938, %v3168
      %v3292 = vmax.f32 %v2939, %v3123
      %v3293 = vmax.f32 %v2940, %v3169
      %v3294 = vmax.f32 %v2941, %v3127
      %v3295 = vmax.f32 %v2942, %v3170
      %v3296 = vmax.f32 %v2943, %v3131
      %v3297 = vmax.f32 %v2944, %v3171
      %v3298 = vmax.f32 %v2945, %v3135
      %v3299 = vmax.f32 %v2946, %v3172
      %v3300 = vmax.f32 %v2947, %v3139
      %v3301 = vld [vmem:[%s2] sm:$0x3]
      %v3303 = vlaneseq
      %v3304 = vshrl.u32 %v3303, 7
      %v3305 = vsub.s32 0, %v3304
      %v3306 = vrot.slane %v3301, %v3305
      %v3307 = vlaneseq
      %v3308 = vshrl.u32 %v3307, 7
      %v3309 = vsub.s32 1, %v3308
      %v3310 = vrot.slane %v3301, %v3309
      %v3313 = vadd.f32 %v3237, %v3306
      %v3314 = vadd.f32 %v3238, %v3310
      %v3315 = vadd.f32 %v3239, %v3306
      %v3316 = vadd.f32 %v3240, %v3310
      %v3317 = vadd.f32 %v3241, %v3306
      %v3318 = vadd.f32 %v3242, %v3310
      %v3319 = vadd.f32 %v3243, %v3306
      %v3320 = vadd.f32 %v3244, %v3310
      %v3321 = vadd.f32 %v3245, %v3306
      %v3322 = vadd.f32 %v3246, %v3310
      %v3323 = vadd.f32 %v3247, %v3306
      %v3324 = vadd.f32 %v3248, %v3310
      %v3325 = vadd.f32 %v3249, %v3306
      %v3326 = vadd.f32 %v3250, %v3310
      %v3327 = vadd.f32 %v3251, %v3306
      %v3328 = vadd.f32 %v3252, %v3310
      %v3329 = vadd.f32 %v3253, %v3306
      %v3330 = vadd.f32 %v3254, %v3310
      %v3331 = vadd.f32 %v3255, %v3306
      %v3332 = vadd.f32 %v3256, %v3310
      %v3333 = vadd.f32 %v3257, %v3306
      %v3334 = vadd.f32 %v3258, %v3310
      %v3335 = vadd.f32 %v3259, %v3306
      %v3336 = vadd.f32 %v3260, %v3310
      %v3337 = vadd.f32 %v3261, %v3306
      %v3338 = vadd.f32 %v3262, %v3310
      %v3339 = vadd.f32 %v3263, %v3306
      %v3340 = vadd.f32 %v3264, %v3310
      %v3341 = vadd.f32 %v3265, %v3306
      %v3342 = vadd.f32 %v3266, %v3310
      %v3343 = vadd.f32 %v3267, %v3306
      %v3344 = vadd.f32 %v3268, %v3310
      %v3345 = vadd.f32 %v3269, %v3306
      %v3346 = vadd.f32 %v3270, %v3310
      %v3347 = vadd.f32 %v3271, %v3306
      %v3348 = vadd.f32 %v3272, %v3310
      %v3349 = vadd.f32 %v3273, %v3306
      %v3350 = vadd.f32 %v3274, %v3310
      %v3351 = vadd.f32 %v3275, %v3306
      %v3352 = vadd.f32 %v3276, %v3310
      %v3353 = vadd.f32 %v3277, %v3306
      %v3354 = vadd.f32 %v3278, %v3310
      %v3355 = vadd.f32 %v3279, %v3306
      %v3356 = vadd.f32 %v3280, %v3310
      %v3357 = vadd.f32 %v3281, %v3306
      %v3358 = vadd.f32 %v3282, %v3310
      %v3359 = vadd.f32 %v3283, %v3306
      %v3360 = vadd.f32 %v3284, %v3310
      %v3361 = vadd.f32 %v3285, %v3306
      %v3362 = vadd.f32 %v3286, %v3310
      %v3363 = vadd.f32 %v3287, %v3306
      %v3364 = vadd.f32 %v3288, %v3310
      %v3365 = vadd.f32 %v3289, %v3306
      %v3366 = vadd.f32 %v3290, %v3310
      %v3367 = vadd.f32 %v3291, %v3306
      %v3368 = vadd.f32 %v3292, %v3310
      %v3369 = vadd.f32 %v3293, %v3306
      %v3370 = vadd.f32 %v3294, %v3310
      %v3371 = vadd.f32 %v3295, %v3306
      %v3372 = vadd.f32 %v3296, %v3310
      %v3373 = vadd.f32 %v3297, %v3306
      %v3374 = vadd.f32 %v3298, %v3310
      %v3375 = vadd.f32 %v3299, %v3306
      %v3376 = vadd.f32 %v3300, %v3310
      %v3377 = vmax.f32 %v3313, 0.0
      %v3378 = vmax.f32 %v3314, 0.0
      %v3379 = vmax.f32 %v3315, 0.0
      %v3380 = vmax.f32 %v3316, 0.0
      %v3381 = vmax.f32 %v3317, 0.0
      %v3382 = vmax.f32 %v3318, 0.0
      %v3383 = vmax.f32 %v3319, 0.0
      %v3384 = vmax.f32 %v3320, 0.0
      %v3385 = vmax.f32 %v3321, 0.0
      %v3386 = vmax.f32 %v3322, 0.0
      %v3387 = vmax.f32 %v3323, 0.0
      %v3388 = vmax.f32 %v3324, 0.0
      %v3389 = vmax.f32 %v3325, 0.0
      %v3390 = vmax.f32 %v3326, 0.0
      %v3391 = vmax.f32 %v3327, 0.0
      %v3392 = vmax.f32 %v3328, 0.0
      %v3393 = vmax.f32 %v3329, 0.0
      %v3394 = vmax.f32 %v3330, 0.0
      %v3395 = vmax.f32 %v3331, 0.0
      %v3396 = vmax.f32 %v3332, 0.0
      %v3397 = vmax.f32 %v3333, 0.0
      %v3398 = vmax.f32 %v3334, 0.0
      %v3399 = vmax.f32 %v3335, 0.0
      %v3400 = vmax.f32 %v3336, 0.0
      %v3401 = vmax.f32 %v3337, 0.0
      %v3402 = vmax.f32 %v3338, 0.0
      %v3403 = vmax.f32 %v3339, 0.0
      %v3404 = vmax.f32 %v3340, 0.0
      %v3405 = vmax.f32 %v3341, 0.0
      %v3406 = vmax.f32 %v3342, 0.0
      %v3407 = vmax.f32 %v3343, 0.0
      %v3408 = vmax.f32 %v3344, 0.0
      %v3409 = vmax.f32 %v3345, 0.0
      %v3410 = vmax.f32 %v3346, 0.0
      %v3411 = vmax.f32 %v3347, 0.0
      %v3412 = vmax.f32 %v3348, 0.0
      %v3413 = vmax.f32 %v3349, 0.0
      %v3414 = vmax.f32 %v3350, 0.0
      %v3415 = vmax.f32 %v3351, 0.0
      %v3416 = vmax.f32 %v3352, 0.0
      %v3417 = vmax.f32 %v3353, 0.0
      %v3418 = vmax.f32 %v3354, 0.0
      %v3419 = vmax.f32 %v3355, 0.0
      %v3420 = vmax.f32 %v3356, 0.0
      %v3421 = vmax.f32 %v3357, 0.0
      %v3422 = vmax.f32 %v3358, 0.0
      %v3423 = vmax.f32 %v3359, 0.0
      %v3424 = vmax.f32 %v3360, 0.0
      %v3425 = vmax.f32 %v3361, 0.0
      %v3426 = vmax.f32 %v3362, 0.0
      %v3427 = vmax.f32 %v3363, 0.0
      %v3428 = vmax.f32 %v3364, 0.0
      %v3429 = vmax.f32 %v3365, 0.0
      %v3430 = vmax.f32 %v3366, 0.0
      %v3431 = vmax.f32 %v3367, 0.0
      %v3432 = vmax.f32 %v3368, 0.0
      %v3433 = vmax.f32 %v3369, 0.0
      %v3434 = vmax.f32 %v3370, 0.0
      %v3435 = vmax.f32 %v3371, 0.0
      %v3436 = vmax.f32 %v3372, 0.0
      %v3437 = vmax.f32 %v3373, 0.0
      %v3438 = vmax.f32 %v3374, 0.0
      %v3439 = vmax.f32 %v3375, 0.0
      %v3440 = vmax.f32 %v3376, 0.0
      %v3441 = vld [vmem:[%s3] sm:$0xff]
      %v3442 = vld [vmem:[%s3 + $0x8] sm:$0xff]
      %v3443 = vld [vmem:[%s3 + $0x10] sm:$0xff]
      %v3444 = vld [vmem:[%s3 + $0x18] sm:$0xff]
      %v3445 = vld [vmem:[%s3 + $0x20] sm:$0xff]
      %v3446 = vld [vmem:[%s3 + $0x28] sm:$0xff]
      %v3447 = vld [vmem:[%s3 + $0x30] sm:$0xff]
      %v3448 = vld [vmem:[%s3 + $0x38] sm:$0xff]
      %v3449 = vld [vmem:[%s3 + $0x40] sm:$0xff]
      %v3450 = vld [vmem:[%s3 + $0x48] sm:$0xff]
      %v3451 = vld [vmem:[%s3 + $0x50] sm:$0xff]
      %v3452 = vld [vmem:[%s3 + $0x58] sm:$0xff]
      %v3453 = vld [vmem:[%s3 + $0x60] sm:$0xff]
      %v3454 = vld [vmem:[%s3 + $0x68] sm:$0xff]
      %v3455 = vld [vmem:[%s3 + $0x70] sm:$0xff]
      %v3456 = vld [vmem:[%s3 + $0x78] sm:$0xff]
      %v3457 = vld [vmem:[%s3 + $0x80] sm:$0xff]
      %v3458 = vld [vmem:[%s3 + $0x88] sm:$0xff]
      %v3459 = vld [vmem:[%s3 + $0x90] sm:$0xff]
      %v3460 = vld [vmem:[%s3 + $0x98] sm:$0xff]
      %v3461 = vld [vmem:[%s3 + $0xa0] sm:$0xff]
      %v3462 = vld [vmem:[%s3 + $0xa8] sm:$0xff]
      %v3463 = vld [vmem:[%s3 + $0xb0] sm:$0xff]
      %v3464 = vld [vmem:[%s3 + $0xb8] sm:$0xff]
      %v3465 = vld [vmem:[%s3 + $0xc0] sm:$0xff]
      %v3466 = vld [vmem:[%s3 + $0xc8] sm:$0xff]
      %v3467 = vld [vmem:[%s3 + $0xd0] sm:$0xff]
      %v3468 = vld [vmem:[%s3 + $0xd8] sm:$0xff]
      %v3469 = vld [vmem:[%s3 + $0xe0] sm:$0xff]
      %v3470 = vld [vmem:[%s3 + $0xe8] sm:$0xff]
      %v3471 = vld [vmem:[%s3 + $0xf0] sm:$0xff]
      %v3472 = vld [vmem:[%s3 + $0xf8] sm:$0xff]
      %v3473 = vld [vmem:[%s3 + $0x100] sm:$0xff]
      %v3474 = vld [vmem:[%s3 + $0x108] sm:$0xff]
      %v3475 = vld [vmem:[%s3 + $0x110] sm:$0xff]
      %v3476 = vld [vmem:[%s3 + $0x118] sm:$0xff]
      %v3477 = vld [vmem:[%s3 + $0x120] sm:$0xff]
      %v3478 = vld [vmem:[%s3 + $0x128] sm:$0xff]
      %v3479 = vld [vmem:[%s3 + $0x130] sm:$0xff]
      %v3480 = vld [vmem:[%s3 + $0x138] sm:$0xff]
      %v3481 = vld [vmem:[%s3 + $0x140] sm:$0x3]
      %v3482 = vld [vmem:[%s3 + $0x148] sm:$0x3]
      %s3483 = scalar_lea.vmem %s3, 336
      %v3484 = vld [vmem:[%s3483] sm:$0xff]
      %v3485 = vld [vmem:[%s3483 + $0x8] sm:$0xff]
      %v3486 = vld [vmem:[%s3483 + $0x10] sm:$0xff]
      %v3487 = vld [vmem:[%s3483 + $0x18] sm:$0xff]
      %v3488 = vld [vmem:[%s3483 + $0x20] sm:$0xff]
      %v3489 = vld [vmem:[%s3483 + $0x28] sm:$0xff]
      %v3490 = vld [vmem:[%s3483 + $0x30] sm:$0xff]
      %v3491 = vld [vmem:[%s3483 + $0x38] sm:$0xff]
      %v3492 = vld [vmem:[%s3483 + $0x40] sm:$0xff]
      %v3493 = vld [vmem:[%s3483 + $0x48] sm:$0xff]
      %v3494 = vld [vmem:[%s3483 + $0x50] sm:$0xff]
      %v3495 = vld [vmem:[%s3483 + $0x58] sm:$0xff]
      %v3496 = vld [vmem:[%s3483 + $0x60] sm:$0xff]
      %v3497 = vld [vmem:[%s3483 + $0x68] sm:$0xff]
      %v3498 = vld [vmem:[%s3483 + $0x70] sm:$0xff]
      %v3499 = vld [vmem:[%s3483 + $0x78] sm:$0xff]
      %v3500 = vld [vmem:[%s3483 + $0x80] sm:$0xff]
      %v3501 = vld [vmem:[%s3483 + $0x88] sm:$0xff]
      %v3502 = vld [vmem:[%s3483 + $0x90] sm:$0xff]
      %v3503 = vld [vmem:[%s3483 + $0x98] sm:$0xff]
      %v3504 = vld [vmem:[%s3483 + $0xa0] sm:$0xff]
      %v3505 = vld [vmem:[%s3483 + $0xa8] sm:$0xff]
      %v3506 = vld [vmem:[%s3483 + $0xb0] sm:$0xff]
      %v3507 = vld [vmem:[%s3483 + $0xb8] sm:$0xff]
      %v3508 = vld [vmem:[%s3483 + $0xc0] sm:$0xff]
      %v3509 = vld [vmem:[%s3483 + $0xc8] sm:$0xff]
      %v3510 = vld [vmem:[%s3483 + $0xd0] sm:$0xff]
      %v3511 = vld [vmem:[%s3483 + $0xd8] sm:$0xff]
      %v3512 = vld [vmem:[%s3483 + $0xe0] sm:$0xff]
      %v3513 = vld [vmem:[%s3483 + $0xe8] sm:$0xff]
      %v3514 = vld [vmem:[%s3483 + $0xf0] sm:$0xff]
      %v3515 = vld [vmem:[%s3483 + $0xf8] sm:$0xff]
      %v3516 = vld [vmem:[%s3483 + $0x100] sm:$0xff]
      %v3517 = vld [vmem:[%s3483 + $0x108] sm:$0xff]
      %v3518 = vld [vmem:[%s3483 + $0x110] sm:$0xff]
      %v3519 = vld [vmem:[%s3483 + $0x118] sm:$0xff]
      %v3520 = vld [vmem:[%s3483 + $0x120] sm:$0xff]
      %v3521 = vld [vmem:[%s3483 + $0x128] sm:$0xff]
      %v3522 = vld [vmem:[%s3483 + $0x130] sm:$0xff]
      %v3523 = vld [vmem:[%s3483 + $0x138] sm:$0xff]
      %v3524 = vld [vmem:[%s3483 + $0x140] sm:$0x3]
      %v3525 = vld [vmem:[%s3483 + $0x148] sm:$0x3]
      %vm3588 = vcmask 1045504
      %v3589 = vrot.slane %v3377, 2
      %v3590 = vrot.slane %v3379, 2
      %v3591 = vsel %vm3588, %v3589, %v3590
      %v3592 = vrot.slane %v3378, 2
      %v3593 = vrot.slane %v3380, 2
      %v3594 = vsel %vm3588, %v3592, %v3593
      %v3595 = vrot.slane %v3381, 2
      %v3596 = vsel %vm3588, %v3590, %v3595
      %v3597 = vrot.slane %v3382, 2
      %v3598 = vsel %vm3588, %v3593, %v3597
      %v3599 = vrot.slane %v3383, 2
      %v3600 = vsel %vm3588, %v3595, %v3599
      %v3601 = vrot.slane %v3384, 2
      %v3602 = vsel %vm3588, %v3597, %v3601
      %v3603 = vrot.slane %v3385, 2
      %v3604 = vsel %vm3588, %v3599, %v3603
      %v3605 = vrot.slane %v3386, 2
      %v3606 = vsel %vm3588, %v3601, %v3605
      %v3607 = vrot.slane %v3387, 2
      %v3608 = vsel %vm3588, %v3603, %v3607
      %v3609 = vrot.slane %v3388, 2
      %v3610 = vsel %vm3588, %v3605, %v3609
      %v3611 = vrot.slane %v3389, 2
      %v3612 = vsel %vm3588, %v3607, %v3611
      %v3613 = vrot.slane %v3390, 2
      %v3614 = vsel %vm3588, %v3609, %v3613
      %v3615 = vrot.slane %v3391, 2
      %v3616 = vsel %vm3588, %v3611, %v3615
      %v3617 = vrot.slane %v3392, 2
      %v3618 = vsel %vm3588, %v3613, %v3617
      %v3619 = vrot.slane %v3393, 2
      %v3620 = vsel %vm3588, %v3615, %v3619
      %v3621 = vrot.slane %v3394, 2
      %v3622 = vsel %vm3588, %v3617, %v3621
      %v3623 = vrot.slane %v3395, 2
      %v3624 = vsel %vm3588, %v3619, %v3623
      %v3625 = vrot.slane %v3396, 2
      %v3626 = vsel %vm3588, %v3621, %v3625
      %v3627 = vrot.slane %v3397, 2
      %v3628 = vsel %vm3588, %v3623, %v3627
      %v3629 = vrot.slane %v3398, 2
      %v3630 = vsel %vm3588, %v3625, %v3629
      %v3631 = vrot.slane %v3399, 2
      %v3632 = vsel %vm3588, %v3627, %v3631
      %v3633 = vrot.slane %v3400, 2
      %v3634 = vsel %vm3588, %v3629, %v3633
      %v3635 = vrot.slane %v3401, 2
      %v3636 = vsel %vm3588, %v3631, %v3635
      %v3637 = vrot.slane %v3402, 2
      %v3638 = vsel %vm3588, %v3633, %v3637
      %v3639 = vrot.slane %v3403, 2
      %v3640 = vsel %vm3588, %v3635, %v3639
      %v3641 = vrot.slane %v3404, 2
      %v3642 = vsel %vm3588, %v3637, %v3641
      %v3643 = vrot.slane %v3405, 2
      %v3644 = vsel %vm3588, %v3639, %v3643
      %v3645 = vrot.slane %v3406, 2
      %v3646 = vsel %vm3588, %v3641, %v3645
      %v3647 = vrot.slane %v3407, 2
      %v3648 = vsel %vm3588, %v3643, %v3647
      %v3649 = vrot.slane %v3408, 2
      %v3650 = vsel %vm3588, %v3645, %v3649
      %v3651 = vrot.slane %v3409, 2
      %v3652 = vsel %vm3588, %v3647, %v3651
      %v3653 = vrot.slane %v3410, 2
      %v3654 = vsel %vm3588, %v3649, %v3653
      %v3655 = vrot.slane %v3411, 2
      %v3656 = vsel %vm3588, %v3651, %v3655
      %v3657 = vrot.slane %v3412, 2
      %v3658 = vsel %vm3588, %v3653, %v3657
      %v3659 = vrot.slane %v3413, 2
      %v3660 = vsel %vm3588, %v3655, %v3659
      %v3661 = vrot.slane %v3414, 2
      %v3662 = vsel %vm3588, %v3657, %v3661
      %v3663 = vrot.slane %v3415, 2
      %v3664 = vsel %vm3588, %v3659, %v3663
      %v3665 = vrot.slane %v3416, 2
      %v3666 = vsel %vm3588, %v3661, %v3665
      %v3667 = vrot.slane %v3417, 2
      %v3668 = vsel %vm3588, %v3663, %v3667
      %v3669 = vrot.slane %v3418, 2
      %v3670 = vsel %vm3588, %v3665, %v3669
      %v3671 = vrot.slane %v3419, 2
      %v3672 = vsel %vm3588, %v3667, %v3671
      %v3673 = vrot.slane %v3420, 2
      %v3674 = vsel %vm3588, %v3669, %v3673
      %v3675 = vrot.slane %v3421, 2
      %v3676 = vsel %vm3588, %v3671, %v3675
      %v3677 = vrot.slane %v3422, 2
      %v3678 = vsel %vm3588, %v3673, %v3677
      %v3679 = vrot.slane %v3423, 2
      %v3680 = vsel %vm3588, %v3675, %v3679
      %v3681 = vrot.slane %v3424, 2
      %v3682 = vsel %vm3588, %v3677, %v3681
      %v3683 = vrot.slane %v3425, 2
      %v3684 = vsel %vm3588, %v3679, %v3683
      %v3685 = vrot.slane %v3426, 2
      %v3686 = vsel %vm3588, %v3681, %v3685
      %v3687 = vrot.slane %v3427, 2
      %v3688 = vsel %vm3588, %v3683, %v3687
      %v3689 = vrot.slane %v3428, 2
      %v3690 = vsel %vm3588, %v3685, %v3689
      %v3691 = vrot.slane %v3429, 2
      %v3692 = vsel %vm3588, %v3687, %v3691
      %v3693 = vrot.slane %v3430, 2
      %v3694 = vsel %vm3588, %v3689, %v3693
      %v3695 = vrot.slane %v3431, 2
      %v3696 = vsel %vm3588, %v3691, %v3695
      %v3697 = vrot.slane %v3432, 2
      %v3698 = vsel %vm3588, %v3693, %v3697
      %v3699 = vrot.slane %v3433, 2
      %v3700 = vsel %vm3588, %v3695, %v3699
      %v3701 = vrot.slane %v3434, 2
      %v3702 = vsel %vm3588, %v3697, %v3701
      %v3703 = vrot.slane %v3435, 2
      %v3704 = vsel %vm3588, %v3699, %v3703
      %v3705 = vrot.slane %v3436, 2
      %v3706 = vsel %vm3588, %v3701, %v3705
      %v3707 = vrot.slane %v3437, 2
      %v3708 = vsel %vm3588, %v3703, %v3707
      %v3709 = vrot.slane %v3438, 2
      %v3710 = vsel %vm3588, %v3705, %v3709
      %vm3742 = vcmask 277504
      %v3743 = vsel %vm3742, %v3594, 0
      %v3745 = vsel %vm3742, %v3598, 0
      %v3747 = vsel %vm3742, %v3602, 0
      %v3749 = vsel %vm3742, %v3606, 0
      %v3751 = vsel %vm3742, %v3610, 0
      %v3753 = vsel %vm3742, %v3614, 0
      %v3755 = vsel %vm3742, %v3618, 0
      %v3757 = vsel %vm3742, %v3622, 0
      %v3759 = vsel %vm3742, %v3626, 0
      %v3761 = vsel %vm3742, %v3630, 0
      %v3763 = vsel %vm3742, %v3634, 0
      %v3765 = vsel %vm3742, %v3638, 0
      %v3767 = vsel %vm3742, %v3642, 0
      %v3769 = vsel %vm3742, %v3646, 0
      %v3771 = vsel %vm3742, %v3650, 0
      %v3773 = vsel %vm3742, %v3654, 0
      %v3775 = vsel %vm3742, %v3658, 0
      %v3777 = vsel %vm3742, %v3662, 0
      %v3779 = vsel %vm3742, %v3666, 0
      %v3781 = vsel %vm3742, %v3670, 0
      %v3783 = vsel %vm3742, %v3674, 0
      %v3785 = vsel %vm3742, %v3678, 0
      %v3787 = vsel %vm3742, %v3682, 0
      %v3789 = vsel %vm3742, %v3686, 0
      %v3791 = vsel %vm3742, %v3690, 0
      %v3793 = vsel %vm3742, %v3694, 0
      %v3795 = vsel %vm3742, %v3698, 0
      %v3797 = vsel %vm3742, %v3702, 0
      %v3799 = vsel %vm3742, %v3706, 0
      %v3801 = vsel %vm3742, %v3710, 0
      %v3803 = vsel %vm3742, %v3709, 0
      %vm3805 = vcmask 1041408
      %v3807 = vsel %vm3805, %v3524, 0
      %v3810 = vsel %vm3805, %v3525, 0
      %3812 = vmatprep.subr.mxu0 %v3485
      %3813 = vmatpush1.msra.mxu0 %v3484
      %3814 = vmatprep.subr.mxu0 %v3487
      %3815 = vmatpush1.msra.mxu0 %v3486
      %3816 = vmatprep.subr.mxu0 %v3489
      %3817 = vmatpush1.msra.mxu0 %v3488
      %3818 = vmatprep.subr.mxu0 %v3491
      %3819 = vmatpush1.msra.mxu0 %v3490
      %3820 = vmatprep.subr.mxu0 %v3493
      %3821 = vmatpush1.msra.mxu0 %v3492
      %3822 = vmatprep.subr.mxu0 %v3495
      %3823 = vmatpush1.msra.mxu0 %v3494
      %3824 = vmatprep.subr.mxu0 %v3497
      %3825 = vmatpush1.msra.mxu0 %v3496
      %3826 = vmatprep.subr.mxu0 %v3499
      %3827 = vmatpush1.msra.mxu0 %v3498
      %3828 = vmatprep.subr.mxu0 %v3501
      %3829 = vmatpush1.msra.mxu0 %v3500
      %3830 = vmatprep.subr.mxu0 %v3503
      %3831 = vmatpush1.msra.mxu0 %v3502
      %3832 = vmatprep.subr.mxu0 %v3505
      %3833 = vmatpush1.msra.mxu0 %v3504
      %3834 = vmatprep.subr.mxu0 %v3507
      %3835 = vmatpush1.msra.mxu0 %v3506
      %3836 = vmatprep.subr.mxu0 %v3509
      %3837 = vmatpush1.msra.mxu0 %v3508
      %3838 = vmatprep.subr.mxu0 %v3511
      %3839 = vmatpush1.msra.mxu0 %v3510
      %3840 = vmatprep.subr.mxu0 %v3513
      %3841 = vmatpush1.msra.mxu0 %v3512
      %3842 = vmatprep.subr.mxu0 %v3515
      %3843 = vmatpush1.msra.mxu0 %v3514
      %3844 = vmatprep.subr.mxu0 %v3517
      %3845 = vmatpush1.msra.mxu0 %v3516
      %3846 = vmatprep.subr.mxu0 %v3519
      %3847 = vmatpush1.msra.mxu0 %v3518
      %3848 = vmatprep.subr.mxu0 %v3521
      %3849 = vmatpush1.msra.mxu0 %v3520
      %3850 = vmatprep.subr.mxu0 %v3523
      %3851 = vmatpush1.msra.mxu0 %v3522
      %3852 = vmatprep.subr.mxu0 %v3810
      %3853 = vmatpush1.msra.mxu0 %v3807
      %3854 = vmatprep.subr.mxu0 0.0
      %3855 = vmatpush1.msra.mxu0 0.0
      %3856 = vmatprep.subr.mxu0 0.0
      %3857 = vmatpush1.msra.mxu0 0.0
      %3858 = vmatprep.subr.mxu0 0.0
      %3859 = vmatpush1.msra.mxu0 0.0
      %3860 = vmatprep.subr.mxu0 0.0
      %3861 = vmatpush1.msra.mxu0 0.0
      %3862 = vmatprep.subr.mxu0 0.0
      %3863 = vmatpush1.msra.mxu0 0.0
      %3864 = vmatprep.subr.mxu0 0.0
      %3865 = vmatpush1.msra.mxu0 0.0
      %3866 = vmatprep.subr.mxu0 0.0
      %3867 = vmatpush1.msra.mxu0 0.0
      %3868 = vmatprep.subr.mxu0 0.0
      %3869 = vmatpush1.msra.mxu0 0.0
      %3870 = vmatprep.subr.mxu0 0.0
      %3871 = vmatpush1.msra.mxu0 0.0
      %3872 = vmatprep.subr.mxu0 0.0
      %3873 = vmatpush1.msra.mxu0 0.0
      %3874 = vmatprep.subr.mxu0 0.0
      %3875 = vmatpush1.msra.mxu0 0.0
      %3876 = vmatprep.mubr.f32.mxu0 %v3743
      %3877 = vmatmul.mubr.f32.gmra.mrb[0].mxu0 %v3591
      %v3878 = vpop.f32.mrb[0].mxu0
      %v3879 = vadd.f32 0.0, %v3878
      %v3880 = vpop.f32.mrb[0].mxu0
      %v3881 = vadd.f32 0.0, %v3880
      %3882 = vmatprep.mubr.f32.mxu0 %v3745
      %3883 = vmatmul.mubr.f32.gmra.mrb[0].mxu0 %v3596
      %v3884 = vpop.f32.mrb[0].mxu0
      %v3885 = vadd.f32 0.0, %v3884
      %v3886 = vpop.f32.mrb[0].mxu0
      %v3887 = vadd.f32 0.0, %v3886
      %3888 = vmatprep.mubr.f32.mxu0 %v3747
      %3889 = vmatmul.mubr.f32.gmra.mrb[0].mxu0 %v3600
      %v3890 = vpop.f32.mrb[0].mxu0
      %v3891 = vadd.f32 0.0, %v3890
      %v3892 = vpop.f32.mrb[0].mxu0
      %v3893 = vadd.f32 0.0, %v3892
      %3894 = vmatprep.mubr.f32.mxu0 %v3749
      %3895 = vmatmul.mubr.f32.gmra.mrb[0].mxu0 %v3604
      %v3896 = vpop.f32.mrb[0].mxu0
      %v3897 = vadd.f32 0.0, %v3896
      %v3898 = vpop.f32.mrb[0].mxu0
      %v3899 = vadd.f32 0.0, %v3898
      %3900 = vmatprep.mubr.f32.mxu0 %v3751
      %3901 = vmatmul.mubr.f32.gmra.mrb[0].mxu0 %v3608
      %v3902 = vpop.f32.mrb[0].mxu0
      %v3903 = vadd.f32 0.0, %v3902
      %v3904 = vpop.f32.mrb[0].mxu0
      %v3905 = vadd.f32 0.0, %v3904
      %3906 = vmatprep.mubr.f32.mxu0 %v3753
      %3907 = vmatmul.mubr.f32.gmra.mrb[0].mxu0 %v3612
      %v3908 = vpop.f32.mrb[0].mxu0
      %v3909 = vadd.f32 0.0, %v3908
      %v3910 = vpop.f32.mrb[0].mxu0
      %v3911 = vadd.f32 0.0, %v3910
      %3912 = vmatprep.mubr.f32.mxu0 %v3755
      %3913 = vmatmul.mubr.f32.gmra.mrb[0].mxu0 %v3616
      %v3914 = vpop.f32.mrb[0].mxu0
      %v3915 = vadd.f32 0.0, %v3914
      %v3916 = vpop.f32.mrb[0].mxu0
      %v3917 = vadd.f32 0.0, %v3916
      %3918 = vmatprep.mubr.f32.mxu0 %v3757
      %3919 = vmatmul.mubr.f32.gmra.mrb[0].mxu0 %v3620
      %v3920 = vpop.f32.mrb[0].mxu0
      %v3921 = vadd.f32 0.0, %v3920
      %v3922 = vpop.f32.mrb[0].mxu0
      %v3923 = vadd.f32 0.0, %v3922
      %3924 = vmatprep.mubr.f32.mxu0 %v3759
      %3925 = vmatmul.mubr.f32.gmra.mrb[0].mxu0 %v3624
      %v3926 = vpop.f32.mrb[0].mxu0
      %v3927 = vadd.f32 0.0, %v3926
      %v3928 = vpop.f32.mrb[0].mxu0
      %v3929 = vadd.f32 0.0, %v3928
      %3930 = vmatprep.mubr.f32.mxu0 %v3761
      %3931 = vmatmul.mubr.f32.gmra.mrb[0].mxu0 %v3628
      %v3932 = vpop.f32.mrb[0].mxu0
      %v3933 = vadd.f32 0.0, %v3932
      %v3934 = vpop.f32.mrb[0].mxu0
      %v3935 = vadd.f32 0.0, %v3934
      %3936 = vmatprep.mubr.f32.mxu0 %v3763
      %3937 = vmatmul.mubr.f32.gmra.mrb[0].mxu0 %v3632
      %v3938 = vpop.f32.mrb[0].mxu0
      %v3939 = vadd.f32 0.0, %v3938
      %v3940 = vpop.f32.mrb[0].mxu0
      %v3941 = vadd.f32 0.0, %v3940
      %3942 = vmatprep.mubr.f32.mxu0 %v3765
      %3943 = vmatmul.mubr.f32.gmra.mrb[0].mxu0 %v3636
      %v3944 = vpop.f32.mrb[0].mxu0
      %v3945 = vadd.f32 0.0, %v3944
      %v3946 = vpop.f32.mrb[0].mxu0
      %v3947 = vadd.f32 0.0, %v3946
      %3948 = vmatprep.mubr.f32.mxu0 %v3767
      %3949 = vmatmul.mubr.f32.gmra.mrb[0].mxu0 %v3640
      %v3950 = vpop.f32.mrb[0].mxu0
      %v3951 = vadd.f32 0.0, %v3950
      %v3952 = vpop.f32.mrb[0].mxu0
      %v3953 = vadd.f32 0.0, %v3952
      %3954 = vmatprep.mubr.f32.mxu0 %v3769
      %3955 = vmatmul.mubr.f32.gmra.mrb[0].mxu0 %v3644
      %v3956 = vpop.f32.mrb[0].mxu0
      %v3957 = vadd.f32 0.0, %v3956
      %v3958 = vpop.f32.mrb[0].mxu0
      %v3959 = vadd.f32 0.0, %v3958
      %3960 = vmatprep.mubr.f32.mxu0 %v3771
      %3961 = vmatmul.mubr.f32.gmra.mrb[0].mxu0 %v3648
      %v3962 = vpop.f32.mrb[0].mxu0
      %v3963 = vadd.f32 0.0, %v3962
      %v3964 = vpop.f32.mrb[0].mxu0
      %v3965 = vadd.f32 0.0, %v3964
      %3966 = vmatprep.mubr.f32.mxu0 %v3773
      %3967 = vmatmul.mubr.f32.gmra.mrb[0].mxu0 %v3652
      %v3968 = vpop.f32.mrb[0].mxu0
      %v3969 = vadd.f32 0.0, %v3968
      %v3970 = vpop.f32.mrb[0].mxu0
      %v3971 = vadd.f32 0.0, %v3970
      %3972 = vmatprep.mubr.f32.mxu0 %v3775
      %3973 = vmatmul.mubr.f32.gmra.mrb[0].mxu0 %v3656
      %v3974 = vpop.f32.mrb[0].mxu0
      %v3975 = vadd.f32 0.0, %v3974
      %v3976 = vpop.f32.mrb[0].mxu0
      %v3977 = vadd.f32 0.0, %v3976
      %3978 = vmatprep.mubr.f32.mxu0 %v3777
      %3979 = vmatmul.mubr.f32.gmra.mrb[0].mxu0 %v3660
      %v3980 = vpop.f32.mrb[0].mxu0
      %v3981 = vadd.f32 0.0, %v3980
      %v3982 = vpop.f32.mrb[0].mxu0
      %v3983 = vadd.f32 0.0, %v3982
      %3984 = vmatprep.mubr.f32.mxu0 %v3779
      %3985 = vmatmul.mubr.f32.gmra.mrb[0].mxu0 %v3664
      %v3986 = vpop.f32.mrb[0].mxu0
      %v3987 = vadd.f32 0.0, %v3986
      %v3988 = vpop.f32.mrb[0].mxu0
      %v3989 = vadd.f32 0.0, %v3988
      %3990 = vmatprep.mubr.f32.mxu0 %v3781
      %3991 = vmatmul.mubr.f32.gmra.mrb[0].mxu0 %v3668
      %v3992 = vpop.f32.mrb[0].mxu0
      %v3993 = vadd.f32 0.0, %v3992
      %v3994 = vpop.f32.mrb[0].mxu0
      %v3995 = vadd.f32 0.0, %v3994
      %3996 = vmatprep.mubr.f32.mxu0 %v3783
      %3997 = vmatmul.mubr.f32.gmra.mrb[0].mxu0 %v3672
      %v3998 = vpop.f32.mrb[0].mxu0
      %v3999 = vadd.f32 0.0, %v3998
      %v4000 = vpop.f32.mrb[0].mxu0
      %v4001 = vadd.f32 0.0, %v4000
      %4002 = vmatprep.mubr.f32.mxu0 %v3785
      %4003 = vmatmul.mubr.f32.gmra.mrb[0].mxu0 %v3676
      %v4004 = vpop.f32.mrb[0].mxu0
      %v4005 = vadd.f32 0.0, %v4004
      %v4006 = vpop.f32.mrb[0].mxu0
      %v4007 = vadd.f32 0.0, %v4006
      %4008 = vmatprep.mubr.f32.mxu0 %v3787
      %4009 = vmatmul.mubr.f32.gmra.mrb[0].mxu0 %v3680
      %v4010 = vpop.f32.mrb[0].mxu0
      %v4011 = vadd.f32 0.0, %v4010
      %v4012 = vpop.f32.mrb[0].mxu0
      %v4013 = vadd.f32 0.0, %v4012
      %4014 = vmatprep.mubr.f32.mxu0 %v3789
      %4015 = vmatmul.mubr.f32.gmra.mrb[0].mxu0 %v3684
      %v4016 = vpop.f32.mrb[0].mxu0
      %v4017 = vadd.f32 0.0, %v4016
      %v4018 = vpop.f32.mrb[0].mxu0
      %v4019 = vadd.f32 0.0, %v4018
      %4020 = vmatprep.mubr.f32.mxu0 %v3791
      %4021 = vmatmul.mubr.f32.gmra.mrb[0].mxu0 %v3688
      %v4022 = vpop.f32.mrb[0].mxu0
      %v4023 = vadd.f32 0.0, %v4022
      %v4024 = vpop.f32.mrb[0].mxu0
      %v4025 = vadd.f32 0.0, %v4024
      %4026 = vmatprep.mubr.f32.mxu0 %v3793
      %4027 = vmatmul.mubr.f32.gmra.mrb[0].mxu0 %v3692
      %v4028 = vpop.f32.mrb[0].mxu0
      %v4029 = vadd.f32 0.0, %v4028
      %v4030 = vpop.f32.mrb[0].mxu0
      %v4031 = vadd.f32 0.0, %v4030
      %4032 = vmatprep.mubr.f32.mxu0 %v3795
      %4033 = vmatmul.mubr.f32.gmra.mrb[0].mxu0 %v3696
      %v4034 = vpop.f32.mrb[0].mxu0
      %v4035 = vadd.f32 0.0, %v4034
      %v4036 = vpop.f32.mrb[0].mxu0
      %v4037 = vadd.f32 0.0, %v4036
      %4038 = vmatprep.mubr.f32.mxu0 %v3797
      %4039 = vmatmul.mubr.f32.gmra.mrb[0].mxu0 %v3700
      %v4040 = vpop.f32.mrb[0].mxu0
      %v4041 = vadd.f32 0.0, %v4040
      %v4042 = vpop.f32.mrb[0].mxu0
      %v4043 = vadd.f32 0.0, %v4042
      %4044 = vmatprep.mubr.f32.mxu0 %v3799
      %4045 = vmatmul.mubr.f32.gmra.mrb[0].mxu0 %v3704
      %v4046 = vpop.f32.mrb[0].mxu0
      %v4047 = vadd.f32 0.0, %v4046
      %v4048 = vpop.f32.mrb[0].mxu0
      %v4049 = vadd.f32 0.0, %v4048
      %4050 = vmatprep.mubr.f32.mxu0 %v3801
      %4051 = vmatmul.mubr.f32.gmra.mrb[0].mxu0 %v3708
      %v4052 = vpop.f32.mrb[0].mxu0
      %v4053 = vadd.f32 0.0, %v4052
      %v4054 = vpop.f32.mrb[0].mxu0
      %v4055 = vadd.f32 0.0, %v4054
      %4056 = vmatprep.mubr.f32.mxu0 %v3803
      %4057 = vmatmul.mubr.f32.gmra.mrb[0].mxu0 %v3707
      %v4058 = vpop.f32.mrb[0].mxu0
      %v4059 = vadd.f32 0.0, %v4058
      %v4060 = vpop.f32.mrb[0].mxu0
      %v4061 = vadd.f32 0.0, %v4060
      %4062 = vdwg.mxu0
      %v4063 = vsel %vm3742, %v3378, 0
      %v4065 = vsel %vm3742, %v3380, 0
      %v4067 = vsel %vm3742, %v3382, 0
      %v4069 = vsel %vm3742, %v3384, 0
      %v4071 = vsel %vm3742, %v3386, 0
      %v4073 = vsel %vm3742, %v3388, 0
      %v4075 = vsel %vm3742, %v3390, 0
      %v4077 = vsel %vm3742, %v3392, 0
      %v4079 = vsel %vm3742, %v3394, 0
      %v4081 = vsel %vm3742, %v3396, 0
      %v4083 = vsel %vm3742, %v3398, 0
      %v4085 = vsel %vm3742, %v3400, 0
      %v4087 = vsel %vm3742, %v3402, 0
      %v4089 = vsel %vm3742, %v3404, 0
      %v4091 = vsel %vm3742, %v3406, 0
      %v4093 = vsel %vm3742, %v3408, 0
      %v4095 = vsel %vm3742, %v3410, 0
      %v4097 = vsel %vm3742, %v3412, 0
      %v4099 = vsel %vm3742, %v3414, 0
      %v4101 = vsel %vm3742, %v3416, 0
      %v4103 = vsel %vm3742, %v3418, 0
      %v4105 = vsel %vm3742, %v3420, 0
      %v4107 = vsel %vm3742, %v3422, 0
      %v4109 = vsel %vm3742, %v3424, 0
      %v4111 = vsel %vm3742, %v3426, 0
      %v4113 = vsel %vm3742, %v3428, 0
      %v4115 = vsel %vm3742, %v3430, 0
      %v4117 = vsel %vm3742, %v3432, 0
      %v4119 = vsel %vm3742, %v3434, 0
      %v4121 = vsel %vm3742, %v3436, 0
      %v4123 = vsel %vm3742, %v3438, 0
      %v4126 = vsel %vm3805, %v3481, 0
      %v4129 = vsel %vm3805, %v3482, 0
      %4131 = vmatprep.subr.mxu0 %v3442
      %4132 = vmatpush1.msra.mxu0 %v3441
      %4133 = vmatprep.subr.mxu0 %v3444
      %4134 = vmatpush1.msra.mxu0 %v3443
      %4135 = vmatprep.subr.mxu0 %v3446
      %4136 = vmatpush1.msra.mxu0 %v3445
      %4137 = vmatprep.subr.mxu0 %v3448
      %4138 = vmatpush1.msra.mxu0 %v3447
      %4139 = vmatprep.subr.mxu0 %v3450
      %4140 = vmatpush1.msra.mxu0 %v3449
      %4141 = vmatprep.subr.mxu0 %v3452
      %4142 = vmatpush1.msra.mxu0 %v3451
      %4143 = vmatprep.subr.mxu0 %v3454
      %4144 = vmatpush1.msra.mxu0 %v3453
      %4145 = vmatprep.subr.mxu0 %v3456
      %4146 = vmatpush1.msra.mxu0 %v3455
      %4147 = vmatprep.subr.mxu0 %v3458
      %4148 = vmatpush1.msra.mxu0 %v3457
      %4149 = vmatprep.subr.mxu0 %v3460
      %4150 = vmatpush1.msra.mxu0 %v3459
      %4151 = vmatprep.subr.mxu0 %v3462
      %4152 = vmatpush1.msra.mxu0 %v3461
      %4153 = vmatprep.subr.mxu0 %v3464
      %4154 = vmatpush1.msra.mxu0 %v3463
      %4155 = vmatprep.subr.mxu0 %v3466
      %4156 = vmatpush1.msra.mxu0 %v3465
      %4157 = vmatprep.subr.mxu0 %v3468
      %4158 = vmatpush1.msra.mxu0 %v3467
      %4159 = vmatprep.subr.mxu0 %v3470
      %4160 = vmatpush1.msra.mxu0 %v3469
      %4161 = vmatprep.subr.mxu0 %v3472
      %4162 = vmatpush1.msra.mxu0 %v3471
      %4163 = vmatprep.subr.mxu0 %v3474
      %4164 = vmatpush1.msra.mxu0 %v3473
      %4165 = vmatprep.subr.mxu0 %v3476
      %4166 = vmatpush1.msra.mxu0 %v3475
      %4167 = vmatprep.subr.mxu0 %v3478
      %4168 = vmatpush1.msra.mxu0 %v3477
      %4169 = vmatprep.subr.mxu0 %v3480
      %4170 = vmatpush1.msra.mxu0 %v3479
      %4171 = vmatprep.subr.mxu0 %v4129
      %4172 = vmatpush1.msra.mxu0 %v4126
      %4173 = vmatprep.subr.mxu0 0.0
      %4174 = vmatpush1.msra.mxu0 0.0
      %4175 = vmatprep.subr.mxu0 0.0
      %4176 = vmatpush1.msra.mxu0 0.0
      %4177 = vmatprep.subr.mxu0 0.0
      %4178 = vmatpush1.msra.mxu0 0.0
      %4179 = vmatprep.subr.mxu0 0.0
      %4180 = vmatpush1.msra.mxu0 0.0
      %4181 = vmatprep.subr.mxu0 0.0
      %4182 = vmatpush1.msra.mxu0 0.0
      %4183 = vmatprep.subr.mxu0 0.0
      %4184 = vmatpush1.msra.mxu0 0.0
      %4185 = vmatprep.subr.mxu0 0.0
      %4186 = vmatpush1.msra.mxu0 0.0
      %4187 = vmatprep.subr.mxu0 0.0
      %4188 = vmatpush1.msra.mxu0 0.0
      %4189 = vmatprep.subr.mxu0 0.0
      %4190 = vmatpush1.msra.mxu0 0.0
      %4191 = vmatprep.subr.mxu0 0.0
      %4192 = vmatpush1.msra.mxu0 0.0
      %4193 = vmatprep.subr.mxu0 0.0
      %4194 = vmatpush1.msra.mxu0 0.0
      %4195 = vmatprep.mubr.f32.mxu0 %v4063
      %4196 = vmatmul.mubr.f32.gmra.mrb[0].mxu0 %v3377
      %v4197 = vpop.f32.mrb[0].mxu0
      %v4198 = vadd.f32 %v3879, %v4197
      %v4199 = vpop.f32.mrb[0].mxu0
      %v4200 = vadd.f32 %v3881, %v4199
      %4201 = vmatprep.mubr.f32.mxu0 %v4065
      %4202 = vmatmul.mubr.f32.gmra.mrb[0].mxu0 %v3379
      %v4203 = vpop.f32.mrb[0].mxu0
      %v4204 = vadd.f32 %v3885, %v4203
      %v4205 = vpop.f32.mrb[0].mxu0
      %v4206 = vadd.f32 %v3887, %v4205
      %4207 = vmatprep.mubr.f32.mxu0 %v4067
      %4208 = vmatmul.mubr.f32.gmra.mrb[0].mxu0 %v3381
      %v4209 = vpop.f32.mrb[0].mxu0
      %v4210 = vadd.f32 %v3891, %v4209
      %v4211 = vpop.f32.mrb[0].mxu0
      %v4212 = vadd.f32 %v3893, %v4211
      %4213 = vmatprep.mubr.f32.mxu0 %v4069
      %4214 = vmatmul.mubr.f32.gmra.mrb[0].mxu0 %v3383
      %v4215 = vpop.f32.mrb[0].mxu0
      %v4216 = vadd.f32 %v3897, %v4215
      %v4217 = vpop.f32.mrb[0].mxu0
      %v4218 = vadd.f32 %v3899, %v4217
      %4219 = vmatprep.mubr.f32.mxu0 %v4071
      %4220 = vmatmul.mubr.f32.gmra.mrb[0].mxu0 %v3385
      %v4221 = vpop.f32.mrb[0].mxu0
      %v4222 = vadd.f32 %v3903, %v4221
      %v4223 = vpop.f32.mrb[0].mxu0
      %v4224 = vadd.f32 %v3905, %v4223
      %4225 = vmatprep.mubr.f32.mxu0 %v4073
      %4226 = vmatmul.mubr.f32.gmra.mrb[0].mxu0 %v3387
      %v4227 = vpop.f32.mrb[0].mxu0
      %v4228 = vadd.f32 %v3909, %v4227
      %v4229 = vpop.f32.mrb[0].mxu0
      %v4230 = vadd.f32 %v3911, %v4229
      %4231 = vmatprep.mubr.f32.mxu0 %v4075
      %4232 = vmatmul.mubr.f32.gmra.mrb[0].mxu0 %v3389
      %v4233 = vpop.f32.mrb[0].mxu0
      %v4234 = vadd.f32 %v3915, %v4233
      %v4235 = vpop.f32.mrb[0].mxu0
      %v4236 = vadd.f32 %v3917, %v4235
      %4237 = vmatprep.mubr.f32.mxu0 %v4077
      %4238 = vmatmul.mubr.f32.gmra.mrb[0].mxu0 %v3391
      %v4239 = vpop.f32.mrb[0].mxu0
      %v4240 = vadd.f32 %v3921, %v4239
      %v4241 = vpop.f32.mrb[0].mxu0
      %v4242 = vadd.f32 %v3923, %v4241
      %4243 = vmatprep.mubr.f32.mxu0 %v4079
      %4244 = vmatmul.mubr.f32.gmra.mrb[0].mxu0 %v3393
      %v4245 = vpop.f32.mrb[0].mxu0
      %v4246 = vadd.f32 %v3927, %v4245
      %v4247 = vpop.f32.mrb[0].mxu0
      %v4248 = vadd.f32 %v3929, %v4247
      %4249 = vmatprep.mubr.f32.mxu0 %v4081
      %4250 = vmatmul.mubr.f32.gmra.mrb[0].mxu0 %v3395
      %v4251 = vpop.f32.mrb[0].mxu0
      %v4252 = vadd.f32 %v3933, %v4251
      %v4253 = vpop.f32.mrb[0].mxu0
      %v4254 = vadd.f32 %v3935, %v4253
      %4255 = vmatprep.mubr.f32.mxu0 %v4083
      %4256 = vmatmul.mubr.f32.gmra.mrb[0].mxu0 %v3397
      %v4257 = vpop.f32.mrb[0].mxu0
      %v4258 = vadd.f32 %v3939, %v4257
      %v4259 = vpop.f32.mrb[0].mxu0
      %v4260 = vadd.f32 %v3941, %v4259
      %4261 = vmatprep.mubr.f32.mxu0 %v4085
      %4262 = vmatmul.mubr.f32.gmra.mrb[0].mxu0 %v3399
      %v4263 = vpop.f32.mrb[0].mxu0
      %v4264 = vadd.f32 %v3945, %v4263
      %v4265 = vpop.f32.mrb[0].mxu0
      %v4266 = vadd.f32 %v3947, %v4265
      %4267 = vmatprep.mubr.f32.mxu0 %v4087
      %4268 = vmatmul.mubr.f32.gmra.mrb[0].mxu0 %v3401
      %v4269 = vpop.f32.mrb[0].mxu0
      %v4270 = vadd.f32 %v3951, %v4269
      %v4271 = vpop.f32.mrb[0].mxu0
      %v4272 = vadd.f32 %v3953, %v4271
      %4273 = vmatprep.mubr.f32.mxu0 %v4089
      %4274 = vmatmul.mubr.f32.gmra.mrb[0].mxu0 %v3403
      %v4275 = vpop.f32.mrb[0].mxu0
      %v4276 = vadd.f32 %v3957, %v4275
      %v4277 = vpop.f32.mrb[0].mxu0
      %v4278 = vadd.f32 %v3959, %v4277
      %4279 = vmatprep.mubr.f32.mxu0 %v4091
      %4280 = vmatmul.mubr.f32.gmra.mrb[0].mxu0 %v3405
      %v4281 = vpop.f32.mrb[0].mxu0
      %v4282 = vadd.f32 %v3963, %v4281
      %v4283 = vpop.f32.mrb[0].mxu0
      %v4284 = vadd.f32 %v3965, %v4283
      %4285 = vmatprep.mubr.f32.mxu0 %v4093
      %4286 = vmatmul.mubr.f32.gmra.mrb[0].mxu0 %v3407
      %v4287 = vpop.f32.mrb[0].mxu0
      %v4288 = vadd.f32 %v3969, %v4287
      %v4289 = vpop.f32.mrb[0].mxu0
      %v4290 = vadd.f32 %v3971, %v4289
      %4291 = vmatprep.mubr.f32.mxu0 %v4095
      %4292 = vmatmul.mubr.f32.gmra.mrb[0].mxu0 %v3409
      %v4293 = vpop.f32.mrb[0].mxu0
      %v4294 = vadd.f32 %v3975, %v4293
      %v4295 = vpop.f32.mrb[0].mxu0
      %v4296 = vadd.f32 %v3977, %v4295
      %4297 = vmatprep.mubr.f32.mxu0 %v4097
      %4298 = vmatmul.mubr.f32.gmra.mrb[0].mxu0 %v3411
      %v4299 = vpop.f32.mrb[0].mxu0
      %v4300 = vadd.f32 %v3981, %v4299
      %v4301 = vpop.f32.mrb[0].mxu0
      %v4302 = vadd.f32 %v3983, %v4301
      %4303 = vmatprep.mubr.f32.mxu0 %v4099
      %4304 = vmatmul.mubr.f32.gmra.mrb[0].mxu0 %v3413
      %v4305 = vpop.f32.mrb[0].mxu0
      %v4306 = vadd.f32 %v3987, %v4305
      %v4307 = vpop.f32.mrb[0].mxu0
      %v4308 = vadd.f32 %v3989, %v4307
      %4309 = vmatprep.mubr.f32.mxu0 %v4101
      %4310 = vmatmul.mubr.f32.gmra.mrb[0].mxu0 %v3415
      %v4311 = vpop.f32.mrb[0].mxu0
      %v4312 = vadd.f32 %v3993, %v4311
      %v4313 = vpop.f32.mrb[0].mxu0
      %v4314 = vadd.f32 %v3995, %v4313
      %4315 = vmatprep.mubr.f32.mxu0 %v4103
      %4316 = vmatmul.mubr.f32.gmra.mrb[0].mxu0 %v3417
      %v4317 = vpop.f32.mrb[0].mxu0
      %v4318 = vadd.f32 %v3999, %v4317
      %v4319 = vpop.f32.mrb[0].mxu0
      %v4320 = vadd.f32 %v4001, %v4319
      %4321 = vmatprep.mubr.f32.mxu0 %v4105
      %4322 = vmatmul.mubr.f32.gmra.mrb[0].mxu0 %v3419
      %v4323 = vpop.f32.mrb[0].mxu0
      %v4324 = vadd.f32 %v4005, %v4323
      %v4325 = vpop.f32.mrb[0].mxu0
      %v4326 = vadd.f32 %v4007, %v4325
      %4327 = vmatprep.mubr.f32.mxu0 %v4107
      %4328 = vmatmul.mubr.f32.gmra.mrb[0].mxu0 %v3421
      %v4329 = vpop.f32.mrb[0].mxu0
      %v4330 = vadd.f32 %v4011, %v4329
      %v4331 = vpop.f32.mrb[0].mxu0
      %v4332 = vadd.f32 %v4013, %v4331
      %4333 = vmatprep.mubr.f32.mxu0 %v4109
      %4334 = vmatmul.mubr.f32.gmra.mrb[0].mxu0 %v3423
      %v4335 = vpop.f32.mrb[0].mxu0
      %v4336 = vadd.f32 %v4017, %v4335
      %v4337 = vpop.f32.mrb[0].mxu0
      %v4338 = vadd.f32 %v4019, %v4337
      %4339 = vmatprep.mubr.f32.mxu0 %v4111
      %4340 = vmatmul.mubr.f32.gmra.mrb[0].mxu0 %v3425
      %v4341 = vpop.f32.mrb[0].mxu0
      %v4342 = vadd.f32 %v4023, %v4341
      %v4343 = vpop.f32.mrb[0].mxu0
      %v4344 = vadd.f32 %v4025, %v4343
      %4345 = vmatprep.mubr.f32.mxu0 %v4113
      %4346 = vmatmul.mubr.f32.gmra.mrb[0].mxu0 %v3427
      %v4347 = vpop.f32.mrb[0].mxu0
      %v4348 = vadd.f32 %v4029, %v4347
      %v4349 = vpop.f32.mrb[0].mxu0
      %v4350 = vadd.f32 %v4031, %v4349
      %4351 = vmatprep.mubr.f32.mxu0 %v4115
      %4352 = vmatmul.mubr.f32.gmra.mrb[0].mxu0 %v3429
      %v4353 = vpop.f32.mrb[0].mxu0
      %v4354 = vadd.f32 %v4035, %v4353
      %v4355 = vpop.f32.mrb[0].mxu0
      %v4356 = vadd.f32 %v4037, %v4355
      %4357 = vmatprep.mubr.f32.mxu0 %v4117
      %4358 = vmatmul.mubr.f32.gmra.mrb[0].mxu0 %v3431
      %v4359 = vpop.f32.mrb[0].mxu0
      %v4360 = vadd.f32 %v4041, %v4359
      %v4361 = vpop.f32.mrb[0].mxu0
      %v4362 = vadd.f32 %v4043, %v4361
      %4363 = vmatprep.mubr.f32.mxu0 %v4119
      %4364 = vmatmul.mubr.f32.gmra.mrb[0].mxu0 %v3433
      %v4365 = vpop.f32.mrb[0].mxu0
      %v4366 = vadd.f32 %v4047, %v4365
      %v4367 = vpop.f32.mrb[0].mxu0
      %v4368 = vadd.f32 %v4049, %v4367
      %4369 = vmatprep.mubr.f32.mxu0 %v4121
      %4370 = vmatmul.mubr.f32.gmra.mrb[0].mxu0 %v3435
      %v4371 = vpop.f32.mrb[0].mxu0
      %v4372 = vadd.f32 %v4053, %v4371
      %v4373 = vpop.f32.mrb[0].mxu0
      %v4374 = vadd.f32 %v4055, %v4373
      %4375 = vmatprep.mubr.f32.mxu0 %v4123
      %4376 = vmatmul.mubr.f32.gmra.mrb[0].mxu0 %v3437
      %v4377 = vpop.f32.mrb[0].mxu0
      %v4378 = vadd.f32 %v4059, %v4377
      %v4379 = vpop.f32.mrb[0].mxu0
      %v4380 = vadd.f32 %v4061, %v4379
      %4381 = vdwg.mxu0
      %s4382 = scalar_lea.vmem %s3, 672
      %v4383 = vld [vmem:[%s4382] sm:$0xff]
      %v4384 = vld [vmem:[%s4382 + $0x8] sm:$0xff]
      %v4385 = vld [vmem:[%s4382 + $0x10] sm:$0xff]
      %v4386 = vld [vmem:[%s4382 + $0x18] sm:$0xff]
      %v4387 = vld [vmem:[%s4382 + $0x20] sm:$0xff]
      %v4388 = vld [vmem:[%s4382 + $0x28] sm:$0xff]
      %v4389 = vld [vmem:[%s4382 + $0x30] sm:$0xff]
      %v4390 = vld [vmem:[%s4382 + $0x38] sm:$0xff]
      %v4391 = vld [vmem:[%s4382 + $0x40] sm:$0xff]
      %v4392 = vld [vmem:[%s4382 + $0x48] sm:$0xff]
      %v4393 = vld [vmem:[%s4382 + $0x50] sm:$0xff]
      %v4394 = vld [vmem:[%s4382 + $0x58] sm:$0xff]
      %v4395 = vld [vmem:[%s4382 + $0x60] sm:$0xff]
      %v4396 = vld [vmem:[%s4382 + $0x68] sm:$0xff]
      %v4397 = vld [vmem:[%s4382 + $0x70] sm:$0xff]
      %v4398 = vld [vmem:[%s4382 + $0x78] sm:$0xff]
      %v4399 = vld [vmem:[%s4382 + $0x80] sm:$0xff]
      %v4400 = vld [vmem:[%s4382 + $0x88] sm:$0xff]
      %v4401 = vld [vmem:[%s4382 + $0x90] sm:$0xff]
      %v4402 = vld [vmem:[%s4382 + $0x98] sm:$0xff]
      %v4403 = vld [vmem:[%s4382 + $0xa0] sm:$0xff]
      %v4404 = vld [vmem:[%s4382 + $0xa8] sm:$0xff]
      %v4405 = vld [vmem:[%s4382 + $0xb0] sm:$0xff]
      %v4406 = vld [vmem:[%s4382 + $0xb8] sm:$0xff]
      %v4407 = vld [vmem:[%s4382 + $0xc0] sm:$0xff]
      %v4408 = vld [vmem:[%s4382 + $0xc8] sm:$0xff]
      %v4409 = vld [vmem:[%s4382 + $0xd0] sm:$0xff]
      %v4410 = vld [vmem:[%s4382 + $0xd8] sm:$0xff]
      %v4411 = vld [vmem:[%s4382 + $0xe0] sm:$0xff]
      %v4412 = vld [vmem:[%s4382 + $0xe8] sm:$0xff]
      %v4413 = vld [vmem:[%s4382 + $0xf0] sm:$0xff]
      %v4414 = vld [vmem:[%s4382 + $0xf8] sm:$0xff]
      %v4415 = vld [vmem:[%s4382 + $0x100] sm:$0xff]
      %v4416 = vld [vmem:[%s4382 + $0x108] sm:$0xff]
      %v4417 = vld [vmem:[%s4382 + $0x110] sm:$0xff]
      %v4418 = vld [vmem:[%s4382 + $0x118] sm:$0xff]
      %v4419 = vld [vmem:[%s4382 + $0x120] sm:$0xff]
      %v4420 = vld [vmem:[%s4382 + $0x128] sm:$0xff]
      %v4421 = vld [vmem:[%s4382 + $0x130] sm:$0xff]
      %v4422 = vld [vmem:[%s4382 + $0x138] sm:$0xff]
      %v4423 = vld [vmem:[%s4382 + $0x140] sm:$0x3]
      %v4424 = vld [vmem:[%s4382 + $0x148] sm:$0x3]
      %vm4425 = vcmask 1043456
      %v4426 = vrot.slane %v3377, 4
      %v4427 = vrot.slane %v3379, 4
      %v4428 = vsel %vm4425, %v4426, %v4427
      %v4429 = vrot.slane %v3378, 4
      %v4430 = vrot.slane %v3380, 4
      %v4431 = vsel %vm4425, %v4429, %v4430
      %v4432 = vrot.slane %v3381, 4
      %v4433 = vsel %vm4425, %v4427, %v4432
      %v4434 = vrot.slane %v3382, 4
      %v4435 = vsel %vm4425, %v4430, %v4434
      %v4436 = vrot.slane %v3383, 4
      %v4437 = vsel %vm4425, %v4432, %v4436
      %v4438 = vrot.slane %v3384, 4
      %v4439 = vsel %vm4425, %v4434, %v4438
      %v4440 = vrot.slane %v3385, 4
      %v4441 = vsel %vm4425, %v4436, %v4440
      %v4442 = vrot.slane %v3386, 4
      %v4443 = vsel %vm4425, %v4438, %v4442
      %v4444 = vrot.slane %v3387, 4
      %v4445 = vsel %vm4425, %v4440, %v4444
      %v4446 = vrot.slane %v3388, 4
      %v4447 = vsel %vm4425, %v4442, %v4446
      %v4448 = vrot.slane %v3389, 4
      %v4449 = vsel %vm4425, %v4444, %v4448
      %v4450 = vrot.slane %v3390, 4
      %v4451 = vsel %vm4425, %v4446, %v4450
      %v4452 = vrot.slane %v3391, 4
      %v4453 = vsel %vm4425, %v4448, %v4452
      %v4454 = vrot.slane %v3392, 4
      %v4455 = vsel %vm4425, %v4450, %v4454
      %v4456 = vrot.slane %v3393, 4
      %v4457 = vsel %vm4425, %v4452, %v4456
      %v4458 = vrot.slane %v3394, 4
      %v4459 = vsel %vm4425, %v4454, %v4458
      %v4460 = vrot.slane %v3395, 4
      %v4461 = vsel %vm4425, %v4456, %v4460
      %v4462 = vrot.slane %v3396, 4
      %v4463 = vsel %vm4425, %v4458, %v4462
      %v4464 = vrot.slane %v3397, 4
      %v4465 = vsel %vm4425, %v4460, %v4464
      %v4466 = vrot.slane %v3398, 4
      %v4467 = vsel %vm4425, %v4462, %v4466
      %v4468 = vrot.slane %v3399, 4
      %v4469 = vsel %vm4425, %v4464, %v4468
      %v4470 = vrot.slane %v3400, 4
      %v4471 = vsel %vm4425, %v4466, %v4470
      %v4472 = vrot.slane %v3401, 4
      %v4473 = vsel %vm4425, %v4468, %v4472
      %v4474 = vrot.slane %v3402, 4
      %v4475 = vsel %vm4425, %v4470, %v4474
      %v4476 = vrot.slane %v3403, 4
      %v4477 = vsel %vm4425, %v4472, %v4476
      %v4478 = vrot.slane %v3404, 4
      %v4479 = vsel %vm4425, %v4474, %v4478
      %v4480 = vrot.slane %v3405, 4
      %v4481 = vsel %vm4425, %v4476, %v4480
      %v4482 = vrot.slane %v3406, 4
      %v4483 = vsel %vm4425, %v4478, %v4482
      %v4484 = vrot.slane %v3407, 4
      %v4485 = vsel %vm4425, %v4480, %v4484
      %v4486 = vrot.slane %v3408, 4
      %v4487 = vsel %vm4425, %v4482, %v4486
      %v4488 = vrot.slane %v3409, 4
      %v4489 = vsel %vm4425, %v4484, %v4488
      %v4490 = vrot.slane %v3410, 4
      %v4491 = vsel %vm4425, %v4486, %v4490
      %v4492 = vrot.slane %v3411, 4
      %v4493 = vsel %vm4425, %v4488, %v4492
      %v4494 = vrot.slane %v3412, 4
      %v4495 = vsel %vm4425, %v4490, %v4494
      %v4496 = vrot.slane %v3413, 4
      %v4497 = vsel %vm4425, %v4492, %v4496
      %v4498 = vrot.slane %v3414, 4
      %v4499 = vsel %vm4425, %v4494, %v4498
      %v4500 = vrot.slane %v3415, 4
      %v4501 = vsel %vm4425, %v4496, %v4500
      %v4502 = vrot.slane %v3416, 4
      %v4503 = vsel %vm4425, %v4498, %v4502
      %v4504 = vrot.slane %v3417, 4
      %v4505 = vsel %vm4425, %v4500, %v4504
      %v4506 = vrot.slane %v3418, 4
      %v4507 = vsel %vm4425, %v4502, %v4506
      %v4508 = vrot.slane %v3419, 4
      %v4509 = vsel %vm4425, %v4504, %v4508
      %v4510 = vrot.slane %v3420, 4
      %v4511 = vsel %vm4425, %v4506, %v4510
      %v4512 = vrot.slane %v3421, 4
      %v4513 = vsel %vm4425, %v4508, %v4512
      %v4514 = vrot.slane %v3422, 4
      %v4515 = vsel %vm4425, %v4510, %v4514
      %v4516 = vrot.slane %v3423, 4
      %v4517 = vsel %vm4425, %v4512, %v4516
      %v4518 = vrot.slane %v3424, 4
      %v4519 = vsel %vm4425, %v4514, %v4518
      %v4520 = vrot.slane %v3425, 4
      %v4521 = vsel %vm4425, %v4516, %v4520
      %v4522 = vrot.slane %v3426, 4
      %v4523 = vsel %vm4425, %v4518, %v4522
      %v4524 = vrot.slane %v3427, 4
      %v4525 = vsel %vm4425, %v4520, %v4524
      %v4526 = vrot.slane %v3428, 4
      %v4527 = vsel %vm4425, %v4522, %v4526
      %v4528 = vrot.slane %v3429, 4
      %v4529 = vsel %vm4425, %v4524, %v4528
      %v4530 = vrot.slane %v3430, 4
      %v4531 = vsel %vm4425, %v4526, %v4530
      %v4532 = vrot.slane %v3431, 4
      %v4533 = vsel %vm4425, %v4528, %v4532
      %v4534 = vrot.slane %v3432, 4
      %v4535 = vsel %vm4425, %v4530, %v4534
      %v4536 = vrot.slane %v3433, 4
      %v4537 = vsel %vm4425, %v4532, %v4536
      %v4538 = vrot.slane %v3434, 4
      %v4539 = vsel %vm4425, %v4534, %v4538
      %v4540 = vrot.slane %v3435, 4
      %v4541 = vsel %vm4425, %v4536, %v4540
      %v4542 = vrot.slane %v3436, 4
      %v4543 = vsel %vm4425, %v4538, %v4542
      %v4544 = vrot.slane %v3437, 4
      %v4545 = vsel %vm4425, %v4540, %v4544
      %v4546 = vrot.slane %v3438, 4
      %v4547 = vsel %vm4425, %v4542, %v4546
      %v4579 = vsel %vm3742, %v4431, 0
      %v4581 = vsel %vm3742, %v4435, 0
      %v4583 = vsel %vm3742, %v4439, 0
      %v4585 = vsel %vm3742, %v4443, 0
      %v4587 = vsel %vm3742, %v4447, 0
      %v4589 = vsel %vm3742, %v4451, 0
      %v4591 = vsel %vm3742, %v4455, 0
      %v4593 = vsel %vm3742, %v4459, 0
      %v4595 = vsel %vm3742, %v4463, 0
      %v4597 = vsel %vm3742, %v4467, 0
      %v4599 = vsel %vm3742, %v4471, 0
      %v4601 = vsel %vm3742, %v4475, 0
      %v4603 = vsel %vm3742, %v4479, 0
      %v4605 = vsel %vm3742, %v4483, 0
      %v4607 = vsel %vm3742, %v4487, 0
      %v4609 = vsel %vm3742, %v4491, 0
      %v4611 = vsel %vm3742, %v4495, 0
      %v4613 = vsel %vm3742, %v4499, 0
      %v4615 = vsel %vm3742, %v4503, 0
      %v4617 = vsel %vm3742, %v4507, 0
      %v4619 = vsel %vm3742, %v4511, 0
      %v4621 = vsel %vm3742, %v4515, 0
      %v4623 = vsel %vm3742, %v4519, 0
      %v4625 = vsel %vm3742, %v4523, 0
      %v4627 = vsel %vm3742, %v4527, 0
      %v4629 = vsel %vm3742, %v4531, 0
      %v4631 = vsel %vm3742, %v4535, 0
      %v4633 = vsel %vm3742, %v4539, 0
      %v4635 = vsel %vm3742, %v4543, 0
      %v4637 = vsel %vm3742, %v4547, 0
      %v4639 = vsel %vm3742, %v4546, 0
      %v4642 = vsel %vm3805, %v4423, 0
      %v4645 = vsel %vm3805, %v4424, 0
      %4647 = vmatprep.subr.mxu0 %v4384
      %4648 = vmatpush1.msra.mxu0 %v4383
      %4649 = vmatprep.subr.mxu0 %v4386
      %4650 = vmatpush1.msra.mxu0 %v4385
      %4651 = vmatprep.subr.mxu0 %v4388
      %4652 = vmatpush1.msra.mxu0 %v4387
      %4653 = vmatprep.subr.mxu0 %v4390
      %4654 = vmatpush1.msra.mxu0 %v4389
      %4655 = vmatprep.subr.mxu0 %v4392
      %4656 = vmatpush1.msra.mxu0 %v4391
      %4657 = vmatprep.subr.mxu0 %v4394
      %4658 = vmatpush1.msra.mxu0 %v4393
      %4659 = vmatprep.subr.mxu0 %v4396
      %4660 = vmatpush1.msra.mxu0 %v4395
      %4661 = vmatprep.subr.mxu0 %v4398
      %4662 = vmatpush1.msra.mxu0 %v4397
      %4663 = vmatprep.subr.mxu0 %v4400
      %4664 = vmatpush1.msra.mxu0 %v4399
      %4665 = vmatprep.subr.mxu0 %v4402
      %4666 = vmatpush1.msra.mxu0 %v4401
      %4667 = vmatprep.subr.mxu0 %v4404
      %4668 = vmatpush1.msra.mxu0 %v4403
      %4669 = vmatprep.subr.mxu0 %v4406
      %4670 = vmatpush1.msra.mxu0 %v4405
      %4671 = vmatprep.subr.mxu0 %v4408
      %4672 = vmatpush1.msra.mxu0 %v4407
      %4673 = vmatprep.subr.mxu0 %v4410
      %4674 = vmatpush1.msra.mxu0 %v4409
      %4675 = vmatprep.subr.mxu0 %v4412
      %4676 = vmatpush1.msra.mxu0 %v4411
      %4677 = vmatprep.subr.mxu0 %v4414
      %4678 = vmatpush1.msra.mxu0 %v4413
      %4679 = vmatprep.subr.mxu0 %v4416
      %4680 = vmatpush1.msra.mxu0 %v4415
      %4681 = vmatprep.subr.mxu0 %v4418
      %4682 = vmatpush1.msra.mxu0 %v4417
      %4683 = vmatprep.subr.mxu0 %v4420
      %4684 = vmatpush1.msra.mxu0 %v4419
      %4685 = vmatprep.subr.mxu0 %v4422
      %4686 = vmatpush1.msra.mxu0 %v4421
      %4687 = vmatprep.subr.mxu0 %v4645
      %4688 = vmatpush1.msra.mxu0 %v4642
      %4689 = vmatprep.subr.mxu0 0.0
      %4690 = vmatpush1.msra.mxu0 0.0
      %4691 = vmatprep.subr.mxu0 0.0
      %4692 = vmatpush1.msra.mxu0 0.0
      %4693 = vmatprep.subr.mxu0 0.0
      %4694 = vmatpush1.msra.mxu0 0.0
      %4695 = vmatprep.subr.mxu0 0.0
      %4696 = vmatpush1.msra.mxu0 0.0
      %4697 = vmatprep.subr.mxu0 0.0
      %4698 = vmatpush1.msra.mxu0 0.0
      %4699 = vmatprep.subr.mxu0 0.0
      %4700 = vmatpush1.msra.mxu0 0.0
      %4701 = vmatprep.subr.mxu0 0.0
      %4702 = vmatpush1.msra.mxu0 0.0
      %4703 = vmatprep.subr.mxu0 0.0
      %4704 = vmatpush1.msra.mxu0 0.0
      %4705 = vmatprep.subr.mxu0 0.0
      %4706 = vmatpush1.msra.mxu0 0.0
      %4707 = vmatprep.subr.mxu0 0.0
      %4708 = vmatpush1.msra.mxu0 0.0
      %4709 = vmatprep.subr.mxu0 0.0
      %4710 = vmatpush1.msra.mxu0 0.0
      %4711 = vmatprep.mubr.f32.mxu0 %v4579
      %4712 = vmatmul.mubr.f32.gmra.mrb[0].mxu0 %v4428
      %v4713 = vpop.f32.mrb[0].mxu0
      %v4714 = vadd.f32 0.0, %v4713
      %v4715 = vpop.f32.mrb[0].mxu0
      %v4716 = vadd.f32 0.0, %v4715
      %4717 = vmatprep.mubr.f32.mxu0 %v4581
      %4718 = vmatmul.mubr.f32.gmra.mrb[0].mxu0 %v4433
      %v4719 = vpop.f32.mrb[0].mxu0
      %v4720 = vadd.f32 0.0, %v4719
      %v4721 = vpop.f32.mrb[0].mxu0
      %v4722 = vadd.f32 0.0, %v4721
      %4723 = vmatprep.mubr.f32.mxu0 %v4583
      %4724 = vmatmul.mubr.f32.gmra.mrb[0].mxu0 %v4437
      %v4725 = vpop.f32.mrb[0].mxu0
      %v4726 = vadd.f32 0.0, %v4725
      %v4727 = vpop.f32.mrb[0].mxu0
      %v4728 = vadd.f32 0.0, %v4727
      %4729 = vmatprep.mubr.f32.mxu0 %v4585
      %4730 = vmatmul.mubr.f32.gmra.mrb[0].mxu0 %v4441
      %v4731 = vpop.f32.mrb[0].mxu0
      %v4732 = vadd.f32 0.0, %v4731
      %v4733 = vpop.f32.mrb[0].mxu0
      %v4734 = vadd.f32 0.0, %v4733
      %4735 = vmatprep.mubr.f32.mxu0 %v4587
      %4736 = vmatmul.mubr.f32.gmra.mrb[0].mxu0 %v4445
      %v4737 = vpop.f32.mrb[0].mxu0
      %v4738 = vadd.f32 0.0, %v4737
      %v4739 = vpop.f32.mrb[0].mxu0
      %v4740 = vadd.f32 0.0, %v4739
      %4741 = vmatprep.mubr.f32.mxu0 %v4589
      %4742 = vmatmul.mubr.f32.gmra.mrb[0].mxu0 %v4449
      %v4743 = vpop.f32.mrb[0].mxu0
      %v4744 = vadd.f32 0.0, %v4743
      %v4745 = vpop.f32.mrb[0].mxu0
      %v4746 = vadd.f32 0.0, %v4745
      %4747 = vmatprep.mubr.f32.mxu0 %v4591
      %4748 = vmatmul.mubr.f32.gmra.mrb[0].mxu0 %v4453
      %v4749 = vpop.f32.mrb[0].mxu0
      %v4750 = vadd.f32 0.0, %v4749
      %v4751 = vpop.f32.mrb[0].mxu0
      %v4752 = vadd.f32 0.0, %v4751
      %4753 = vmatprep.mubr.f32.mxu0 %v4593
      %4754 = vmatmul.mubr.f32.gmra.mrb[0].mxu0 %v4457
      %v4755 = vpop.f32.mrb[0].mxu0
      %v4756 = vadd.f32 0.0, %v4755
      %v4757 = vpop.f32.mrb[0].mxu0
      %v4758 = vadd.f32 0.0, %v4757
      %4759 = vmatprep.mubr.f32.mxu0 %v4595
      %4760 = vmatmul.mubr.f32.gmra.mrb[0].mxu0 %v4461
      %v4761 = vpop.f32.mrb[0].mxu0
      %v4762 = vadd.f32 0.0, %v4761
      %v4763 = vpop.f32.mrb[0].mxu0
      %v4764 = vadd.f32 0.0, %v4763
      %4765 = vmatprep.mubr.f32.mxu0 %v4597
      %4766 = vmatmul.mubr.f32.gmra.mrb[0].mxu0 %v4465
      %v4767 = vpop.f32.mrb[0].mxu0
      %v4768 = vadd.f32 0.0, %v4767
      %v4769 = vpop.f32.mrb[0].mxu0
      %v4770 = vadd.f32 0.0, %v4769
      %4771 = vmatprep.mubr.f32.mxu0 %v4599
      %4772 = vmatmul.mubr.f32.gmra.mrb[0].mxu0 %v4469
      %v4773 = vpop.f32.mrb[0].mxu0
      %v4774 = vadd.f32 0.0, %v4773
      %v4775 = vpop.f32.mrb[0].mxu0
      %v4776 = vadd.f32 0.0, %v4775
      %4777 = vmatprep.mubr.f32.mxu0 %v4601
      %4778 = vmatmul.mubr.f32.gmra.mrb[0].mxu0 %v4473
      %v4779 = vpop.f32.mrb[0].mxu0
      %v4780 = vadd.f32 0.0, %v4779
      %v4781 = vpop.f32.mrb[0].mxu0
      %v4782 = vadd.f32 0.0, %v4781
      %4783 = vmatprep.mubr.f32.mxu0 %v4603
      %4784 = vmatmul.mubr.f32.gmra.mrb[0].mxu0 %v4477
      %v4785 = vpop.f32.mrb[0].mxu0
      %v4786 = vadd.f32 0.0, %v4785
      %v4787 = vpop.f32.mrb[0].mxu0
      %v4788 = vadd.f32 0.0, %v4787
      %4789 = vmatprep.mubr.f32.mxu0 %v4605
      %4790 = vmatmul.mubr.f32.gmra.mrb[0].mxu0 %v4481
      %v4791 = vpop.f32.mrb[0].mxu0
      %v4792 = vadd.f32 0.0, %v4791
      %v4793 = vpop.f32.mrb[0].mxu0
      %v4794 = vadd.f32 0.0, %v4793
      %4795 = vmatprep.mubr.f32.mxu0 %v4607
      %4796 = vmatmul.mubr.f32.gmra.mrb[0].mxu0 %v4485
      %v4797 = vpop.f32.mrb[0].mxu0
      %v4798 = vadd.f32 0.0, %v4797
      %v4799 = vpop.f32.mrb[0].mxu0
      %v4800 = vadd.f32 0.0, %v4799
      %4801 = vmatprep.mubr.f32.mxu0 %v4609
      %4802 = vmatmul.mubr.f32.gmra.mrb[0].mxu0 %v4489
      %v4803 = vpop.f32.mrb[0].mxu0
      %v4804 = vadd.f32 0.0, %v4803
      %v4805 = vpop.f32.mrb[0].mxu0
      %v4806 = vadd.f32 0.0, %v4805
      %4807 = vmatprep.mubr.f32.mxu0 %v4611
      %4808 = vmatmul.mubr.f32.gmra.mrb[0].mxu0 %v4493
      %v4809 = vpop.f32.mrb[0].mxu0
      %v4810 = vadd.f32 0.0, %v4809
      %v4811 = vpop.f32.mrb[0].mxu0
      %v4812 = vadd.f32 0.0, %v4811
      %4813 = vmatprep.mubr.f32.mxu0 %v4613
      %4814 = vmatmul.mubr.f32.gmra.mrb[0].mxu0 %v4497
      %v4815 = vpop.f32.mrb[0].mxu0
      %v4816 = vadd.f32 0.0, %v4815
      %v4817 = vpop.f32.mrb[0].mxu0
      %v4818 = vadd.f32 0.0, %v4817
      %4819 = vmatprep.mubr.f32.mxu0 %v4615
      %4820 = vmatmul.mubr.f32.gmra.mrb[0].mxu0 %v4501
      %v4821 = vpop.f32.mrb[0].mxu0
      %v4822 = vadd.f32 0.0, %v4821
      %v4823 = vpop.f32.mrb[0].mxu0
      %v4824 = vadd.f32 0.0, %v4823
      %4825 = vmatprep.mubr.f32.mxu0 %v4617
      %4826 = vmatmul.mubr.f32.gmra.mrb[0].mxu0 %v4505
      %v4827 = vpop.f32.mrb[0].mxu0
      %v4828 = vadd.f32 0.0, %v4827
      %v4829 = vpop.f32.mrb[0].mxu0
      %v4830 = vadd.f32 0.0, %v4829
      %4831 = vmatprep.mubr.f32.mxu0 %v4619
      %4832 = vmatmul.mubr.f32.gmra.mrb[0].mxu0 %v4509
      %v4833 = vpop.f32.mrb[0].mxu0
      %v4834 = vadd.f32 0.0, %v4833
      %v4835 = vpop.f32.mrb[0].mxu0
      %v4836 = vadd.f32 0.0, %v4835
      %4837 = vmatprep.mubr.f32.mxu0 %v4621
      %4838 = vmatmul.mubr.f32.gmra.mrb[0].mxu0 %v4513
      %v4839 = vpop.f32.mrb[0].mxu0
      %v4840 = vadd.f32 0.0, %v4839
      %v4841 = vpop.f32.mrb[0].mxu0
      %v4842 = vadd.f32 0.0, %v4841
      %4843 = vmatprep.mubr.f32.mxu0 %v4623
      %4844 = vmatmul.mubr.f32.gmra.mrb[0].mxu0 %v4517
      %v4845 = vpop.f32.mrb[0].mxu0
      %v4846 = vadd.f32 0.0, %v4845
      %v4847 = vpop.f32.mrb[0].mxu0
      %v4848 = vadd.f32 0.0, %v4847
      %4849 = vmatprep.mubr.f32.mxu0 %v4625
      %4850 = vmatmul.mubr.f32.gmra.mrb[0].mxu0 %v4521
      %v4851 = vpop.f32.mrb[0].mxu0
      %v4852 = vadd.f32 0.0, %v4851
      %v4853 = vpop.f32.mrb[0].mxu0
      %v4854 = vadd.f32 0.0, %v4853
      %4855 = vmatprep.mubr.f32.mxu0 %v4627
      %4856 = vmatmul.mubr.f32.gmra.mrb[0].mxu0 %v4525
      %v4857 = vpop.f32.mrb[0].mxu0
      %v4858 = vadd.f32 0.0, %v4857
      %v4859 = vpop.f32.mrb[0].mxu0
      %v4860 = vadd.f32 0.0, %v4859
      %4861 = vmatprep.mubr.f32.mxu0 %v4629
      %4862 = vmatmul.mubr.f32.gmra.mrb[0].mxu0 %v4529
      %v4863 = vpop.f32.mrb[0].mxu0
      %v4864 = vadd.f32 0.0, %v4863
      %v4865 = vpop.f32.mrb[0].mxu0
      %v4866 = vadd.f32 0.0, %v4865
      %4867 = vmatprep.mubr.f32.mxu0 %v4631
      %4868 = vmatmul.mubr.f32.gmra.mrb[0].mxu0 %v4533
      %v4869 = vpop.f32.mrb[0].mxu0
      %v4870 = vadd.f32 0.0, %v4869
      %v4871 = vpop.f32.mrb[0].mxu0
      %v4872 = vadd.f32 0.0, %v4871
      %4873 = vmatprep.mubr.f32.mxu0 %v4633
      %4874 = vmatmul.mubr.f32.gmra.mrb[0].mxu0 %v4537
      %v4875 = vpop.f32.mrb[0].mxu0
      %v4876 = vadd.f32 0.0, %v4875
      %v4877 = vpop.f32.mrb[0].mxu0
      %v4878 = vadd.f32 0.0, %v4877
      %4879 = vmatprep.mubr.f32.mxu0 %v4635
      %4880 = vmatmul.mubr.f32.gmra.mrb[0].mxu0 %v4541
      %v4881 = vpop.f32.mrb[0].mxu0
      %v4882 = vadd.f32 0.0, %v4881
      %v4883 = vpop.f32.mrb[0].mxu0
      %v4884 = vadd.f32 0.0, %v4883
      %4885 = vmatprep.mubr.f32.mxu0 %v4637
      %4886 = vmatmul.mubr.f32.gmra.mrb[0].mxu0 %v4545
      %v4887 = vpop.f32.mrb[0].mxu0
      %v4888 = vadd.f32 0.0, %v4887
      %v4889 = vpop.f32.mrb[0].mxu0
      %v4890 = vadd.f32 0.0, %v4889
      %4891 = vmatprep.mubr.f32.mxu0 %v4639
      %4892 = vmatmul.mubr.f32.gmra.mrb[0].mxu0 %v4544
      %v4893 = vpop.f32.mrb[0].mxu0
      %v4894 = vadd.f32 0.0, %v4893
      %v4895 = vpop.f32.mrb[0].mxu0
      %v4896 = vadd.f32 0.0, %v4895
      %4897 = vdwg.mxu0
      %v4898 = vadd.f32 %v4198, %v4714
      %v4899 = vadd.f32 %v4200, %v4716
      %v4900 = vadd.f32 %v4204, %v4720
      %v4901 = vadd.f32 %v4206, %v4722
      %v4902 = vadd.f32 %v4210, %v4726
      %v4903 = vadd.f32 %v4212, %v4728
      %v4904 = vadd.f32 %v4216, %v4732
      %v4905 = vadd.f32 %v4218, %v4734
      %v4906 = vadd.f32 %v4222, %v4738
      %v4907 = vadd.f32 %v4224, %v4740
      %v4908 = vadd.f32 %v4228, %v4744
      %v4909 = vadd.f32 %v4230, %v4746
      %v4910 = vadd.f32 %v4234, %v4750
      %v4911 = vadd.f32 %v4236, %v4752
      %v4912 = vadd.f32 %v4240, %v4756
      %v4913 = vadd.f32 %v4242, %v4758
      %v4914 = vadd.f32 %v4246, %v4762
      %v4915 = vadd.f32 %v4248, %v4764
      %v4916 = vadd.f32 %v4252, %v4768
      %v4917 = vadd.f32 %v4254, %v4770
      %v4918 = vadd.f32 %v4258, %v4774
      %v4919 = vadd.f32 %v4260, %v4776
      %v4920 = vadd.f32 %v4264, %v4780
      %v4921 = vadd.f32 %v4266, %v4782
      %v4922 = vadd.f32 %v4270, %v4786
      %v4923 = vadd.f32 %v4272, %v4788
      %v4924 = vadd.f32 %v4276, %v4792
      %v4925 = vadd.f32 %v4278, %v4794
      %v4926 = vadd.f32 %v4282, %v4798
      %v4927 = vadd.f32 %v4284, %v4800
      %v4928 = vadd.f32 %v4288, %v4804
      %v4929 = vadd.f32 %v4290, %v4806
      %v4930 = vadd.f32 %v4294, %v4810
      %v4931 = vadd.f32 %v4296, %v4812
      %v4932 = vadd.f32 %v4300, %v4816
      %v4933 = vadd.f32 %v4302, %v4818
      %v4934 = vadd.f32 %v4306, %v4822
      %v4935 = vadd.f32 %v4308, %v4824
      %v4936 = vadd.f32 %v4312, %v4828
      %v4937 = vadd.f32 %v4314, %v4830
      %v4938 = vadd.f32 %v4318, %v4834
      %v4939 = vadd.f32 %v4320, %v4836
      %v4940 = vadd.f32 %v4324, %v4840
      %v4941 = vadd.f32 %v4326, %v4842
      %v4942 = vadd.f32 %v4330, %v4846
      %v4943 = vadd.f32 %v4332, %v4848
      %v4944 = vadd.f32 %v4336, %v4852
      %v4945 = vadd.f32 %v4338, %v4854
      %v4946 = vadd.f32 %v4342, %v4858
      %v4947 = vadd.f32 %v4344, %v4860
      %v4948 = vadd.f32 %v4348, %v4864
      %v4949 = vadd.f32 %v4350, %v4866
      %v4950 = vadd.f32 %v4354, %v4870
      %v4951 = vadd.f32 %v4356, %v4872
      %v4952 = vadd.f32 %v4360, %v4876
      %v4953 = vadd.f32 %v4362, %v4878
      %v4954 = vadd.f32 %v4366, %v4882
      %v4955 = vadd.f32 %v4368, %v4884
      %v4956 = vadd.f32 %v4372, %v4888
      %v4957 = vadd.f32 %v4374, %v4890
      %v4958 = vadd.f32 %v4378, %v4894
      %v4959 = vadd.f32 %v4380, %v4896
      %s4960 = scalar_lea.vmem %s3, 1008
      %v4961 = vld [vmem:[%s4960] sm:$0xff]
      %v4962 = vld [vmem:[%s4960 + $0x8] sm:$0xff]
      %v4963 = vld [vmem:[%s4960 + $0x10] sm:$0xff]
      %v4964 = vld [vmem:[%s4960 + $0x18] sm:$0xff]
      %v4965 = vld [vmem:[%s4960 + $0x20] sm:$0xff]
      %v4966 = vld [vmem:[%s4960 + $0x28] sm:$0xff]
      %v4967 = vld [vmem:[%s4960 + $0x30] sm:$0xff]
      %v4968 = vld [vmem:[%s4960 + $0x38] sm:$0xff]
      %v4969 = vld [vmem:[%s4960 + $0x40] sm:$0xff]
      %v4970 = vld [vmem:[%s4960 + $0x48] sm:$0xff]
      %v4971 = vld [vmem:[%s4960 + $0x50] sm:$0xff]
      %v4972 = vld [vmem:[%s4960 + $0x58] sm:$0xff]
      %v4973 = vld [vmem:[%s4960 + $0x60] sm:$0xff]
      %v4974 = vld [vmem:[%s4960 + $0x68] sm:$0xff]
      %v4975 = vld [vmem:[%s4960 + $0x70] sm:$0xff]
      %v4976 = vld [vmem:[%s4960 + $0x78] sm:$0xff]
      %v4977 = vld [vmem:[%s4960 + $0x80] sm:$0xff]
      %v4978 = vld [vmem:[%s4960 + $0x88] sm:$0xff]
      %v4979 = vld [vmem:[%s4960 + $0x90] sm:$0xff]
      %v4980 = vld [vmem:[%s4960 + $0x98] sm:$0xff]
      %v4981 = vld [vmem:[%s4960 + $0xa0] sm:$0xff]
      %v4982 = vld [vmem:[%s4960 + $0xa8] sm:$0xff]
      %v4983 = vld [vmem:[%s4960 + $0xb0] sm:$0xff]
      %v4984 = vld [vmem:[%s4960 + $0xb8] sm:$0xff]
      %v4985 = vld [vmem:[%s4960 + $0xc0] sm:$0xff]
      %v4986 = vld [vmem:[%s4960 + $0xc8] sm:$0xff]
      %v4987 = vld [vmem:[%s4960 + $0xd0] sm:$0xff]
      %v4988 = vld [vmem:[%s4960 + $0xd8] sm:$0xff]
      %v4989 = vld [vmem:[%s4960 + $0xe0] sm:$0xff]
      %v4990 = vld [vmem:[%s4960 + $0xe8] sm:$0xff]
      %v4991 = vld [vmem:[%s4960 + $0xf0] sm:$0xff]
      %v4992 = vld [vmem:[%s4960 + $0xf8] sm:$0xff]
      %v4993 = vld [vmem:[%s4960 + $0x100] sm:$0xff]
      %v4994 = vld [vmem:[%s4960 + $0x108] sm:$0xff]
      %v4995 = vld [vmem:[%s4960 + $0x110] sm:$0xff]
      %v4996 = vld [vmem:[%s4960 + $0x118] sm:$0xff]
      %v4997 = vld [vmem:[%s4960 + $0x120] sm:$0xff]
      %v4998 = vld [vmem:[%s4960 + $0x128] sm:$0xff]
      %v4999 = vld [vmem:[%s4960 + $0x130] sm:$0xff]
      %v5000 = vld [vmem:[%s4960 + $0x138] sm:$0xff]
      %v5001 = vld [vmem:[%s4960 + $0x140] sm:$0x3]
      %v5002 = vld [vmem:[%s4960 + $0x148] sm:$0x3]
      %v5005 = vrot.slane %v3377, 6
      %v5006 = vrot.slane %v3379, 6
      %v5007 = vsel %vm3805, %v5005, %v5006
      %v5008 = vrot.slane %v3378, 6
      %v5009 = vrot.slane %v3380, 6
      %v5010 = vsel %vm3805, %v5008, %v5009
      %v5011 = vrot.slane %v3381, 6
      %v5012 = vsel %vm3805, %v5006, %v5011
      %v5013 = vrot.slane %v3382, 6
      %v5014 = vsel %vm3805, %v5009, %v5013
      %v5015 = vrot.slane %v3383, 6
      %v5016 = vsel %vm3805, %v5011, %v5015
      %v5017 = vrot.slane %v3384, 6
      %v5018 = vsel %vm3805, %v5013, %v5017
      %v5019 = vrot.slane %v3385, 6
      %v5020 = vsel %vm3805, %v5015, %v5019
      %v5021 = vrot.slane %v3386, 6
      %v5022 = vsel %vm3805, %v5017, %v5021
      %v5023 = vrot.slane %v3387, 6
      %v5024 = vsel %vm3805, %v5019, %v5023
      %v5025 = vrot.slane %v3388, 6
      %v5026 = vsel %vm3805, %v5021, %v5025
      %v5027 = vrot.slane %v3389, 6
      %v5028 = vsel %vm3805, %v5023, %v5027
      %v5029 = vrot.slane %v3390, 6
      %v5030 = vsel %vm3805, %v5025, %v5029
      %v5031 = vrot.slane %v3391, 6
      %v5032 = vsel %vm3805, %v5027, %v5031
      %v5033 = vrot.slane %v3392, 6
      %v5034 = vsel %vm3805, %v5029, %v5033
      %v5035 = vrot.slane %v3393, 6
      %v5036 = vsel %vm3805, %v5031, %v5035
      %v5037 = vrot.slane %v3394, 6
      %v5038 = vsel %vm3805, %v5033, %v5037
      %v5039 = vrot.slane %v3395, 6
      %v5040 = vsel %vm3805, %v5035, %v5039
      %v5041 = vrot.slane %v3396, 6
      %v5042 = vsel %vm3805, %v5037, %v5041
      %v5043 = vrot.slane %v3397, 6
      %v5044 = vsel %vm3805, %v5039, %v5043
      %v5045 = vrot.slane %v3398, 6
      %v5046 = vsel %vm3805, %v5041, %v5045
      %v5047 = vrot.slane %v3399, 6
      %v5048 = vsel %vm3805, %v5043, %v5047
      %v5049 = vrot.slane %v3400, 6
      %v5050 = vsel %vm3805, %v5045, %v5049
      %v5051 = vrot.slane %v3401, 6
      %v5052 = vsel %vm3805, %v5047, %v5051
      %v5053 = vrot.slane %v3402, 6
      %v5054 = vsel %vm3805, %v5049, %v5053
      %v5055 = vrot.slane %v3403, 6
      %v5056 = vsel %vm3805, %v5051, %v5055
      %v5057 = vrot.slane %v3404, 6
      %v5058 = vsel %vm3805, %v5053, %v5057
      %v5059 = vrot.slane %v3405, 6
      %v5060 = vsel %vm3805, %v5055, %v5059
      %v5061 = vrot.slane %v3406, 6
      %v5062 = vsel %vm3805, %v5057, %v5061
      %v5063 = vrot.slane %v3407, 6
      %v5064 = vsel %vm3805, %v5059, %v5063
      %v5065 = vrot.slane %v3408, 6
      %v5066 = vsel %vm3805, %v5061, %v5065
      %v5067 = vrot.slane %v3409, 6
      %v5068 = vsel %vm3805, %v5063, %v5067
      %v5069 = vrot.slane %v3410, 6
      %v5070 = vsel %vm3805, %v5065, %v5069
      %v5071 = vrot.slane %v3411, 6
      %v5072 = vsel %vm3805, %v5067, %v5071
      %v5073 = vrot.slane %v3412, 6
      %v5074 = vsel %vm3805, %v5069, %v5073
      %v5075 = vrot.slane %v3413, 6
      %v5076 = vsel %vm3805, %v5071, %v5075
      %v5077 = vrot.slane %v3414, 6
      %v5078 = vsel %vm3805, %v5073, %v5077
      %v5079 = vrot.slane %v3415, 6
      %v5080 = vsel %vm3805, %v5075, %v5079
      %v5081 = vrot.slane %v3416, 6
      %v5082 = vsel %vm3805, %v5077, %v5081
      %v5083 = vrot.slane %v3417, 6
      %v5084 = vsel %vm3805, %v5079, %v5083
      %v5085 = vrot.slane %v3418, 6
      %v5086 = vsel %vm3805, %v5081, %v5085
      %v5087 = vrot.slane %v3419, 6
      %v5088 = vsel %vm3805, %v5083, %v5087
      %v5089 = vrot.slane %v3420, 6
      %v5090 = vsel %vm3805, %v5085, %v5089
      %v5091 = vrot.slane %v3421, 6
      %v5092 = vsel %vm3805, %v5087, %v5091
      %v5093 = vrot.slane %v3422, 6
      %v5094 = vsel %vm3805, %v5089, %v5093
      %v5095 = vrot.slane %v3423, 6
      %v5096 = vsel %vm3805, %v5091, %v5095
      %v5097 = vrot.slane %v3424, 6
      %v5098 = vsel %vm3805, %v5093, %v5097
      %v5099 = vrot.slane %v3425, 6
      %v5100 = vsel %vm3805, %v5095, %v5099
      %v5101 = vrot.slane %v3426, 6
      %v5102 = vsel %vm3805, %v5097, %v5101
      %v5103 = vrot.slane %v3427, 6
      %v5104 = vsel %vm3805, %v5099, %v5103
      %v5105 = vrot.slane %v3428, 6
      %v5106 = vsel %vm3805, %v5101, %v5105
      %v5107 = vrot.slane %v3429, 6
      %v5108 = vsel %vm3805, %v5103, %v5107
      %v5109 = vrot.slane %v3430, 6
      %v5110 = vsel %vm3805, %v5105, %v5109
      %v5111 = vrot.slane %v3431, 6
      %v5112 = vsel %vm3805, %v5107, %v5111
      %v5113 = vrot.slane %v3432, 6
      %v5114 = vsel %vm3805, %v5109, %v5113
      %v5115 = vrot.slane %v3433, 6
      %v5116 = vsel %vm3805, %v5111, %v5115
      %v5117 = vrot.slane %v3434, 6
      %v5118 = vsel %vm3805, %v5113, %v5117
      %v5119 = vrot.slane %v3435, 6
      %v5120 = vsel %vm3805, %v5115, %v5119
      %v5121 = vrot.slane %v3436, 6
      %v5122 = vsel %vm3805, %v5117, %v5121
      %v5123 = vrot.slane %v3437, 6
      %v5124 = vsel %vm3805, %v5119, %v5123
      %v5125 = vrot.slane %v3438, 6
      %v5126 = vsel %vm3805, %v5121, %v5125
      %v5127 = vrot.slane %v3439, 6
      %v5128 = vsel %vm3805, %v5123, %v5127
      %v5129 = vrot.slane %v3440, 6
      %v5130 = vsel %vm3805, %v5125, %v5129
      %v5162 = vsel %vm3742, %v5010, 0
      %v5164 = vsel %vm3742, %v5014, 0
      %v5166 = vsel %vm3742, %v5018, 0
      %v5168 = vsel %vm3742, %v5022, 0
      %v5170 = vsel %vm3742, %v5026, 0
      %v5172 = vsel %vm3742, %v5030, 0
      %v5174 = vsel %vm3742, %v5034, 0
      %v5176 = vsel %vm3742, %v5038, 0
      %v5178 = vsel %vm3742, %v5042, 0
      %v5180 = vsel %vm3742, %v5046, 0
      %v5182 = vsel %vm3742, %v5050, 0
      %v5184 = vsel %vm3742, %v5054, 0
      %v5186 = vsel %vm3742, %v5058, 0
      %v5188 = vsel %vm3742, %v5062, 0
      %v5190 = vsel %vm3742, %v5066, 0
      %v5192 = vsel %vm3742, %v5070, 0
      %v5194 = vsel %vm3742, %v5074, 0
      %v5196 = vsel %vm3742, %v5078, 0
      %v5198 = vsel %vm3742, %v5082, 0
      %v5200 = vsel %vm3742, %v5086, 0
      %v5202 = vsel %vm3742, %v5090, 0
      %v5204 = vsel %vm3742, %v5094, 0
      %v5206 = vsel %vm3742, %v5098, 0
      %v5208 = vsel %vm3742, %v5102, 0
      %v5210 = vsel %vm3742, %v5106, 0
      %v5212 = vsel %vm3742, %v5110, 0
      %v5214 = vsel %vm3742, %v5114, 0
      %v5216 = vsel %vm3742, %v5118, 0
      %v5218 = vsel %vm3742, %v5122, 0
      %v5220 = vsel %vm3742, %v5126, 0
      %v5222 = vsel %vm3742, %v5130, 0
      %v5225 = vsel %vm3805, %v5001, 0
      %v5228 = vsel %vm3805, %v5002, 0
      %5230 = vmatprep.subr.mxu0 %v4962
      %5231 = vmatpush1.msra.mxu0 %v4961
      %5232 = vmatprep.subr.mxu0 %v4964
      %5233 = vmatpush1.msra.mxu0 %v4963
      %5234 = vmatprep.subr.mxu0 %v4966
      %5235 = vmatpush1.msra.mxu0 %v4965
      %5236 = vmatprep.subr.mxu0 %v4968
      %5237 = vmatpush1.msra.mxu0 %v4967
      %5238 = vmatprep.subr.mxu0 %v4970
      %5239 = vmatpush1.msra.mxu0 %v4969
      %5240 = vmatprep.subr.mxu0 %v4972
      %5241 = vmatpush1.msra.mxu0 %v4971
      %5242 = vmatprep.subr.mxu0 %v4974
      %5243 = vmatpush1.msra.mxu0 %v4973
      %5244 = vmatprep.subr.mxu0 %v4976
      %5245 = vmatpush1.msra.mxu0 %v4975
      %5246 = vmatprep.subr.mxu0 %v4978
      %5247 = vmatpush1.msra.mxu0 %v4977
      %5248 = vmatprep.subr.mxu0 %v4980
      %5249 = vmatpush1.msra.mxu0 %v4979
      %5250 = vmatprep.subr.mxu0 %v4982
      %5251 = vmatpush1.msra.mxu0 %v4981
      %5252 = vmatprep.subr.mxu0 %v4984
      %5253 = vmatpush1.msra.mxu0 %v4983
      %5254 = vmatprep.subr.mxu0 %v4986
      %5255 = vmatpush1.msra.mxu0 %v4985
      %5256 = vmatprep.subr.mxu0 %v4988
      %5257 = vmatpush1.msra.mxu0 %v4987
      %5258 = vmatprep.subr.mxu0 %v4990
      %5259 = vmatpush1.msra.mxu0 %v4989
      %5260 = vmatprep.subr.mxu0 %v4992
      %5261 = vmatpush1.msra.mxu0 %v4991
      %5262 = vmatprep.subr.mxu0 %v4994
      %5263 = vmatpush1.msra.mxu0 %v4993
      %5264 = vmatprep.subr.mxu0 %v4996
      %5265 = vmatpush1.msra.mxu0 %v4995
      %5266 = vmatprep.subr.mxu0 %v4998
      %5267 = vmatpush1.msra.mxu0 %v4997
      %5268 = vmatprep.subr.mxu0 %v5000
      %5269 = vmatpush1.msra.mxu0 %v4999
      %5270 = vmatprep.subr.mxu0 %v5228
      %5271 = vmatpush1.msra.mxu0 %v5225
      %5272 = vmatprep.subr.mxu0 0.0
      %5273 = vmatpush1.msra.mxu0 0.0
      %5274 = vmatprep.subr.mxu0 0.0
      %5275 = vmatpush1.msra.mxu0 0.0
      %5276 = vmatprep.subr.mxu0 0.0
      %5277 = vmatpush1.msra.mxu0 0.0
      %5278 = vmatprep.subr.mxu0 0.0
      %5279 = vmatpush1.msra.mxu0 0.0
      %5280 = vmatprep.subr.mxu0 0.0
      %5281 = vmatpush1.msra.mxu0 0.0
      %5282 = vmatprep.subr.mxu0 0.0
      %5283 = vmatpush1.msra.mxu0 0.0
      %5284 = vmatprep.subr.mxu0 0.0
      %5285 = vmatpush1.msra.mxu0 0.0
      %5286 = vmatprep.subr.mxu0 0.0
      %5287 = vmatpush1.msra.mxu0 0.0
      %5288 = vmatprep.subr.mxu0 0.0
      %5289 = vmatpush1.msra.mxu0 0.0
      %5290 = vmatprep.subr.mxu0 0.0
      %5291 = vmatpush1.msra.mxu0 0.0
      %5292 = vmatprep.subr.mxu0 0.0
      %5293 = vmatpush1.msra.mxu0 0.0
      %5294 = vmatprep.mubr.f32.mxu0 %v5162
      %5295 = vmatmul.mubr.f32.gmra.mrb[0].mxu0 %v5007
      %v5296 = vpop.f32.mrb[0].mxu0
      %v5297 = vadd.f32 0.0, %v5296
      %v5298 = vpop.f32.mrb[0].mxu0
      %v5299 = vadd.f32 0.0, %v5298
      %5300 = vmatprep.mubr.f32.mxu0 %v5164
      %5301 = vmatmul.mubr.f32.gmra.mrb[0].mxu0 %v5012
      %v5302 = vpop.f32.mrb[0].mxu0
      %v5303 = vadd.f32 0.0, %v5302
      %v5304 = vpop.f32.mrb[0].mxu0
      %v5305 = vadd.f32 0.0, %v5304
      %5306 = vmatprep.mubr.f32.mxu0 %v5166
      %5307 = vmatmul.mubr.f32.gmra.mrb[0].mxu0 %v5016
      %v5308 = vpop.f32.mrb[0].mxu0
      %v5309 = vadd.f32 0.0, %v5308
      %v5310 = vpop.f32.mrb[0].mxu0
      %v5311 = vadd.f32 0.0, %v5310
      %5312 = vmatprep.mubr.f32.mxu0 %v5168
      %5313 = vmatmul.mubr.f32.gmra.mrb[0].mxu0 %v5020
      %v5314 = vpop.f32.mrb[0].mxu0
      %v5315 = vadd.f32 0.0, %v5314
      %v5316 = vpop.f32.mrb[0].mxu0
      %v5317 = vadd.f32 0.0, %v5316
      %5318 = vmatprep.mubr.f32.mxu0 %v5170
      %5319 = vmatmul.mubr.f32.gmra.mrb[0].mxu0 %v5024
      %v5320 = vpop.f32.mrb[0].mxu0
      %v5321 = vadd.f32 0.0, %v5320
      %v5322 = vpop.f32.mrb[0].mxu0
      %v5323 = vadd.f32 0.0, %v5322
      %5324 = vmatprep.mubr.f32.mxu0 %v5172
      %5325 = vmatmul.mubr.f32.gmra.mrb[0].mxu0 %v5028
      %v5326 = vpop.f32.mrb[0].mxu0
      %v5327 = vadd.f32 0.0, %v5326
      %v5328 = vpop.f32.mrb[0].mxu0
      %v5329 = vadd.f32 0.0, %v5328
      %5330 = vmatprep.mubr.f32.mxu0 %v5174
      %5331 = vmatmul.mubr.f32.gmra.mrb[0].mxu0 %v5032
      %v5332 = vpop.f32.mrb[0].mxu0
      %v5333 = vadd.f32 0.0, %v5332
      %v5334 = vpop.f32.mrb[0].mxu0
      %v5335 = vadd.f32 0.0, %v5334
      %5336 = vmatprep.mubr.f32.mxu0 %v5176
      %5337 = vmatmul.mubr.f32.gmra.mrb[0].mxu0 %v5036
      %v5338 = vpop.f32.mrb[0].mxu0
      %v5339 = vadd.f32 0.0, %v5338
      %v5340 = vpop.f32.mrb[0].mxu0
      %v5341 = vadd.f32 0.0, %v5340
      %5342 = vmatprep.mubr.f32.mxu0 %v5178
      %5343 = vmatmul.mubr.f32.gmra.mrb[0].mxu0 %v5040
      %v5344 = vpop.f32.mrb[0].mxu0
      %v5345 = vadd.f32 0.0, %v5344
      %v5346 = vpop.f32.mrb[0].mxu0
      %v5347 = vadd.f32 0.0, %v5346
      %5348 = vmatprep.mubr.f32.mxu0 %v5180
      %5349 = vmatmul.mubr.f32.gmra.mrb[0].mxu0 %v5044
      %v5350 = vpop.f32.mrb[0].mxu0
      %v5351 = vadd.f32 0.0, %v5350
      %v5352 = vpop.f32.mrb[0].mxu0
      %v5353 = vadd.f32 0.0, %v5352
      %5354 = vmatprep.mubr.f32.mxu0 %v5182
      %5355 = vmatmul.mubr.f32.gmra.mrb[0].mxu0 %v5048
      %v5356 = vpop.f32.mrb[0].mxu0
      %v5357 = vadd.f32 0.0, %v5356
      %v5358 = vpop.f32.mrb[0].mxu0
      %v5359 = vadd.f32 0.0, %v5358
      %5360 = vmatprep.mubr.f32.mxu0 %v5184
      %5361 = vmatmul.mubr.f32.gmra.mrb[0].mxu0 %v5052
      %v5362 = vpop.f32.mrb[0].mxu0
      %v5363 = vadd.f32 0.0, %v5362
      %v5364 = vpop.f32.mrb[0].mxu0
      %v5365 = vadd.f32 0.0, %v5364
      %5366 = vmatprep.mubr.f32.mxu0 %v5186
      %5367 = vmatmul.mubr.f32.gmra.mrb[0].mxu0 %v5056
      %v5368 = vpop.f32.mrb[0].mxu0
      %v5369 = vadd.f32 0.0, %v5368
      %v5370 = vpop.f32.mrb[0].mxu0
      %v5371 = vadd.f32 0.0, %v5370
      %5372 = vmatprep.mubr.f32.mxu0 %v5188
      %5373 = vmatmul.mubr.f32.gmra.mrb[0].mxu0 %v5060
      %v5374 = vpop.f32.mrb[0].mxu0
      %v5375 = vadd.f32 0.0, %v5374
      %v5376 = vpop.f32.mrb[0].mxu0
      %v5377 = vadd.f32 0.0, %v5376
      %5378 = vmatprep.mubr.f32.mxu0 %v5190
      %5379 = vmatmul.mubr.f32.gmra.mrb[0].mxu0 %v5064
      %v5380 = vpop.f32.mrb[0].mxu0
      %v5381 = vadd.f32 0.0, %v5380
      %v5382 = vpop.f32.mrb[0].mxu0
      %v5383 = vadd.f32 0.0, %v5382
      %5384 = vmatprep.mubr.f32.mxu0 %v5192
      %5385 = vmatmul.mubr.f32.gmra.mrb[0].mxu0 %v5068
      %v5386 = vpop.f32.mrb[0].mxu0
      %v5387 = vadd.f32 0.0, %v5386
      %v5388 = vpop.f32.mrb[0].mxu0
      %v5389 = vadd.f32 0.0, %v5388
      %5390 = vmatprep.mubr.f32.mxu0 %v5194
      %5391 = vmatmul.mubr.f32.gmra.mrb[0].mxu0 %v5072
      %v5392 = vpop.f32.mrb[0].mxu0
      %v5393 = vadd.f32 0.0, %v5392
      %v5394 = vpop.f32.mrb[0].mxu0
      %v5395 = vadd.f32 0.0, %v5394
      %5396 = vmatprep.mubr.f32.mxu0 %v5196
      %5397 = vmatmul.mubr.f32.gmra.mrb[0].mxu0 %v5076
      %v5398 = vpop.f32.mrb[0].mxu0
      %v5399 = vadd.f32 0.0, %v5398
      %v5400 = vpop.f32.mrb[0].mxu0
      %v5401 = vadd.f32 0.0, %v5400
      %5402 = vmatprep.mubr.f32.mxu0 %v5198
      %5403 = vmatmul.mubr.f32.gmra.mrb[0].mxu0 %v5080
      %v5404 = vpop.f32.mrb[0].mxu0
      %v5405 = vadd.f32 0.0, %v5404
      %v5406 = vpop.f32.mrb[0].mxu0
      %v5407 = vadd.f32 0.0, %v5406
      %5408 = vmatprep.mubr.f32.mxu0 %v5200
      %5409 = vmatmul.mubr.f32.gmra.mrb[0].mxu0 %v5084
      %v5410 = vpop.f32.mrb[0].mxu0
      %v5411 = vadd.f32 0.0, %v5410
      %v5412 = vpop.f32.mrb[0].mxu0
      %v5413 = vadd.f32 0.0, %v5412
      %5414 = vmatprep.mubr.f32.mxu0 %v5202
      %5415 = vmatmul.mubr.f32.gmra.mrb[0].mxu0 %v5088
      %v5416 = vpop.f32.mrb[0].mxu0
      %v5417 = vadd.f32 0.0, %v5416
      %v5418 = vpop.f32.mrb[0].mxu0
      %v5419 = vadd.f32 0.0, %v5418
      %5420 = vmatprep.mubr.f32.mxu0 %v5204
      %5421 = vmatmul.mubr.f32.gmra.mrb[0].mxu0 %v5092
      %v5422 = vpop.f32.mrb[0].mxu0
      %v5423 = vadd.f32 0.0, %v5422
      %v5424 = vpop.f32.mrb[0].mxu0
      %v5425 = vadd.f32 0.0, %v5424
      %5426 = vmatprep.mubr.f32.mxu0 %v5206
      %5427 = vmatmul.mubr.f32.gmra.mrb[0].mxu0 %v5096
      %v5428 = vpop.f32.mrb[0].mxu0
      %v5429 = vadd.f32 0.0, %v5428
      %v5430 = vpop.f32.mrb[0].mxu0
      %v5431 = vadd.f32 0.0, %v5430
      %5432 = vmatprep.mubr.f32.mxu0 %v5208
      %5433 = vmatmul.mubr.f32.gmra.mrb[0].mxu0 %v5100
      %v5434 = vpop.f32.mrb[0].mxu0
      %v5435 = vadd.f32 0.0, %v5434
      %v5436 = vpop.f32.mrb[0].mxu0
      %v5437 = vadd.f32 0.0, %v5436
      %5438 = vmatprep.mubr.f32.mxu0 %v5210
      %5439 = vmatmul.mubr.f32.gmra.mrb[0].mxu0 %v5104
      %v5440 = vpop.f32.mrb[0].mxu0
      %v5441 = vadd.f32 0.0, %v5440
      %v5442 = vpop.f32.mrb[0].mxu0
      %v5443 = vadd.f32 0.0, %v5442
      %5444 = vmatprep.mubr.f32.mxu0 %v5212
      %5445 = vmatmul.mubr.f32.gmra.mrb[0].mxu0 %v5108
      %v5446 = vpop.f32.mrb[0].mxu0
      %v5447 = vadd.f32 0.0, %v5446
      %v5448 = vpop.f32.mrb[0].mxu0
      %v5449 = vadd.f32 0.0, %v5448
      %5450 = vmatprep.mubr.f32.mxu0 %v5214
      %5451 = vmatmul.mubr.f32.gmra.mrb[0].mxu0 %v5112
      %v5452 = vpop.f32.mrb[0].mxu0
      %v5453 = vadd.f32 0.0, %v5452
      %v5454 = vpop.f32.mrb[0].mxu0
      %v5455 = vadd.f32 0.0, %v5454
      %5456 = vmatprep.mubr.f32.mxu0 %v5216
      %5457 = vmatmul.mubr.f32.gmra.mrb[0].mxu0 %v5116
      %v5458 = vpop.f32.mrb[0].mxu0
      %v5459 = vadd.f32 0.0, %v5458
      %v5460 = vpop.f32.mrb[0].mxu0
      %v5461 = vadd.f32 0.0, %v5460
      %5462 = vmatprep.mubr.f32.mxu0 %v5218
      %5463 = vmatmul.mubr.f32.gmra.mrb[0].mxu0 %v5120
      %v5464 = vpop.f32.mrb[0].mxu0
      %v5465 = vadd.f32 0.0, %v5464
      %v5466 = vpop.f32.mrb[0].mxu0
      %v5467 = vadd.f32 0.0, %v5466
      %5468 = vmatprep.mubr.f32.mxu0 %v5220
      %5469 = vmatmul.mubr.f32.gmra.mrb[0].mxu0 %v5124
      %v5470 = vpop.f32.mrb[0].mxu0
      %v5471 = vadd.f32 0.0, %v5470
      %v5472 = vpop.f32.mrb[0].mxu0
      %v5473 = vadd.f32 0.0, %v5472
      %5474 = vmatprep.mubr.f32.mxu0 %v5222
      %5475 = vmatmul.mubr.f32.gmra.mrb[0].mxu0 %v5128
      %v5476 = vpop.f32.mrb[0].mxu0
      %v5477 = vadd.f32 0.0, %v5476
      %v5478 = vpop.f32.mrb[0].mxu0
      %v5479 = vadd.f32 0.0, %v5478
      %5480 = vdwg.mxu0
      %v5481 = vadd.f32 %v4898, %v5297
      %v5482 = vadd.f32 %v4899, %v5299
      %v5483 = vadd.f32 %v4900, %v5303
      %v5484 = vadd.f32 %v4901, %v5305
      %v5485 = vadd.f32 %v4902, %v5309
      %v5486 = vadd.f32 %v4903, %v5311
      %v5487 = vadd.f32 %v4904, %v5315
      %v5488 = vadd.f32 %v4905, %v5317
      %v5489 = vadd.f32 %v4906, %v5321
      %v5490 = vadd.f32 %v4907, %v5323
      %v5491 = vadd.f32 %v4908, %v5327
      %v5492 = vadd.f32 %v4909, %v5329
      %v5493 = vadd.f32 %v4910, %v5333
      %v5494 = vadd.f32 %v4911, %v5335
      %v5495 = vadd.f32 %v4912, %v5339
      %v5496 = vadd.f32 %v4913, %v5341
      %v5497 = vadd.f32 %v4914, %v5345
      %v5498 = vadd.f32 %v4915, %v5347
      %v5499 = vadd.f32 %v4916, %v5351
      %v5500 = vadd.f32 %v4917, %v5353
      %v5501 = vadd.f32 %v4918, %v5357
      %v5502 = vadd.f32 %v4919, %v5359
      %v5503 = vadd.f32 %v4920, %v5363
      %v5504 = vadd.f32 %v4921, %v5365
      %v5505 = vadd.f32 %v4922, %v5369
      %v5506 = vadd.f32 %v4923, %v5371
      %v5507 = vadd.f32 %v4924, %v5375
      %v5508 = vadd.f32 %v4925, %v5377
      %v5509 = vadd.f32 %v4926, %v5381
      %v5510 = vadd.f32 %v4927, %v5383
      %v5511 = vadd.f32 %v4928, %v5387
      %v5512 = vadd.f32 %v4929, %v5389
      %v5513 = vadd.f32 %v4930, %v5393
      %v5514 = vadd.f32 %v4931, %v5395
      %v5515 = vadd.f32 %v4932, %v5399
      %v5516 = vadd.f32 %v4933, %v5401
      %v5517 = vadd.f32 %v4934, %v5405
      %v5518 = vadd.f32 %v4935, %v5407
      %v5519 = vadd.f32 %v4936, %v5411
      %v5520 = vadd.f32 %v4937, %v5413
      %v5521 = vadd.f32 %v4938, %v5417
      %v5522 = vadd.f32 %v4939, %v5419
      %v5523 = vadd.f32 %v4940, %v5423
      %v5524 = vadd.f32 %v4941, %v5425
      %v5525 = vadd.f32 %v4942, %v5429
      %v5526 = vadd.f32 %v4943, %v5431
      %v5527 = vadd.f32 %v4944, %v5435
      %v5528 = vadd.f32 %v4945, %v5437
      %v5529 = vadd.f32 %v4946, %v5441
      %v5530 = vadd.f32 %v4947, %v5443
      %v5531 = vadd.f32 %v4948, %v5447
      %v5532 = vadd.f32 %v4949, %v5449
      %v5533 = vadd.f32 %v4950, %v5453
      %v5534 = vadd.f32 %v4951, %v5455
      %v5535 = vadd.f32 %v4952, %v5459
      %v5536 = vadd.f32 %v4953, %v5461
      %v5537 = vadd.f32 %v4954, %v5465
      %v5538 = vadd.f32 %v4955, %v5467
      %v5539 = vadd.f32 %v4956, %v5471
      %v5540 = vadd.f32 %v4957, %v5473
      %v5541 = vadd.f32 %v4958, %v5477
      %v5542 = vadd.f32 %v4959, %v5479
      %s5543 = scalar_lea.vmem %s3, 1344
      %v5544 = vld [vmem:[%s5543] sm:$0xff]
      %v5545 = vld [vmem:[%s5543 + $0x8] sm:$0xff]
      %v5546 = vld [vmem:[%s5543 + $0x10] sm:$0xff]
      %v5547 = vld [vmem:[%s5543 + $0x18] sm:$0xff]
      %v5548 = vld [vmem:[%s5543 + $0x20] sm:$0xff]
      %v5549 = vld [vmem:[%s5543 + $0x28] sm:$0xff]
      %v5550 = vld [vmem:[%s5543 + $0x30] sm:$0xff]
      %v5551 = vld [vmem:[%s5543 + $0x38] sm:$0xff]
      %v5552 = vld [vmem:[%s5543 + $0x40] sm:$0xff]
      %v5553 = vld [vmem:[%s5543 + $0x48] sm:$0xff]
      %v5554 = vld [vmem:[%s5543 + $0x50] sm:$0xff]
      %v5555 = vld [vmem:[%s5543 + $0x58] sm:$0xff]
      %v5556 = vld [vmem:[%s5543 + $0x60] sm:$0xff]
      %v5557 = vld [vmem:[%s5543 + $0x68] sm:$0xff]
      %v5558 = vld [vmem:[%s5543 + $0x70] sm:$0xff]
      %v5559 = vld [vmem:[%s5543 + $0x78] sm:$0xff]
      %v5560 = vld [vmem:[%s5543 + $0x80] sm:$0xff]
      %v5561 = vld [vmem:[%s5543 + $0x88] sm:$0xff]
      %v5562 = vld [vmem:[%s5543 + $0x90] sm:$0xff]
      %v5563 = vld [vmem:[%s5543 + $0x98] sm:$0xff]
      %v5564 = vld [vmem:[%s5543 + $0xa0] sm:$0xff]
      %v5565 = vld [vmem:[%s5543 + $0xa8] sm:$0xff]
      %v5566 = vld [vmem:[%s5543 + $0xb0] sm:$0xff]
      %v5567 = vld [vmem:[%s5543 + $0xb8] sm:$0xff]
      %v5568 = vld [vmem:[%s5543 + $0xc0] sm:$0xff]
      %v5569 = vld [vmem:[%s5543 + $0xc8] sm:$0xff]
      %v5570 = vld [vmem:[%s5543 + $0xd0] sm:$0xff]
      %v5571 = vld [vmem:[%s5543 + $0xd8] sm:$0xff]
      %v5572 = vld [vmem:[%s5543 + $0xe0] sm:$0xff]
      %v5573 = vld [vmem:[%s5543 + $0xe8] sm:$0xff]
      %v5574 = vld [vmem:[%s5543 + $0xf0] sm:$0xff]
      %v5575 = vld [vmem:[%s5543 + $0xf8] sm:$0xff]
      %v5576 = vld [vmem:[%s5543 + $0x100] sm:$0xff]
      %v5577 = vld [vmem:[%s5543 + $0x108] sm:$0xff]
      %v5578 = vld [vmem:[%s5543 + $0x110] sm:$0xff]
      %v5579 = vld [vmem:[%s5543 + $0x118] sm:$0xff]
      %v5580 = vld [vmem:[%s5543 + $0x120] sm:$0xff]
      %v5581 = vld [vmem:[%s5543 + $0x128] sm:$0xff]
      %v5582 = vld [vmem:[%s5543 + $0x130] sm:$0xff]
      %v5583 = vld [vmem:[%s5543 + $0x138] sm:$0xff]
      %v5584 = vld [vmem:[%s5543 + $0x140] sm:$0x3]
      %v5585 = vld [vmem:[%s5543 + $0x148] sm:$0x3]
      %v5586 = vsel %vm3742, %v3440, 0
      %v5589 = vsel %vm3805, %v5584, 0
      %v5592 = vsel %vm3805, %v5585, 0
      %5594 = vmatprep.subr.mxu0 %v5545
      %5595 = vmatpush1.msra.mxu0 %v5544
      %5596 = vmatprep.subr.mxu0 %v5547
      %5597 = vmatpush1.msra.mxu0 %v5546
      %5598 = vmatprep.subr.mxu0 %v5549
      %5599 = vmatpush1.msra.mxu0 %v5548
      %5600 = vmatprep.subr.mxu0 %v5551
      %5601 = vmatpush1.msra.mxu0 %v5550
      %5602 = vmatprep.subr.mxu0 %v5553
      %5603 = vmatpush1.msra.mxu0 %v5552
      %5604 = vmatprep.subr.mxu0 %v5555
      %5605 = vmatpush1.msra.mxu0 %v5554
      %5606 = vmatprep.subr.mxu0 %v5557
      %5607 = vmatpush1.msra.mxu0 %v5556
      %5608 = vmatprep.subr.mxu0 %v5559
      %5609 = vmatpush1.msra.mxu0 %v5558
      %5610 = vmatprep.subr.mxu0 %v5561
      %5611 = vmatpush1.msra.mxu0 %v5560
      %5612 = vmatprep.subr.mxu0 %v5563
      %5613 = vmatpush1.msra.mxu0 %v5562
      %5614 = vmatprep.subr.mxu0 %v5565
      %5615 = vmatpush1.msra.mxu0 %v5564
      %5616 = vmatprep.subr.mxu0 %v5567
      %5617 = vmatpush1.msra.mxu0 %v5566
      %5618 = vmatprep.subr.mxu0 %v5569
      %5619 = vmatpush1.msra.mxu0 %v5568
      %5620 = vmatprep.subr.mxu0 %v5571
      %5621 = vmatpush1.msra.mxu0 %v5570
      %5622 = vmatprep.subr.mxu0 %v5573
      %5623 = vmatpush1.msra.mxu0 %v5572
      %5624 = vmatprep.subr.mxu0 %v5575
      %5625 = vmatpush1.msra.mxu0 %v5574
      %5626 = vmatprep.subr.mxu0 %v5577
      %5627 = vmatpush1.msra.mxu0 %v5576
      %5628 = vmatprep.subr.mxu0 %v5579
      %5629 = vmatpush1.msra.mxu0 %v5578
      %5630 = vmatprep.subr.mxu0 %v5581
      %5631 = vmatpush1.msra.mxu0 %v5580
      %5632 = vmatprep.subr.mxu0 %v5583
      %5633 = vmatpush1.msra.mxu0 %v5582
      %5634 = vmatprep.subr.mxu0 %v5592
      %5635 = vmatpush1.msra.mxu0 %v5589
      %5636 = vmatprep.subr.mxu0 0.0
      %5637 = vmatpush1.msra.mxu0 0.0
      %5638 = vmatprep.subr.mxu0 0.0
      %5639 = vmatpush1.msra.mxu0 0.0
      %5640 = vmatprep.subr.mxu0 0.0
      %5641 = vmatpush1.msra.mxu0 0.0
      %5642 = vmatprep.subr.mxu0 0.0
      %5643 = vmatpush1.msra.mxu0 0.0
      %5644 = vmatprep.subr.mxu0 0.0
      %5645 = vmatpush1.msra.mxu0 0.0
      %5646 = vmatprep.subr.mxu0 0.0
      %5647 = vmatpush1.msra.mxu0 0.0
      %5648 = vmatprep.subr.mxu0 0.0
      %5649 = vmatpush1.msra.mxu0 0.0
      %5650 = vmatprep.subr.mxu0 0.0
      %5651 = vmatpush1.msra.mxu0 0.0
      %5652 = vmatprep.subr.mxu0 0.0
      %5653 = vmatpush1.msra.mxu0 0.0
      %5654 = vmatprep.subr.mxu0 0.0
      %5655 = vmatpush1.msra.mxu0 0.0
      %5656 = vmatprep.subr.mxu0 0.0
      %5657 = vmatpush1.msra.mxu0 0.0
      %5658 = vmatprep.mubr.f32.mxu0 %v4065
      %5659 = vmatmul.mubr.f32.gmra.mrb[0].mxu0 %v3379
      %v5660 = vpop.f32.mrb[0].mxu0
      %v5661 = vadd.f32 0.0, %v5660
      %v5662 = vpop.f32.mrb[0].mxu0
      %v5663 = vadd.f32 0.0, %v5662
      %5664 = vmatprep.mubr.f32.mxu0 %v4067
      %5665 = vmatmul.mubr.f32.gmra.mrb[0].mxu0 %v3381
      %v5666 = vpop.f32.mrb[0].mxu0
      %v5667 = vadd.f32 0.0, %v5666
      %v5668 = vpop.f32.mrb[0].mxu0
      %v5669 = vadd.f32 0.0, %v5668
      %5670 = vmatprep.mubr.f32.mxu0 %v4069
      %5671 = vmatmul.mubr.f32.gmra.mrb[0].mxu0 %v3383
      %v5672 = vpop.f32.mrb[0].mxu0
      %v5673 = vadd.f32 0.0, %v5672
      %v5674 = vpop.f32.mrb[0].mxu0
      %v5675 = vadd.f32 0.0, %v5674
      %5676 = vmatprep.mubr.f32.mxu0 %v4071
      %5677 = vmatmul.mubr.f32.gmra.mrb[0].mxu0 %v3385
      %v5678 = vpop.f32.mrb[0].mxu0
      %v5679 = vadd.f32 0.0, %v5678
      %v5680 = vpop.f32.mrb[0].mxu0
      %v5681 = vadd.f32 0.0, %v5680
      %5682 = vmatprep.mubr.f32.mxu0 %v4073
      %5683 = vmatmul.mubr.f32.gmra.mrb[0].mxu0 %v3387
      %v5684 = vpop.f32.mrb[0].mxu0
      %v5685 = vadd.f32 0.0, %v5684
      %v5686 = vpop.f32.mrb[0].mxu0
      %v5687 = vadd.f32 0.0, %v5686
      %5688 = vmatprep.mubr.f32.mxu0 %v4075
      %5689 = vmatmul.mubr.f32.gmra.mrb[0].mxu0 %v3389
      %v5690 = vpop.f32.mrb[0].mxu0
      %v5691 = vadd.f32 0.0, %v5690
      %v5692 = vpop.f32.mrb[0].mxu0
      %v5693 = vadd.f32 0.0, %v5692
      %5694 = vmatprep.mubr.f32.mxu0 %v4077
      %5695 = vmatmul.mubr.f32.gmra.mrb[0].mxu0 %v3391
      %v5696 = vpop.f32.mrb[0].mxu0
      %v5697 = vadd.f32 0.0, %v5696
      %v5698 = vpop.f32.mrb[0].mxu0
      %v5699 = vadd.f32 0.0, %v5698
      %5700 = vmatprep.mubr.f32.mxu0 %v4079
      %5701 = vmatmul.mubr.f32.gmra.mrb[0].mxu0 %v3393
      %v5702 = vpop.f32.mrb[0].mxu0
      %v5703 = vadd.f32 0.0, %v5702
      %v5704 = vpop.f32.mrb[0].mxu0
      %v5705 = vadd.f32 0.0, %v5704
      %5706 = vmatprep.mubr.f32.mxu0 %v4081
      %5707 = vmatmul.mubr.f32.gmra.mrb[0].mxu0 %v3395
      %v5708 = vpop.f32.mrb[0].mxu0
      %v5709 = vadd.f32 0.0, %v5708
      %v5710 = vpop.f32.mrb[0].mxu0
      %v5711 = vadd.f32 0.0, %v5710
      %5712 = vmatprep.mubr.f32.mxu0 %v4083
      %5713 = vmatmul.mubr.f32.gmra.mrb[0].mxu0 %v3397
      %v5714 = vpop.f32.mrb[0].mxu0
      %v5715 = vadd.f32 0.0, %v5714
      %v5716 = vpop.f32.mrb[0].mxu0
      %v5717 = vadd.f32 0.0, %v5716
      %5718 = vmatprep.mubr.f32.mxu0 %v4085
      %5719 = vmatmul.mubr.f32.gmra.mrb[0].mxu0 %v3399
      %v5720 = vpop.f32.mrb[0].mxu0
      %v5721 = vadd.f32 0.0, %v5720
      %v5722 = vpop.f32.mrb[0].mxu0
      %v5723 = vadd.f32 0.0, %v5722
      %5724 = vmatprep.mubr.f32.mxu0 %v4087
      %5725 = vmatmul.mubr.f32.gmra.mrb[0].mxu0 %v3401
      %v5726 = vpop.f32.mrb[0].mxu0
      %v5727 = vadd.f32 0.0, %v5726
      %v5728 = vpop.f32.mrb[0].mxu0
      %v5729 = vadd.f32 0.0, %v5728
      %5730 = vmatprep.mubr.f32.mxu0 %v4089
      %5731 = vmatmul.mubr.f32.gmra.mrb[0].mxu0 %v3403
      %v5732 = vpop.f32.mrb[0].mxu0
      %v5733 = vadd.f32 0.0, %v5732
      %v5734 = vpop.f32.mrb[0].mxu0
      %v5735 = vadd.f32 0.0, %v5734
      %5736 = vmatprep.mubr.f32.mxu0 %v4091
      %5737 = vmatmul.mubr.f32.gmra.mrb[0].mxu0 %v3405
      %v5738 = vpop.f32.mrb[0].mxu0
      %v5739 = vadd.f32 0.0, %v5738
      %v5740 = vpop.f32.mrb[0].mxu0
      %v5741 = vadd.f32 0.0, %v5740
      %5742 = vmatprep.mubr.f32.mxu0 %v4093
      %5743 = vmatmul.mubr.f32.gmra.mrb[0].mxu0 %v3407
      %v5744 = vpop.f32.mrb[0].mxu0
      %v5745 = vadd.f32 0.0, %v5744
      %v5746 = vpop.f32.mrb[0].mxu0
      %v5747 = vadd.f32 0.0, %v5746
      %5748 = vmatprep.mubr.f32.mxu0 %v4095
      %5749 = vmatmul.mubr.f32.gmra.mrb[0].mxu0 %v3409
      %v5750 = vpop.f32.mrb[0].mxu0
      %v5751 = vadd.f32 0.0, %v5750
      %v5752 = vpop.f32.mrb[0].mxu0
      %v5753 = vadd.f32 0.0, %v5752
      %5754 = vmatprep.mubr.f32.mxu0 %v4097
      %5755 = vmatmul.mubr.f32.gmra.mrb[0].mxu0 %v3411
      %v5756 = vpop.f32.mrb[0].mxu0
      %v5757 = vadd.f32 0.0, %v5756
      %v5758 = vpop.f32.mrb[0].mxu0
      %v5759 = vadd.f32 0.0, %v5758
      %5760 = vmatprep.mubr.f32.mxu0 %v4099
      %5761 = vmatmul.mubr.f32.gmra.mrb[0].mxu0 %v3413
      %v5762 = vpop.f32.mrb[0].mxu0
      %v5763 = vadd.f32 0.0, %v5762
      %v5764 = vpop.f32.mrb[0].mxu0
      %v5765 = vadd.f32 0.0, %v5764
      %5766 = vmatprep.mubr.f32.mxu0 %v4101
      %5767 = vmatmul.mubr.f32.gmra.mrb[0].mxu0 %v3415
      %v5768 = vpop.f32.mrb[0].mxu0
      %v5769 = vadd.f32 0.0, %v5768
      %v5770 = vpop.f32.mrb[0].mxu0
      %v5771 = vadd.f32 0.0, %v5770
      %5772 = vmatprep.mubr.f32.mxu0 %v4103
      %5773 = vmatmul.mubr.f32.gmra.mrb[0].mxu0 %v3417
      %v5774 = vpop.f32.mrb[0].mxu0
      %v5775 = vadd.f32 0.0, %v5774
      %v5776 = vpop.f32.mrb[0].mxu0
      %v5777 = vadd.f32 0.0, %v5776
      %5778 = vmatprep.mubr.f32.mxu0 %v4105
      %5779 = vmatmul.mubr.f32.gmra.mrb[0].mxu0 %v3419
      %v5780 = vpop.f32.mrb[0].mxu0
      %v5781 = vadd.f32 0.0, %v5780
      %v5782 = vpop.f32.mrb[0].mxu0
      %v5783 = vadd.f32 0.0, %v5782
      %5784 = vmatprep.mubr.f32.mxu0 %v4107
      %5785 = vmatmul.mubr.f32.gmra.mrb[0].mxu0 %v3421
      %v5786 = vpop.f32.mrb[0].mxu0
      %v5787 = vadd.f32 0.0, %v5786
      %v5788 = vpop.f32.mrb[0].mxu0
      %v5789 = vadd.f32 0.0, %v5788
      %5790 = vmatprep.mubr.f32.mxu0 %v4109
      %5791 = vmatmul.mubr.f32.gmra.mrb[0].mxu0 %v3423
      %v5792 = vpop.f32.mrb[0].mxu0
      %v5793 = vadd.f32 0.0, %v5792
      %v5794 = vpop.f32.mrb[0].mxu0
      %v5795 = vadd.f32 0.0, %v5794
      %5796 = vmatprep.mubr.f32.mxu0 %v4111
      %5797 = vmatmul.mubr.f32.gmra.mrb[0].mxu0 %v3425
      %v5798 = vpop.f32.mrb[0].mxu0
      %v5799 = vadd.f32 0.0, %v5798
      %v5800 = vpop.f32.mrb[0].mxu0
      %v5801 = vadd.f32 0.0, %v5800
      %5802 = vmatprep.mubr.f32.mxu0 %v4113
      %5803 = vmatmul.mubr.f32.gmra.mrb[0].mxu0 %v3427
      %v5804 = vpop.f32.mrb[0].mxu0
      %v5805 = vadd.f32 0.0, %v5804
      %v5806 = vpop.f32.mrb[0].mxu0
      %v5807 = vadd.f32 0.0, %v5806
      %5808 = vmatprep.mubr.f32.mxu0 %v4115
      %5809 = vmatmul.mubr.f32.gmra.mrb[0].mxu0 %v3429
      %v5810 = vpop.f32.mrb[0].mxu0
      %v5811 = vadd.f32 0.0, %v5810
      %v5812 = vpop.f32.mrb[0].mxu0
      %v5813 = vadd.f32 0.0, %v5812
      %5814 = vmatprep.mubr.f32.mxu0 %v4117
      %5815 = vmatmul.mubr.f32.gmra.mrb[0].mxu0 %v3431
      %v5816 = vpop.f32.mrb[0].mxu0
      %v5817 = vadd.f32 0.0, %v5816
      %v5818 = vpop.f32.mrb[0].mxu0
      %v5819 = vadd.f32 0.0, %v5818
      %5820 = vmatprep.mubr.f32.mxu0 %v4119
      %5821 = vmatmul.mubr.f32.gmra.mrb[0].mxu0 %v3433
      %v5822 = vpop.f32.mrb[0].mxu0
      %v5823 = vadd.f32 0.0, %v5822
      %v5824 = vpop.f32.mrb[0].mxu0
      %v5825 = vadd.f32 0.0, %v5824
      %5826 = vmatprep.mubr.f32.mxu0 %v4121
      %5827 = vmatmul.mubr.f32.gmra.mrb[0].mxu0 %v3435
      %v5828 = vpop.f32.mrb[0].mxu0
      %v5829 = vadd.f32 0.0, %v5828
      %v5830 = vpop.f32.mrb[0].mxu0
      %v5831 = vadd.f32 0.0, %v5830
      %5832 = vmatprep.mubr.f32.mxu0 %v4123
      %5833 = vmatmul.mubr.f32.gmra.mrb[0].mxu0 %v3437
      %v5834 = vpop.f32.mrb[0].mxu0
      %v5835 = vadd.f32 0.0, %v5834
      %v5836 = vpop.f32.mrb[0].mxu0
      %v5837 = vadd.f32 0.0, %v5836
      %5838 = vmatprep.mubr.f32.mxu0 %v5586
      %5839 = vmatmul.mubr.f32.gmra.mrb[0].mxu0 %v3439
      %v5840 = vpop.f32.mrb[0].mxu0
      %v5841 = vadd.f32 0.0, %v5840
      %v5842 = vpop.f32.mrb[0].mxu0
      %v5843 = vadd.f32 0.0, %v5842
      %5844 = vdwg.mxu0
      %v5845 = vadd.f32 %v5481, %v5661
      %v5846 = vadd.f32 %v5482, %v5663
      %v5847 = vadd.f32 %v5483, %v5667
      %v5848 = vadd.f32 %v5484, %v5669
      %v5849 = vadd.f32 %v5485, %v5673
      %v5850 = vadd.f32 %v5486, %v5675
      %v5851 = vadd.f32 %v5487, %v5679
      %v5852 = vadd.f32 %v5488, %v5681
      %v5853 = vadd.f32 %v5489, %v5685
      %v5854 = vadd.f32 %v5490, %v5687
      %v5855 = vadd.f32 %v5491, %v5691
      %v5856 = vadd.f32 %v5492, %v5693
      %v5857 = vadd.f32 %v5493, %v5697
      %v5858 = vadd.f32 %v5494, %v5699
      %v5859 = vadd.f32 %v5495, %v5703
      %v5860 = vadd.f32 %v5496, %v5705
      %v5861 = vadd.f32 %v5497, %v5709
      %v5862 = vadd.f32 %v5498, %v5711
      %v5863 = vadd.f32 %v5499, %v5715
      %v5864 = vadd.f32 %v5500, %v5717
      %v5865 = vadd.f32 %v5501, %v5721
      %v5866 = vadd.f32 %v5502, %v5723
      %v5867 = vadd.f32 %v5503, %v5727
      %v5868 = vadd.f32 %v5504, %v5729
      %v5869 = vadd.f32 %v5505, %v5733
      %v5870 = vadd.f32 %v5506, %v5735
      %v5871 = vadd.f32 %v5507, %v5739
      %v5872 = vadd.f32 %v5508, %v5741
      %v5873 = vadd.f32 %v5509, %v5745
      %v5874 = vadd.f32 %v5510, %v5747
      %v5875 = vadd.f32 %v5511, %v5751
      %v5876 = vadd.f32 %v5512, %v5753
      %v5877 = vadd.f32 %v5513, %v5757
      %v5878 = vadd.f32 %v5514, %v5759
      %v5879 = vadd.f32 %v5515, %v5763
      %v5880 = vadd.f32 %v5516, %v5765
      %v5881 = vadd.f32 %v5517, %v5769
      %v5882 = vadd.f32 %v5518, %v5771
      %v5883 = vadd.f32 %v5519, %v5775
      %v5884 = vadd.f32 %v5520, %v5777
      %v5885 = vadd.f32 %v5521, %v5781
      %v5886 = vadd.f32 %v5522, %v5783
      %v5887 = vadd.f32 %v5523, %v5787
      %v5888 = vadd.f32 %v5524, %v5789
      %v5889 = vadd.f32 %v5525, %v5793
      %v5890 = vadd.f32 %v5526, %v5795
      %v5891 = vadd.f32 %v5527, %v5799
      %v5892 = vadd.f32 %v5528, %v5801
      %v5893 = vadd.f32 %v5529, %v5805
      %v5894 = vadd.f32 %v5530, %v5807
      %v5895 = vadd.f32 %v5531, %v5811
      %v5896 = vadd.f32 %v5532, %v5813
      %v5897 = vadd.f32 %v5533, %v5817
      %v5898 = vadd.f32 %v5534, %v5819
      %v5899 = vadd.f32 %v5535, %v5823
      %v5900 = vadd.f32 %v5536, %v5825
      %v5901 = vadd.f32 %v5537, %v5829
      %v5902 = vadd.f32 %v5538, %v5831
      %v5903 = vadd.f32 %v5539, %v5835
      %v5904 = vadd.f32 %v5540, %v5837
      %v5905 = vadd.f32 %v5541, %v5841
      %v5906 = vadd.f32 %v5542, %v5843
      %v5969 = vrot.slane %v5845, 2
      %v5970 = vrot.slane %v5847, 2
      %v5971 = vsel %vm3588, %v5969, %v5970
      %v5972 = vrot.slane %v5846, 2
      %v5973 = vrot.slane %v5848, 2
      %v5974 = vsel %vm3588, %v5972, %v5973
      %v5975 = vrot.slane %v5849, 2
      %v5976 = vsel %vm3588, %v5970, %v5975
      %v5977 = vrot.slane %v5850, 2
      %v5978 = vsel %vm3588, %v5973, %v5977
      %v5979 = vrot.slane %v5851, 2
      %v5980 = vsel %vm3588, %v5975, %v5979
      %v5981 = vrot.slane %v5852, 2
      %v5982 = vsel %vm3588, %v5977, %v5981
      %v5983 = vrot.slane %v5853, 2
      %v5984 = vsel %vm3588, %v5979, %v5983
      %v5985 = vrot.slane %v5854, 2
      %v5986 = vsel %vm3588, %v5981, %v5985
      %v5987 = vrot.slane %v5855, 2
      %v5988 = vsel %vm3588, %v5983, %v5987
      %v5989 = vrot.slane %v5856, 2
      %v5990 = vsel %vm3588, %v5985, %v5989
      %v5991 = vrot.slane %v5857, 2
      %v5992 = vsel %vm3588, %v5987, %v5991
      %v5993 = vrot.slane %v5858, 2
      %v5994 = vsel %vm3588, %v5989, %v5993
      %v5995 = vrot.slane %v5859, 2
      %v5996 = vsel %vm3588, %v5991, %v5995
      %v5997 = vrot.slane %v5860, 2
      %v5998 = vsel %vm3588, %v5993, %v5997
      %v5999 = vrot.slane %v5861, 2
      %v6000 = vsel %vm3588, %v5995, %v5999
      %v6001 = vrot.slane %v5862, 2
      %v6002 = vsel %vm3588, %v5997, %v6001
      %v6003 = vrot.slane %v5863, 2
      %v6004 = vsel %vm3588, %v5999, %v6003
      %v6005 = vrot.slane %v5864, 2
      %v6006 = vsel %vm3588, %v6001, %v6005
      %v6007 = vrot.slane %v5865, 2
      %v6008 = vsel %vm3588, %v6003, %v6007
      %v6009 = vrot.slane %v5866, 2
      %v6010 = vsel %vm3588, %v6005, %v6009
      %v6011 = vrot.slane %v5867, 2
      %v6012 = vsel %vm3588, %v6007, %v6011
      %v6013 = vrot.slane %v5868, 2
      %v6014 = vsel %vm3588, %v6009, %v6013
      %v6015 = vrot.slane %v5869, 2
      %v6016 = vsel %vm3588, %v6011, %v6015
      %v6017 = vrot.slane %v5870, 2
      %v6018 = vsel %vm3588, %v6013, %v6017
      %v6019 = vrot.slane %v5871, 2
      %v6020 = vsel %vm3588, %v6015, %v6019
      %v6021 = vrot.slane %v5872, 2
      %v6022 = vsel %vm3588, %v6017, %v6021
      %v6023 = vrot.slane %v5873, 2
      %v6024 = vsel %vm3588, %v6019, %v6023
      %v6025 = vrot.slane %v5874, 2
      %v6026 = vsel %vm3588, %v6021, %v6025
      %v6027 = vrot.slane %v5875, 2
      %v6028 = vsel %vm3588, %v6023, %v6027
      %v6029 = vrot.slane %v5876, 2
      %v6030 = vsel %vm3588, %v6025, %v6029
      %v6031 = vrot.slane %v5877, 2
      %v6032 = vsel %vm3588, %v6027, %v6031
      %v6033 = vrot.slane %v5878, 2
      %v6034 = vsel %vm3588, %v6029, %v6033
      %v6035 = vrot.slane %v5879, 2
      %v6036 = vsel %vm3588, %v6031, %v6035
      %v6037 = vrot.slane %v5880, 2
      %v6038 = vsel %vm3588, %v6033, %v6037
      %v6039 = vrot.slane %v5881, 2
      %v6040 = vsel %vm3588, %v6035, %v6039
      %v6041 = vrot.slane %v5882, 2
      %v6042 = vsel %vm3588, %v6037, %v6041
      %v6043 = vrot.slane %v5883, 2
      %v6044 = vsel %vm3588, %v6039, %v6043
      %v6045 = vrot.slane %v5884, 2
      %v6046 = vsel %vm3588, %v6041, %v6045
      %v6047 = vrot.slane %v5885, 2
      %v6048 = vsel %vm3588, %v6043, %v6047
      %v6049 = vrot.slane %v5886, 2
      %v6050 = vsel %vm3588, %v6045, %v6049
      %v6051 = vrot.slane %v5887, 2
      %v6052 = vsel %vm3588, %v6047, %v6051
      %v6053 = vrot.slane %v5888, 2
      %v6054 = vsel %vm3588, %v6049, %v6053
      %v6055 = vrot.slane %v5889, 2
      %v6056 = vsel %vm3588, %v6051, %v6055
      %v6057 = vrot.slane %v5890, 2
      %v6058 = vsel %vm3588, %v6053, %v6057
      %v6059 = vrot.slane %v5891, 2
      %v6060 = vsel %vm3588, %v6055, %v6059
      %v6061 = vrot.slane %v5892, 2
      %v6062 = vsel %vm3588, %v6057, %v6061
      %v6063 = vrot.slane %v5893, 2
      %v6064 = vsel %vm3588, %v6059, %v6063
      %v6065 = vrot.slane %v5894, 2
      %v6066 = vsel %vm3588, %v6061, %v6065
      %v6067 = vrot.slane %v5895, 2
      %v6068 = vsel %vm3588, %v6063, %v6067
      %v6069 = vrot.slane %v5896, 2
      %v6070 = vsel %vm3588, %v6065, %v6069
      %v6071 = vrot.slane %v5897, 2
      %v6072 = vsel %vm3588, %v6067, %v6071
      %v6073 = vrot.slane %v5898, 2
      %v6074 = vsel %vm3588, %v6069, %v6073
      %v6075 = vrot.slane %v5899, 2
      %v6076 = vsel %vm3588, %v6071, %v6075
      %v6077 = vrot.slane %v5900, 2
      %v6078 = vsel %vm3588, %v6073, %v6077
      %v6079 = vrot.slane %v5901, 2
      %v6080 = vsel %vm3588, %v6075, %v6079
      %v6081 = vrot.slane %v5902, 2
      %v6082 = vsel %vm3588, %v6077, %v6081
      %v6083 = vrot.slane %v5903, 2
      %v6084 = vsel %vm3588, %v6079, %v6083
      %v6085 = vrot.slane %v5904, 2
      %v6086 = vsel %vm3588, %v6081, %v6085
      %v6087 = vrot.slane %v5905, 2
      %v6088 = vsel %vm3588, %v6083, %v6087
      %v6089 = vrot.slane %v5906, 2
      %v6090 = vsel %vm3588, %v6085, %v6089
      %v6153 = vmax.f32 %v5845, %v5971
      %v6154 = vmax.f32 %v5846, %v5974
      %v6155 = vmax.f32 %v5847, %v5976
      %v6156 = vmax.f32 %v5848, %v5978
      %v6157 = vmax.f32 %v5849, %v5980
      %v6158 = vmax.f32 %v5850, %v5982
      %v6159 = vmax.f32 %v5851, %v5984
      %v6160 = vmax.f32 %v5852, %v5986
      %v6161 = vmax.f32 %v5853, %v5988
      %v6162 = vmax.f32 %v5854, %v5990
      %v6163 = vmax.f32 %v5855, %v5992
      %v6164 = vmax.f32 %v5856, %v5994
      %v6165 = vmax.f32 %v5857, %v5996
      %v6166 = vmax.f32 %v5858, %v5998
      %v6167 = vmax.f32 %v5859, %v6000
      %v6168 = vmax.f32 %v5860, %v6002
      %v6169 = vmax.f32 %v5861, %v6004
      %v6170 = vmax.f32 %v5862, %v6006
      %v6171 = vmax.f32 %v5863, %v6008
      %v6172 = vmax.f32 %v5864, %v6010
      %v6173 = vmax.f32 %v5865, %v6012
      %v6174 = vmax.f32 %v5866, %v6014
      %v6175 = vmax.f32 %v5867, %v6016
      %v6176 = vmax.f32 %v5868, %v6018
      %v6177 = vmax.f32 %v5869, %v6020
      %v6178 = vmax.f32 %v5870, %v6022
      %v6179 = vmax.f32 %v5871, %v6024
      %v6180 = vmax.f32 %v5872, %v6026
      %v6181 = vmax.f32 %v5873, %v6028
      %v6182 = vmax.f32 %v5874, %v6030
      %v6183 = vmax.f32 %v5875, %v6032
      %v6184 = vmax.f32 %v5876, %v6034
      %v6185 = vmax.f32 %v5877, %v6036
      %v6186 = vmax.f32 %v5878, %v6038
      %v6187 = vmax.f32 %v5879, %v6040
      %v6188 = vmax.f32 %v5880, %v6042
      %v6189 = vmax.f32 %v5881, %v6044
      %v6190 = vmax.f32 %v5882, %v6046
      %v6191 = vmax.f32 %v5883, %v6048
      %v6192 = vmax.f32 %v5884, %v6050
      %v6193 = vmax.f32 %v5885, %v6052
      %v6194 = vmax.f32 %v5886, %v6054
      %v6195 = vmax.f32 %v5887, %v6056
      %v6196 = vmax.f32 %v5888, %v6058
      %v6197 = vmax.f32 %v5889, %v6060
      %v6198 = vmax.f32 %v5890, %v6062
      %v6199 = vmax.f32 %v5891, %v6064
      %v6200 = vmax.f32 %v5892, %v6066
      %v6201 = vmax.f32 %v5893, %v6068
      %v6202 = vmax.f32 %v5894, %v6070
      %v6203 = vmax.f32 %v5895, %v6072
      %v6204 = vmax.f32 %v5896, %v6074
      %v6205 = vmax.f32 %v5897, %v6076
      %v6206 = vmax.f32 %v5898, %v6078
      %v6207 = vmax.f32 %v5899, %v6080
      %v6208 = vmax.f32 %v5900, %v6082
      %v6209 = vmax.f32 %v5901, %v6084
      %v6210 = vmax.f32 %v5902, %v6086
      %v6211 = vmax.f32 %v5903, %v6088
      %v6212 = vmax.f32 %v5904, %v6090
      %v6213 = vmax.f32 %v5905, %v6087
      %v6214 = vmax.f32 %v5906, %v6089
      %6277 = vrot.lane.b32.xlu0 %v6153, 112
      %v6278 = vpop.permute.xlu0 %6277
      %6279 = vrot.lane.b32.xlu0 %v6154, 112
      %v6280 = vpop.permute.xlu0 %6279
      %6281 = vrot.lane.b32.xlu0 %v6155, 112
      %v6282 = vpop.permute.xlu0 %6281
      %6283 = vrot.lane.b32.xlu0 %v6156, 112
      %v6284 = vpop.permute.xlu0 %6283
      %6285 = vrot.lane.b32.xlu0 %v6157, 112
      %v6286 = vpop.permute.xlu0 %6285
      %6287 = vrot.lane.b32.xlu0 %v6158, 112
      %v6288 = vpop.permute.xlu0 %6287
      %6289 = vrot.lane.b32.xlu0 %v6159, 112
      %v6290 = vpop.permute.xlu0 %6289
      %6291 = vrot.lane.b32.xlu0 %v6160, 112
      %v6292 = vpop.permute.xlu0 %6291
      %6293 = vrot.lane.b32.xlu0 %v6161, 112
      %v6294 = vpop.permute.xlu0 %6293
      %6295 = vrot.lane.b32.xlu0 %v6162, 112
      %v6296 = vpop.permute.xlu0 %6295
      %6297 = vrot.lane.b32.xlu0 %v6163, 112
      %v6298 = vpop.permute.xlu0 %6297
      %6299 = vrot.lane.b32.xlu0 %v6164, 112
      %v6300 = vpop.permute.xlu0 %6299
      %6301 = vrot.lane.b32.xlu0 %v6165, 112
      %v6302 = vpop.permute.xlu0 %6301
      %6303 = vrot.lane.b32.xlu0 %v6166, 112
      %v6304 = vpop.permute.xlu0 %6303
      %6305 = vrot.lane.b32.xlu0 %v6167, 112
      %v6306 = vpop.permute.xlu0 %6305
      %6307 = vrot.lane.b32.xlu0 %v6168, 112
      %v6308 = vpop.permute.xlu0 %6307
      %6309 = vrot.lane.b32.xlu0 %v6169, 112
      %v6310 = vpop.permute.xlu0 %6309
      %6311 = vrot.lane.b32.xlu0 %v6170, 112
      %v6312 = vpop.permute.xlu0 %6311
      %6313 = vrot.lane.b32.xlu0 %v6171, 112
      %v6314 = vpop.permute.xlu0 %6313
      %6315 = vrot.lane.b32.xlu0 %v6172, 112
      %v6316 = vpop.permute.xlu0 %6315
      %6317 = vrot.lane.b32.xlu0 %v6173, 112
      %v6318 = vpop.permute.xlu0 %6317
      %6319 = vrot.lane.b32.xlu0 %v6174, 112
      %v6320 = vpop.permute.xlu0 %6319
      %6321 = vrot.lane.b32.xlu0 %v6175, 112
      %v6322 = vpop.permute.xlu0 %6321
      %6323 = vrot.lane.b32.xlu0 %v6176, 112
      %v6324 = vpop.permute.xlu0 %6323
      %6325 = vrot.lane.b32.xlu0 %v6177, 112
      %v6326 = vpop.permute.xlu0 %6325
      %6327 = vrot.lane.b32.xlu0 %v6178, 112
      %v6328 = vpop.permute.xlu0 %6327
      %6329 = vrot.lane.b32.xlu0 %v6179, 112
      %v6330 = vpop.permute.xlu0 %6329
      %6331 = vrot.lane.b32.xlu0 %v6180, 112
      %v6332 = vpop.permute.xlu0 %6331
      %6333 = vrot.lane.b32.xlu0 %v6181, 112
      %v6334 = vpop.permute.xlu0 %6333
      %6335 = vrot.lane.b32.xlu0 %v6182, 112
      %v6336 = vpop.permute.xlu0 %6335
      %6337 = vrot.lane.b32.xlu0 %v6183, 112
      %v6338 = vpop.permute.xlu0 %6337
      %6339 = vrot.lane.b32.xlu0 %v6184, 112
      %v6340 = vpop.permute.xlu0 %6339
      %6341 = vrot.lane.b32.xlu0 %v6185, 112
      %v6342 = vpop.permute.xlu0 %6341
      %6343 = vrot.lane.b32.xlu0 %v6186, 112
      %v6344 = vpop.permute.xlu0 %6343
      %6345 = vrot.lane.b32.xlu0 %v6187, 112
      %v6346 = vpop.permute.xlu0 %6345
      %6347 = vrot.lane.b32.xlu0 %v6188, 112
      %v6348 = vpop.permute.xlu0 %6347
      %6349 = vrot.lane.b32.xlu0 %v6189, 112
      %v6350 = vpop.permute.xlu0 %6349
      %6351 = vrot.lane.b32.xlu0 %v6190, 112
      %v6352 = vpop.permute.xlu0 %6351
      %6353 = vrot.lane.b32.xlu0 %v6191, 112
      %v6354 = vpop.permute.xlu0 %6353
      %6355 = vrot.lane.b32.xlu0 %v6192, 112
      %v6356 = vpop.permute.xlu0 %6355
      %6357 = vrot.lane.b32.xlu0 %v6193, 112
      %v6358 = vpop.permute.xlu0 %6357
      %6359 = vrot.lane.b32.xlu0 %v6194, 112
      %v6360 = vpop.permute.xlu0 %6359
      %6361 = vrot.lane.b32.xlu0 %v6195, 112
      %v6362 = vpop.permute.xlu0 %6361
      %6363 = vrot.lane.b32.xlu0 %v6196, 112
      %v6364 = vpop.permute.xlu0 %6363
      %6365 = vrot.lane.b32.xlu0 %v6197, 112
      %v6366 = vpop.permute.xlu0 %6365
      %6367 = vrot.lane.b32.xlu0 %v6198, 112
      %v6368 = vpop.permute.xlu0 %6367
      %6369 = vrot.lane.b32.xlu0 %v6199, 112
      %v6370 = vpop.permute.xlu0 %6369
      %6371 = vrot.lane.b32.xlu0 %v6200, 112
      %v6372 = vpop.permute.xlu0 %6371
      %6373 = vrot.lane.b32.xlu0 %v6201, 112
      %v6374 = vpop.permute.xlu0 %6373
      %6375 = vrot.lane.b32.xlu0 %v6202, 112
      %v6376 = vpop.permute.xlu0 %6375
      %6377 = vrot.lane.b32.xlu0 %v6203, 112
      %v6378 = vpop.permute.xlu0 %6377
      %6379 = vrot.lane.b32.xlu0 %v6204, 112
      %v6380 = vpop.permute.xlu0 %6379
      %6381 = vrot.lane.b32.xlu0 %v6205, 112
      %v6382 = vpop.permute.xlu0 %6381
      %6383 = vrot.lane.b32.xlu0 %v6206, 112
      %v6384 = vpop.permute.xlu0 %6383
      %6385 = vrot.lane.b32.xlu0 %v6207, 112
      %v6386 = vpop.permute.xlu0 %6385
      %6387 = vrot.lane.b32.xlu0 %v6208, 112
      %v6388 = vpop.permute.xlu0 %6387
      %6389 = vrot.lane.b32.xlu0 %v6209, 112
      %v6390 = vpop.permute.xlu0 %6389
      %6391 = vrot.lane.b32.xlu0 %v6210, 112
      %v6392 = vpop.permute.xlu0 %6391
      %6393 = vrot.lane.b32.xlu0 %v6211, 112
      %v6394 = vpop.permute.xlu0 %6393
      %6395 = vrot.lane.b32.xlu0 %v6212, 112
      %v6396 = vpop.permute.xlu0 %6395
      %6397 = vrot.lane.b32.xlu0 %v6213, 112
      %v6398 = vpop.permute.xlu0 %6397
      %6399 = vrot.lane.b32.xlu0 %v6214, 112
      %v6400 = vpop.permute.xlu0 %6399
      %vm6401 = vcmask 916480
      %v6402 = vsel %vm6401, %v6278, %v6280
      %v6403 = vsel %vm6401, %v6282, %v6284
      %v6404 = vsel %vm6401, %v6286, %v6288
      %v6405 = vsel %vm6401, %v6290, %v6292
      %v6406 = vsel %vm6401, %v6294, %v6296
      %v6407 = vsel %vm6401, %v6298, %v6300
      %v6408 = vsel %vm6401, %v6302, %v6304
      %v6409 = vsel %vm6401, %v6306, %v6308
      %v6410 = vsel %vm6401, %v6310, %v6312
      %v6411 = vsel %vm6401, %v6314, %v6316
      %v6412 = vsel %vm6401, %v6318, %v6320
      %v6413 = vsel %vm6401, %v6322, %v6324
      %v6414 = vsel %vm6401, %v6326, %v6328
      %v6415 = vsel %vm6401, %v6330, %v6332
      %v6416 = vsel %vm6401, %v6334, %v6336
      %v6417 = vsel %vm6401, %v6338, %v6340
      %v6418 = vsel %vm6401, %v6342, %v6344
      %v6419 = vsel %vm6401, %v6346, %v6348
      %v6420 = vsel %vm6401, %v6350, %v6352
      %v6421 = vsel %vm6401, %v6354, %v6356
      %v6422 = vsel %vm6401, %v6358, %v6360
      %v6423 = vsel %vm6401, %v6362, %v6364
      %v6424 = vsel %vm6401, %v6366, %v6368
      %v6425 = vsel %vm6401, %v6370, %v6372
      %v6426 = vsel %vm6401, %v6374, %v6376
      %v6427 = vsel %vm6401, %v6378, %v6380
      %v6428 = vsel %vm6401, %v6382, %v6384
      %v6429 = vsel %vm6401, %v6386, %v6388
      %v6430 = vsel %vm6401, %v6390, %v6392
      %v6431 = vsel %vm6401, %v6394, %v6396
      %v6432 = vsel %vm6401, %v6398, %v6400
      %v6495 = vmax.f32 %v6153, %v6402
      %v6496 = vmax.f32 %v6154, %v6280
      %v6497 = vmax.f32 %v6155, %v6403
      %v6498 = vmax.f32 %v6156, %v6284
      %v6499 = vmax.f32 %v6157, %v6404
      %v6500 = vmax.f32 %v6158, %v6288
      %v6501 = vmax.f32 %v6159, %v6405
      %v6502 = vmax.f32 %v6160, %v6292
      %v6503 = vmax.f32 %v6161, %v6406
      %v6504 = vmax.f32 %v6162, %v6296
      %v6505 = vmax.f32 %v6163, %v6407
      %v6506 = vmax.f32 %v6164, %v6300
      %v6507 = vmax.f32 %v6165, %v6408
      %v6508 = vmax.f32 %v6166, %v6304
      %v6509 = vmax.f32 %v6167, %v6409
      %v6510 = vmax.f32 %v6168, %v6308
      %v6511 = vmax.f32 %v6169, %v6410
      %v6512 = vmax.f32 %v6170, %v6312
      %v6513 = vmax.f32 %v6171, %v6411
      %v6514 = vmax.f32 %v6172, %v6316
      %v6515 = vmax.f32 %v6173, %v6412
      %v6516 = vmax.f32 %v6174, %v6320
      %v6517 = vmax.f32 %v6175, %v6413
      %v6518 = vmax.f32 %v6176, %v6324
      %v6519 = vmax.f32 %v6177, %v6414
      %v6520 = vmax.f32 %v6178, %v6328
      %v6521 = vmax.f32 %v6179, %v6415
      %v6522 = vmax.f32 %v6180, %v6332
      %v6523 = vmax.f32 %v6181, %v6416
      %v6524 = vmax.f32 %v6182, %v6336
      %v6525 = vmax.f32 %v6183, %v6417
      %v6526 = vmax.f32 %v6184, %v6340
      %v6527 = vmax.f32 %v6185, %v6418
      %v6528 = vmax.f32 %v6186, %v6344
      %v6529 = vmax.f32 %v6187, %v6419
      %v6530 = vmax.f32 %v6188, %v6348
      %v6531 = vmax.f32 %v6189, %v6420
      %v6532 = vmax.f32 %v6190, %v6352
      %v6533 = vmax.f32 %v6191, %v6421
      %v6534 = vmax.f32 %v6192, %v6356
      %v6535 = vmax.f32 %v6193, %v6422
      %v6536 = vmax.f32 %v6194, %v6360
      %v6537 = vmax.f32 %v6195, %v6423
      %v6538 = vmax.f32 %v6196, %v6364
      %v6539 = vmax.f32 %v6197, %v6424
      %v6540 = vmax.f32 %v6198, %v6368
      %v6541 = vmax.f32 %v6199, %v6425
      %v6542 = vmax.f32 %v6200, %v6372
      %v6543 = vmax.f32 %v6201, %v6426
      %v6544 = vmax.f32 %v6202, %v6376
      %v6545 = vmax.f32 %v6203, %v6427
      %v6546 = vmax.f32 %v6204, %v6380
      %v6547 = vmax.f32 %v6205, %v6428
      %v6548 = vmax.f32 %v6206, %v6384
      %v6549 = vmax.f32 %v6207, %v6429
      %v6550 = vmax.f32 %v6208, %v6388
      %v6551 = vmax.f32 %v6209, %v6430
      %v6552 = vmax.f32 %v6210, %v6392
      %v6553 = vmax.f32 %v6211, %v6431
      %v6554 = vmax.f32 %v6212, %v6396
      %v6555 = vmax.f32 %v6213, %v6432
      %v6556 = vmax.f32 %v6214, %v6400
      %v6557 = vld [vmem:[%s4] sm:$0x3]
      %v6559 = vlaneseq
      %v6560 = vshrl.u32 %v6559, 7
      %v6561 = vsub.s32 0, %v6560
      %v6562 = vrot.slane %v6557, %v6561
      %v6563 = vlaneseq
      %v6564 = vshrl.u32 %v6563, 7
      %v6565 = vsub.s32 1, %v6564
      %v6566 = vrot.slane %v6557, %v6565
      %v6569 = vadd.f32 %v6495, %v6562
      %v6570 = vadd.f32 %v6496, %v6566
      %v6571 = vadd.f32 %v6497, %v6562
      %v6572 = vadd.f32 %v6498, %v6566
      %v6573 = vadd.f32 %v6499, %v6562
      %v6574 = vadd.f32 %v6500, %v6566
      %v6575 = vadd.f32 %v6501, %v6562
      %v6576 = vadd.f32 %v6502, %v6566
      %v6577 = vadd.f32 %v6503, %v6562
      %v6578 = vadd.f32 %v6504, %v6566
      %v6579 = vadd.f32 %v6505, %v6562
      %v6580 = vadd.f32 %v6506, %v6566
      %v6581 = vadd.f32 %v6507, %v6562
      %v6582 = vadd.f32 %v6508, %v6566
      %v6583 = vadd.f32 %v6509, %v6562
      %v6584 = vadd.f32 %v6510, %v6566
      %v6585 = vadd.f32 %v6511, %v6562
      %v6586 = vadd.f32 %v6512, %v6566
      %v6587 = vadd.f32 %v6513, %v6562
      %v6588 = vadd.f32 %v6514, %v6566
      %v6589 = vadd.f32 %v6515, %v6562
      %v6590 = vadd.f32 %v6516, %v6566
      %v6591 = vadd.f32 %v6517, %v6562
      %v6592 = vadd.f32 %v6518, %v6566
      %v6593 = vadd.f32 %v6519, %v6562
      %v6594 = vadd.f32 %v6520, %v6566
      %v6595 = vadd.f32 %v6521, %v6562
      %v6596 = vadd.f32 %v6522, %v6566
      %v6597 = vadd.f32 %v6523, %v6562
      %v6598 = vadd.f32 %v6524, %v6566
      %v6599 = vadd.f32 %v6525, %v6562
      %v6600 = vadd.f32 %v6526, %v6566
      %v6601 = vadd.f32 %v6527, %v6562
      %v6602 = vadd.f32 %v6528, %v6566
      %v6603 = vadd.f32 %v6529, %v6562
      %v6604 = vadd.f32 %v6530, %v6566
      %v6605 = vadd.f32 %v6531, %v6562
      %v6606 = vadd.f32 %v6532, %v6566
      %v6607 = vadd.f32 %v6533, %v6562
      %v6608 = vadd.f32 %v6534, %v6566
      %v6609 = vadd.f32 %v6535, %v6562
      %v6610 = vadd.f32 %v6536, %v6566
      %v6611 = vadd.f32 %v6537, %v6562
      %v6612 = vadd.f32 %v6538, %v6566
      %v6613 = vadd.f32 %v6539, %v6562
      %v6614 = vadd.f32 %v6540, %v6566
      %v6615 = vadd.f32 %v6541, %v6562
      %v6616 = vadd.f32 %v6542, %v6566
      %v6617 = vadd.f32 %v6543, %v6562
      %v6618 = vadd.f32 %v6544, %v6566
      %v6619 = vadd.f32 %v6545, %v6562
      %v6620 = vadd.f32 %v6546, %v6566
      %v6621 = vadd.f32 %v6547, %v6562
      %v6622 = vadd.f32 %v6548, %v6566
      %v6623 = vadd.f32 %v6549, %v6562
      %v6624 = vadd.f32 %v6550, %v6566
      %v6625 = vadd.f32 %v6551, %v6562
      %v6626 = vadd.f32 %v6552, %v6566
      %v6627 = vadd.f32 %v6553, %v6562
      %v6628 = vadd.f32 %v6554, %v6566
      %v6629 = vadd.f32 %v6555, %v6562
      %v6630 = vadd.f32 %v6556, %v6566
      %v6631 = vmax.f32 %v6569, 0.0
      %v6632 = vmax.f32 %v6570, 0.0
      %v6633 = vmax.f32 %v6571, 0.0
      %v6634 = vmax.f32 %v6572, 0.0
      %v6635 = vmax.f32 %v6573, 0.0
      %v6636 = vmax.f32 %v6574, 0.0
      %v6637 = vmax.f32 %v6575, 0.0
      %v6638 = vmax.f32 %v6576, 0.0
      %v6639 = vmax.f32 %v6577, 0.0
      %v6640 = vmax.f32 %v6578, 0.0
      %v6641 = vmax.f32 %v6579, 0.0
      %v6642 = vmax.f32 %v6580, 0.0
      %v6643 = vmax.f32 %v6581, 0.0
      %v6644 = vmax.f32 %v6582, 0.0
      %v6645 = vmax.f32 %v6583, 0.0
      %v6646 = vmax.f32 %v6584, 0.0
      %v6647 = vmax.f32 %v6585, 0.0
      %v6648 = vmax.f32 %v6586, 0.0
      %v6649 = vmax.f32 %v6587, 0.0
      %v6650 = vmax.f32 %v6588, 0.0
      %v6651 = vmax.f32 %v6589, 0.0
      %v6652 = vmax.f32 %v6590, 0.0
      %v6653 = vmax.f32 %v6591, 0.0
      %v6654 = vmax.f32 %v6592, 0.0
      %v6655 = vmax.f32 %v6593, 0.0
      %v6656 = vmax.f32 %v6594, 0.0
      %v6657 = vmax.f32 %v6595, 0.0
      %v6658 = vmax.f32 %v6596, 0.0
      %v6659 = vmax.f32 %v6597, 0.0
      %v6660 = vmax.f32 %v6598, 0.0
      %v6661 = vmax.f32 %v6599, 0.0
      %v6662 = vmax.f32 %v6600, 0.0
      %v6663 = vmax.f32 %v6601, 0.0
      %v6664 = vmax.f32 %v6602, 0.0
      %v6665 = vmax.f32 %v6603, 0.0
      %v6666 = vmax.f32 %v6604, 0.0
      %v6667 = vmax.f32 %v6605, 0.0
      %v6668 = vmax.f32 %v6606, 0.0
      %v6669 = vmax.f32 %v6607, 0.0
      %v6670 = vmax.f32 %v6608, 0.0
      %v6671 = vmax.f32 %v6609, 0.0
      %v6672 = vmax.f32 %v6610, 0.0
      %v6673 = vmax.f32 %v6611, 0.0
      %v6674 = vmax.f32 %v6612, 0.0
      %v6675 = vmax.f32 %v6613, 0.0
      %v6676 = vmax.f32 %v6614, 0.0
      %v6677 = vmax.f32 %v6615, 0.0
      %v6678 = vmax.f32 %v6616, 0.0
      %v6679 = vmax.f32 %v6617, 0.0
      %v6680 = vmax.f32 %v6618, 0.0
      %v6681 = vmax.f32 %v6619, 0.0
      %v6682 = vmax.f32 %v6620, 0.0
      %v6683 = vmax.f32 %v6621, 0.0
      %v6684 = vmax.f32 %v6622, 0.0
      %v6685 = vmax.f32 %v6623, 0.0
      %v6686 = vmax.f32 %v6624, 0.0
      %v6687 = vmax.f32 %v6625, 0.0
      %v6688 = vmax.f32 %v6626, 0.0
      %v6689 = vmax.f32 %v6627, 0.0
      %v6690 = vmax.f32 %v6628, 0.0
      %v6691 = vmax.f32 %v6629, 0.0
      %v6692 = vmax.f32 %v6630, 0.0
      %v6693 = vld [vmem:[%s5] sm:$0xff]
      %v6694 = vld [vmem:[%s5 + $0x8] sm:$0xff]
      %v6695 = vld [vmem:[%s5 + $0x10] sm:$0xff]
      %v6696 = vld [vmem:[%s5 + $0x18] sm:$0xff]
      %v6697 = vld [vmem:[%s5 + $0x20] sm:$0xff]
      %v6698 = vld [vmem:[%s5 + $0x28] sm:$0xff]
      %v6699 = vld [vmem:[%s5 + $0x30] sm:$0xff]
      %v6700 = vld [vmem:[%s5 + $0x38] sm:$0xff]
      %v6701 = vld [vmem:[%s5 + $0x40] sm:$0xff]
      %v6702 = vld [vmem:[%s5 + $0x48] sm:$0xff]
      %v6703 = vld [vmem:[%s5 + $0x50] sm:$0xff]
      %v6704 = vld [vmem:[%s5 + $0x58] sm:$0xff]
      %v6705 = vld [vmem:[%s5 + $0x60] sm:$0xff]
      %v6706 = vld [vmem:[%s5 + $0x68] sm:$0xff]
      %v6707 = vld [vmem:[%s5 + $0x70] sm:$0xff]
      %v6708 = vld [vmem:[%s5 + $0x78] sm:$0xff]
      %v6709 = vld [vmem:[%s5 + $0x80] sm:$0xff]
      %v6710 = vld [vmem:[%s5 + $0x88] sm:$0xff]
      %s6711 = scalar_lea.vmem %s5, 144
      %v6712 = vld [vmem:[%s6711] sm:$0xff]
      %v6713 = vld [vmem:[%s6711 + $0x8] sm:$0xff]
      %v6714 = vld [vmem:[%s6711 + $0x10] sm:$0xff]
      %v6715 = vld [vmem:[%s6711 + $0x18] sm:$0xff]
      %v6716 = vld [vmem:[%s6711 + $0x20] sm:$0xff]
      %v6717 = vld [vmem:[%s6711 + $0x28] sm:$0xff]
      %v6718 = vld [vmem:[%s6711 + $0x30] sm:$0xff]
      %v6719 = vld [vmem:[%s6711 + $0x38] sm:$0xff]
      %v6720 = vld [vmem:[%s6711 + $0x40] sm:$0xff]
      %v6721 = vld [vmem:[%s6711 + $0x48] sm:$0xff]
      %v6722 = vld [vmem:[%s6711 + $0x50] sm:$0xff]
      %v6723 = vld [vmem:[%s6711 + $0x58] sm:$0xff]
      %v6724 = vld [vmem:[%s6711 + $0x60] sm:$0xff]
      %v6725 = vld [vmem:[%s6711 + $0x68] sm:$0xff]
      %v6726 = vld [vmem:[%s6711 + $0x70] sm:$0xff]
      %v6727 = vld [vmem:[%s6711 + $0x78] sm:$0xff]
      %v6728 = vld [vmem:[%s6711 + $0x80] sm:$0xff]
      %v6729 = vld [vmem:[%s6711 + $0x88] sm:$0xff]
      %v6788 = vrot.slane %v6631, 4
      %v6789 = vrot.slane %v6633, 4
      %v6790 = vsel %vm4425, %v6788, %v6789
      %v6791 = vrot.slane %v6632, 4
      %v6792 = vrot.slane %v6634, 4
      %v6793 = vsel %vm4425, %v6791, %v6792
      %v6794 = vrot.slane %v6635, 4
      %v6795 = vsel %vm4425, %v6789, %v6794
      %v6796 = vrot.slane %v6636, 4
      %v6797 = vsel %vm4425, %v6792, %v6796
      %v6798 = vrot.slane %v6637, 4
      %v6799 = vsel %vm4425, %v6794, %v6798
      %v6800 = vrot.slane %v6638, 4
      %v6801 = vsel %vm4425, %v6796, %v6800
      %v6802 = vrot.slane %v6639, 4
      %v6803 = vsel %vm4425, %v6798, %v6802
      %v6804 = vrot.slane %v6640, 4
      %v6805 = vsel %vm4425, %v6800, %v6804
      %v6806 = vrot.slane %v6641, 4
      %v6807 = vsel %vm4425, %v6802, %v6806
      %v6808 = vrot.slane %v6642, 4
      %v6809 = vsel %vm4425, %v6804, %v6808
      %v6810 = vrot.slane %v6643, 4
      %v6811 = vsel %vm4425, %v6806, %v6810
      %v6812 = vrot.slane %v6644, 4
      %v6813 = vsel %vm4425, %v6808, %v6812
      %v6814 = vrot.slane %v6645, 4
      %v6815 = vsel %vm4425, %v6810, %v6814
      %v6816 = vrot.slane %v6646, 4
      %v6817 = vsel %vm4425, %v6812, %v6816
      %v6818 = vrot.slane %v6647, 4
      %v6819 = vsel %vm4425, %v6814, %v6818
      %v6820 = vrot.slane %v6648, 4
      %v6821 = vsel %vm4425, %v6816, %v6820
      %v6822 = vrot.slane %v6649, 4
      %v6823 = vsel %vm4425, %v6818, %v6822
      %v6824 = vrot.slane %v6650, 4
      %v6825 = vsel %vm4425, %v6820, %v6824
      %v6826 = vrot.slane %v6651, 4
      %v6827 = vsel %vm4425, %v6822, %v6826
      %v6828 = vrot.slane %v6652, 4
      %v6829 = vsel %vm4425, %v6824, %v6828
      %v6830 = vrot.slane %v6653, 4
      %v6831 = vsel %vm4425, %v6826, %v6830
      %v6832 = vrot.slane %v6654, 4
      %v6833 = vsel %vm4425, %v6828, %v6832
      %v6834 = vrot.slane %v6655, 4
      %v6835 = vsel %vm4425, %v6830, %v6834
      %v6836 = vrot.slane %v6656, 4
      %v6837 = vsel %vm4425, %v6832, %v6836
      %v6838 = vrot.slane %v6657, 4
      %v6839 = vsel %vm4425, %v6834, %v6838
      %v6840 = vrot.slane %v6658, 4
      %v6841 = vsel %vm4425, %v6836, %v6840
      %v6842 = vrot.slane %v6659, 4
      %v6843 = vsel %vm4425, %v6838, %v6842
      %v6844 = vrot.slane %v6660, 4
      %v6845 = vsel %vm4425, %v6840, %v6844
      %v6846 = vrot.slane %v6661, 4
      %v6847 = vsel %vm4425, %v6842, %v6846
      %v6848 = vrot.slane %v6662, 4
      %v6849 = vsel %vm4425, %v6844, %v6848
      %v6850 = vrot.slane %v6663, 4
      %v6851 = vsel %vm4425, %v6846, %v6850
      %v6852 = vrot.slane %v6664, 4
      %v6853 = vsel %vm4425, %v6848, %v6852
      %v6854 = vrot.slane %v6665, 4
      %v6855 = vsel %vm4425, %v6850, %v6854
      %v6856 = vrot.slane %v6666, 4
      %v6857 = vsel %vm4425, %v6852, %v6856
      %v6858 = vrot.slane %v6667, 4
      %v6859 = vsel %vm4425, %v6854, %v6858
      %v6860 = vrot.slane %v6668, 4
      %v6861 = vsel %vm4425, %v6856, %v6860
      %v6862 = vrot.slane %v6669, 4
      %v6863 = vsel %vm4425, %v6858, %v6862
      %v6864 = vrot.slane %v6670, 4
      %v6865 = vsel %vm4425, %v6860, %v6864
      %v6866 = vrot.slane %v6671, 4
      %v6867 = vsel %vm4425, %v6862, %v6866
      %v6868 = vrot.slane %v6672, 4
      %v6869 = vsel %vm4425, %v6864, %v6868
      %v6870 = vrot.slane %v6673, 4
      %v6871 = vsel %vm4425, %v6866, %v6870
      %v6872 = vrot.slane %v6674, 4
      %v6873 = vsel %vm4425, %v6868, %v6872
      %v6874 = vrot.slane %v6675, 4
      %v6875 = vsel %vm4425, %v6870, %v6874
      %v6876 = vrot.slane %v6676, 4
      %v6877 = vsel %vm4425, %v6872, %v6876
      %v6878 = vrot.slane %v6677, 4
      %v6879 = vsel %vm4425, %v6874, %v6878
      %v6880 = vrot.slane %v6678, 4
      %v6881 = vsel %vm4425, %v6876, %v6880
      %v6882 = vrot.slane %v6679, 4
      %v6883 = vsel %vm4425, %v6878, %v6882
      %v6884 = vrot.slane %v6680, 4
      %v6885 = vsel %vm4425, %v6880, %v6884
      %v6886 = vrot.slane %v6681, 4
      %v6887 = vsel %vm4425, %v6882, %v6886
      %v6888 = vrot.slane %v6682, 4
      %v6889 = vsel %vm4425, %v6884, %v6888
      %v6890 = vrot.slane %v6683, 4
      %v6891 = vsel %vm4425, %v6886, %v6890
      %v6892 = vrot.slane %v6684, 4
      %v6893 = vsel %vm4425, %v6888, %v6892
      %v6894 = vrot.slane %v6685, 4
      %v6895 = vsel %vm4425, %v6890, %v6894
      %v6896 = vrot.slane %v6686, 4
      %v6897 = vsel %vm4425, %v6892, %v6896
      %v6898 = vrot.slane %v6687, 4
      %v6899 = vsel %vm4425, %v6894, %v6898
      %v6900 = vrot.slane %v6688, 4
      %v6901 = vsel %vm4425, %v6896, %v6900
      %vm6931 = vcmask 130048
      %v6932 = vsel %vm6931, %v6793, 0
      %v6934 = vsel %vm6931, %v6797, 0
      %v6936 = vsel %vm6931, %v6801, 0
      %v6938 = vsel %vm6931, %v6805, 0
      %v6940 = vsel %vm6931, %v6809, 0
      %v6942 = vsel %vm6931, %v6813, 0
      %v6944 = vsel %vm6931, %v6817, 0
      %v6946 = vsel %vm6931, %v6821, 0
      %v6948 = vsel %vm6931, %v6825, 0
      %v6950 = vsel %vm6931, %v6829, 0
      %v6952 = vsel %vm6931, %v6833, 0
      %v6954 = vsel %vm6931, %v6837, 0
      %v6956 = vsel %vm6931, %v6841, 0
      %v6958 = vsel %vm6931, %v6845, 0
      %v6960 = vsel %vm6931, %v6849, 0
      %v6962 = vsel %vm6931, %v6853, 0
      %v6964 = vsel %vm6931, %v6857, 0
      %v6966 = vsel %vm6931, %v6861, 0
      %v6968 = vsel %vm6931, %v6865, 0
      %v6970 = vsel %vm6931, %v6869, 0
      %v6972 = vsel %vm6931, %v6873, 0
      %v6974 = vsel %vm6931, %v6877, 0
      %v6976 = vsel %vm6931, %v6881, 0
      %v6978 = vsel %vm6931, %v6885, 0
      %v6980 = vsel %vm6931, %v6889, 0
      %v6982 = vsel %vm6931, %v6893, 0
      %v6984 = vsel %vm6931, %v6897, 0
      %v6986 = vsel %vm6931, %v6901, 0
      %v6988 = vsel %vm6931, %v6900, 0
      %6990 = vmatprep.subr.mxu0 0.0
      %6991 = vmatpush1.msra.mxu0 %v6712
      %6992 = vmatprep.subr.mxu0 0.0
      %6993 = vmatpush1.msra.mxu0 %v6713
      %6994 = vmatprep.subr.mxu0 0.0
      %6995 = vmatpush1.msra.mxu0 %v6714
      %6996 = vmatprep.subr.mxu0 0.0
      %6997 = vmatpush1.msra.mxu0 %v6715
      %6998 = vmatprep.subr.mxu0 0.0
      %6999 = vmatpush1.msra.mxu0 %v6716
      %7000 = vmatprep.subr.mxu0 0.0
      %7001 = vmatpush1.msra.mxu0 %v6717
      %7002 = vmatprep.subr.mxu0 0.0
      %7003 = vmatpush1.msra.mxu0 %v6718
      %7004 = vmatprep.subr.mxu0 0.0
      %7005 = vmatpush1.msra.mxu0 %v6719
      %7006 = vmatprep.subr.mxu0 0.0
      %7007 = vmatpush1.msra.mxu0 %v6720
      %7008 = vmatprep.subr.mxu0 0.0
      %7009 = vmatpush1.msra.mxu0 %v6721
      %7010 = vmatprep.subr.mxu0 0.0
      %7011 = vmatpush1.msra.mxu0 %v6722
      %7012 = vmatprep.subr.mxu0 0.0
      %7013 = vmatpush1.msra.mxu0 %v6723
      %7014 = vmatprep.subr.mxu0 0.0
      %7015 = vmatpush1.msra.mxu0 %v6724
      %7016 = vmatprep.subr.mxu0 0.0
      %7017 = vmatpush1.msra.mxu0 %v6725
      %7018 = vmatprep.subr.mxu0 0.0
      %7019 = vmatpush1.msra.mxu0 %v6726
      %7020 = vmatprep.subr.mxu0 0.0
      %7021 = vmatpush1.msra.mxu0 %v6727
      %7022 = vmatprep.subr.mxu0 0.0
      %7023 = vmatpush1.msra.mxu0 %v6728
      %7024 = vmatprep.subr.mxu0 0.0
      %7025 = vmatpush1.msra.mxu0 %v6729
      %7026 = vmatprep.subr.mxu0 0.0
      %7027 = vmatpush1.msra.mxu0 0.0
      %7028 = vmatprep.subr.mxu0 0.0
      %7029 = vmatpush1.msra.mxu0 0.0
      %7030 = vmatprep.subr.mxu0 0.0
      %7031 = vmatpush1.msra.mxu0 0.0
      %7032 = vmatprep.subr.mxu0 0.0
      %7033 = vmatpush1.msra.mxu0 0.0
      %7034 = vmatprep.subr.mxu0 0.0
      %7035 = vmatpush1.msra.mxu0 0.0
      %7036 = vmatprep.subr.mxu0 0.0
      %7037 = vmatpush1.msra.mxu0 0.0
      %7038 = vmatprep.subr.mxu0 0.0
      %7039 = vmatpush1.msra.mxu0 0.0
      %7040 = vmatprep.subr.mxu0 0.0
      %7041 = vmatpush1.msra.mxu0 0.0
      %7042 = vmatprep.subr.mxu0 0.0
      %7043 = vmatpush1.msra.mxu0 0.0
      %7044 = vmatprep.subr.mxu0 0.0
      %7045 = vmatpush1.msra.mxu0 0.0
      %7046 = vmatprep.subr.mxu0 0.0
      %7047 = vmatpush1.msra.mxu0 0.0
      %7048 = vmatprep.subr.mxu0 0.0
      %7049 = vmatpush1.msra.mxu0 0.0
      %7050 = vmatprep.subr.mxu0 0.0
      %7051 = vmatpush1.msra.mxu0 0.0
      %7052 = vmatprep.subr.mxu0 0.0
      %7053 = vmatpush1.msra.mxu0 0.0
      %7054 = vmatprep.mubr.f32.mxu0 %v6932
      %7055 = vmatmul.mubr.f32.gmra.mrb[0].mxu0 %v6790
      %v7056 = vpop.f32.mrb[0].mxu0
      %v7057 = vadd.f32 0.0, %v7056
      %v7058 = vpop.f32.mrb[0].mxu0
      %7059 = vmatprep.mubr.f32.mxu0 %v6934
      %7060 = vmatmul.mubr.f32.gmra.mrb[0].mxu0 %v6795
      %v7061 = vpop.f32.mrb[0].mxu0
      %v7062 = vadd.f32 0.0, %v7061
      %v7063 = vpop.f32.mrb[0].mxu0
      %7064 = vmatprep.mubr.f32.mxu0 %v6936
      %7065 = vmatmul.mubr.f32.gmra.mrb[0].mxu0 %v6799
      %v7066 = vpop.f32.mrb[0].mxu0
      %v7067 = vadd.f32 0.0, %v7066
      %v7068 = vpop.f32.mrb[0].mxu0
      %7069 = vmatprep.mubr.f32.mxu0 %v6938
      %7070 = vmatmul.mubr.f32.gmra.mrb[0].mxu0 %v6803
      %v7071 = vpop.f32.mrb[0].mxu0
      %v7072 = vadd.f32 0.0, %v7071
      %v7073 = vpop.f32.mrb[0].mxu0
      %7074 = vmatprep.mubr.f32.mxu0 %v6940
      %7075 = vmatmul.mubr.f32.gmra.mrb[0].mxu0 %v6807
      %v7076 = vpop.f32.mrb[0].mxu0
      %v7077 = vadd.f32 0.0, %v7076
      %v7078 = vpop.f32.mrb[0].mxu0
      %7079 = vmatprep.mubr.f32.mxu0 %v6942
      %7080 = vmatmul.mubr.f32.gmra.mrb[0].mxu0 %v6811
      %v7081 = vpop.f32.mrb[0].mxu0
      %v7082 = vadd.f32 0.0, %v7081
      %v7083 = vpop.f32.mrb[0].mxu0
      %7084 = vmatprep.mubr.f32.mxu0 %v6944
      %7085 = vmatmul.mubr.f32.gmra.mrb[0].mxu0 %v6815
      %v7086 = vpop.f32.mrb[0].mxu0
      %v7087 = vadd.f32 0.0, %v7086
      %v7088 = vpop.f32.mrb[0].mxu0
      %7089 = vmatprep.mubr.f32.mxu0 %v6946
      %7090 = vmatmul.mubr.f32.gmra.mrb[0].mxu0 %v6819
      %v7091 = vpop.f32.mrb[0].mxu0
      %v7092 = vadd.f32 0.0, %v7091
      %v7093 = vpop.f32.mrb[0].mxu0
      %7094 = vmatprep.mubr.f32.mxu0 %v6948
      %7095 = vmatmul.mubr.f32.gmra.mrb[0].mxu0 %v6823
      %v7096 = vpop.f32.mrb[0].mxu0
      %v7097 = vadd.f32 0.0, %v7096
      %v7098 = vpop.f32.mrb[0].mxu0
      %7099 = vmatprep.mubr.f32.mxu0 %v6950
      %7100 = vmatmul.mubr.f32.gmra.mrb[0].mxu0 %v6827
      %v7101 = vpop.f32.mrb[0].mxu0
      %v7102 = vadd.f32 0.0, %v7101
      %v7103 = vpop.f32.mrb[0].mxu0
      %7104 = vmatprep.mubr.f32.mxu0 %v6952
      %7105 = vmatmul.mubr.f32.gmra.mrb[0].mxu0 %v6831
      %v7106 = vpop.f32.mrb[0].mxu0
      %v7107 = vadd.f32 0.0, %v7106
      %v7108 = vpop.f32.mrb[0].mxu0
      %7109 = vmatprep.mubr.f32.mxu0 %v6954
      %7110 = vmatmul.mubr.f32.gmra.mrb[0].mxu0 %v6835
      %v7111 = vpop.f32.mrb[0].mxu0
      %v7112 = vadd.f32 0.0, %v7111
      %v7113 = vpop.f32.mrb[0].mxu0
      %7114 = vmatprep.mubr.f32.mxu0 %v6956
      %7115 = vmatmul.mubr.f32.gmra.mrb[0].mxu0 %v6839
      %v7116 = vpop.f32.mrb[0].mxu0
      %v7117 = vadd.f32 0.0, %v7116
      %v7118 = vpop.f32.mrb[0].mxu0
      %7119 = vmatprep.mubr.f32.mxu0 %v6958
      %7120 = vmatmul.mubr.f32.gmra.mrb[0].mxu0 %v6843
      %v7121 = vpop.f32.mrb[0].mxu0
      %v7122 = vadd.f32 0.0, %v7121
      %v7123 = vpop.f32.mrb[0].mxu0
      %7124 = vmatprep.mubr.f32.mxu0 %v6960
      %7125 = vmatmul.mubr.f32.gmra.mrb[0].mxu0 %v6847
      %v7126 = vpop.f32.mrb[0].mxu0
      %v7127 = vadd.f32 0.0, %v7126
      %v7128 = vpop.f32.mrb[0].mxu0
      %7129 = vmatprep.mubr.f32.mxu0 %v6962
      %7130 = vmatmul.mubr.f32.gmra.mrb[0].mxu0 %v6851
      %v7131 = vpop.f32.mrb[0].mxu0
      %v7132 = vadd.f32 0.0, %v7131
      %v7133 = vpop.f32.mrb[0].mxu0
      %7134 = vmatprep.mubr.f32.mxu0 %v6964
      %7135 = vmatmul.mubr.f32.gmra.mrb[0].mxu0 %v6855
      %v7136 = vpop.f32.mrb[0].mxu0
      %v7137 = vadd.f32 0.0, %v7136
      %v7138 = vpop.f32.mrb[0].mxu0
      %7139 = vmatprep.mubr.f32.mxu0 %v6966
      %7140 = vmatmul.mubr.f32.gmra.mrb[0].mxu0 %v6859
      %v7141 = vpop.f32.mrb[0].mxu0
      %v7142 = vadd.f32 0.0, %v7141
      %v7143 = vpop.f32.mrb[0].mxu0
      %7144 = vmatprep.mubr.f32.mxu0 %v6968
      %7145 = vmatmul.mubr.f32.gmra.mrb[0].mxu0 %v6863
      %v7146 = vpop.f32.mrb[0].mxu0
      %v7147 = vadd.f32 0.0, %v7146
      %v7148 = vpop.f32.mrb[0].mxu0
      %7149 = vmatprep.mubr.f32.mxu0 %v6970
      %7150 = vmatmul.mubr.f32.gmra.mrb[0].mxu0 %v6867
      %v7151 = vpop.f32.mrb[0].mxu0
      %v7152 = vadd.f32 0.0, %v7151
      %v7153 = vpop.f32.mrb[0].mxu0
      %7154 = vmatprep.mubr.f32.mxu0 %v6972
      %7155 = vmatmul.mubr.f32.gmra.mrb[0].mxu0 %v6871
      %v7156 = vpop.f32.mrb[0].mxu0
      %v7157 = vadd.f32 0.0, %v7156
      %v7158 = vpop.f32.mrb[0].mxu0
      %7159 = vmatprep.mubr.f32.mxu0 %v6974
      %7160 = vmatmul.mubr.f32.gmra.mrb[0].mxu0 %v6875
      %v7161 = vpop.f32.mrb[0].mxu0
      %v7162 = vadd.f32 0.0, %v7161
      %v7163 = vpop.f32.mrb[0].mxu0
      %7164 = vmatprep.mubr.f32.mxu0 %v6976
      %7165 = vmatmul.mubr.f32.gmra.mrb[0].mxu0 %v6879
      %v7166 = vpop.f32.mrb[0].mxu0
      %v7167 = vadd.f32 0.0, %v7166
      %v7168 = vpop.f32.mrb[0].mxu0
      %7169 = vmatprep.mubr.f32.mxu0 %v6978
      %7170 = vmatmul.mubr.f32.gmra.mrb[0].mxu0 %v6883
      %v7171 = vpop.f32.mrb[0].mxu0
      %v7172 = vadd.f32 0.0, %v7171
      %v7173 = vpop.f32.mrb[0].mxu0
      %7174 = vmatprep.mubr.f32.mxu0 %v6980
      %7175 = vmatmul.mubr.f32.gmra.mrb[0].mxu0 %v6887
      %v7176 = vpop.f32.mrb[0].mxu0
      %v7177 = vadd.f32 0.0, %v7176
      %v7178 = vpop.f32.mrb[0].mxu0
      %7179 = vmatprep.mubr.f32.mxu0 %v6982
      %7180 = vmatmul.mubr.f32.gmra.mrb[0].mxu0 %v6891
      %v7181 = vpop.f32.mrb[0].mxu0
      %v7182 = vadd.f32 0.0, %v7181
      %v7183 = vpop.f32.mrb[0].mxu0
      %7184 = vmatprep.mubr.f32.mxu0 %v6984
      %7185 = vmatmul.mubr.f32.gmra.mrb[0].mxu0 %v6895
      %v7186 = vpop.f32.mrb[0].mxu0
      %v7187 = vadd.f32 0.0, %v7186
      %v7188 = vpop.f32.mrb[0].mxu0
      %7189 = vmatprep.mubr.f32.mxu0 %v6986
      %7190 = vmatmul.mubr.f32.gmra.mrb[0].mxu0 %v6899
      %v7191 = vpop.f32.mrb[0].mxu0
      %v7192 = vadd.f32 0.0, %v7191
      %v7193 = vpop.f32.mrb[0].mxu0
      %7194 = vmatprep.mubr.f32.mxu0 %v6988
      %7195 = vmatmul.mubr.f32.gmra.mrb[0].mxu0 %v6898
      %v7196 = vpop.f32.mrb[0].mxu0
      %v7197 = vadd.f32 0.0, %v7196
      %v7198 = vpop.f32.mrb[0].mxu0
      %7199 = vdwg.mxu0
      %v7200 = vsel %vm6931, %v6632, 0
      %v7202 = vsel %vm6931, %v6634, 0
      %v7204 = vsel %vm6931, %v6636, 0
      %v7206 = vsel %vm6931, %v6638, 0
      %v7208 = vsel %vm6931, %v6640, 0
      %v7210 = vsel %vm6931, %v6642, 0
      %v7212 = vsel %vm6931, %v6644, 0
      %v7214 = vsel %vm6931, %v6646, 0
      %v7216 = vsel %vm6931, %v6648, 0
      %v7218 = vsel %vm6931, %v6650, 0
      %v7220 = vsel %vm6931, %v6652, 0
      %v7222 = vsel %vm6931, %v6654, 0
      %v7224 = vsel %vm6931, %v6656, 0
      %v7226 = vsel %vm6931, %v6658, 0
      %v7228 = vsel %vm6931, %v6660, 0
      %v7230 = vsel %vm6931, %v6662, 0
      %v7232 = vsel %vm6931, %v6664, 0
      %v7234 = vsel %vm6931, %v6666, 0
      %v7236 = vsel %vm6931, %v6668, 0
      %v7238 = vsel %vm6931, %v6670, 0
      %v7240 = vsel %vm6931, %v6672, 0
      %v7242 = vsel %vm6931, %v6674, 0
      %v7244 = vsel %vm6931, %v6676, 0
      %v7246 = vsel %vm6931, %v6678, 0
      %v7248 = vsel %vm6931, %v6680, 0
      %v7250 = vsel %vm6931, %v6682, 0
      %v7252 = vsel %vm6931, %v6684, 0
      %v7254 = vsel %vm6931, %v6686, 0
      %v7256 = vsel %vm6931, %v6688, 0
      %7258 = vmatprep.subr.mxu0 0.0
      %7259 = vmatpush1.msra.mxu0 %v6693
      %7260 = vmatprep.subr.mxu0 0.0
      %7261 = vmatpush1.msra.mxu0 %v6694
      %7262 = vmatprep.subr.mxu0 0.0
      %7263 = vmatpush1.msra.mxu0 %v6695
      %7264 = vmatprep.subr.mxu0 0.0
      %7265 = vmatpush1.msra.mxu0 %v6696
      %7266 = vmatprep.subr.mxu0 0.0
      %7267 = vmatpush1.msra.mxu0 %v6697
      %7268 = vmatprep.subr.mxu0 0.0
      %7269 = vmatpush1.msra.mxu0 %v6698
      %7270 = vmatprep.subr.mxu0 0.0
      %7271 = vmatpush1.msra.mxu0 %v6699
      %7272 = vmatprep.subr.mxu0 0.0
      %7273 = vmatpush1.msra.mxu0 %v6700
      %7274 = vmatprep.subr.mxu0 0.0
      %7275 = vmatpush1.msra.mxu0 %v6701
      %7276 = vmatprep.subr.mxu0 0.0
      %7277 = vmatpush1.msra.mxu0 %v6702
      %7278 = vmatprep.subr.mxu0 0.0
      %7279 = vmatpush1.msra.mxu0 %v6703
      %7280 = vmatprep.subr.mxu0 0.0
      %7281 = vmatpush1.msra.mxu0 %v6704
      %7282 = vmatprep.subr.mxu0 0.0
      %7283 = vmatpush1.msra.mxu0 %v6705
      %7284 = vmatprep.subr.mxu0 0.0
      %7285 = vmatpush1.msra.mxu0 %v6706
      %7286 = vmatprep.subr.mxu0 0.0
      %7287 = vmatpush1.msra.mxu0 %v6707
      %7288 = vmatprep.subr.mxu0 0.0
      %7289 = vmatpush1.msra.mxu0 %v6708
      %7290 = vmatprep.subr.mxu0 0.0
      %7291 = vmatpush1.msra.mxu0 %v6709
      %7292 = vmatprep.subr.mxu0 0.0
      %7293 = vmatpush1.msra.mxu0 %v6710
      %7294 = vmatprep.subr.mxu0 0.0
      %7295 = vmatpush1.msra.mxu0 0.0
      %7296 = vmatprep.subr.mxu0 0.0
      %7297 = vmatpush1.msra.mxu0 0.0
      %7298 = vmatprep.subr.mxu0 0.0
      %7299 = vmatpush1.msra.mxu0 0.0
      %7300 = vmatprep.subr.mxu0 0.0
      %7301 = vmatpush1.msra.mxu0 0.0
      %7302 = vmatprep.subr.mxu0 0.0
      %7303 = vmatpush1.msra.mxu0 0.0
      %7304 = vmatprep.subr.mxu0 0.0
      %7305 = vmatpush1.msra.mxu0 0.0
      %7306 = vmatprep.subr.mxu0 0.0
      %7307 = vmatpush1.msra.mxu0 0.0
      %7308 = vmatprep.subr.mxu0 0.0
      %7309 = vmatpush1.msra.mxu0 0.0
      %7310 = vmatprep.subr.mxu0 0.0
      %7311 = vmatpush1.msra.mxu0 0.0
      %7312 = vmatprep.subr.mxu0 0.0
      %7313 = vmatpush1.msra.mxu0 0.0
      %7314 = vmatprep.subr.mxu0 0.0
      %7315 = vmatpush1.msra.mxu0 0.0
      %7316 = vmatprep.subr.mxu0 0.0
      %7317 = vmatpush1.msra.mxu0 0.0
      %7318 = vmatprep.subr.mxu0 0.0
      %7319 = vmatpush1.msra.mxu0 0.0
      %7320 = vmatprep.subr.mxu0 0.0
      %7321 = vmatpush1.msra.mxu0 0.0
      %7322 = vmatprep.mubr.f32.mxu0 %v7200
      %7323 = vmatmul.mubr.f32.gmra.mrb[0].mxu0 %v6631
      %v7324 = vpop.f32.mrb[0].mxu0
      %v7325 = vadd.f32 %v7057, %v7324
      %v7326 = vpop.f32.mrb[0].mxu0
      %7327 = vmatprep.mubr.f32.mxu0 %v7202
      %7328 = vmatmul.mubr.f32.gmra.mrb[0].mxu0 %v6633
      %v7329 = vpop.f32.mrb[0].mxu0
      %v7330 = vadd.f32 %v7062, %v7329
      %v7331 = vpop.f32.mrb[0].mxu0
      %7332 = vmatprep.mubr.f32.mxu0 %v7204
      %7333 = vmatmul.mubr.f32.gmra.mrb[0].mxu0 %v6635
      %v7334 = vpop.f32.mrb[0].mxu0
      %v7335 = vadd.f32 %v7067, %v7334
      %v7336 = vpop.f32.mrb[0].mxu0
      %7337 = vmatprep.mubr.f32.mxu0 %v7206
      %7338 = vmatmul.mubr.f32.gmra.mrb[0].mxu0 %v6637
      %v7339 = vpop.f32.mrb[0].mxu0
      %v7340 = vadd.f32 %v7072, %v7339
      %v7341 = vpop.f32.mrb[0].mxu0
      %7342 = vmatprep.mubr.f32.mxu0 %v7208
      %7343 = vmatmul.mubr.f32.gmra.mrb[0].mxu0 %v6639
      %v7344 = vpop.f32.mrb[0].mxu0
      %v7345 = vadd.f32 %v7077, %v7344
      %v7346 = vpop.f32.mrb[0].mxu0
      %7347 = vmatprep.mubr.f32.mxu0 %v7210
      %7348 = vmatmul.mubr.f32.gmra.mrb[0].mxu0 %v6641
      %v7349 = vpop.f32.mrb[0].mxu0
      %v7350 = vadd.f32 %v7082, %v7349
      %v7351 = vpop.f32.mrb[0].mxu0
      %7352 = vmatprep.mubr.f32.mxu0 %v7212
      %7353 = vmatmul.mubr.f32.gmra.mrb[0].mxu0 %v6643
      %v7354 = vpop.f32.mrb[0].mxu0
      %v7355 = vadd.f32 %v7087, %v7354
      %v7356 = vpop.f32.mrb[0].mxu0
      %7357 = vmatprep.mubr.f32.mxu0 %v7214
      %7358 = vmatmul.mubr.f32.gmra.mrb[0].mxu0 %v6645
      %v7359 = vpop.f32.mrb[0].mxu0
      %v7360 = vadd.f32 %v7092, %v7359
      %v7361 = vpop.f32.mrb[0].mxu0
      %7362 = vmatprep.mubr.f32.mxu0 %v7216
      %7363 = vmatmul.mubr.f32.gmra.mrb[0].mxu0 %v6647
      %v7364 = vpop.f32.mrb[0].mxu0
      %v7365 = vadd.f32 %v7097, %v7364
      %v7366 = vpop.f32.mrb[0].mxu0
      %7367 = vmatprep.mubr.f32.mxu0 %v7218
      %7368 = vmatmul.mubr.f32.gmra.mrb[0].mxu0 %v6649
      %v7369 = vpop.f32.mrb[0].mxu0
      %v7370 = vadd.f32 %v7102, %v7369
      %v7371 = vpop.f32.mrb[0].mxu0
      %7372 = vmatprep.mubr.f32.mxu0 %v7220
      %7373 = vmatmul.mubr.f32.gmra.mrb[0].mxu0 %v6651
      %v7374 = vpop.f32.mrb[0].mxu0
      %v7375 = vadd.f32 %v7107, %v7374
      %v7376 = vpop.f32.mrb[0].mxu0
      %7377 = vmatprep.mubr.f32.mxu0 %v7222
      %7378 = vmatmul.mubr.f32.gmra.mrb[0].mxu0 %v6653
      %v7379 = vpop.f32.mrb[0].mxu0
      %v7380 = vadd.f32 %v7112, %v7379
      %v7381 = vpop.f32.mrb[0].mxu0
      %7382 = vmatprep.mubr.f32.mxu0 %v7224
      %7383 = vmatmul.mubr.f32.gmra.mrb[0].mxu0 %v6655
      %v7384 = vpop.f32.mrb[0].mxu0
      %v7385 = vadd.f32 %v7117, %v7384
      %v7386 = vpop.f32.mrb[0].mxu0
      %7387 = vmatprep.mubr.f32.mxu0 %v7226
      %7388 = vmatmul.mubr.f32.gmra.mrb[0].mxu0 %v6657
      %v7389 = vpop.f32.mrb[0].mxu0
      %v7390 = vadd.f32 %v7122, %v7389
      %v7391 = vpop.f32.mrb[0].mxu0
      %7392 = vmatprep.mubr.f32.mxu0 %v7228
      %7393 = vmatmul.mubr.f32.gmra.mrb[0].mxu0 %v6659
      %v7394 = vpop.f32.mrb[0].mxu0
      %v7395 = vadd.f32 %v7127, %v7394
      %v7396 = vpop.f32.mrb[0].mxu0
      %7397 = vmatprep.mubr.f32.mxu0 %v7230
      %7398 = vmatmul.mubr.f32.gmra.mrb[0].mxu0 %v6661
      %v7399 = vpop.f32.mrb[0].mxu0
      %v7400 = vadd.f32 %v7132, %v7399
      %v7401 = vpop.f32.mrb[0].mxu0
      %7402 = vmatprep.mubr.f32.mxu0 %v7232
      %7403 = vmatmul.mubr.f32.gmra.mrb[0].mxu0 %v6663
      %v7404 = vpop.f32.mrb[0].mxu0
      %v7405 = vadd.f32 %v7137, %v7404
      %v7406 = vpop.f32.mrb[0].mxu0
      %7407 = vmatprep.mubr.f32.mxu0 %v7234
      %7408 = vmatmul.mubr.f32.gmra.mrb[0].mxu0 %v6665
      %v7409 = vpop.f32.mrb[0].mxu0
      %v7410 = vadd.f32 %v7142, %v7409
      %v7411 = vpop.f32.mrb[0].mxu0
      %7412 = vmatprep.mubr.f32.mxu0 %v7236
      %7413 = vmatmul.mubr.f32.gmra.mrb[0].mxu0 %v6667
      %v7414 = vpop.f32.mrb[0].mxu0
      %v7415 = vadd.f32 %v7147, %v7414
      %v7416 = vpop.f32.mrb[0].mxu0
      %7417 = vmatprep.mubr.f32.mxu0 %v7238
      %7418 = vmatmul.mubr.f32.gmra.mrb[0].mxu0 %v6669
      %v7419 = vpop.f32.mrb[0].mxu0
      %v7420 = vadd.f32 %v7152, %v7419
      %v7421 = vpop.f32.mrb[0].mxu0
      %7422 = vmatprep.mubr.f32.mxu0 %v7240
      %7423 = vmatmul.mubr.f32.gmra.mrb[0].mxu0 %v6671
      %v7424 = vpop.f32.mrb[0].mxu0
      %v7425 = vadd.f32 %v7157, %v7424
      %v7426 = vpop.f32.mrb[0].mxu0
      %7427 = vmatprep.mubr.f32.mxu0 %v7242
      %7428 = vmatmul.mubr.f32.gmra.mrb[0].mxu0 %v6673
      %v7429 = vpop.f32.mrb[0].mxu0
      %v7430 = vadd.f32 %v7162, %v7429
      %v7431 = vpop.f32.mrb[0].mxu0
      %7432 = vmatprep.mubr.f32.mxu0 %v7244
      %7433 = vmatmul.mubr.f32.gmra.mrb[0].mxu0 %v6675
      %v7434 = vpop.f32.mrb[0].mxu0
      %v7435 = vadd.f32 %v7167, %v7434
      %v7436 = vpop.f32.mrb[0].mxu0
      %7437 = vmatprep.mubr.f32.mxu0 %v7246
      %7438 = vmatmul.mubr.f32.gmra.mrb[0].mxu0 %v6677
      %v7439 = vpop.f32.mrb[0].mxu0
      %v7440 = vadd.f32 %v7172, %v7439
      %v7441 = vpop.f32.mrb[0].mxu0
      %7442 = vmatprep.mubr.f32.mxu0 %v7248
      %7443 = vmatmul.mubr.f32.gmra.mrb[0].mxu0 %v6679
      %v7444 = vpop.f32.mrb[0].mxu0
      %v7445 = vadd.f32 %v7177, %v7444
      %v7446 = vpop.f32.mrb[0].mxu0
      %7447 = vmatprep.mubr.f32.mxu0 %v7250
      %7448 = vmatmul.mubr.f32.gmra.mrb[0].mxu0 %v6681
      %v7449 = vpop.f32.mrb[0].mxu0
      %v7450 = vadd.f32 %v7182, %v7449
      %v7451 = vpop.f32.mrb[0].mxu0
      %7452 = vmatprep.mubr.f32.mxu0 %v7252
      %7453 = vmatmul.mubr.f32.gmra.mrb[0].mxu0 %v6683
      %v7454 = vpop.f32.mrb[0].mxu0
      %v7455 = vadd.f32 %v7187, %v7454
      %v7456 = vpop.f32.mrb[0].mxu0
      %7457 = vmatprep.mubr.f32.mxu0 %v7254
      %7458 = vmatmul.mubr.f32.gmra.mrb[0].mxu0 %v6685
      %v7459 = vpop.f32.mrb[0].mxu0
      %v7460 = vadd.f32 %v7192, %v7459
      %v7461 = vpop.f32.mrb[0].mxu0
      %7462 = vmatprep.mubr.f32.mxu0 %v7256
      %7463 = vmatmul.mubr.f32.gmra.mrb[0].mxu0 %v6687
      %v7464 = vpop.f32.mrb[0].mxu0
      %v7465 = vadd.f32 %v7197, %v7464
      %v7466 = vpop.f32.mrb[0].mxu0
      %7467 = vdwg.mxu0
      %s7468 = scalar_lea.vmem %s5, 288
      %v7469 = vld [vmem:[%s7468] sm:$0xff]
      %v7470 = vld [vmem:[%s7468 + $0x8] sm:$0xff]
      %v7471 = vld [vmem:[%s7468 + $0x10] sm:$0xff]
      %v7472 = vld [vmem:[%s7468 + $0x18] sm:$0xff]
      %v7473 = vld [vmem:[%s7468 + $0x20] sm:$0xff]
      %v7474 = vld [vmem:[%s7468 + $0x28] sm:$0xff]
      %v7475 = vld [vmem:[%s7468 + $0x30] sm:$0xff]
      %v7476 = vld [vmem:[%s7468 + $0x38] sm:$0xff]
      %v7477 = vld [vmem:[%s7468 + $0x40] sm:$0xff]
      %v7478 = vld [vmem:[%s7468 + $0x48] sm:$0xff]
      %v7479 = vld [vmem:[%s7468 + $0x50] sm:$0xff]
      %v7480 = vld [vmem:[%s7468 + $0x58] sm:$0xff]
      %v7481 = vld [vmem:[%s7468 + $0x60] sm:$0xff]
      %v7482 = vld [vmem:[%s7468 + $0x68] sm:$0xff]
      %v7483 = vld [vmem:[%s7468 + $0x70] sm:$0xff]
      %v7484 = vld [vmem:[%s7468 + $0x78] sm:$0xff]
      %v7485 = vld [vmem:[%s7468 + $0x80] sm:$0xff]
      %v7486 = vld [vmem:[%s7468 + $0x88] sm:$0xff]
      %v7488 = vsel %vm6931, %v6690, 0
      %7490 = vmatprep.subr.mxu0 0.0
      %7491 = vmatpush1.msra.mxu0 %v7469
      %7492 = vmatprep.subr.mxu0 0.0
      %7493 = vmatpush1.msra.mxu0 %v7470
      %7494 = vmatprep.subr.mxu0 0.0
      %7495 = vmatpush1.msra.mxu0 %v7471
      %7496 = vmatprep.subr.mxu0 0.0
      %7497 = vmatpush1.msra.mxu0 %v7472
      %7498 = vmatprep.subr.mxu0 0.0
      %7499 = vmatpush1.msra.mxu0 %v7473
      %7500 = vmatprep.subr.mxu0 0.0
      %7501 = vmatpush1.msra.mxu0 %v7474
      %7502 = vmatprep.subr.mxu0 0.0
      %7503 = vmatpush1.msra.mxu0 %v7475
      %7504 = vmatprep.subr.mxu0 0.0
      %7505 = vmatpush1.msra.mxu0 %v7476
      %7506 = vmatprep.subr.mxu0 0.0
      %7507 = vmatpush1.msra.mxu0 %v7477
      %7508 = vmatprep.subr.mxu0 0.0
      %7509 = vmatpush1.msra.mxu0 %v7478
      %7510 = vmatprep.subr.mxu0 0.0
      %7511 = vmatpush1.msra.mxu0 %v7479
      %7512 = vmatprep.subr.mxu0 0.0
      %7513 = vmatpush1.msra.mxu0 %v7480
      %7514 = vmatprep.subr.mxu0 0.0
      %7515 = vmatpush1.msra.mxu0 %v7481
      %7516 = vmatprep.subr.mxu0 0.0
      %7517 = vmatpush1.msra.mxu0 %v7482
      %7518 = vmatprep.subr.mxu0 0.0
      %7519 = vmatpush1.msra.mxu0 %v7483
      %7520 = vmatprep.subr.mxu0 0.0
      %7521 = vmatpush1.msra.mxu0 %v7484
      %7522 = vmatprep.subr.mxu0 0.0
      %7523 = vmatpush1.msra.mxu0 %v7485
      %7524 = vmatprep.subr.mxu0 0.0
      %7525 = vmatpush1.msra.mxu0 %v7486
      %7526 = vmatprep.subr.mxu0 0.0
      %7527 = vmatpush1.msra.mxu0 0.0
      %7528 = vmatprep.subr.mxu0 0.0
      %7529 = vmatpush1.msra.mxu0 0.0
      %7530 = vmatprep.subr.mxu0 0.0
      %7531 = vmatpush1.msra.mxu0 0.0
      %7532 = vmatprep.subr.mxu0 0.0
      %7533 = vmatpush1.msra.mxu0 0.0
      %7534 = vmatprep.subr.mxu0 0.0
      %7535 = vmatpush1.msra.mxu0 0.0
      %7536 = vmatprep.subr.mxu0 0.0
      %7537 = vmatpush1.msra.mxu0 0.0
      %7538 = vmatprep.subr.mxu0 0.0
      %7539 = vmatpush1.msra.mxu0 0.0
      %7540 = vmatprep.subr.mxu0 0.0
      %7541 = vmatpush1.msra.mxu0 0.0
      %7542 = vmatprep.subr.mxu0 0.0
      %7543 = vmatpush1.msra.mxu0 0.0
      %7544 = vmatprep.subr.mxu0 0.0
      %7545 = vmatpush1.msra.mxu0 0.0
      %7546 = vmatprep.subr.mxu0 0.0
      %7547 = vmatpush1.msra.mxu0 0.0
      %7548 = vmatprep.subr.mxu0 0.0
      %7549 = vmatpush1.msra.mxu0 0.0
      %7550 = vmatprep.subr.mxu0 0.0
      %7551 = vmatpush1.msra.mxu0 0.0
      %7552 = vmatprep.subr.mxu0 0.0
      %7553 = vmatpush1.msra.mxu0 0.0
      %7554 = vmatprep.mubr.f32.mxu0 %v7202
      %7555 = vmatmul.mubr.f32.gmra.mrb[0].mxu0 %v6633
      %v7556 = vpop.f32.mrb[0].mxu0
      %v7557 = vadd.f32 0.0, %v7556
      %v7558 = vpop.f32.mrb[0].mxu0
      %7559 = vmatprep.mubr.f32.mxu0 %v7204
      %7560 = vmatmul.mubr.f32.gmra.mrb[0].mxu0 %v6635
      %v7561 = vpop.f32.mrb[0].mxu0
      %v7562 = vadd.f32 0.0, %v7561
      %v7563 = vpop.f32.mrb[0].mxu0
      %7564 = vmatprep.mubr.f32.mxu0 %v7206
      %7565 = vmatmul.mubr.f32.gmra.mrb[0].mxu0 %v6637
      %v7566 = vpop.f32.mrb[0].mxu0
      %v7567 = vadd.f32 0.0, %v7566
      %v7568 = vpop.f32.mrb[0].mxu0
      %7569 = vmatprep.mubr.f32.mxu0 %v7208
      %7570 = vmatmul.mubr.f32.gmra.mrb[0].mxu0 %v6639
      %v7571 = vpop.f32.mrb[0].mxu0
      %v7572 = vadd.f32 0.0, %v7571
      %v7573 = vpop.f32.mrb[0].mxu0
      %7574 = vmatprep.mubr.f32.mxu0 %v7210
      %7575 = vmatmul.mubr.f32.gmra.mrb[0].mxu0 %v6641
      %v7576 = vpop.f32.mrb[0].mxu0
      %v7577 = vadd.f32 0.0, %v7576
      %v7578 = vpop.f32.mrb[0].mxu0
      %7579 = vmatprep.mubr.f32.mxu0 %v7212
      %7580 = vmatmul.mubr.f32.gmra.mrb[0].mxu0 %v6643
      %v7581 = vpop.f32.mrb[0].mxu0
      %v7582 = vadd.f32 0.0, %v7581
      %v7583 = vpop.f32.mrb[0].mxu0
      %7584 = vmatprep.mubr.f32.mxu0 %v7214
      %7585 = vmatmul.mubr.f32.gmra.mrb[0].mxu0 %v6645
      %v7586 = vpop.f32.mrb[0].mxu0
      %v7587 = vadd.f32 0.0, %v7586
      %v7588 = vpop.f32.mrb[0].mxu0
      %7589 = vmatprep.mubr.f32.mxu0 %v7216
      %7590 = vmatmul.mubr.f32.gmra.mrb[0].mxu0 %v6647
      %v7591 = vpop.f32.mrb[0].mxu0
      %v7592 = vadd.f32 0.0, %v7591
      %v7593 = vpop.f32.mrb[0].mxu0
      %7594 = vmatprep.mubr.f32.mxu0 %v7218
      %7595 = vmatmul.mubr.f32.gmra.mrb[0].mxu0 %v6649
      %v7596 = vpop.f32.mrb[0].mxu0
      %v7597 = vadd.f32 0.0, %v7596
      %v7598 = vpop.f32.mrb[0].mxu0
      %7599 = vmatprep.mubr.f32.mxu0 %v7220
      %7600 = vmatmul.mubr.f32.gmra.mrb[0].mxu0 %v6651
      %v7601 = vpop.f32.mrb[0].mxu0
      %v7602 = vadd.f32 0.0, %v7601
      %v7603 = vpop.f32.mrb[0].mxu0
      %7604 = vmatprep.mubr.f32.mxu0 %v7222
      %7605 = vmatmul.mubr.f32.gmra.mrb[0].mxu0 %v6653
      %v7606 = vpop.f32.mrb[0].mxu0
      %v7607 = vadd.f32 0.0, %v7606
      %v7608 = vpop.f32.mrb[0].mxu0
      %7609 = vmatprep.mubr.f32.mxu0 %v7224
      %7610 = vmatmul.mubr.f32.gmra.mrb[0].mxu0 %v6655
      %v7611 = vpop.f32.mrb[0].mxu0
      %v7612 = vadd.f32 0.0, %v7611
      %v7613 = vpop.f32.mrb[0].mxu0
      %7614 = vmatprep.mubr.f32.mxu0 %v7226
      %7615 = vmatmul.mubr.f32.gmra.mrb[0].mxu0 %v6657
      %v7616 = vpop.f32.mrb[0].mxu0
      %v7617 = vadd.f32 0.0, %v7616
      %v7618 = vpop.f32.mrb[0].mxu0
      %7619 = vmatprep.mubr.f32.mxu0 %v7228
      %7620 = vmatmul.mubr.f32.gmra.mrb[0].mxu0 %v6659
      %v7621 = vpop.f32.mrb[0].mxu0
      %v7622 = vadd.f32 0.0, %v7621
      %v7623 = vpop.f32.mrb[0].mxu0
      %7624 = vmatprep.mubr.f32.mxu0 %v7230
      %7625 = vmatmul.mubr.f32.gmra.mrb[0].mxu0 %v6661
      %v7626 = vpop.f32.mrb[0].mxu0
      %v7627 = vadd.f32 0.0, %v7626
      %v7628 = vpop.f32.mrb[0].mxu0
      %7629 = vmatprep.mubr.f32.mxu0 %v7232
      %7630 = vmatmul.mubr.f32.gmra.mrb[0].mxu0 %v6663
      %v7631 = vpop.f32.mrb[0].mxu0
      %v7632 = vadd.f32 0.0, %v7631
      %v7633 = vpop.f32.mrb[0].mxu0
      %7634 = vmatprep.mubr.f32.mxu0 %v7234
      %7635 = vmatmul.mubr.f32.gmra.mrb[0].mxu0 %v6665
      %v7636 = vpop.f32.mrb[0].mxu0
      %v7637 = vadd.f32 0.0, %v7636
      %v7638 = vpop.f32.mrb[0].mxu0
      %7639 = vmatprep.mubr.f32.mxu0 %v7236
      %7640 = vmatmul.mubr.f32.gmra.mrb[0].mxu0 %v6667
      %v7641 = vpop.f32.mrb[0].mxu0
      %v7642 = vadd.f32 0.0, %v7641
      %v7643 = vpop.f32.mrb[0].mxu0
      %7644 = vmatprep.mubr.f32.mxu0 %v7238
      %7645 = vmatmul.mubr.f32.gmra.mrb[0].mxu0 %v6669
      %v7646 = vpop.f32.mrb[0].mxu0
      %v7647 = vadd.f32 0.0, %v7646
      %v7648 = vpop.f32.mrb[0].mxu0
      %7649 = vmatprep.mubr.f32.mxu0 %v7240
      %7650 = vmatmul.mubr.f32.gmra.mrb[0].mxu0 %v6671
      %v7651 = vpop.f32.mrb[0].mxu0
      %v7652 = vadd.f32 0.0, %v7651
      %v7653 = vpop.f32.mrb[0].mxu0
      %7654 = vmatprep.mubr.f32.mxu0 %v7242
      %7655 = vmatmul.mubr.f32.gmra.mrb[0].mxu0 %v6673
      %v7656 = vpop.f32.mrb[0].mxu0
      %v7657 = vadd.f32 0.0, %v7656
      %v7658 = vpop.f32.mrb[0].mxu0
      %7659 = vmatprep.mubr.f32.mxu0 %v7244
      %7660 = vmatmul.mubr.f32.gmra.mrb[0].mxu0 %v6675
      %v7661 = vpop.f32.mrb[0].mxu0
      %v7662 = vadd.f32 0.0, %v7661
      %v7663 = vpop.f32.mrb[0].mxu0
      %7664 = vmatprep.mubr.f32.mxu0 %v7246
      %7665 = vmatmul.mubr.f32.gmra.mrb[0].mxu0 %v6677
      %v7666 = vpop.f32.mrb[0].mxu0
      %v7667 = vadd.f32 0.0, %v7666
      %v7668 = vpop.f32.mrb[0].mxu0
      %7669 = vmatprep.mubr.f32.mxu0 %v7248
      %7670 = vmatmul.mubr.f32.gmra.mrb[0].mxu0 %v6679
      %v7671 = vpop.f32.mrb[0].mxu0
      %v7672 = vadd.f32 0.0, %v7671
      %v7673 = vpop.f32.mrb[0].mxu0
      %7674 = vmatprep.mubr.f32.mxu0 %v7250
      %7675 = vmatmul.mubr.f32.gmra.mrb[0].mxu0 %v6681
      %v7676 = vpop.f32.mrb[0].mxu0
      %v7677 = vadd.f32 0.0, %v7676
      %v7678 = vpop.f32.mrb[0].mxu0
      %7679 = vmatprep.mubr.f32.mxu0 %v7252
      %7680 = vmatmul.mubr.f32.gmra.mrb[0].mxu0 %v6683
      %v7681 = vpop.f32.mrb[0].mxu0
      %v7682 = vadd.f32 0.0, %v7681
      %v7683 = vpop.f32.mrb[0].mxu0
      %7684 = vmatprep.mubr.f32.mxu0 %v7254
      %7685 = vmatmul.mubr.f32.gmra.mrb[0].mxu0 %v6685
      %v7686 = vpop.f32.mrb[0].mxu0
      %v7687 = vadd.f32 0.0, %v7686
      %v7688 = vpop.f32.mrb[0].mxu0
      %7689 = vmatprep.mubr.f32.mxu0 %v7256
      %7690 = vmatmul.mubr.f32.gmra.mrb[0].mxu0 %v6687
      %v7691 = vpop.f32.mrb[0].mxu0
      %v7692 = vadd.f32 0.0, %v7691
      %v7693 = vpop.f32.mrb[0].mxu0
      %7694 = vmatprep.mubr.f32.mxu0 %v7488
      %7695 = vmatmul.mubr.f32.gmra.mrb[0].mxu0 %v6689
      %v7696 = vpop.f32.mrb[0].mxu0
      %v7697 = vadd.f32 0.0, %v7696
      %v7698 = vpop.f32.mrb[0].mxu0
      %7699 = vdwg.mxu0
      %v7700 = vadd.f32 %v7325, %v7557
      %v7701 = vadd.f32 %v7330, %v7562
      %v7702 = vadd.f32 %v7335, %v7567
      %v7703 = vadd.f32 %v7340, %v7572
      %v7704 = vadd.f32 %v7345, %v7577
      %v7705 = vadd.f32 %v7350, %v7582
      %v7706 = vadd.f32 %v7355, %v7587
      %v7707 = vadd.f32 %v7360, %v7592
      %v7708 = vadd.f32 %v7365, %v7597
      %v7709 = vadd.f32 %v7370, %v7602
      %v7710 = vadd.f32 %v7375, %v7607
      %v7711 = vadd.f32 %v7380, %v7612
      %v7712 = vadd.f32 %v7385, %v7617
      %v7713 = vadd.f32 %v7390, %v7622
      %v7714 = vadd.f32 %v7395, %v7627
      %v7715 = vadd.f32 %v7400, %v7632
      %v7716 = vadd.f32 %v7405, %v7637
      %v7717 = vadd.f32 %v7410, %v7642
      %v7718 = vadd.f32 %v7415, %v7647
      %v7719 = vadd.f32 %v7420, %v7652
      %v7720 = vadd.f32 %v7425, %v7657
      %v7721 = vadd.f32 %v7430, %v7662
      %v7722 = vadd.f32 %v7435, %v7667
      %v7723 = vadd.f32 %v7440, %v7672
      %v7724 = vadd.f32 %v7445, %v7677
      %v7725 = vadd.f32 %v7450, %v7682
      %v7726 = vadd.f32 %v7455, %v7687
      %v7727 = vadd.f32 %v7460, %v7692
      %v7728 = vadd.f32 %v7465, %v7697
      %s7729 = scalar_lea.vmem %s5, 432
      %v7730 = vld [vmem:[%s7729] sm:$0xff]
      %v7731 = vld [vmem:[%s7729 + $0x8] sm:$0xff]
      %v7732 = vld [vmem:[%s7729 + $0x10] sm:$0xff]
      %v7733 = vld [vmem:[%s7729 + $0x18] sm:$0xff]
      %v7734 = vld [vmem:[%s7729 + $0x20] sm:$0xff]
      %v7735 = vld [vmem:[%s7729 + $0x28] sm:$0xff]
      %v7736 = vld [vmem:[%s7729 + $0x30] sm:$0xff]
      %v7737 = vld [vmem:[%s7729 + $0x38] sm:$0xff]
      %v7738 = vld [vmem:[%s7729 + $0x40] sm:$0xff]
      %v7739 = vld [vmem:[%s7729 + $0x48] sm:$0xff]
      %v7740 = vld [vmem:[%s7729 + $0x50] sm:$0xff]
      %v7741 = vld [vmem:[%s7729 + $0x58] sm:$0xff]
      %v7742 = vld [vmem:[%s7729 + $0x60] sm:$0xff]
      %v7743 = vld [vmem:[%s7729 + $0x68] sm:$0xff]
      %v7744 = vld [vmem:[%s7729 + $0x70] sm:$0xff]
      %v7745 = vld [vmem:[%s7729 + $0x78] sm:$0xff]
      %v7746 = vld [vmem:[%s7729 + $0x80] sm:$0xff]
      %v7747 = vld [vmem:[%s7729 + $0x88] sm:$0xff]
      %v7749 = vrot.slane %v6689, 4
      %v7750 = vsel %vm4425, %v6898, %v7749
      %v7751 = vrot.slane %v6690, 4
      %v7752 = vsel %vm4425, %v6900, %v7751
      %v7755 = vsel %vm6931, %v7752, 0
      %v7757 = vsel %vm6931, %v7751, 0
      %7759 = vmatprep.subr.mxu0 0.0
      %7760 = vmatpush1.msra.mxu0 %v7730
      %7761 = vmatprep.subr.mxu0 0.0
      %7762 = vmatpush1.msra.mxu0 %v7731
      %7763 = vmatprep.subr.mxu0 0.0
      %7764 = vmatpush1.msra.mxu0 %v7732
      %7765 = vmatprep.subr.mxu0 0.0
      %7766 = vmatpush1.msra.mxu0 %v7733
      %7767 = vmatprep.subr.mxu0 0.0
      %7768 = vmatpush1.msra.mxu0 %v7734
      %7769 = vmatprep.subr.mxu0 0.0
      %7770 = vmatpush1.msra.mxu0 %v7735
      %7771 = vmatprep.subr.mxu0 0.0
      %7772 = vmatpush1.msra.mxu0 %v7736
      %7773 = vmatprep.subr.mxu0 0.0
      %7774 = vmatpush1.msra.mxu0 %v7737
      %7775 = vmatprep.subr.mxu0 0.0
      %7776 = vmatpush1.msra.mxu0 %v7738
      %7777 = vmatprep.subr.mxu0 0.0
      %7778 = vmatpush1.msra.mxu0 %v7739
      %7779 = vmatprep.subr.mxu0 0.0
      %7780 = vmatpush1.msra.mxu0 %v7740
      %7781 = vmatprep.subr.mxu0 0.0
      %7782 = vmatpush1.msra.mxu0 %v7741
      %7783 = vmatprep.subr.mxu0 0.0
      %7784 = vmatpush1.msra.mxu0 %v7742
      %7785 = vmatprep.subr.mxu0 0.0
      %7786 = vmatpush1.msra.mxu0 %v7743
      %7787 = vmatprep.subr.mxu0 0.0
      %7788 = vmatpush1.msra.mxu0 %v7744
      %7789 = vmatprep.subr.mxu0 0.0
      %7790 = vmatpush1.msra.mxu0 %v7745
      %7791 = vmatprep.subr.mxu0 0.0
      %7792 = vmatpush1.msra.mxu0 %v7746
      %7793 = vmatprep.subr.mxu0 0.0
      %7794 = vmatpush1.msra.mxu0 %v7747
      %7795 = vmatprep.subr.mxu0 0.0
      %7796 = vmatpush1.msra.mxu0 0.0
      %7797 = vmatprep.subr.mxu0 0.0
      %7798 = vmatpush1.msra.mxu0 0.0
      %7799 = vmatprep.subr.mxu0 0.0
      %7800 = vmatpush1.msra.mxu0 0.0
      %7801 = vmatprep.subr.mxu0 0.0
      %7802 = vmatpush1.msra.mxu0 0.0
      %7803 = vmatprep.subr.mxu0 0.0
      %7804 = vmatpush1.msra.mxu0 0.0
      %7805 = vmatprep.subr.mxu0 0.0
      %7806 = vmatpush1.msra.mxu0 0.0
      %7807 = vmatprep.subr.mxu0 0.0
      %7808 = vmatpush1.msra.mxu0 0.0
      %7809 = vmatprep.subr.mxu0 0.0
      %7810 = vmatpush1.msra.mxu0 0.0
      %7811 = vmatprep.subr.mxu0 0.0
      %7812 = vmatpush1.msra.mxu0 0.0
      %7813 = vmatprep.subr.mxu0 0.0
      %7814 = vmatpush1.msra.mxu0 0.0
      %7815 = vmatprep.subr.mxu0 0.0
      %7816 = vmatpush1.msra.mxu0 0.0
      %7817 = vmatprep.subr.mxu0 0.0
      %7818 = vmatpush1.msra.mxu0 0.0
      %7819 = vmatprep.subr.mxu0 0.0
      %7820 = vmatpush1.msra.mxu0 0.0
      %7821 = vmatprep.subr.mxu0 0.0
      %7822 = vmatpush1.msra.mxu0 0.0
      %7823 = vmatprep.mubr.f32.mxu0 %v6934
      %7824 = vmatmul.mubr.f32.gmra.mrb[0].mxu0 %v6795
      %v7825 = vpop.f32.mrb[0].mxu0
      %v7826 = vadd.f32 0.0, %v7825
      %v7827 = vpop.f32.mrb[0].mxu0
      %7828 = vmatprep.mubr.f32.mxu0 %v6936
      %7829 = vmatmul.mubr.f32.gmra.mrb[0].mxu0 %v6799
      %v7830 = vpop.f32.mrb[0].mxu0
      %v7831 = vadd.f32 0.0, %v7830
      %v7832 = vpop.f32.mrb[0].mxu0
      %7833 = vmatprep.mubr.f32.mxu0 %v6938
      %7834 = vmatmul.mubr.f32.gmra.mrb[0].mxu0 %v6803
      %v7835 = vpop.f32.mrb[0].mxu0
      %v7836 = vadd.f32 0.0, %v7835
      %v7837 = vpop.f32.mrb[0].mxu0
      %7838 = vmatprep.mubr.f32.mxu0 %v6940
      %7839 = vmatmul.mubr.f32.gmra.mrb[0].mxu0 %v6807
      %v7840 = vpop.f32.mrb[0].mxu0
      %v7841 = vadd.f32 0.0, %v7840
      %v7842 = vpop.f32.mrb[0].mxu0
      %7843 = vmatprep.mubr.f32.mxu0 %v6942
      %7844 = vmatmul.mubr.f32.gmra.mrb[0].mxu0 %v6811
      %v7845 = vpop.f32.mrb[0].mxu0
      %v7846 = vadd.f32 0.0, %v7845
      %v7847 = vpop.f32.mrb[0].mxu0
      %7848 = vmatprep.mubr.f32.mxu0 %v6944
      %7849 = vmatmul.mubr.f32.gmra.mrb[0].mxu0 %v6815
      %v7850 = vpop.f32.mrb[0].mxu0
      %v7851 = vadd.f32 0.0, %v7850
      %v7852 = vpop.f32.mrb[0].mxu0
      %7853 = vmatprep.mubr.f32.mxu0 %v6946
      %7854 = vmatmul.mubr.f32.gmra.mrb[0].mxu0 %v6819
      %v7855 = vpop.f32.mrb[0].mxu0
      %v7856 = vadd.f32 0.0, %v7855
      %v7857 = vpop.f32.mrb[0].mxu0
      %7858 = vmatprep.mubr.f32.mxu0 %v6948
      %7859 = vmatmul.mubr.f32.gmra.mrb[0].mxu0 %v6823
      %v7860 = vpop.f32.mrb[0].mxu0
      %v7861 = vadd.f32 0.0, %v7860
      %v7862 = vpop.f32.mrb[0].mxu0
      %7863 = vmatprep.mubr.f32.mxu0 %v6950
      %7864 = vmatmul.mubr.f32.gmra.mrb[0].mxu0 %v6827
      %v7865 = vpop.f32.mrb[0].mxu0
      %v7866 = vadd.f32 0.0, %v7865
      %v7867 = vpop.f32.mrb[0].mxu0
      %7868 = vmatprep.mubr.f32.mxu0 %v6952
      %7869 = vmatmul.mubr.f32.gmra.mrb[0].mxu0 %v6831
      %v7870 = vpop.f32.mrb[0].mxu0
      %v7871 = vadd.f32 0.0, %v7870
      %v7872 = vpop.f32.mrb[0].mxu0
      %7873 = vmatprep.mubr.f32.mxu0 %v6954
      %7874 = vmatmul.mubr.f32.gmra.mrb[0].mxu0 %v6835
      %v7875 = vpop.f32.mrb[0].mxu0
      %v7876 = vadd.f32 0.0, %v7875
      %v7877 = vpop.f32.mrb[0].mxu0
      %7878 = vmatprep.mubr.f32.mxu0 %v6956
      %7879 = vmatmul.mubr.f32.gmra.mrb[0].mxu0 %v6839
      %v7880 = vpop.f32.mrb[0].mxu0
      %v7881 = vadd.f32 0.0, %v7880
      %v7882 = vpop.f32.mrb[0].mxu0
      %7883 = vmatprep.mubr.f32.mxu0 %v6958
      %7884 = vmatmul.mubr.f32.gmra.mrb[0].mxu0 %v6843
      %v7885 = vpop.f32.mrb[0].mxu0
      %v7886 = vadd.f32 0.0, %v7885
      %v7887 = vpop.f32.mrb[0].mxu0
      %7888 = vmatprep.mubr.f32.mxu0 %v6960
      %7889 = vmatmul.mubr.f32.gmra.mrb[0].mxu0 %v6847
      %v7890 = vpop.f32.mrb[0].mxu0
      %v7891 = vadd.f32 0.0, %v7890
      %v7892 = vpop.f32.mrb[0].mxu0
      %7893 = vmatprep.mubr.f32.mxu0 %v6962
      %7894 = vmatmul.mubr.f32.gmra.mrb[0].mxu0 %v6851
      %v7895 = vpop.f32.mrb[0].mxu0
      %v7896 = vadd.f32 0.0, %v7895
      %v7897 = vpop.f32.mrb[0].mxu0
      %7898 = vmatprep.mubr.f32.mxu0 %v6964
      %7899 = vmatmul.mubr.f32.gmra.mrb[0].mxu0 %v6855
      %v7900 = vpop.f32.mrb[0].mxu0
      %v7901 = vadd.f32 0.0, %v7900
      %v7902 = vpop.f32.mrb[0].mxu0
      %7903 = vmatprep.mubr.f32.mxu0 %v6966
      %7904 = vmatmul.mubr.f32.gmra.mrb[0].mxu0 %v6859
      %v7905 = vpop.f32.mrb[0].mxu0
      %v7906 = vadd.f32 0.0, %v7905
      %v7907 = vpop.f32.mrb[0].mxu0
      %7908 = vmatprep.mubr.f32.mxu0 %v6968
      %7909 = vmatmul.mubr.f32.gmra.mrb[0].mxu0 %v6863
      %v7910 = vpop.f32.mrb[0].mxu0
      %v7911 = vadd.f32 0.0, %v7910
      %v7912 = vpop.f32.mrb[0].mxu0
      %7913 = vmatprep.mubr.f32.mxu0 %v6970
      %7914 = vmatmul.mubr.f32.gmra.mrb[0].mxu0 %v6867
      %v7915 = vpop.f32.mrb[0].mxu0
      %v7916 = vadd.f32 0.0, %v7915
      %v7917 = vpop.f32.mrb[0].mxu0
      %7918 = vmatprep.mubr.f32.mxu0 %v6972
      %7919 = vmatmul.mubr.f32.gmra.mrb[0].mxu0 %v6871
      %v7920 = vpop.f32.mrb[0].mxu0
      %v7921 = vadd.f32 0.0, %v7920
      %v7922 = vpop.f32.mrb[0].mxu0
      %7923 = vmatprep.mubr.f32.mxu0 %v6974
      %7924 = vmatmul.mubr.f32.gmra.mrb[0].mxu0 %v6875
      %v7925 = vpop.f32.mrb[0].mxu0
      %v7926 = vadd.f32 0.0, %v7925
      %v7927 = vpop.f32.mrb[0].mxu0
      %7928 = vmatprep.mubr.f32.mxu0 %v6976
      %7929 = vmatmul.mubr.f32.gmra.mrb[0].mxu0 %v6879
      %v7930 = vpop.f32.mrb[0].mxu0
      %v7931 = vadd.f32 0.0, %v7930
      %v7932 = vpop.f32.mrb[0].mxu0
      %7933 = vmatprep.mubr.f32.mxu0 %v6978
      %7934 = vmatmul.mubr.f32.gmra.mrb[0].mxu0 %v6883
      %v7935 = vpop.f32.mrb[0].mxu0
      %v7936 = vadd.f32 0.0, %v7935
      %v7937 = vpop.f32.mrb[0].mxu0
      %7938 = vmatprep.mubr.f32.mxu0 %v6980
      %7939 = vmatmul.mubr.f32.gmra.mrb[0].mxu0 %v6887
      %v7940 = vpop.f32.mrb[0].mxu0
      %v7941 = vadd.f32 0.0, %v7940
      %v7942 = vpop.f32.mrb[0].mxu0
      %7943 = vmatprep.mubr.f32.mxu0 %v6982
      %7944 = vmatmul.mubr.f32.gmra.mrb[0].mxu0 %v6891
      %v7945 = vpop.f32.mrb[0].mxu0
      %v7946 = vadd.f32 0.0, %v7945
      %v7947 = vpop.f32.mrb[0].mxu0
      %7948 = vmatprep.mubr.f32.mxu0 %v6984
      %7949 = vmatmul.mubr.f32.gmra.mrb[0].mxu0 %v6895
      %v7950 = vpop.f32.mrb[0].mxu0
      %v7951 = vadd.f32 0.0, %v7950
      %v7952 = vpop.f32.mrb[0].mxu0
      %7953 = vmatprep.mubr.f32.mxu0 %v6986
      %7954 = vmatmul.mubr.f32.gmra.mrb[0].mxu0 %v6899
      %v7955 = vpop.f32.mrb[0].mxu0
      %v7956 = vadd.f32 0.0, %v7955
      %v7957 = vpop.f32.mrb[0].mxu0
      %7958 = vmatprep.mubr.f32.mxu0 %v7755
      %7959 = vmatmul.mubr.f32.gmra.mrb[0].mxu0 %v7750
      %v7960 = vpop.f32.mrb[0].mxu0
      %v7961 = vadd.f32 0.0, %v7960
      %v7962 = vpop.f32.mrb[0].mxu0
      %7963 = vmatprep.mubr.f32.mxu0 %v7757
      %7964 = vmatmul.mubr.f32.gmra.mrb[0].mxu0 %v7749
      %v7965 = vpop.f32.mrb[0].mxu0
      %v7966 = vadd.f32 0.0, %v7965
      %v7967 = vpop.f32.mrb[0].mxu0
      %7968 = vdwg.mxu0
      %v7969 = vadd.f32 %v7700, %v7826
      %v7970 = vadd.f32 %v7701, %v7831
      %v7971 = vadd.f32 %v7702, %v7836
      %v7972 = vadd.f32 %v7703, %v7841
      %v7973 = vadd.f32 %v7704, %v7846
      %v7974 = vadd.f32 %v7705, %v7851
      %v7975 = vadd.f32 %v7706, %v7856
      %v7976 = vadd.f32 %v7707, %v7861
      %v7977 = vadd.f32 %v7708, %v7866
      %v7978 = vadd.f32 %v7709, %v7871
      %v7979 = vadd.f32 %v7710, %v7876
      %v7980 = vadd.f32 %v7711, %v7881
      %v7981 = vadd.f32 %v7712, %v7886
      %v7982 = vadd.f32 %v7713, %v7891
      %v7983 = vadd.f32 %v7714, %v7896
      %v7984 = vadd.f32 %v7715, %v7901
      %v7985 = vadd.f32 %v7716, %v7906
      %v7986 = vadd.f32 %v7717, %v7911
      %v7987 = vadd.f32 %v7718, %v7916
      %v7988 = vadd.f32 %v7719, %v7921
      %v7989 = vadd.f32 %v7720, %v7926
      %v7990 = vadd.f32 %v7721, %v7931
      %v7991 = vadd.f32 %v7722, %v7936
      %v7992 = vadd.f32 %v7723, %v7941
      %v7993 = vadd.f32 %v7724, %v7946
      %v7994 = vadd.f32 %v7725, %v7951
      %v7995 = vadd.f32 %v7726, %v7956
      %v7996 = vadd.f32 %v7727, %v7961
      %v7997 = vadd.f32 %v7728, %v7966
      %s7998 = scalar_lea.vmem %s5, 576
      %v7999 = vld [vmem:[%s7998] sm:$0xff]
      %v8000 = vld [vmem:[%s7998 + $0x8] sm:$0xff]
      %v8001 = vld [vmem:[%s7998 + $0x10] sm:$0xff]
      %v8002 = vld [vmem:[%s7998 + $0x18] sm:$0xff]
      %v8003 = vld [vmem:[%s7998 + $0x20] sm:$0xff]
      %v8004 = vld [vmem:[%s7998 + $0x28] sm:$0xff]
      %v8005 = vld [vmem:[%s7998 + $0x30] sm:$0xff]
      %v8006 = vld [vmem:[%s7998 + $0x38] sm:$0xff]
      %v8007 = vld [vmem:[%s7998 + $0x40] sm:$0xff]
      %v8008 = vld [vmem:[%s7998 + $0x48] sm:$0xff]
      %v8009 = vld [vmem:[%s7998 + $0x50] sm:$0xff]
      %v8010 = vld [vmem:[%s7998 + $0x58] sm:$0xff]
      %v8011 = vld [vmem:[%s7998 + $0x60] sm:$0xff]
      %v8012 = vld [vmem:[%s7998 + $0x68] sm:$0xff]
      %v8013 = vld [vmem:[%s7998 + $0x70] sm:$0xff]
      %v8014 = vld [vmem:[%s7998 + $0x78] sm:$0xff]
      %v8015 = vld [vmem:[%s7998 + $0x80] sm:$0xff]
      %v8016 = vld [vmem:[%s7998 + $0x88] sm:$0xff]
      %v8018 = vsel %vm6931, %v6692, 0
      %8020 = vmatprep.subr.mxu0 0.0
      %8021 = vmatpush1.msra.mxu0 %v7999
      %8022 = vmatprep.subr.mxu0 0.0
      %8023 = vmatpush1.msra.mxu0 %v8000
      %8024 = vmatprep.subr.mxu0 0.0
      %8025 = vmatpush1.msra.mxu0 %v8001
      %8026 = vmatprep.subr.mxu0 0.0
      %8027 = vmatpush1.msra.mxu0 %v8002
      %8028 = vmatprep.subr.mxu0 0.0
      %8029 = vmatpush1.msra.mxu0 %v8003
      %8030 = vmatprep.subr.mxu0 0.0
      %8031 = vmatpush1.msra.mxu0 %v8004
      %8032 = vmatprep.subr.mxu0 0.0
      %8033 = vmatpush1.msra.mxu0 %v8005
      %8034 = vmatprep.subr.mxu0 0.0
      %8035 = vmatpush1.msra.mxu0 %v8006
      %8036 = vmatprep.subr.mxu0 0.0
      %8037 = vmatpush1.msra.mxu0 %v8007
      %8038 = vmatprep.subr.mxu0 0.0
      %8039 = vmatpush1.msra.mxu0 %v8008
      %8040 = vmatprep.subr.mxu0 0.0
      %8041 = vmatpush1.msra.mxu0 %v8009
      %8042 = vmatprep.subr.mxu0 0.0
      %8043 = vmatpush1.msra.mxu0 %v8010
      %8044 = vmatprep.subr.mxu0 0.0
      %8045 = vmatpush1.msra.mxu0 %v8011
      %8046 = vmatprep.subr.mxu0 0.0
      %8047 = vmatpush1.msra.mxu0 %v8012
      %8048 = vmatprep.subr.mxu0 0.0
      %8049 = vmatpush1.msra.mxu0 %v8013
      %8050 = vmatprep.subr.mxu0 0.0
      %8051 = vmatpush1.msra.mxu0 %v8014
      %8052 = vmatprep.subr.mxu0 0.0
      %8053 = vmatpush1.msra.mxu0 %v8015
      %8054 = vmatprep.subr.mxu0 0.0
      %8055 = vmatpush1.msra.mxu0 %v8016
      %8056 = vmatprep.subr.mxu0 0.0
      %8057 = vmatpush1.msra.mxu0 0.0
      %8058 = vmatprep.subr.mxu0 0.0
      %8059 = vmatpush1.msra.mxu0 0.0
      %8060 = vmatprep.subr.mxu0 0.0
      %8061 = vmatpush1.msra.mxu0 0.0
      %8062 = vmatprep.subr.mxu0 0.0
      %8063 = vmatpush1.msra.mxu0 0.0
      %8064 = vmatprep.subr.mxu0 0.0
      %8065 = vmatpush1.msra.mxu0 0.0
      %8066 = vmatprep.subr.mxu0 0.0
      %8067 = vmatpush1.msra.mxu0 0.0
      %8068 = vmatprep.subr.mxu0 0.0
      %8069 = vmatpush1.msra.mxu0 0.0
      %8070 = vmatprep.subr.mxu0 0.0
      %8071 = vmatpush1.msra.mxu0 0.0
      %8072 = vmatprep.subr.mxu0 0.0
      %8073 = vmatpush1.msra.mxu0 0.0
      %8074 = vmatprep.subr.mxu0 0.0
      %8075 = vmatpush1.msra.mxu0 0.0
      %8076 = vmatprep.subr.mxu0 0.0
      %8077 = vmatpush1.msra.mxu0 0.0
      %8078 = vmatprep.subr.mxu0 0.0
      %8079 = vmatpush1.msra.mxu0 0.0
      %8080 = vmatprep.subr.mxu0 0.0
      %8081 = vmatpush1.msra.mxu0 0.0
      %8082 = vmatprep.subr.mxu0 0.0
      %8083 = vmatpush1.msra.mxu0 0.0
      %8084 = vmatprep.mubr.f32.mxu0 %v7204
      %8085 = vmatmul.mubr.f32.gmra.mrb[0].mxu0 %v6635
      %v8086 = vpop.f32.mrb[0].mxu0
      %v8087 = vadd.f32 0.0, %v8086
      %v8088 = vpop.f32.mrb[0].mxu0
      %8089 = vmatprep.mubr.f32.mxu0 %v7206
      %8090 = vmatmul.mubr.f32.gmra.mrb[0].mxu0 %v6637
      %v8091 = vpop.f32.mrb[0].mxu0
      %v8092 = vadd.f32 0.0, %v8091
      %v8093 = vpop.f32.mrb[0].mxu0
      %8094 = vmatprep.mubr.f32.mxu0 %v7208
      %8095 = vmatmul.mubr.f32.gmra.mrb[0].mxu0 %v6639
      %v8096 = vpop.f32.mrb[0].mxu0
      %v8097 = vadd.f32 0.0, %v8096
      %v8098 = vpop.f32.mrb[0].mxu0
      %8099 = vmatprep.mubr.f32.mxu0 %v7210
      %8100 = vmatmul.mubr.f32.gmra.mrb[0].mxu0 %v6641
      %v8101 = vpop.f32.mrb[0].mxu0
      %v8102 = vadd.f32 0.0, %v8101
      %v8103 = vpop.f32.mrb[0].mxu0
      %8104 = vmatprep.mubr.f32.mxu0 %v7212
      %8105 = vmatmul.mubr.f32.gmra.mrb[0].mxu0 %v6643
      %v8106 = vpop.f32.mrb[0].mxu0
      %v8107 = vadd.f32 0.0, %v8106
      %v8108 = vpop.f32.mrb[0].mxu0
      %8109 = vmatprep.mubr.f32.mxu0 %v7214
      %8110 = vmatmul.mubr.f32.gmra.mrb[0].mxu0 %v6645
      %v8111 = vpop.f32.mrb[0].mxu0
      %v8112 = vadd.f32 0.0, %v8111
      %v8113 = vpop.f32.mrb[0].mxu0
      %8114 = vmatprep.mubr.f32.mxu0 %v7216
      %8115 = vmatmul.mubr.f32.gmra.mrb[0].mxu0 %v6647
      %v8116 = vpop.f32.mrb[0].mxu0
      %v8117 = vadd.f32 0.0, %v8116
      %v8118 = vpop.f32.mrb[0].mxu0
      %8119 = vmatprep.mubr.f32.mxu0 %v7218
      %8120 = vmatmul.mubr.f32.gmra.mrb[0].mxu0 %v6649
      %v8121 = vpop.f32.mrb[0].mxu0
      %v8122 = vadd.f32 0.0, %v8121
      %v8123 = vpop.f32.mrb[0].mxu0
      %8124 = vmatprep.mubr.f32.mxu0 %v7220
      %8125 = vmatmul.mubr.f32.gmra.mrb[0].mxu0 %v6651
      %v8126 = vpop.f32.mrb[0].mxu0
      %v8127 = vadd.f32 0.0, %v8126
      %v8128 = vpop.f32.mrb[0].mxu0
      %8129 = vmatprep.mubr.f32.mxu0 %v7222
      %8130 = vmatmul.mubr.f32.gmra.mrb[0].mxu0 %v6653
      %v8131 = vpop.f32.mrb[0].mxu0
      %v8132 = vadd.f32 0.0, %v8131
      %v8133 = vpop.f32.mrb[0].mxu0
      %8134 = vmatprep.mubr.f32.mxu0 %v7224
      %8135 = vmatmul.mubr.f32.gmra.mrb[0].mxu0 %v6655
      %v8136 = vpop.f32.mrb[0].mxu0
      %v8137 = vadd.f32 0.0, %v8136
      %v8138 = vpop.f32.mrb[0].mxu0
      %8139 = vmatprep.mubr.f32.mxu0 %v7226
      %8140 = vmatmul.mubr.f32.gmra.mrb[0].mxu0 %v6657
      %v8141 = vpop.f32.mrb[0].mxu0
      %v8142 = vadd.f32 0.0, %v8141
      %v8143 = vpop.f32.mrb[0].mxu0
      %8144 = vmatprep.mubr.f32.mxu0 %v7228
      %8145 = vmatmul.mubr.f32.gmra.mrb[0].mxu0 %v6659
      %v8146 = vpop.f32.mrb[0].mxu0
      %v8147 = vadd.f32 0.0, %v8146
      %v8148 = vpop.f32.mrb[0].mxu0
      %8149 = vmatprep.mubr.f32.mxu0 %v7230
      %8150 = vmatmul.mubr.f32.gmra.mrb[0].mxu0 %v6661
      %v8151 = vpop.f32.mrb[0].mxu0
      %v8152 = vadd.f32 0.0, %v8151
      %v8153 = vpop.f32.mrb[0].mxu0
      %8154 = vmatprep.mubr.f32.mxu0 %v7232
      %8155 = vmatmul.mubr.f32.gmra.mrb[0].mxu0 %v6663
      %v8156 = vpop.f32.mrb[0].mxu0
      %v8157 = vadd.f32 0.0, %v8156
      %v8158 = vpop.f32.mrb[0].mxu0
      %8159 = vmatprep.mubr.f32.mxu0 %v7234
      %8160 = vmatmul.mubr.f32.gmra.mrb[0].mxu0 %v6665
      %v8161 = vpop.f32.mrb[0].mxu0
      %v8162 = vadd.f32 0.0, %v8161
      %v8163 = vpop.f32.mrb[0].mxu0
      %8164 = vmatprep.mubr.f32.mxu0 %v7236
      %8165 = vmatmul.mubr.f32.gmra.mrb[0].mxu0 %v6667
      %v8166 = vpop.f32.mrb[0].mxu0
      %v8167 = vadd.f32 0.0, %v8166
      %v8168 = vpop.f32.mrb[0].mxu0
      %8169 = vmatprep.mubr.f32.mxu0 %v7238
      %8170 = vmatmul.mubr.f32.gmra.mrb[0].mxu0 %v6669
      %v8171 = vpop.f32.mrb[0].mxu0
      %v8172 = vadd.f32 0.0, %v8171
      %v8173 = vpop.f32.mrb[0].mxu0
      %8174 = vmatprep.mubr.f32.mxu0 %v7240
      %8175 = vmatmul.mubr.f32.gmra.mrb[0].mxu0 %v6671
      %v8176 = vpop.f32.mrb[0].mxu0
      %v8177 = vadd.f32 0.0, %v8176
      %v8178 = vpop.f32.mrb[0].mxu0
      %8179 = vmatprep.mubr.f32.mxu0 %v7242
      %8180 = vmatmul.mubr.f32.gmra.mrb[0].mxu0 %v6673
      %v8181 = vpop.f32.mrb[0].mxu0
      %v8182 = vadd.f32 0.0, %v8181
      %v8183 = vpop.f32.mrb[0].mxu0
      %8184 = vmatprep.mubr.f32.mxu0 %v7244
      %8185 = vmatmul.mubr.f32.gmra.mrb[0].mxu0 %v6675
      %v8186 = vpop.f32.mrb[0].mxu0
      %v8187 = vadd.f32 0.0, %v8186
      %v8188 = vpop.f32.mrb[0].mxu0
      %8189 = vmatprep.mubr.f32.mxu0 %v7246
      %8190 = vmatmul.mubr.f32.gmra.mrb[0].mxu0 %v6677
      %v8191 = vpop.f32.mrb[0].mxu0
      %v8192 = vadd.f32 0.0, %v8191
      %v8193 = vpop.f32.mrb[0].mxu0
      %8194 = vmatprep.mubr.f32.mxu0 %v7248
      %8195 = vmatmul.mubr.f32.gmra.mrb[0].mxu0 %v6679
      %v8196 = vpop.f32.mrb[0].mxu0
      %v8197 = vadd.f32 0.0, %v8196
      %v8198 = vpop.f32.mrb[0].mxu0
      %8199 = vmatprep.mubr.f32.mxu0 %v7250
      %8200 = vmatmul.mubr.f32.gmra.mrb[0].mxu0 %v6681
      %v8201 = vpop.f32.mrb[0].mxu0
      %v8202 = vadd.f32 0.0, %v8201
      %v8203 = vpop.f32.mrb[0].mxu0
      %8204 = vmatprep.mubr.f32.mxu0 %v7252
      %8205 = vmatmul.mubr.f32.gmra.mrb[0].mxu0 %v6683
      %v8206 = vpop.f32.mrb[0].mxu0
      %v8207 = vadd.f32 0.0, %v8206
      %v8208 = vpop.f32.mrb[0].mxu0
      %8209 = vmatprep.mubr.f32.mxu0 %v7254
      %8210 = vmatmul.mubr.f32.gmra.mrb[0].mxu0 %v6685
      %v8211 = vpop.f32.mrb[0].mxu0
      %v8212 = vadd.f32 0.0, %v8211
      %v8213 = vpop.f32.mrb[0].mxu0
      %8214 = vmatprep.mubr.f32.mxu0 %v7256
      %8215 = vmatmul.mubr.f32.gmra.mrb[0].mxu0 %v6687
      %v8216 = vpop.f32.mrb[0].mxu0
      %v8217 = vadd.f32 0.0, %v8216
      %v8218 = vpop.f32.mrb[0].mxu0
      %8219 = vmatprep.mubr.f32.mxu0 %v7488
      %8220 = vmatmul.mubr.f32.gmra.mrb[0].mxu0 %v6689
      %v8221 = vpop.f32.mrb[0].mxu0
      %v8222 = vadd.f32 0.0, %v8221
      %v8223 = vpop.f32.mrb[0].mxu0
      %8224 = vmatprep.mubr.f32.mxu0 %v8018
      %8225 = vmatmul.mubr.f32.gmra.mrb[0].mxu0 %v6691
      %v8226 = vpop.f32.mrb[0].mxu0
      %v8227 = vadd.f32 0.0, %v8226
      %v8228 = vpop.f32.mrb[0].mxu0
      %8229 = vdwg.mxu0
      %v8230 = vadd.f32 %v7969, %v8087
      %v8231 = vadd.f32 %v7970, %v8092
      %v8232 = vadd.f32 %v7971, %v8097
      %v8233 = vadd.f32 %v7972, %v8102
      %v8234 = vadd.f32 %v7973, %v8107
      %v8235 = vadd.f32 %v7974, %v8112
      %v8236 = vadd.f32 %v7975, %v8117
      %v8237 = vadd.f32 %v7976, %v8122
      %v8238 = vadd.f32 %v7977, %v8127
      %v8239 = vadd.f32 %v7978, %v8132
      %v8240 = vadd.f32 %v7979, %v8137
      %v8241 = vadd.f32 %v7980, %v8142
      %v8242 = vadd.f32 %v7981, %v8147
      %v8243 = vadd.f32 %v7982, %v8152
      %v8244 = vadd.f32 %v7983, %v8157
      %v8245 = vadd.f32 %v7984, %v8162
      %v8246 = vadd.f32 %v7985, %v8167
      %v8247 = vadd.f32 %v7986, %v8172
      %v8248 = vadd.f32 %v7987, %v8177
      %v8249 = vadd.f32 %v7988, %v8182
      %v8250 = vadd.f32 %v7989, %v8187
      %v8251 = vadd.f32 %v7990, %v8192
      %v8252 = vadd.f32 %v7991, %v8197
      %v8253 = vadd.f32 %v7992, %v8202
      %v8254 = vadd.f32 %v7993, %v8207
      %v8255 = vadd.f32 %v7994, %v8212
      %v8256 = vadd.f32 %v7995, %v8217
      %v8257 = vadd.f32 %v7996, %v8222
      %v8258 = vadd.f32 %v7997, %v8227
      %v8259 = vlaneseq
      %v8260 = vand.u32 %v8259, 127
      %v8261 = vadd.s32 %v8260, 128
      %v8262 = vlaneseq
      %v8263 = vshrl.u32 %v8262, 7
      %v8264 = vmul.u32 %v8263, 32
      %vm8265 = vcmp.eq.s32.totalorder %v8260, %v8264
      %vm8266 = vcmp.eq.s32.totalorder %v8261, %v8264
      %v8267 = vsel %vm8265, 1, 0
      %v8268 = vsel %vm8266, 1, 0
      %v8269 = vcvt.s32.f32 %v8267
      %v8270 = vcvt.s32.f32 %v8268
      %v8271 = vld [vmem:[%s6] sm:$0x1]
      %v8273 = vlaneseq
      %v8274 = vshrl.u32 %v8273, 7
      %v8275 = vsub.s32 0, %v8274
      %v8276 = vrot.slane %v8271, %v8275
      %vm8278 = vcmask 793600
      %v8280 = vsel %vm8278, %v8270, 0
      %vm8282 = vcmask 1040384
      %v8284 = vsel %vm8282, %v8258, 0
      %8286 = vmatprep.subr.mxu0 0.0
      %8287 = vmatpush1.msra.mxu0 %v8230
      %8288 = vmatprep.subr.mxu0 0.0
      %8289 = vmatpush1.msra.mxu0 %v8231
      %8290 = vmatprep.subr.mxu0 0.0
      %8291 = vmatpush1.msra.mxu0 %v8232
      %8292 = vmatprep.subr.mxu0 0.0
      %8293 = vmatpush1.msra.mxu0 %v8233
      %8294 = vmatprep.subr.mxu0 0.0
      %8295 = vmatpush1.msra.mxu0 %v8234
      %8296 = vmatprep.subr.mxu0 0.0
      %8297 = vmatpush1.msra.mxu0 %v8235
      %8298 = vmatprep.subr.mxu0 0.0
      %8299 = vmatpush1.msra.mxu0 %v8236
      %8300 = vmatprep.subr.mxu0 0.0
      %8301 = vmatpush1.msra.mxu0 %v8237
      %8302 = vmatprep.subr.mxu0 0.0
      %8303 = vmatpush1.msra.mxu0 %v8238
      %8304 = vmatprep.subr.mxu0 0.0
      %8305 = vmatpush1.msra.mxu0 %v8239
      %8306 = vmatprep.subr.mxu0 0.0
      %8307 = vmatpush1.msra.mxu0 %v8240
      %8308 = vmatprep.subr.mxu0 0.0
      %8309 = vmatpush1.msra.mxu0 %v8241
      %8310 = vmatprep.subr.mxu0 0.0
      %8311 = vmatpush1.msra.mxu0 %v8242
      %8312 = vmatprep.subr.mxu0 0.0
      %8313 = vmatpush1.msra.mxu0 %v8243
      %8314 = vmatprep.subr.mxu0 0.0
      %8315 = vmatpush1.msra.mxu0 %v8244
      %8316 = vmatprep.subr.mxu0 0.0
      %8317 = vmatpush1.msra.mxu0 %v8245
      %8318 = vmatprep.subr.mxu0 0.0
      %8319 = vmatpush1.msra.mxu0 %v8246
      %8320 = vmatprep.subr.mxu0 0.0
      %8321 = vmatpush1.msra.mxu0 %v8247
      %8322 = vmatprep.subr.mxu0 0.0
      %8323 = vmatpush1.msra.mxu0 %v8248
      %8324 = vmatprep.subr.mxu0 0.0
      %8325 = vmatpush1.msra.mxu0 %v8249
      %8326 = vmatprep.subr.mxu0 0.0
      %8327 = vmatpush1.msra.mxu0 %v8250
      %8328 = vmatprep.subr.mxu0 0.0
      %8329 = vmatpush1.msra.mxu0 %v8251
      %8330 = vmatprep.subr.mxu0 0.0
      %8331 = vmatpush1.msra.mxu0 %v8252
      %8332 = vmatprep.subr.mxu0 0.0
      %8333 = vmatpush1.msra.mxu0 %v8253
      %8334 = vmatprep.subr.mxu0 0.0
      %8335 = vmatpush1.msra.mxu0 %v8254
      %8336 = vmatprep.subr.mxu0 0.0
      %8337 = vmatpush1.msra.mxu0 %v8255
      %8338 = vmatprep.subr.mxu0 0.0
      %8339 = vmatpush1.msra.mxu0 %v8256
      %8340 = vmatprep.subr.mxu0 0.0
      %8341 = vmatpush1.msra.mxu0 %v8257
      %8342 = vmatprep.subr.mxu0 0.0
      %8343 = vmatpush1.msra.mxu0 %v8284
      %8344 = vmatprep.subr.mxu0 0.0
      %8345 = vmatpush1.msra.mxu0 0.0
      %8346 = vmatprep.subr.mxu0 0.0
      %8347 = vmatpush1.msra.mxu0 0.0
      %8348 = vmatprep.subr.mxu0 0.0
      %8349 = vmatpush1.msra.mxu0 0.0
      %8350 = vmatprep.mubr.f32.mxu0 %v8280
      %8351 = vmatmul.mubr.f32.gmra.mrb[0].mxu0 %v8269
      %v8352 = vpop.f32.mrb[0].mxu0
      %v8353 = vadd.f32 %v8276, %v8352
      %v8354 = vpop.f32.mrb[0].mxu0
      %8355 = vdwg.mxu0
      %v8356 = vmax.f32 %v8353, 0.0
      %v8357 = vld [vmem:[%s7] sm:$0xff]
      %v8358 = vld [vmem:[%s7 + $0x8] sm:$0xff]
      %v8359 = vld [vmem:[%s7 + $0x10] sm:$0xff]
      %v8360 = vld [vmem:[%s7 + $0x18] sm:$0xff]
      %v8361 = vld [vmem:[%s7 + $0x20] sm:$0xff]
      %v8362 = vld [vmem:[%s7 + $0x28] sm:$0xff]
      %v8363 = vld [vmem:[%s7 + $0x30] sm:$0xff]
      %v8364 = vld [vmem:[%s7 + $0x38] sm:$0xff]
      %v8365 = vld [vmem:[%s7 + $0x40] sm:$0xff]
      %v8366 = vld [vmem:[%s7 + $0x48] sm:$0xff]
      %v8367 = vld [vmem:[%s7 + $0x50] sm:$0xff]
      %v8368 = vld [vmem:[%s7 + $0x58] sm:$0xff]
      %v8369 = vld [vmem:[%s7 + $0x60] sm:$0xff]
      %v8370 = vld [vmem:[%s7 + $0x68] sm:$0xff]
      %v8371 = vld [vmem:[%s7 + $0x70] sm:$0xff]
      %v8372 = vld [vmem:[%s7 + $0x78] sm:$0xff]
      %v8373 = vld [vmem:[%s8] sm:$0x1]
      %v8375 = vlaneseq
      %v8376 = vshrl.u32 %v8375, 7
      %v8377 = vsub.s32 0, %v8376
      %v8378 = vrot.slane %v8373, %v8377
      %8380 = vmatprep.subr.mxu0 0.0
      %8381 = vmatpush1.msra.mxu0 %v8357
      %8382 = vmatprep.subr.mxu0 0.0
      %8383 = vmatpush1.msra.mxu0 %v8358
      %8384 = vmatprep.subr.mxu0 0.0
      %8385 = vmatpush1.msra.mxu0 %v8359
      %8386 = vmatprep.subr.mxu0 0.0
      %8387 = vmatpush1.msra.mxu0 %v8360
      %8388 = vmatprep.subr.mxu0 0.0
      %8389 = vmatpush1.msra.mxu0 %v8361
      %8390 = vmatprep.subr.mxu0 0.0
      %8391 = vmatpush1.msra.mxu0 %v8362
      %8392 = vmatprep.subr.mxu0 0.0
      %8393 = vmatpush1.msra.mxu0 %v8363
      %8394 = vmatprep.subr.mxu0 0.0
      %8395 = vmatpush1.msra.mxu0 %v8364
      %8396 = vmatprep.subr.mxu0 0.0
      %8397 = vmatpush1.msra.mxu0 %v8365
      %8398 = vmatprep.subr.mxu0 0.0
      %8399 = vmatpush1.msra.mxu0 %v8366
      %8400 = vmatprep.subr.mxu0 0.0
      %8401 = vmatpush1.msra.mxu0 %v8367
      %8402 = vmatprep.subr.mxu0 0.0
      %8403 = vmatpush1.msra.mxu0 %v8368
      %8404 = vmatprep.subr.mxu0 0.0
      %8405 = vmatpush1.msra.mxu0 %v8369
      %8406 = vmatprep.subr.mxu0 0.0
      %8407 = vmatpush1.msra.mxu0 %v8370
      %8408 = vmatprep.subr.mxu0 0.0
      %8409 = vmatpush1.msra.mxu0 %v8371
      %8410 = vmatprep.subr.mxu0 0.0
      %8411 = vmatpush1.msra.mxu0 %v8372
      %8412 = vmatprep.subr.mxu0 0.0
      %8413 = vmatpush1.msra.mxu0 0.0
      %8414 = vmatprep.subr.mxu0 0.0
      %8415 = vmatpush1.msra.mxu0 0.0
      %8416 = vmatprep.subr.mxu0 0.0
      %8417 = vmatpush1.msra.mxu0 0.0
      %8418 = vmatprep.subr.mxu0 0.0
      %8419 = vmatpush1.msra.mxu0 0.0
      %8420 = vmatprep.subr.mxu0 0.0
      %8421 = vmatpush1.msra.mxu0 0.0
      %8422 = vmatprep.subr.mxu0 0.0
      %8423 = vmatpush1.msra.mxu0 0.0
      %8424 = vmatprep.subr.mxu0 0.0
      %8425 = vmatpush1.msra.mxu0 0.0
      %8426 = vmatprep.subr.mxu0 0.0
      %8427 = vmatpush1.msra.mxu0 0.0
      %8428 = vmatprep.subr.mxu0 0.0
      %8429 = vmatpush1.msra.mxu0 0.0
      %8430 = vmatprep.subr.mxu0 0.0
      %8431 = vmatpush1.msra.mxu0 0.0
      %8432 = vmatprep.subr.mxu0 0.0
      %8433 = vmatpush1.msra.mxu0 0.0
      %8434 = vmatprep.subr.mxu0 0.0
      %8435 = vmatpush1.msra.mxu0 0.0
      %8436 = vmatprep.subr.mxu0 0.0
      %8437 = vmatpush1.msra.mxu0 0.0
      %8438 = vmatprep.subr.mxu0 0.0
      %8439 = vmatpush1.msra.mxu0 0.0
      %8440 = vmatprep.subr.mxu0 0.0
      %8441 = vmatpush1.msra.mxu0 0.0
      %8442 = vmatprep.subr.mxu0 0.0
      %8443 = vmatpush1.msra.mxu0 0.0
      %8444 = vmatprep.mubr.f32.mxu0 0.0
      %8445 = vmatmul.mubr.f32.gmra.mrb[0].mxu0 %v8356
      %v8446 = vpop.f32.mrb[0].mxu0
      %v8447 = vadd.f32 %v8378, %v8446
      %v8448 = vpop.f32.mrb[0].mxu0
      %8449 = vdwg.mxu0
      %v8450 = vmax.f32 %v8447, 0.0
      %v8451 = vld [vmem:[%s9] sm:$0xff]
      %v8452 = vld [vmem:[%s9 + $0x8] sm:$0xff]
      %v8453 = vld [vmem:[%s9 + $0x10] sm:$0xff]
      %v8454 = vld [vmem:[%s9 + $0x18] sm:$0xff]
      %v8455 = vld [vmem:[%s9 + $0x20] sm:$0xff]
      %v8456 = vld [vmem:[%s9 + $0x28] sm:$0xff]
      %v8457 = vld [vmem:[%s9 + $0x30] sm:$0xff]
      %v8458 = vld [vmem:[%s9 + $0x38] sm:$0xff]
      %v8459 = vld [vmem:[%s9 + $0x40] sm:$0xff]
      %v8460 = vld [vmem:[%s9 + $0x48] sm:$0xff]
      %v8461 = vld [vmem:[%s9 + $0x50] sm:$0xff]
      %v8462 = vld [vmem:[%s9 + $0x58] sm:$0xff]
      %v8463 = vld [vmem:[%s9 + $0x60] sm:$0xff]
      %v8464 = vld [vmem:[%s9 + $0x68] sm:$0xff]
      %v8465 = vld [vmem:[%s9 + $0x70] sm:$0xff]
      %v8466 = vld [vmem:[%s9 + $0x78] sm:$0xff]
      %v8467 = vld [vmem:[%s10] sm:$0x1]
      %v8469 = vlaneseq
      %v8470 = vshrl.u32 %v8469, 7
      %v8471 = vsub.s32 0, %v8470
      %v8472 = vrot.slane %v8467, %v8471
      %8474 = vmatprep.subr.mxu0 0.0
      %8475 = vmatpush1.msra.mxu0 %v8451
      %8476 = vmatprep.subr.mxu0 0.0
      %8477 = vmatpush1.msra.mxu0 %v8452
      %8478 = vmatprep.subr.mxu0 0.0
      %8479 = vmatpush1.msra.mxu0 %v8453
      %8480 = vmatprep.subr.mxu0 0.0
      %8481 = vmatpush1.msra.mxu0 %v8454
      %8482 = vmatprep.subr.mxu0 0.0
      %8483 = vmatpush1.msra.mxu0 %v8455
      %8484 = vmatprep.subr.mxu0 0.0
      %8485 = vmatpush1.msra.mxu0 %v8456
      %8486 = vmatprep.subr.mxu0 0.0
      %8487 = vmatpush1.msra.mxu0 %v8457
      %8488 = vmatprep.subr.mxu0 0.0
      %8489 = vmatpush1.msra.mxu0 %v8458
      %8490 = vmatprep.subr.mxu0 0.0
      %8491 = vmatpush1.msra.mxu0 %v8459
      %8492 = vmatprep.subr.mxu0 0.0
      %8493 = vmatpush1.msra.mxu0 %v8460
      %8494 = vmatprep.subr.mxu0 0.0
      %8495 = vmatpush1.msra.mxu0 %v8461
      %8496 = vmatprep.subr.mxu0 0.0
      %8497 = vmatpush1.msra.mxu0 %v8462
      %8498 = vmatprep.subr.mxu0 0.0
      %8499 = vmatpush1.msra.mxu0 %v8463
      %8500 = vmatprep.subr.mxu0 0.0
      %8501 = vmatpush1.msra.mxu0 %v8464
      %8502 = vmatprep.subr.mxu0 0.0
      %8503 = vmatpush1.msra.mxu0 %v8465
      %8504 = vmatprep.subr.mxu0 0.0
      %8505 = vmatpush1.msra.mxu0 %v8466
      %8506 = vmatprep.subr.mxu0 0.0
      %8507 = vmatpush1.msra.mxu0 0.0
      %8508 = vmatprep.subr.mxu0 0.0
      %8509 = vmatpush1.msra.mxu0 0.0
      %8510 = vmatprep.subr.mxu0 0.0
      %8511 = vmatpush1.msra.mxu0 0.0
      %8512 = vmatprep.subr.mxu0 0.0
      %8513 = vmatpush1.msra.mxu0 0.0
      %8514 = vmatprep.subr.mxu0 0.0
      %8515 = vmatpush1.msra.mxu0 0.0
      %8516 = vmatprep.subr.mxu0 0.0
      %8517 = vmatpush1.msra.mxu0 0.0
      %8518 = vmatprep.subr.mxu0 0.0
      %8519 = vmatpush1.msra.mxu0 0.0
      %8520 = vmatprep.subr.mxu0 0.0
      %8521 = vmatpush1.msra.mxu0 0.0
      %8522 = vmatprep.subr.mxu0 0.0
      %8523 = vmatpush1.msra.mxu0 0.0
      %8524 = vmatprep.subr.mxu0 0.0
      %8525 = vmatpush1.msra.mxu0 0.0
      %8526 = vmatprep.subr.mxu0 0.0
      %8527 = vmatpush1.msra.mxu0 0.0
      %8528 = vmatprep.subr.mxu0 0.0
      %8529 = vmatpush1.msra.mxu0 0.0
      %8530 = vmatprep.subr.mxu0 0.0
      %8531 = vmatpush1.msra.mxu0 0.0
      %8532 = vmatprep.subr.mxu0 0.0
      %8533 = vmatpush1.msra.mxu0 0.0
      %8534 = vmatprep.subr.mxu0 0.0
      %8535 = vmatpush1.msra.mxu0 0.0
      %8536 = vmatprep.subr.mxu0 0.0
      %8537 = vmatpush1.msra.mxu0 0.0
      %8538 = vmatprep.mubr.f32.mxu0 0.0
      %8539 = vmatmul.mubr.f32.gmra.mrb[0].mxu0 %v8450
      %v8540 = vpop.f32.mrb[0].mxu0
      %v8541 = vadd.f32 %v8472, %v8540
      %v8542 = vpop.f32.mrb[0].mxu0
      %8543 = vdwg.mxu0
      %8544 = vst [vmem:[%s386] sm:$0xff] %v8541
      %p8545 = scmp.lt.s32.totalorder %s22, 1
      %s8546 = scalar_select %p8545, %s22, 1
      %s8547 = smul.addr %s8546, 8
      %s8548 = scalar_lea.vmem %s11, %s8547
      // Predicated region
      $region65: #{cnn_forward.1} parent=63 // pred_check
        %p8549 = pneg %p276
      $region66: #{cnn_forward.1} parent=63 // pred_check_branch
        %8551 = sbr.rel (%p8549) target = $region68
      $region67: #{cnn_forward.1} parent=63 // pred_region
        _
      $region68: #{cnn_forward.1} parent=63 // pred_fallthru
        _
    $region64: #{cnn_forward.1} parent=5 // pred_fallthru
      _
    %p8552 = scmp.le.s32.totalorder 2, %s17
    // Predicated region
    $region69: #{cnn_forward.1} parent=5 // pred_check
      %p8553 = pneg %p8552
    $region70: #{cnn_forward.1} parent=5 // pred_check_branch
      %8555 = sbr.rel (%p8553) target = $region72
    $region71: #{cnn_forward.1} parent=5 // pred_region
      %s8556 = ssub.s32 %s17, 2
      // Predicated region
      $region73: #{cnn_forward.1} parent=71 // pred_check
        %p8557 = pneg %p282
      $region74: #{cnn_forward.1} parent=71 // pred_check_branch
        %8559 = sbr.rel (%p8557) target = $region76
      $region75: #{cnn_forward.1} parent=71 // pred_region
        %p8560 = scmp.lt.s32.totalorder %s23, 1
        %s8561 = scalar_select %p8560, %s23, 1
        %s8562 = smul.addr %s8561, 8
        %s8563 = scalar_lea.vmem %s11, %s8562
      $region76: #{cnn_forward.1} parent=71 // pred_fallthru
        _
    $region72: #{cnn_forward.1} parent=5 // pred_fallthru
      _
  $region6: #{cnn_forward.1} parent=0 // loop_footer
    %s21 = sadd.s32 1, %s17
  $region7: #{cnn_forward.1} parent=0 // loop_footer_branch
    %16 = sbr.rel target = $region3
  $region8: #{cnn_forward.1} parent=0 // loop_exit
    _

</llo_original>
